<compile_context>
chip_gen: v7x
topology: tpu7x:2x2x1
jax: 0.10.0
libtpu: 0.0.40
codegen_flags: <defaults>
</compile_context>

<pallas_src>
import functools

import jax
import jax.numpy as jnp
from jax.experimental import pallas as pl
from jax.experimental.pallas import tpu as pltpu


# ----------------------------------------------------------------------------
# Pallas kernels
# ----------------------------------------------------------------------------
def _fused_conv_kernel(lhs1_ref, w1_ref, b1_ref, w2_ref, b2_ref, o_ref,
                       y1p_ref):
    """conv1(+bias,ReLU,pool) -> conv2(+bias,ReLU,pool) for one batch tile.

    lhs1_ref: (4, bt, 256, 32) bf16  conv1 phase-im2col; phase p=(dy*2+dx),
              rows ordered (b, a, c, i, j) with h1=2i+a, w1=2j+c, K=(ky,kx,ci).
    w1_ref  : (32, 64)   bf16  packed conv1 weight (rows (ky*3+kx)*3+ci).
    b1_ref  : (1, 64)    f32
    w2_ref  : (3, 3, 64, 128) bf16  HWIO conv2 weight.
    b2_ref  : (1, 128)   f32
    o_ref   : (bt, 64, 128) bf16  pooled conv2 output, rows ho*8+wo, lanes c.
    y1p_ref : (bt, 2, 2, 9, 9, 64) f32 scratch: padded parity planes of the
              pooled conv1 output;  y1p[b,A,C,I,J,:] == out1_padded[b,2I+A,2J+C,:].
    """
    bt = o_ref.shape[0]

    # ---------------- conv1: 4 pooling-phase GEMMs, max, bias, ReLU ---------
    pooled1 = None
    for p in range(4):
        lhs = lhs1_ref[p].reshape(bt * 256, 32)                  # bf16
        acc = jnp.dot(lhs, w1_ref[...], preferred_element_type=jnp.float32)
        pooled1 = acc if pooled1 is None else jnp.maximum(pooled1, acc)
    y1 = jnp.maximum(pooled1 + b1_ref[...], 0.0)                 # (bt*256,64) f32

    # ------ scatter conv1 output into the padded parity-plane scratch -------
    y1p_ref[...] = jnp.zeros_like(y1p_ref)
    y1b = y1.reshape(bt, 2, 2, 8, 8, 64)                         # (b,a,c,i,j,64)
    for a in range(2):
        for c in range(2):
            # out1[2i+a, 2j+c] lands in plane (1-a, 1-c) at (i+a, j+c);
            # the uncovered border row/col of each plane stays zero (= padding).
            y1p_ref[:, 1 - a, 1 - c, a:a + 8, c:c + 8, :] = y1b[:, a, c]

    # ---------------- conv2: per-tap GEMMs, max over phases, bias, ReLU -----
    w2t = [[w2_ref[ky, kx] for kx in range(3)] for ky in range(3)]  # (64,128) bf16
    pooled2 = None
    for dy in range(2):
        for dx in range(2):
            acc = None
            for ky in range(3):
                for kx in range(3):
                    t, s = dy + ky, dx + kx
                    piece = y1p_ref[:, t % 2, s % 2,
                                    (t // 2):(t // 2) + 8,
                                    (s // 2):(s // 2) + 8, :]     # (bt,8,8,64) f32
                    lhs = piece.reshape(bt * 64, 64).astype(jnp.bfloat16)
                    part = jnp.dot(lhs, w2t[ky][kx],
                                   preferred_element_type=jnp.float32)
                    acc = part if acc is None else acc + part
            pooled2 = acc if pooled2 is None else jnp.maximum(pooled2, acc)
    y2 = jnp.maximum(pooled2 + b2_ref[...], 0.0)                 # (bt*64,128) f32
    o_ref[...] = y2.reshape(bt, 64, 128).astype(o_ref.dtype)


def _matmul_bias_kernel(x_ref, w_ref, b_ref, o_ref):
    # x: (TM, K) bf16, w: (K, N) bf16, b: (1, N) f32 -> o: (TM, N) f32
    acc = jnp.dot(x_ref[...], w_ref[...], preferred_element_type=jnp.float32)
    o_ref[...] = (acc + b_ref[...]).astype(o_ref.dtype)


# ----------------------------------------------------------------------------
# Wrappers around pallas_call
# ----------------------------------------------------------------------------
def _pick_batch_tile(batch, max_tile=8):
    """Largest divisor of `batch` <= max_tile, preferring grid length >= 2."""
    cap = min(max_tile, batch if batch < 2 else max(1, batch // 2))
    bt = 1
    for d in range(1, cap + 1):
        if batch % d == 0:
            bt = d
    return bt


def _conv1_phase_im2col(x_nhwc):
    """(B,32,32,3) bf16 -> (4, B, 256, 32) bf16 conv1 pooling-phase im2col.

    Row order inside each phase is (a, c, i, j) with h1 = 2i+a, w1 = 2j+c, so
    the conv1 output drops straight into parity-plane layout in the kernel.
    """
    B, H, W, Cin = x_nhwc.shape
    Ho, Wo = H // 2, W // 2
    xp = jnp.pad(x_nhwc, ((0, 0), (1, 1), (1, 1), (0, 0)))       # (B,34,34,3)
    phases = []
    for dy in range(2):
        for dx in range(2):
            taps = []
            for ky in range(3):
                for kx in range(3):
                    h0, w0 = dy + ky, dx + kx
                    taps.append(
                        xp[:, h0:h0 + 2 * Ho - 1:2, w0:w0 + 2 * Wo - 1:2, :])
            ph = jnp.concatenate(taps, axis=-1)                  # (B,16,16,27)
            ph = ph.reshape(B, Ho // 2, 2, Wo // 2, 2, 9 * Cin)  # (B,i,a,j,c,27)
            ph = jnp.transpose(ph, (0, 2, 4, 1, 3, 5))           # (B,a,c,i,j,27)
            phases.append(ph.reshape(B, Ho * Wo, 9 * Cin))
    lhs = jnp.stack(phases, axis=0)                              # (4,B,256,27)
    pad_k = (-lhs.shape[-1]) % 32
    lhs = jnp.pad(lhs, ((0, 0), (0, 0), (0, 0), (0, pad_k)))
    return lhs.astype(jnp.bfloat16)                              # (4,B,256,32)


def conv_stack(x_nhwc, kp, *, batch_tile=8):
    """x: (B,32,32,3) bf16 -> (B, 64, 128) bf16 (rows ho*8+wo, lanes c)."""
    B = x_nhwc.shape[0]
    bt = _pick_batch_tile(B, batch_tile)
    lhs1 = _conv1_phase_im2col(x_nhwc)

    return pl.pallas_call(
        _fused_conv_kernel,
        out_shape=jax.ShapeDtypeStruct((B, 64, 128), jnp.bfloat16),
        grid=(B // bt,),
        in_specs=[
            pl.BlockSpec((4, bt, 256, 32), lambda i: (0, i, 0, 0)),
            pl.BlockSpec((32, 64), lambda i: (0, 0)),
            pl.BlockSpec((1, 64), lambda i: (0, 0)),
            pl.BlockSpec((3, 3, 64, 128), lambda i: (0, 0, 0, 0)),
            pl.BlockSpec((1, 128), lambda i: (0, 0)),
        ],
        out_specs=pl.BlockSpec((bt, 64, 128), lambda i: (i, 0, 0)),
        scratch_shapes=[pltpu.VMEM((bt, 2, 2, 9, 9, 64), jnp.float32)],
        compiler_params=pltpu.CompilerParams(
            dimension_semantics=("parallel",),
            vmem_limit_bytes=32 * 1024 * 1024),
    )(lhs1, kp["w1"], kp["b1"], kp["w2"], kp["b2"])


def linear(x, w, b, *, tile_m=256):
    """x:(M,K) bf16 @ w:(K,N) bf16 + b:(1,N) f32 -> (M,N) f32, tiled over M."""
    M, K = x.shape
    _, N = w.shape
    tm = M if M < tile_m else tile_m
    return pl.pallas_call(
        _matmul_bias_kernel,
        out_shape=jax.ShapeDtypeStruct((M, N), jnp.float32),
        grid=(pl.cdiv(M, tm),),
        in_specs=[
            pl.BlockSpec((tm, K), lambda i: (i, 0)),
            pl.BlockSpec((K, N), lambda i: (0, 0)),
            pl.BlockSpec((1, N), lambda i: (0, 0)),
        ],
        out_specs=pl.BlockSpec((tm, N), lambda i: (i, 0)),
        compiler_params=pltpu.CompilerParams(
            dimension_semantics=("parallel",),
            vmem_limit_bytes=32 * 1024 * 1024),
    )(x, w, b)


# ----------------------------------------------------------------------------
# Parameters (PyTorch layouts) and one-time kernel-ready conversion
# ----------------------------------------------------------------------------
def init_params(key):
    ks = jax.random.split(key, 6)
    scale = 0.05
    return {
        # PyTorch layouts: conv weight (Cout, Cin, KH, KW), linear weight (out, in)
        "w1": jax.random.normal(ks[0], (64, 3, 3, 3), jnp.float32) * scale,
        "b1": jax.random.normal(ks[1], (64,), jnp.float32) * scale,
        "w2": jax.random.normal(ks[2], (128, 64, 3, 3), jnp.float32) * scale,
        "b2": jax.random.normal(ks[3], (128,), jnp.float32) * scale,
        "wfc": jax.random.normal(ks[4], (10, 128 * 8 * 8), jnp.float32) * scale,
        "bfc": jax.random.normal(ks[5], (10,), jnp.float32) * scale,
    }


def prepare_params(params):
    """One-time conversion of PyTorch-layout params to kernel-ready layouts."""
    # conv1: (O,I,KH,KW) -> rows (ky*3+kx)*3+ci, cols O; pad K 27 -> 32.
    w1 = jnp.transpose(params["w1"], (2, 3, 1, 0)).reshape(27, 64)
    w1 = jnp.pad(w1, ((0, 5), (0, 0))).astype(jnp.bfloat16)
    # conv2: (O,I,KH,KW) -> HWIO.
    w2 = jnp.transpose(params["w2"], (2, 3, 1, 0)).astype(jnp.bfloat16)
    # fc: reorder input features from NCHW-flatten (c*64 + h*8 + w) to
    # NHWC-flatten ((h*8+w)*128 + c), transpose to (in, out), pad 10 -> 128.
    wfc = params["wfc"].reshape(10, 128, 8 * 8)               # (out, c, hw)
    wfc = jnp.transpose(wfc, (2, 1, 0)).reshape(8 * 8 * 128, 10)
    wfc = jnp.pad(wfc, ((0, 0), (0, 128 - 10))).astype(jnp.bfloat16)
    bfc = jnp.pad(params["bfc"], (0, 128 - 10)).reshape(1, 128)
    return {
        "w1": w1, "b1": params["b1"].reshape(1, 64).astype(jnp.float32),
        "w2": w2, "b2": params["b2"].reshape(1, 128).astype(jnp.float32),
        "wfc": wfc, "bfc": bfc.astype(jnp.float32),
    }


# ----------------------------------------------------------------------------
# Forward pass (kernel path) and pure-JAX reference
# ----------------------------------------------------------------------------
def cifar10_forward(kp, x_nchw, *, batch_tile=8):
    """x_nchw: (B, 3, 32, 32) float32 -> logits (B, 10) float32."""
    B = x_nchw.shape[0]
    x = jnp.transpose(x_nchw, (0, 2, 3, 1)).astype(jnp.bfloat16)   # NHWC bf16
    y = conv_stack(x, kp, batch_tile=batch_tile)                    # (B,64,128)
    flat = y.reshape(B, 8 * 8 * 128)          # free reshape (NHWC flatten)
    logits = linear(flat, kp["wfc"], kp["bfc"])                     # (B,128) f32
    return logits[:, :10]


def reference_forward(params, x_nchw):
    """Pure-JAX reference with the same bf16-in / f32-accumulate policy."""
    x = jnp.transpose(x_nchw, (0, 2, 3, 1)).astype(jnp.bfloat16)

    def conv_block(h, w, b):
        wk = jnp.transpose(w, (2, 3, 1, 0)).astype(jnp.bfloat16)
        y = jax.lax.conv_general_dilated(
            h, wk, window_strides=(1, 1), padding="SAME",
            dimension_numbers=("NHWC", "HWIO", "NHWC"),
            preferred_element_type=jnp.float32)
        y = jnp.maximum(y + b.astype(jnp.float32), 0.0)
        Bb, Hh, Ww, Cc = y.shape
        y = y.reshape(Bb, Hh // 2, 2, Ww // 2, 2, Cc).max(axis=(2, 4))
        return y.astype(jnp.bfloat16)

    y = conv_block(x, params["w1"], params["b1"])
    y = conv_block(y, params["w2"], params["b2"])
    flat = jnp.transpose(y, (0, 3, 1, 2)).reshape(x.shape[0], -1)  # NCHW order
    logits = jnp.dot(flat, params["wfc"].T.astype(jnp.bfloat16),
                     preferred_element_type=jnp.float32)
    return logits + params["bfc"].astype(jnp.float32)


if __name__ == "__main__":
    key = jax.random.PRNGKey(0)
    pkey, xkey = jax.random.split(key)
    params = init_params(pkey)
    kparams = prepare_params(params)   # one-time weight layout conversion

    # CIFAR-10 style input (batch=2); 32x32x3 is required by fc1's 128*8*8.
    x = jax.random.normal(xkey, (2, 3, 32, 32), jnp.float32)

    fwd = jax.jit(functools.partial(cifar10_forward, kparams))
    out = fwd(x)
    jax.block_until_ready(out)
    assert out.shape == (2, 10) and out.dtype == jnp.float32

    ref = jax.jit(functools.partial(reference_forward, params))(x)
    jax.block_until_ready(ref)
    err = float(jnp.max(jnp.abs(out - ref)))
    scale = float(jnp.max(jnp.abs(ref))) + 1e-6
    assert err <= 5e-2 * scale + 1e-2, f"kernel/reference mismatch: {err} (scale {scale})"

    print("KERNEL_OK")
</pallas_src>

<mosaic_0001>
module attributes {stable_mosaic.version = 11 : i64} {
  func.func @_fused_conv_kernel(%arg0: i32, %arg1: memref<4x1x256x32xbf16, #tpu.memory_space<vmem>>, %arg2: memref<32x64xbf16, #tpu.memory_space<vmem>>, %arg3: memref<1x64xf32, #tpu.memory_space<vmem>>, %arg4: memref<3x3x64x128xbf16, #tpu.memory_space<vmem>>, %arg5: memref<1x128xf32, #tpu.memory_space<vmem>>, %arg6: memref<1x64x128xbf16, #tpu.memory_space<vmem>>, %arg7: memref<1x2x2x9x9x64xf32, #tpu.memory_space<vmem>>) attributes {dimension_semantics = [#tpu.dimension_semantics<parallel>], iteration_bounds = array<i64: 2>, scalar_prefetch = 0 : i64, scratch_operands = 1 : i64, tpu.core_type = #tpu.core_type<tc>, window_params = [{transform_indices = @transform_0, window_bounds = array<i64: 4, 1, 256, 32>}, {pipeline_mode = #tpu.pipeline_mode<synchronous>, transform_indices = @transform_1, window_bounds = array<i64: 32, 64>}, {pipeline_mode = #tpu.pipeline_mode<synchronous>, transform_indices = @transform_2, window_bounds = array<i64: 1, 64>}, {pipeline_mode = #tpu.pipeline_mode<synchronous>, transform_indices = @transform_3, window_bounds = array<i64: 3, 3, 64, 128>}, {pipeline_mode = #tpu.pipeline_mode<synchronous>, transform_indices = @transform_4, window_bounds = array<i64: 1, 128>}, {transform_indices = @transform_5, window_bounds = array<i64: 1, 64, 128>}]} {
    %c0 = arith.constant 0 : index
    %c0_0 = arith.constant 0 : index
    %c0_1 = arith.constant 0 : index
    %c0_2 = arith.constant 0 : index
    %0 = vector.load %arg1[%c0, %c0_0, %c0_1, %c0_2] : memref<4x1x256x32xbf16, #tpu.memory_space<vmem>>, vector<1x1x256x32xbf16>
    %1 = vector.shape_cast %0 : vector<1x1x256x32xbf16> to vector<1x256x32xbf16>
    %2 = vector.shape_cast %1 : vector<1x256x32xbf16> to vector<256x32xbf16>
    %c0_3 = arith.constant 0 : index
    %c0_4 = arith.constant 0 : index
    %3 = vector.load %arg2[%c0_3, %c0_4] : memref<32x64xbf16, #tpu.memory_space<vmem>>, vector<32x64xbf16>
    %cst = arith.constant dense<0.000000e+00> : vector<256x64xf32>
    %4 = tpu.matmul %2, %3, %cst {dimension_numbers = #tpu.dot_dimension_numbers<[1], [0], [0], [1], [0, 0, 1, 1], [], []>} : vector<256x32xbf16>, vector<32x64xbf16>, vector<256x64xf32> -> vector<256x64xf32>
    %c1 = arith.constant 1 : index
    %c0_5 = arith.constant 0 : index
    %c0_6 = arith.constant 0 : index
    %c0_7 = arith.constant 0 : index
    %5 = vector.load %arg1[%c1, %c0_5, %c0_6, %c0_7] : memref<4x1x256x32xbf16, #tpu.memory_space<vmem>>, vector<1x1x256x32xbf16>
    %6 = vector.shape_cast %5 : vector<1x1x256x32xbf16> to vector<1x256x32xbf16>
    %7 = vector.shape_cast %6 : vector<1x256x32xbf16> to vector<256x32xbf16>
    %c0_8 = arith.constant 0 : index
    %c0_9 = arith.constant 0 : index
    %8 = vector.load %arg2[%c0_8, %c0_9] : memref<32x64xbf16, #tpu.memory_space<vmem>>, vector<32x64xbf16>
    %cst_10 = arith.constant dense<0.000000e+00> : vector<256x64xf32>
    %9 = tpu.matmul %7, %8, %cst_10 {dimension_numbers = #tpu.dot_dimension_numbers<[1], [0], [0], [1], [0, 0, 1, 1], [], []>} : vector<256x32xbf16>, vector<32x64xbf16>, vector<256x64xf32> -> vector<256x64xf32>
    %10 = arith.maximumf %4, %9 : vector<256x64xf32>
    %c2 = arith.constant 2 : index
    %c0_11 = arith.constant 0 : index
    %c0_12 = arith.constant 0 : index
    %c0_13 = arith.constant 0 : index
    %11 = vector.load %arg1[%c2, %c0_11, %c0_12, %c0_13] : memref<4x1x256x32xbf16, #tpu.memory_space<vmem>>, vector<1x1x256x32xbf16>
    %12 = vector.shape_cast %11 : vector<1x1x256x32xbf16> to vector<1x256x32xbf16>
    %13 = vector.shape_cast %12 : vector<1x256x32xbf16> to vector<256x32xbf16>
    %c0_14 = arith.constant 0 : index
    %c0_15 = arith.constant 0 : index
    %14 = vector.load %arg2[%c0_14, %c0_15] : memref<32x64xbf16, #tpu.memory_space<vmem>>, vector<32x64xbf16>
    %cst_16 = arith.constant dense<0.000000e+00> : vector<256x64xf32>
    %15 = tpu.matmul %13, %14, %cst_16 {dimension_numbers = #tpu.dot_dimension_numbers<[1], [0], [0], [1], [0, 0, 1, 1], [], []>} : vector<256x32xbf16>, vector<32x64xbf16>, vector<256x64xf32> -> vector<256x64xf32>
    %16 = arith.maximumf %10, %15 : vector<256x64xf32>
    %c3 = arith.constant 3 : index
    %c0_17 = arith.constant 0 : index
    %c0_18 = arith.constant 0 : index
    %c0_19 = arith.constant 0 : index
    %17 = vector.load %arg1[%c3, %c0_17, %c0_18, %c0_19] : memref<4x1x256x32xbf16, #tpu.memory_space<vmem>>, vector<1x1x256x32xbf16>
    %18 = vector.shape_cast %17 : vector<1x1x256x32xbf16> to vector<1x256x32xbf16>
    %19 = vector.shape_cast %18 : vector<1x256x32xbf16> to vector<256x32xbf16>
    %c0_20 = arith.constant 0 : index
    %c0_21 = arith.constant 0 : index
    %20 = vector.load %arg2[%c0_20, %c0_21] : memref<32x64xbf16, #tpu.memory_space<vmem>>, vector<32x64xbf16>
    %cst_22 = arith.constant dense<0.000000e+00> : vector<256x64xf32>
    %21 = tpu.matmul %19, %20, %cst_22 {dimension_numbers = #tpu.dot_dimension_numbers<[1], [0], [0], [1], [0, 0, 1, 1], [], []>} : vector<256x32xbf16>, vector<32x64xbf16>, vector<256x64xf32> -> vector<256x64xf32>
    %22 = arith.maximumf %16, %21 : vector<256x64xf32>
    %c0_23 = arith.constant 0 : index
    %c0_24 = arith.constant 0 : index
    %23 = vector.load %arg3[%c0_23, %c0_24] : memref<1x64xf32, #tpu.memory_space<vmem>>, vector<1x64xf32>
    %24 = vector.broadcast %23 : vector<1x64xf32> to vector<256x64xf32>
    %25 = arith.addf %22, %24 : vector<256x64xf32>
    %cst_25 = arith.constant 0.000000e+00 : f32
    %26 = vector.broadcast %cst_25 : f32 to vector<256x64xf32>
    %27 = arith.maximumf %25, %26 : vector<256x64xf32>
    %cst_26 = arith.constant 0.000000e+00 : f32
    %28 = vector.broadcast %cst_26 : f32 to vector<1x2x2x9x9x64xf32>
    %c0_27 = arith.constant 0 : index
    %c0_28 = arith.constant 0 : index
    %c0_29 = arith.constant 0 : index
    %c0_30 = arith.constant 0 : index
    %c0_31 = arith.constant 0 : index
    %c0_32 = arith.constant 0 : index
    %29 = vector.load %arg7[%c0_27, %c0_28, %c0_29, %c0_30, %c0_31, %c0_32] : memref<1x2x2x9x9x64xf32, #tpu.memory_space<vmem>>, vector<1x2x2x9x9x64xf32>
    tpu.vector_store %arg7[%c0_27, %c0_28, %c0_29, %c0_30, %c0_31, %c0_32], %28 {strides = array<i32>} : memref<1x2x2x9x9x64xf32, #tpu.memory_space<vmem>>, vector<1x2x2x9x9x64xf32>,
    %30 = vector.shape_cast %27 : vector<256x64xf32> to vector<1x2x2x8x8x64xf32>
    %31 = vector.extract_strided_slice %30 {offsets = [0, 0, 0, 0, 0, 0], sizes = [1, 1, 1, 8, 8, 64], strides = [1, 1, 1, 1, 1, 1]} : vector<1x2x2x8x8x64xf32> to vector<1x1x1x8x8x64xf32>
    %32 = vector.shape_cast %31 : vector<1x1x1x8x8x64xf32> to vector<1x8x8x64xf32>
    %c0_33 = arith.constant 0 : index
    %c1_34 = arith.constant 1 : index
    %c1_35 = arith.constant 1 : index
    %c0_36 = arith.constant 0 : index
    %c0_37 = arith.constant 0 : index
    %c0_38 = arith.constant 0 : index
    %33 = vector.load %arg7[%c0_33, %c1_34, %c1_35, %c0_36, %c0_37, %c0_38] : memref<1x2x2x9x9x64xf32, #tpu.memory_space<vmem>>, vector<1x1x1x8x8x64xf32>
    %34 = vector.shape_cast %33 : vector<1x1x1x8x8x64xf32> to vector<1x8x8x64xf32>
    %35 = vector.shape_cast %32 : vector<1x8x8x64xf32> to vector<1x1x1x8x8x64xf32>
    tpu.vector_store %arg7[%c0_33, %c1_34, %c1_35, %c0_36, %c0_37, %c0_38], %35 {strides = array<i32>} : memref<1x2x2x9x9x64xf32, #tpu.memory_space<vmem>>, vector<1x1x1x8x8x64xf32>,
    %36 = vector.extract_strided_slice %30 {offsets = [0, 0, 1, 0, 0, 0], sizes = [1, 1, 1, 8, 8, 64], strides = [1, 1, 1, 1, 1, 1]} : vector<1x2x2x8x8x64xf32> to vector<1x1x1x8x8x64xf32>
    %37 = vector.shape_cast %36 : vector<1x1x1x8x8x64xf32> to vector<1x8x8x64xf32>
    %c0_39 = arith.constant 0 : index
    %c1_40 = arith.constant 1 : index
    %c0_41 = arith.constant 0 : index
    %c0_42 = arith.constant 0 : index
    %c1_43 = arith.constant 1 : index
    %c0_44 = arith.constant 0 : index
    %38 = vector.load %arg7[%c0_39, %c1_40, %c0_41, %c0_42, %c1_43, %c0_44] : memref<1x2x2x9x9x64xf32, #tpu.memory_space<vmem>>, vector<1x1x1x8x8x64xf32>
    %39 = vector.shape_cast %38 : vector<1x1x1x8x8x64xf32> to vector<1x8x8x64xf32>
    %40 = vector.shape_cast %37 : vector<1x8x8x64xf32> to vector<1x1x1x8x8x64xf32>
    tpu.vector_store %arg7[%c0_39, %c1_40, %c0_41, %c0_42, %c1_43, %c0_44], %40 {strides = array<i32>} : memref<1x2x2x9x9x64xf32, #tpu.memory_space<vmem>>, vector<1x1x1x8x8x64xf32>,
    %41 = vector.extract_strided_slice %30 {offsets = [0, 1, 0, 0, 0, 0], sizes = [1, 1, 1, 8, 8, 64], strides = [1, 1, 1, 1, 1, 1]} : vector<1x2x2x8x8x64xf32> to vector<1x1x1x8x8x64xf32>
    %42 = vector.shape_cast %41 : vector<1x1x1x8x8x64xf32> to vector<1x8x8x64xf32>
    %c0_45 = arith.constant 0 : index
    %c0_46 = arith.constant 0 : index
    %c1_47 = arith.constant 1 : index
    %c1_48 = arith.constant 1 : index
    %c0_49 = arith.constant 0 : index
    %c0_50 = arith.constant 0 : index
    %43 = vector.load %arg7[%c0_45, %c0_46, %c1_47, %c1_48, %c0_49, %c0_50] : memref<1x2x2x9x9x64xf32, #tpu.memory_space<vmem>>, vector<1x1x1x8x8x64xf32>
    %44 = vector.shape_cast %43 : vector<1x1x1x8x8x64xf32> to vector<1x8x8x64xf32>
    %45 = vector.shape_cast %42 : vector<1x8x8x64xf32> to vector<1x1x1x8x8x64xf32>
    tpu.vector_store %arg7[%c0_45, %c0_46, %c1_47, %c1_48, %c0_49, %c0_50], %45 {strides = array<i32>} : memref<1x2x2x9x9x64xf32, #tpu.memory_space<vmem>>, vector<1x1x1x8x8x64xf32>,
    %46 = vector.extract_strided_slice %30 {offsets = [0, 1, 1, 0, 0, 0], sizes = [1, 1, 1, 8, 8, 64], strides = [1, 1, 1, 1, 1, 1]} : vector<1x2x2x8x8x64xf32> to vector<1x1x1x8x8x64xf32>
    %47 = vector.shape_cast %46 : vector<1x1x1x8x8x64xf32> to vector<1x8x8x64xf32>
    %c0_51 = arith.constant 0 : index
    %c0_52 = arith.constant 0 : index
    %c0_53 = arith.constant 0 : index
    %c1_54 = arith.constant 1 : index
    %c1_55 = arith.constant 1 : index
    %c0_56 = arith.constant 0 : index
    %48 = vector.load %arg7[%c0_51, %c0_52, %c0_53, %c1_54, %c1_55, %c0_56] : memref<1x2x2x9x9x64xf32, #tpu.memory_space<vmem>>, vector<1x1x1x8x8x64xf32>
    %49 = vector.shape_cast %48 : vector<1x1x1x8x8x64xf32> to vector<1x8x8x64xf32>
    %50 = vector.shape_cast %47 : vector<1x8x8x64xf32> to vector<1x1x1x8x8x64xf32>
    tpu.vector_store %arg7[%c0_51, %c0_52, %c0_53, %c1_54, %c1_55, %c0_56], %50 {strides = array<i32>} : memref<1x2x2x9x9x64xf32, #tpu.memory_space<vmem>>, vector<1x1x1x8x8x64xf32>,
    %c0_57 = arith.constant 0 : index
    %c0_58 = arith.constant 0 : index
    %c0_59 = arith.constant 0 : index
    %c0_60 = arith.constant 0 : index
    %51 = vector.load %arg4[%c0_57, %c0_58, %c0_59, %c0_60] : memref<3x3x64x128xbf16, #tpu.memory_space<vmem>>, vector<1x1x64x128xbf16>
    %52 = vector.shape_cast %51 : vector<1x1x64x128xbf16> to vector<64x128xbf16>
    %c0_61 = arith.constant 0 : index
    %c1_62 = arith.constant 1 : index
    %c0_63 = arith.constant 0 : index
    %c0_64 = arith.constant 0 : index
    %53 = vector.load %arg4[%c0_61, %c1_62, %c0_63, %c0_64] : memref<3x3x64x128xbf16, #tpu.memory_space<vmem>>, vector<1x1x64x128xbf16>
    %54 = vector.shape_cast %53 : vector<1x1x64x128xbf16> to vector<64x128xbf16>
    %c0_65 = arith.constant 0 : index
    %c2_66 = arith.constant 2 : index
    %c0_67 = arith.constant 0 : index
    %c0_68 = arith.constant 0 : index
    %55 = vector.load %arg4[%c0_65, %c2_66, %c0_67, %c0_68] : memref<3x3x64x128xbf16, #tpu.memory_space<vmem>>, vector<1x1x64x128xbf16>
    %56 = vector.shape_cast %55 : vector<1x1x64x128xbf16> to vector<64x128xbf16>
    %c1_69 = arith.constant 1 : index
    %c0_70 = arith.constant 0 : index
    %c0_71 = arith.constant 0 : index
    %c0_72 = arith.constant 0 : index
    %57 = vector.load %arg4[%c1_69, %c0_70, %c0_71, %c0_72] : memref<3x3x64x128xbf16, #tpu.memory_space<vmem>>, vector<1x1x64x128xbf16>
    %58 = vector.shape_cast %57 : vector<1x1x64x128xbf16> to vector<64x128xbf16>
    %c1_73 = arith.constant 1 : index
    %c1_74 = arith.constant 1 : index
    %c0_75 = arith.constant 0 : index
    %c0_76 = arith.constant 0 : index
    %59 = vector.load %arg4[%c1_73, %c1_74, %c0_75, %c0_76] : memref<3x3x64x128xbf16, #tpu.memory_space<vmem>>, vector<1x1x64x128xbf16>
    %60 = vector.shape_cast %59 : vector<1x1x64x128xbf16> to vector<64x128xbf16>
    %c1_77 = arith.constant 1 : index
    %c2_78 = arith.constant 2 : index
    %c0_79 = arith.constant 0 : index
    %c0_80 = arith.constant 0 : index
    %61 = vector.load %arg4[%c1_77, %c2_78, %c0_79, %c0_80] : memref<3x3x64x128xbf16, #tpu.memory_space<vmem>>, vector<1x1x64x128xbf16>
    %62 = vector.shape_cast %61 : vector<1x1x64x128xbf16> to vector<64x128xbf16>
    %c2_81 = arith.constant 2 : index
    %c0_82 = arith.constant 0 : index
    %c0_83 = arith.constant 0 : index
    %c0_84 = arith.constant 0 : index
    %63 = vector.load %arg4[%c2_81, %c0_82, %c0_83, %c0_84] : memref<3x3x64x128xbf16, #tpu.memory_space<vmem>>, vector<1x1x64x128xbf16>
    %64 = vector.shape_cast %63 : vector<1x1x64x128xbf16> to vector<64x128xbf16>
    %c2_85 = arith.constant 2 : index
    %c1_86 = arith.constant 1 : index
    %c0_87 = arith.constant 0 : index
    %c0_88 = arith.constant 0 : index
    %65 = vector.load %arg4[%c2_85, %c1_86, %c0_87, %c0_88] : memref<3x3x64x128xbf16, #tpu.memory_space<vmem>>, vector<1x1x64x128xbf16>
    %66 = vector.shape_cast %65 : vector<1x1x64x128xbf16> to vector<64x128xbf16>
    %c2_89 = arith.constant 2 : index
    %c2_90 = arith.constant 2 : index
    %c0_91 = arith.constant 0 : index
    %c0_92 = arith.constant 0 : index
    %67 = vector.load %arg4[%c2_89, %c2_90, %c0_91, %c0_92] : memref<3x3x64x128xbf16, #tpu.memory_space<vmem>>, vector<1x1x64x128xbf16>
    %68 = vector.shape_cast %67 : vector<1x1x64x128xbf16> to vector<64x128xbf16>
    %c0_93 = arith.constant 0 : index
    %c0_94 = arith.constant 0 : index
    %c0_95 = arith.constant 0 : index
    %c0_96 = arith.constant 0 : index
    %c0_97 = arith.constant 0 : index
    %c0_98 = arith.constant 0 : index
    %69 = vector.load %arg7[%c0_93, %c0_94, %c0_95, %c0_96, %c0_97, %c0_98] : memref<1x2x2x9x9x64xf32, #tpu.memory_space<vmem>>, vector<1x1x1x8x8x64xf32>
    %70 = vector.shape_cast %69 : vector<1x1x1x8x8x64xf32> to vector<1x8x8x64xf32>
    %71 = vector.shape_cast %70 : vector<1x8x8x64xf32> to vector<64x64xf32>
    %72 = arith.truncf %71 : vector<64x64xf32> to vector<64x64xbf16>
    %cst_99 = arith.constant dense<0.000000e+00> : vector<64x128xf32>
    %73 = tpu.matmul %72, %52, %cst_99 {dimension_numbers = #tpu.dot_dimension_numbers<[1], [0], [0], [1], [0, 0, 1, 1], [], []>} : vector<64x64xbf16>, vector<64x128xbf16>, vector<64x128xf32> -> vector<64x128xf32>
    %c0_100 = arith.constant 0 : index
    %c0_101 = arith.constant 0 : index
    %c1_102 = arith.constant 1 : index
    %c0_103 = arith.constant 0 : index
    %c0_104 = arith.constant 0 : index
    %c0_105 = arith.constant 0 : index
    %74 = vector.load %arg7[%c0_100, %c0_101, %c1_102, %c0_103, %c0_104, %c0_105] : memref<1x2x2x9x9x64xf32, #tpu.memory_space<vmem>>, vector<1x1x1x8x8x64xf32>
    %75 = vector.shape_cast %74 : vector<1x1x1x8x8x64xf32> to vector<1x8x8x64xf32>
    %76 = vector.shape_cast %75 : vector<1x8x8x64xf32> to vector<64x64xf32>
    %77 = arith.truncf %76 : vector<64x64xf32> to vector<64x64xbf16>
    %cst_106 = arith.constant dense<0.000000e+00> : vector<64x128xf32>
    %78 = tpu.matmul %77, %54, %cst_106 {dimension_numbers = #tpu.dot_dimension_numbers<[1], [0], [0], [1], [0, 0, 1, 1], [], []>} : vector<64x64xbf16>, vector<64x128xbf16>, vector<64x128xf32> -> vector<64x128xf32>
    %79 = arith.addf %73, %78 : vector<64x128xf32>
    %c0_107 = arith.constant 0 : index
    %c0_108 = arith.constant 0 : index
    %c0_109 = arith.constant 0 : index
    %c0_110 = arith.constant 0 : index
    %c1_111 = arith.constant 1 : index
    %c0_112 = arith.constant 0 : index
    %80 = vector.load %arg7[%c0_107, %c0_108, %c0_109, %c0_110, %c1_111, %c0_112] : memref<1x2x2x9x9x64xf32, #tpu.memory_space<vmem>>, vector<1x1x1x8x8x64xf32>
    %81 = vector.shape_cast %80 : vector<1x1x1x8x8x64xf32> to vector<1x8x8x64xf32>
    %82 = vector.shape_cast %81 : vector<1x8x8x64xf32> to vector<64x64xf32>
    %83 = arith.truncf %82 : vector<64x64xf32> to vector<64x64xbf16>
    %cst_113 = arith.constant dense<0.000000e+00> : vector<64x128xf32>
    %84 = tpu.matmul %83, %56, %cst_113 {dimension_numbers = #tpu.dot_dimension_numbers<[1], [0], [0], [1], [0, 0, 1, 1], [], []>} : vector<64x64xbf16>, vector<64x128xbf16>, vector<64x128xf32> -> vector<64x128xf32>
    %85 = arith.addf %79, %84 : vector<64x128xf32>
    %c0_114 = arith.constant 0 : index
    %c1_115 = arith.constant 1 : index
    %c0_116 = arith.constant 0 : index
    %c0_117 = arith.constant 0 : index
    %c0_118 = arith.constant 0 : index
    %c0_119 = arith.constant 0 : index
    %86 = vector.load %arg7[%c0_114, %c1_115, %c0_116, %c0_117, %c0_118, %c0_119] : memref<1x2x2x9x9x64xf32, #tpu.memory_space<vmem>>, vector<1x1x1x8x8x64xf32>
    %87 = vector.shape_cast %86 : vector<1x1x1x8x8x64xf32> to vector<1x8x8x64xf32>
    %88 = vector.shape_cast %87 : vector<1x8x8x64xf32> to vector<64x64xf32>
    %89 = arith.truncf %88 : vector<64x64xf32> to vector<64x64xbf16>
    %cst_120 = arith.constant dense<0.000000e+00> : vector<64x128xf32>
    %90 = tpu.matmul %89, %58, %cst_120 {dimension_numbers = #tpu.dot_dimension_numbers<[1], [0], [0], [1], [0, 0, 1, 1], [], []>} : vector<64x64xbf16>, vector<64x128xbf16>, vector<64x128xf32> -> vector<64x128xf32>
    %91 = arith.addf %85, %90 : vector<64x128xf32>
    %c0_121 = arith.constant 0 : index
    %c1_122 = arith.constant 1 : index
    %c1_123 = arith.constant 1 : index
    %c0_124 = arith.constant 0 : index
    %c0_125 = arith.constant 0 : index
    %c0_126 = arith.constant 0 : index
    %92 = vector.load %arg7[%c0_121, %c1_122, %c1_123, %c0_124, %c0_125, %c0_126] : memref<1x2x2x9x9x64xf32, #tpu.memory_space<vmem>>, vector<1x1x1x8x8x64xf32>
    %93 = vector.shape_cast %92 : vector<1x1x1x8x8x64xf32> to vector<1x8x8x64xf32>
    %94 = vector.shape_cast %93 : vector<1x8x8x64xf32> to vector<64x64xf32>
    %95 = arith.truncf %94 : vector<64x64xf32> to vector<64x64xbf16>
    %cst_127 = arith.constant dense<0.000000e+00> : vector<64x128xf32>
    %96 = tpu.matmul %95, %60, %cst_127 {dimension_numbers = #tpu.dot_dimension_numbers<[1], [0], [0], [1], [0, 0, 1, 1], [], []>} : vector<64x64xbf16>, vector<64x128xbf16>, vector<64x128xf32> -> vector<64x128xf32>
    %97 = arith.addf %91, %96 : vector<64x128xf32>
    %c0_128 = arith.constant 0 : index
    %c1_129 = arith.constant 1 : index
    %c0_130 = arith.constant 0 : index
    %c0_131 = arith.constant 0 : index
    %c1_132 = arith.constant 1 : index
    %c0_133 = arith.constant 0 : index
    %98 = vector.load %arg7[%c0_128, %c1_129, %c0_130, %c0_131, %c1_132, %c0_133] : memref<1x2x2x9x9x64xf32, #tpu.memory_space<vmem>>, vector<1x1x1x8x8x64xf32>
    %99 = vector.shape_cast %98 : vector<1x1x1x8x8x64xf32> to vector<1x8x8x64xf32>
    %100 = vector.shape_cast %99 : vector<1x8x8x64xf32> to vector<64x64xf32>
    %101 = arith.truncf %100 : vector<64x64xf32> to vector<64x64xbf16>
    %cst_134 = arith.constant dense<0.000000e+00> : vector<64x128xf32>
    %102 = tpu.matmul %101, %62, %cst_134 {dimension_numbers = #tpu.dot_dimension_numbers<[1], [0], [0], [1], [0, 0, 1, 1], [], []>} : vector<64x64xbf16>, vector<64x128xbf16>, vector<64x128xf32> -> vector<64x128xf32>
    %103 = arith.addf %97, %102 : vector<64x128xf32>
    %c0_135 = arith.constant 0 : index
    %c0_136 = arith.constant 0 : index
    %c0_137 = arith.constant 0 : index
    %c1_138 = arith.constant 1 : index
    %c0_139 = arith.constant 0 : index
    %c0_140 = arith.constant 0 : index
    %104 = vector.load %arg7[%c0_135, %c0_136, %c0_137, %c1_138, %c0_139, %c0_140] : memref<1x2x2x9x9x64xf32, #tpu.memory_space<vmem>>, vector<1x1x1x8x8x64xf32>
    %105 = vector.shape_cast %104 : vector<1x1x1x8x8x64xf32> to vector<1x8x8x64xf32>
    %106 = vector.shape_cast %105 : vector<1x8x8x64xf32> to vector<64x64xf32>
    %107 = arith.truncf %106 : vector<64x64xf32> to vector<64x64xbf16>
    %cst_141 = arith.constant dense<0.000000e+00> : vector<64x128xf32>
    %108 = tpu.matmul %107, %64, %cst_141 {dimension_numbers = #tpu.dot_dimension_numbers<[1], [0], [0], [1], [0, 0, 1, 1], [], []>} : vector<64x64xbf16>, vector<64x128xbf16>, vector<64x128xf32> -> vector<64x128xf32>
    %109 = arith.addf %103, %108 : vector<64x128xf32>
    %c0_142 = arith.constant 0 : index
    %c0_143 = arith.constant 0 : index
    %c1_144 = arith.constant 1 : index
    %c1_145 = arith.constant 1 : index
    %c0_146 = arith.constant 0 : index
    %c0_147 = arith.constant 0 : index
    %110 = vector.load %arg7[%c0_142, %c0_143, %c1_144, %c1_145, %c0_146, %c0_147] : memref<1x2x2x9x9x64xf32, #tpu.memory_space<vmem>>, vector<1x1x1x8x8x64xf32>
    %111 = vector.shape_cast %110 : vector<1x1x1x8x8x64xf32> to vector<1x8x8x64xf32>
    %112 = vector.shape_cast %111 : vector<1x8x8x64xf32> to vector<64x64xf32>
    %113 = arith.truncf %112 : vector<64x64xf32> to vector<64x64xbf16>
    %cst_148 = arith.constant dense<0.000000e+00> : vector<64x128xf32>
    %114 = tpu.matmul %113, %66, %cst_148 {dimension_numbers = #tpu.dot_dimension_numbers<[1], [0], [0], [1], [0, 0, 1, 1], [], []>} : vector<64x64xbf16>, vector<64x128xbf16>, vector<64x128xf32> -> vector<64x128xf32>
    %115 = arith.addf %109, %114 : vector<64x128xf32>
    %c0_149 = arith.constant 0 : index
    %c0_150 = arith.constant 0 : index
    %c0_151 = arith.constant 0 : index
    %c1_152 = arith.constant 1 : index
    %c1_153 = arith.constant 1 : index
    %c0_154 = arith.constant 0 : index
    %116 = vector.load %arg7[%c0_149, %c0_150, %c0_151, %c1_152, %c1_153, %c0_154] : memref<1x2x2x9x9x64xf32, #tpu.memory_space<vmem>>, vector<1x1x1x8x8x64xf32>
    %117 = vector.shape_cast %116 : vector<1x1x1x8x8x64xf32> to vector<1x8x8x64xf32>
    %118 = vector.shape_cast %117 : vector<1x8x8x64xf32> to vector<64x64xf32>
    %119 = arith.truncf %118 : vector<64x64xf32> to vector<64x64xbf16>
    %cst_155 = arith.constant dense<0.000000e+00> : vector<64x128xf32>
    %120 = tpu.matmul %119, %68, %cst_155 {dimension_numbers = #tpu.dot_dimension_numbers<[1], [0], [0], [1], [0, 0, 1, 1], [], []>} : vector<64x64xbf16>, vector<64x128xbf16>, vector<64x128xf32> -> vector<64x128xf32>
    %121 = arith.addf %115, %120 : vector<64x128xf32>
    %c0_156 = arith.constant 0 : index
    %c0_157 = arith.constant 0 : index
    %c1_158 = arith.constant 1 : index
    %c0_159 = arith.constant 0 : index
    %c0_160 = arith.constant 0 : index
    %c0_161 = arith.constant 0 : index
    %122 = vector.load %arg7[%c0_156, %c0_157, %c1_158, %c0_159, %c0_160, %c0_161] : memref<1x2x2x9x9x64xf32, #tpu.memory_space<vmem>>, vector<1x1x1x8x8x64xf32>
    %123 = vector.shape_cast %122 : vector<1x1x1x8x8x64xf32> to vector<1x8x8x64xf32>
    %124 = vector.shape_cast %123 : vector<1x8x8x64xf32> to vector<64x64xf32>
    %125 = arith.truncf %124 : vector<64x64xf32> to vector<64x64xbf16>
    %cst_162 = arith.constant dense<0.000000e+00> : vector<64x128xf32>
    %126 = tpu.matmul %125, %52, %cst_162 {dimension_numbers = #tpu.dot_dimension_numbers<[1], [0], [0], [1], [0, 0, 1, 1], [], []>} : vector<64x64xbf16>, vector<64x128xbf16>, vector<64x128xf32> -> vector<64x128xf32>
    %c0_163 = arith.constant 0 : index
    %c0_164 = arith.constant 0 : index
    %c0_165 = arith.constant 0 : index
    %c0_166 = arith.constant 0 : index
    %c1_167 = arith.constant 1 : index
    %c0_168 = arith.constant 0 : index
    %127 = vector.load %arg7[%c0_163, %c0_164, %c0_165, %c0_166, %c1_167, %c0_168] : memref<1x2x2x9x9x64xf32, #tpu.memory_space<vmem>>, vector<1x1x1x8x8x64xf32>
    %128 = vector.shape_cast %127 : vector<1x1x1x8x8x64xf32> to vector<1x8x8x64xf32>
    %129 = vector.shape_cast %128 : vector<1x8x8x64xf32> to vector<64x64xf32>
    %130 = arith.truncf %129 : vector<64x64xf32> to vector<64x64xbf16>
    %cst_169 = arith.constant dense<0.000000e+00> : vector<64x128xf32>
    %131 = tpu.matmul %130, %54, %cst_169 {dimension_numbers = #tpu.dot_dimension_numbers<[1], [0], [0], [1], [0, 0, 1, 1], [], []>} : vector<64x64xbf16>, vector<64x128xbf16>, vector<64x128xf32> -> vector<64x128xf32>
    %132 = arith.addf %126, %131 : vector<64x128xf32>
    %c0_170 = arith.constant 0 : index
    %c0_171 = arith.constant 0 : index
    %c1_172 = arith.constant 1 : index
    %c0_173 = arith.constant 0 : index
    %c1_174 = arith.constant 1 : index
    %c0_175 = arith.constant 0 : index
    %133 = vector.load %arg7[%c0_170, %c0_171, %c1_172, %c0_173, %c1_174, %c0_175] : memref<1x2x2x9x9x64xf32, #tpu.memory_space<vmem>>, vector<1x1x1x8x8x64xf32>
    %134 = vector.shape_cast %133 : vector<1x1x1x8x8x64xf32> to vector<1x8x8x64xf32>
    %135 = vector.shape_cast %134 : vector<1x8x8x64xf32> to vector<64x64xf32>
    %136 = arith.truncf %135 : vector<64x64xf32> to vector<64x64xbf16>
    %cst_176 = arith.constant dense<0.000000e+00> : vector<64x128xf32>
    %137 = tpu.matmul %136, %56, %cst_176 {dimension_numbers = #tpu.dot_dimension_numbers<[1], [0], [0], [1], [0, 0, 1, 1], [], []>} : vector<64x64xbf16>, vector<64x128xbf16>, vector<64x128xf32> -> vector<64x128xf32>
    %138 = arith.addf %132, %137 : vector<64x128xf32>
    %c0_177 = arith.constant 0 : index
    %c1_178 = arith.constant 1 : index
    %c1_179 = arith.constant 1 : index
    %c0_180 = arith.constant 0 : index
    %c0_181 = arith.constant 0 : index
    %c0_182 = arith.constant 0 : index
    %139 = vector.load %arg7[%c0_177, %c1_178, %c1_179, %c0_180, %c0_181, %c0_182] : memref<1x2x2x9x9x64xf32, #tpu.memory_space<vmem>>, vector<1x1x1x8x8x64xf32>
    %140 = vector.shape_cast %139 : vector<1x1x1x8x8x64xf32> to vector<1x8x8x64xf32>
    %141 = vector.shape_cast %140 : vector<1x8x8x64xf32> to vector<64x64xf32>
    %142 = arith.truncf %141 : vector<64x64xf32> to vector<64x64xbf16>
    %cst_183 = arith.constant dense<0.000000e+00> : vector<64x128xf32>
    %143 = tpu.matmul %142, %58, %cst_183 {dimension_numbers = #tpu.dot_dimension_numbers<[1], [0], [0], [1], [0, 0, 1, 1], [], []>} : vector<64x64xbf16>, vector<64x128xbf16>, vector<64x128xf32> -> vector<64x128xf32>
    %144 = arith.addf %138, %143 : vector<64x128xf32>
    %c0_184 = arith.constant 0 : index
    %c1_185 = arith.constant 1 : index
    %c0_186 = arith.constant 0 : index
    %c0_187 = arith.constant 0 : index
    %c1_188 = arith.constant 1 : index
    %c0_189 = arith.constant 0 : index
    %145 = vector.load %arg7[%c0_184, %c1_185, %c0_186, %c0_187, %c1_188, %c0_189] : memref<1x2x2x9x9x64xf32, #tpu.memory_space<vmem>>, vector<1x1x1x8x8x64xf32>
    %146 = vector.shape_cast %145 : vector<1x1x1x8x8x64xf32> to vector<1x8x8x64xf32>
    %147 = vector.shape_cast %146 : vector<1x8x8x64xf32> to vector<64x64xf32>
    %148 = arith.truncf %147 : vector<64x64xf32> to vector<64x64xbf16>
    %cst_190 = arith.constant dense<0.000000e+00> : vector<64x128xf32>
    %149 = tpu.matmul %148, %60, %cst_190 {dimension_numbers = #tpu.dot_dimension_numbers<[1], [0], [0], [1], [0, 0, 1, 1], [], []>} : vector<64x64xbf16>, vector<64x128xbf16>, vector<64x128xf32> -> vector<64x128xf32>
    %150 = arith.addf %144, %149 : vector<64x128xf32>
    %c0_191 = arith.constant 0 : index
    %c1_192 = arith.constant 1 : index
    %c1_193 = arith.constant 1 : index
    %c0_194 = arith.constant 0 : index
    %c1_195 = arith.constant 1 : index
    %c0_196 = arith.constant 0 : index
    %151 = vector.load %arg7[%c0_191, %c1_192, %c1_193, %c0_194, %c1_195, %c0_196] : memref<1x2x2x9x9x64xf32, #tpu.memory_space<vmem>>, vector<1x1x1x8x8x64xf32>
    %152 = vector.shape_cast %151 : vector<1x1x1x8x8x64xf32> to vector<1x8x8x64xf32>
    %153 = vector.shape_cast %152 : vector<1x8x8x64xf32> to vector<64x64xf32>
    %154 = arith.truncf %153 : vector<64x64xf32> to vector<64x64xbf16>
    %cst_197 = arith.constant dense<0.000000e+00> : vector<64x128xf32>
    %155 = tpu.matmul %154, %62, %cst_197 {dimension_numbers = #tpu.dot_dimension_numbers<[1], [0], [0], [1], [0, 0, 1, 1], [], []>} : vector<64x64xbf16>, vector<64x128xbf16>, vector<64x128xf32> -> vector<64x128xf32>
    %156 = arith.addf %150, %155 : vector<64x128xf32>
    %c0_198 = arith.constant 0 : index
    %c0_199 = arith.constant 0 : index
    %c1_200 = arith.constant 1 : index
    %c1_201 = arith.constant 1 : index
    %c0_202 = arith.constant 0 : index
    %c0_203 = arith.constant 0 : index
    %157 = vector.load %arg7[%c0_198, %c0_199, %c1_200, %c1_201, %c0_202, %c0_203] : memref<1x2x2x9x9x64xf32, #tpu.memory_space<vmem>>, vector<1x1x1x8x8x64xf32>
    %158 = vector.shape_cast %157 : vector<1x1x1x8x8x64xf32> to vector<1x8x8x64xf32>
    %159 = vector.shape_cast %158 : vector<1x8x8x64xf32> to vector<64x64xf32>
    %160 = arith.truncf %159 : vector<64x64xf32> to vector<64x64xbf16>
    %cst_204 = arith.constant dense<0.000000e+00> : vector<64x128xf32>
    %161 = tpu.matmul %160, %64, %cst_204 {dimension_numbers = #tpu.dot_dimension_numbers<[1], [0], [0], [1], [0, 0, 1, 1], [], []>} : vector<64x64xbf16>, vector<64x128xbf16>, vector<64x128xf32> -> vector<64x128xf32>
    %162 = arith.addf %156, %161 : vector<64x128xf32>
    %c0_205 = arith.constant 0 : index
    %c0_206 = arith.constant 0 : index
    %c0_207 = arith.constant 0 : index
    %c1_208 = arith.constant 1 : index
    %c1_209 = arith.constant 1 : index
    %c0_210 = arith.constant 0 : index
    %163 = vector.load %arg7[%c0_205, %c0_206, %c0_207, %c1_208, %c1_209, %c0_210] : memref<1x2x2x9x9x64xf32, #tpu.memory_space<vmem>>, vector<1x1x1x8x8x64xf32>
    %164 = vector.shape_cast %163 : vector<1x1x1x8x8x64xf32> to vector<1x8x8x64xf32>
    %165 = vector.shape_cast %164 : vector<1x8x8x64xf32> to vector<64x64xf32>
    %166 = arith.truncf %165 : vector<64x64xf32> to vector<64x64xbf16>
    %cst_211 = arith.constant dense<0.000000e+00> : vector<64x128xf32>
    %167 = tpu.matmul %166, %66, %cst_211 {dimension_numbers = #tpu.dot_dimension_numbers<[1], [0], [0], [1], [0, 0, 1, 1], [], []>} : vector<64x64xbf16>, vector<64x128xbf16>, vector<64x128xf32> -> vector<64x128xf32>
    %168 = arith.addf %162, %167 : vector<64x128xf32>
    %c0_212 = arith.constant 0 : index
    %c0_213 = arith.constant 0 : index
    %c1_214 = arith.constant 1 : index
    %c1_215 = arith.constant 1 : index
    %c1_216 = arith.constant 1 : index
    %c0_217 = arith.constant 0 : index
    %169 = vector.load %arg7[%c0_212, %c0_213, %c1_214, %c1_215, %c1_216, %c0_217] : memref<1x2x2x9x9x64xf32, #tpu.memory_space<vmem>>, vector<1x1x1x8x8x64xf32>
    %170 = vector.shape_cast %169 : vector<1x1x1x8x8x64xf32> to vector<1x8x8x64xf32>
    %171 = vector.shape_cast %170 : vector<1x8x8x64xf32> to vector<64x64xf32>
    %172 = arith.truncf %171 : vector<64x64xf32> to vector<64x64xbf16>
    %cst_218 = arith.constant dense<0.000000e+00> : vector<64x128xf32>
    %173 = tpu.matmul %172, %68, %cst_218 {dimension_numbers = #tpu.dot_dimension_numbers<[1], [0], [0], [1], [0, 0, 1, 1], [], []>} : vector<64x64xbf16>, vector<64x128xbf16>, vector<64x128xf32> -> vector<64x128xf32>
    %174 = arith.addf %168, %173 : vector<64x128xf32>
    %175 = arith.maximumf %121, %174 : vector<64x128xf32>
    %c0_219 = arith.constant 0 : index
    %c1_220 = arith.constant 1 : index
    %c0_221 = arith.constant 0 : index
    %c0_222 = arith.constant 0 : index
    %c0_223 = arith.constant 0 : index
    %c0_224 = arith.constant 0 : index
    %176 = vector.load %arg7[%c0_219, %c1_220, %c0_221, %c0_222, %c0_223, %c0_224] : memref<1x2x2x9x9x64xf32, #tpu.memory_space<vmem>>, vector<1x1x1x8x8x64xf32>
    %177 = vector.shape_cast %176 : vector<1x1x1x8x8x64xf32> to vector<1x8x8x64xf32>
    %178 = vector.shape_cast %177 : vector<1x8x8x64xf32> to vector<64x64xf32>
    %179 = arith.truncf %178 : vector<64x64xf32> to vector<64x64xbf16>
    %cst_225 = arith.constant dense<0.000000e+00> : vector<64x128xf32>
    %180 = tpu.matmul %179, %52, %cst_225 {dimension_numbers = #tpu.dot_dimension_numbers<[1], [0], [0], [1], [0, 0, 1, 1], [], []>} : vector<64x64xbf16>, vector<64x128xbf16>, vector<64x128xf32> -> vector<64x128xf32>
    %c0_226 = arith.constant 0 : index
    %c1_227 = arith.constant 1 : index
    %c1_228 = arith.constant 1 : index
    %c0_229 = arith.constant 0 : index
    %c0_230 = arith.constant 0 : index
    %c0_231 = arith.constant 0 : index
    %181 = vector.load %arg7[%c0_226, %c1_227, %c1_228, %c0_229, %c0_230, %c0_231] : memref<1x2x2x9x9x64xf32, #tpu.memory_space<vmem>>, vector<1x1x1x8x8x64xf32>
    %182 = vector.shape_cast %181 : vector<1x1x1x8x8x64xf32> to vector<1x8x8x64xf32>
    %183 = vector.shape_cast %182 : vector<1x8x8x64xf32> to vector<64x64xf32>
    %184 = arith.truncf %183 : vector<64x64xf32> to vector<64x64xbf16>
    %cst_232 = arith.constant dense<0.000000e+00> : vector<64x128xf32>
    %185 = tpu.matmul %184, %54, %cst_232 {dimension_numbers = #tpu.dot_dimension_numbers<[1], [0], [0], [1], [0, 0, 1, 1], [], []>} : vector<64x64xbf16>, vector<64x128xbf16>, vector<64x128xf32> -> vector<64x128xf32>
    %186 = arith.addf %180, %185 : vector<64x128xf32>
    %c0_233 = arith.constant 0 : index
    %c1_234 = arith.constant 1 : index
    %c0_235 = arith.constant 0 : index
    %c0_236 = arith.constant 0 : index
    %c1_237 = arith.constant 1 : index
    %c0_238 = arith.constant 0 : index
    %187 = vector.load %arg7[%c0_233, %c1_234, %c0_235, %c0_236, %c1_237, %c0_238] : memref<1x2x2x9x9x64xf32, #tpu.memory_space<vmem>>, vector<1x1x1x8x8x64xf32>
    %188 = vector.shape_cast %187 : vector<1x1x1x8x8x64xf32> to vector<1x8x8x64xf32>
    %189 = vector.shape_cast %188 : vector<1x8x8x64xf32> to vector<64x64xf32>
    %190 = arith.truncf %189 : vector<64x64xf32> to vector<64x64xbf16>
    %cst_239 = arith.constant dense<0.000000e+00> : vector<64x128xf32>
    %191 = tpu.matmul %190, %56, %cst_239 {dimension_numbers = #tpu.dot_dimension_numbers<[1], [0], [0], [1], [0, 0, 1, 1], [], []>} : vector<64x64xbf16>, vector<64x128xbf16>, vector<64x128xf32> -> vector<64x128xf32>
    %192 = arith.addf %186, %191 : vector<64x128xf32>
    %c0_240 = arith.constant 0 : index
    %c0_241 = arith.constant 0 : index
    %c0_242 = arith.constant 0 : index
    %c1_243 = arith.constant 1 : index
    %c0_244 = arith.constant 0 : index
    %c0_245 = arith.constant 0 : index
    %193 = vector.load %arg7[%c0_240, %c0_241, %c0_242, %c1_243, %c0_244, %c0_245] : memref<1x2x2x9x9x64xf32, #tpu.memory_space<vmem>>, vector<1x1x1x8x8x64xf32>
    %194 = vector.shape_cast %193 : vector<1x1x1x8x8x64xf32> to vector<1x8x8x64xf32>
    %195 = vector.shape_cast %194 : vector<1x8x8x64xf32> to vector<64x64xf32>
    %196 = arith.truncf %195 : vector<64x64xf32> to vector<64x64xbf16>
    %cst_246 = arith.constant dense<0.000000e+00> : vector<64x128xf32>
    %197 = tpu.matmul %196, %58, %cst_246 {dimension_numbers = #tpu.dot_dimension_numbers<[1], [0], [0], [1], [0, 0, 1, 1], [], []>} : vector<64x64xbf16>, vector<64x128xbf16>, vector<64x128xf32> -> vector<64x128xf32>
    %198 = arith.addf %192, %197 : vector<64x128xf32>
    %c0_247 = arith.constant 0 : index
    %c0_248 = arith.constant 0 : index
    %c1_249 = arith.constant 1 : index
    %c1_250 = arith.constant 1 : index
    %c0_251 = arith.constant 0 : index
    %c0_252 = arith.constant 0 : index
    %199 = vector.load %arg7[%c0_247, %c0_248, %c1_249, %c1_250, %c0_251, %c0_252] : memref<1x2x2x9x9x64xf32, #tpu.memory_space<vmem>>, vector<1x1x1x8x8x64xf32>
    %200 = vector.shape_cast %199 : vector<1x1x1x8x8x64xf32> to vector<1x8x8x64xf32>
    %201 = vector.shape_cast %200 : vector<1x8x8x64xf32> to vector<64x64xf32>
    %202 = arith.truncf %201 : vector<64x64xf32> to vector<64x64xbf16>
    %cst_253 = arith.constant dense<0.000000e+00> : vector<64x128xf32>
    %203 = tpu.matmul %202, %60, %cst_253 {dimension_numbers = #tpu.dot_dimension_numbers<[1], [0], [0], [1], [0, 0, 1, 1], [], []>} : vector<64x64xbf16>, vector<64x128xbf16>, vector<64x128xf32> -> vector<64x128xf32>
    %204 = arith.addf %198, %203 : vector<64x128xf32>
    %c0_254 = arith.constant 0 : index
    %c0_255 = arith.constant 0 : index
    %c0_256 = arith.constant 0 : index
    %c1_257 = arith.constant 1 : index
    %c1_258 = arith.constant 1 : index
    %c0_259 = arith.constant 0 : index
    %205 = vector.load %arg7[%c0_254, %c0_255, %c0_256, %c1_257, %c1_258, %c0_259] : memref<1x2x2x9x9x64xf32, #tpu.memory_space<vmem>>, vector<1x1x1x8x8x64xf32>
    %206 = vector.shape_cast %205 : vector<1x1x1x8x8x64xf32> to vector<1x8x8x64xf32>
    %207 = vector.shape_cast %206 : vector<1x8x8x64xf32> to vector<64x64xf32>
    %208 = arith.truncf %207 : vector<64x64xf32> to vector<64x64xbf16>
    %cst_260 = arith.constant dense<0.000000e+00> : vector<64x128xf32>
    %209 = tpu.matmul %208, %62, %cst_260 {dimension_numbers = #tpu.dot_dimension_numbers<[1], [0], [0], [1], [0, 0, 1, 1], [], []>} : vector<64x64xbf16>, vector<64x128xbf16>, vector<64x128xf32> -> vector<64x128xf32>
    %210 = arith.addf %204, %209 : vector<64x128xf32>
    %c0_261 = arith.constant 0 : index
    %c1_262 = arith.constant 1 : index
    %c0_263 = arith.constant 0 : index
    %c1_264 = arith.constant 1 : index
    %c0_265 = arith.constant 0 : index
    %c0_266 = arith.constant 0 : index
    %211 = vector.load %arg7[%c0_261, %c1_262, %c0_263, %c1_264, %c0_265, %c0_266] : memref<1x2x2x9x9x64xf32, #tpu.memory_space<vmem>>, vector<1x1x1x8x8x64xf32>
    %212 = vector.shape_cast %211 : vector<1x1x1x8x8x64xf32> to vector<1x8x8x64xf32>
    %213 = vector.shape_cast %212 : vector<1x8x8x64xf32> to vector<64x64xf32>
    %214 = arith.truncf %213 : vector<64x64xf32> to vector<64x64xbf16>
    %cst_267 = arith.constant dense<0.000000e+00> : vector<64x128xf32>
    %215 = tpu.matmul %214, %64, %cst_267 {dimension_numbers = #tpu.dot_dimension_numbers<[1], [0], [0], [1], [0, 0, 1, 1], [], []>} : vector<64x64xbf16>, vector<64x128xbf16>, vector<64x128xf32> -> vector<64x128xf32>
    %216 = arith.addf %210, %215 : vector<64x128xf32>
    %c0_268 = arith.constant 0 : index
    %c1_269 = arith.constant 1 : index
    %c1_270 = arith.constant 1 : index
    %c1_271 = arith.constant 1 : index
    %c0_272 = arith.constant 0 : index
    %c0_273 = arith.constant 0 : index
    %217 = vector.load %arg7[%c0_268, %c1_269, %c1_270, %c1_271, %c0_272, %c0_273] : memref<1x2x2x9x9x64xf32, #tpu.memory_space<vmem>>, vector<1x1x1x8x8x64xf32>
    %218 = vector.shape_cast %217 : vector<1x1x1x8x8x64xf32> to vector<1x8x8x64xf32>
    %219 = vector.shape_cast %218 : vector<1x8x8x64xf32> to vector<64x64xf32>
    %220 = arith.truncf %219 : vector<64x64xf32> to vector<64x64xbf16>
    %cst_274 = arith.constant dense<0.000000e+00> : vector<64x128xf32>
    %221 = tpu.matmul %220, %66, %cst_274 {dimension_numbers = #tpu.dot_dimension_numbers<[1], [0], [0], [1], [0, 0, 1, 1], [], []>} : vector<64x64xbf16>, vector<64x128xbf16>, vector<64x128xf32> -> vector<64x128xf32>
    %222 = arith.addf %216, %221 : vector<64x128xf32>
    %c0_275 = arith.constant 0 : index
    %c1_276 = arith.constant 1 : index
    %c0_277 = arith.constant 0 : index
    %c1_278 = arith.constant 1 : index
    %c1_279 = arith.constant 1 : index
    %c0_280 = arith.constant 0 : index
    %223 = vector.load %arg7[%c0_275, %c1_276, %c0_277, %c1_278, %c1_279, %c0_280] : memref<1x2x2x9x9x64xf32, #tpu.memory_space<vmem>>, vector<1x1x1x8x8x64xf32>
    %224 = vector.shape_cast %223 : vector<1x1x1x8x8x64xf32> to vector<1x8x8x64xf32>
    %225 = vector.shape_cast %224 : vector<1x8x8x64xf32> to vector<64x64xf32>
    %226 = arith.truncf %225 : vector<64x64xf32> to vector<64x64xbf16>
    %cst_281 = arith.constant dense<0.000000e+00> : vector<64x128xf32>
    %227 = tpu.matmul %226, %68, %cst_281 {dimension_numbers = #tpu.dot_dimension_numbers<[1], [0], [0], [1], [0, 0, 1, 1], [], []>} : vector<64x64xbf16>, vector<64x128xbf16>, vector<64x128xf32> -> vector<64x128xf32>
    %228 = arith.addf %222, %227 : vector<64x128xf32>
    %229 = arith.maximumf %175, %228 : vector<64x128xf32>
    %c0_282 = arith.constant 0 : index
    %c1_283 = arith.constant 1 : index
    %c1_284 = arith.constant 1 : index
    %c0_285 = arith.constant 0 : index
    %c0_286 = arith.constant 0 : index
    %c0_287 = arith.constant 0 : index
    %230 = vector.load %arg7[%c0_282, %c1_283, %c1_284, %c0_285, %c0_286, %c0_287] : memref<1x2x2x9x9x64xf32, #tpu.memory_space<vmem>>, vector<1x1x1x8x8x64xf32>
    %231 = vector.shape_cast %230 : vector<1x1x1x8x8x64xf32> to vector<1x8x8x64xf32>
    %232 = vector.shape_cast %231 : vector<1x8x8x64xf32> to vector<64x64xf32>
    %233 = arith.truncf %232 : vector<64x64xf32> to vector<64x64xbf16>
    %cst_288 = arith.constant dense<0.000000e+00> : vector<64x128xf32>
    %234 = tpu.matmul %233, %52, %cst_288 {dimension_numbers = #tpu.dot_dimension_numbers<[1], [0], [0], [1], [0, 0, 1, 1], [], []>} : vector<64x64xbf16>, vector<64x128xbf16>, vector<64x128xf32> -> vector<64x128xf32>
    %c0_289 = arith.constant 0 : index
    %c1_290 = arith.constant 1 : index
    %c0_291 = arith.constant 0 : index
    %c0_292 = arith.constant 0 : index
    %c1_293 = arith.constant 1 : index
    %c0_294 = arith.constant 0 : index
    %235 = vector.load %arg7[%c0_289, %c1_290, %c0_291, %c0_292, %c1_293, %c0_294] : memref<1x2x2x9x9x64xf32, #tpu.memory_space<vmem>>, vector<1x1x1x8x8x64xf32>
    %236 = vector.shape_cast %235 : vector<1x1x1x8x8x64xf32> to vector<1x8x8x64xf32>
    %237 = vector.shape_cast %236 : vector<1x8x8x64xf32> to vector<64x64xf32>
    %238 = arith.truncf %237 : vector<64x64xf32> to vector<64x64xbf16>
    %cst_295 = arith.constant dense<0.000000e+00> : vector<64x128xf32>
    %239 = tpu.matmul %238, %54, %cst_295 {dimension_numbers = #tpu.dot_dimension_numbers<[1], [0], [0], [1], [0, 0, 1, 1], [], []>} : vector<64x64xbf16>, vector<64x128xbf16>, vector<64x128xf32> -> vector<64x128xf32>
    %240 = arith.addf %234, %239 : vector<64x128xf32>
    %c0_296 = arith.constant 0 : index
    %c1_297 = arith.constant 1 : index
    %c1_298 = arith.constant 1 : index
    %c0_299 = arith.constant 0 : index
    %c1_300 = arith.constant 1 : index
    %c0_301 = arith.constant 0 : index
    %241 = vector.load %arg7[%c0_296, %c1_297, %c1_298, %c0_299, %c1_300, %c0_301] : memref<1x2x2x9x9x64xf32, #tpu.memory_space<vmem>>, vector<1x1x1x8x8x64xf32>
    %242 = vector.shape_cast %241 : vector<1x1x1x8x8x64xf32> to vector<1x8x8x64xf32>
    %243 = vector.shape_cast %242 : vector<1x8x8x64xf32> to vector<64x64xf32>
    %244 = arith.truncf %243 : vector<64x64xf32> to vector<64x64xbf16>
    %cst_302 = arith.constant dense<0.000000e+00> : vector<64x128xf32>
    %245 = tpu.matmul %244, %56, %cst_302 {dimension_numbers = #tpu.dot_dimension_numbers<[1], [0], [0], [1], [0, 0, 1, 1], [], []>} : vector<64x64xbf16>, vector<64x128xbf16>, vector<64x128xf32> -> vector<64x128xf32>
    %246 = arith.addf %240, %245 : vector<64x128xf32>
    %c0_303 = arith.constant 0 : index
    %c0_304 = arith.constant 0 : index
    %c1_305 = arith.constant 1 : index
    %c1_306 = arith.constant 1 : index
    %c0_307 = arith.constant 0 : index
    %c0_308 = arith.constant 0 : index
    %247 = vector.load %arg7[%c0_303, %c0_304, %c1_305, %c1_306, %c0_307, %c0_308] : memref<1x2x2x9x9x64xf32, #tpu.memory_space<vmem>>, vector<1x1x1x8x8x64xf32>
    %248 = vector.shape_cast %247 : vector<1x1x1x8x8x64xf32> to vector<1x8x8x64xf32>
    %249 = vector.shape_cast %248 : vector<1x8x8x64xf32> to vector<64x64xf32>
    %250 = arith.truncf %249 : vector<64x64xf32> to vector<64x64xbf16>
    %cst_309 = arith.constant dense<0.000000e+00> : vector<64x128xf32>
    %251 = tpu.matmul %250, %58, %cst_309 {dimension_numbers = #tpu.dot_dimension_numbers<[1], [0], [0], [1], [0, 0, 1, 1], [], []>} : vector<64x64xbf16>, vector<64x128xbf16>, vector<64x128xf32> -> vector<64x128xf32>
    %252 = arith.addf %246, %251 : vector<64x128xf32>
    %c0_310 = arith.constant 0 : index
    %c0_311 = arith.constant 0 : index
    %c0_312 = arith.constant 0 : index
    %c1_313 = arith.constant 1 : index
    %c1_314 = arith.constant 1 : index
    %c0_315 = arith.constant 0 : index
    %253 = vector.load %arg7[%c0_310, %c0_311, %c0_312, %c1_313, %c1_314, %c0_315] : memref<1x2x2x9x9x64xf32, #tpu.memory_space<vmem>>, vector<1x1x1x8x8x64xf32>
    %254 = vector.shape_cast %253 : vector<1x1x1x8x8x64xf32> to vector<1x8x8x64xf32>
    %255 = vector.shape_cast %254 : vector<1x8x8x64xf32> to vector<64x64xf32>
    %256 = arith.truncf %255 : vector<64x64xf32> to vector<64x64xbf16>
    %cst_316 = arith.constant dense<0.000000e+00> : vector<64x128xf32>
    %257 = tpu.matmul %256, %60, %cst_316 {dimension_numbers = #tpu.dot_dimension_numbers<[1], [0], [0], [1], [0, 0, 1, 1], [], []>} : vector<64x64xbf16>, vector<64x128xbf16>, vector<64x128xf32> -> vector<64x128xf32>
    %258 = arith.addf %252, %257 : vector<64x128xf32>
    %c0_317 = arith.constant 0 : index
    %c0_318 = arith.constant 0 : index
    %c1_319 = arith.constant 1 : index
    %c1_320 = arith.constant 1 : index
    %c1_321 = arith.constant 1 : index
    %c0_322 = arith.constant 0 : index
    %259 = vector.load %arg7[%c0_317, %c0_318, %c1_319, %c1_320, %c1_321, %c0_322] : memref<1x2x2x9x9x64xf32, #tpu.memory_space<vmem>>, vector<1x1x1x8x8x64xf32>
    %260 = vector.shape_cast %259 : vector<1x1x1x8x8x64xf32> to vector<1x8x8x64xf32>
    %261 = vector.shape_cast %260 : vector<1x8x8x64xf32> to vector<64x64xf32>
    %262 = arith.truncf %261 : vector<64x64xf32> to vector<64x64xbf16>
    %cst_323 = arith.constant dense<0.000000e+00> : vector<64x128xf32>
    %263 = tpu.matmul %262, %62, %cst_323 {dimension_numbers = #tpu.dot_dimension_numbers<[1], [0], [0], [1], [0, 0, 1, 1], [], []>} : vector<64x64xbf16>, vector<64x128xbf16>, vector<64x128xf32> -> vector<64x128xf32>
    %264 = arith.addf %258, %263 : vector<64x128xf32>
    %c0_324 = arith.constant 0 : index
    %c1_325 = arith.constant 1 : index
    %c1_326 = arith.constant 1 : index
    %c1_327 = arith.constant 1 : index
    %c0_328 = arith.constant 0 : index
    %c0_329 = arith.constant 0 : index
    %265 = vector.load %arg7[%c0_324, %c1_325, %c1_326, %c1_327, %c0_328, %c0_329] : memref<1x2x2x9x9x64xf32, #tpu.memory_space<vmem>>, vector<1x1x1x8x8x64xf32>
    %266 = vector.shape_cast %265 : vector<1x1x1x8x8x64xf32> to vector<1x8x8x64xf32>
    %267 = vector.shape_cast %266 : vector<1x8x8x64xf32> to vector<64x64xf32>
    %268 = arith.truncf %267 : vector<64x64xf32> to vector<64x64xbf16>
    %cst_330 = arith.constant dense<0.000000e+00> : vector<64x128xf32>
    %269 = tpu.matmul %268, %64, %cst_330 {dimension_numbers = #tpu.dot_dimension_numbers<[1], [0], [0], [1], [0, 0, 1, 1], [], []>} : vector<64x64xbf16>, vector<64x128xbf16>, vector<64x128xf32> -> vector<64x128xf32>
    %270 = arith.addf %264, %269 : vector<64x128xf32>
    %c0_331 = arith.constant 0 : index
    %c1_332 = arith.constant 1 : index
    %c0_333 = arith.constant 0 : index
    %c1_334 = arith.constant 1 : index
    %c1_335 = arith.constant 1 : index
    %c0_336 = arith.constant 0 : index
    %271 = vector.load %arg7[%c0_331, %c1_332, %c0_333, %c1_334, %c1_335, %c0_336] : memref<1x2x2x9x9x64xf32, #tpu.memory_space<vmem>>, vector<1x1x1x8x8x64xf32>
    %272 = vector.shape_cast %271 : vector<1x1x1x8x8x64xf32> to vector<1x8x8x64xf32>
    %273 = vector.shape_cast %272 : vector<1x8x8x64xf32> to vector<64x64xf32>
    %274 = arith.truncf %273 : vector<64x64xf32> to vector<64x64xbf16>
    %cst_337 = arith.constant dense<0.000000e+00> : vector<64x128xf32>
    %275 = tpu.matmul %274, %66, %cst_337 {dimension_numbers = #tpu.dot_dimension_numbers<[1], [0], [0], [1], [0, 0, 1, 1], [], []>} : vector<64x64xbf16>, vector<64x128xbf16>, vector<64x128xf32> -> vector<64x128xf32>
    %276 = arith.addf %270, %275 : vector<64x128xf32>
    %c0_338 = arith.constant 0 : index
    %c1_339 = arith.constant 1 : index
    %c1_340 = arith.constant 1 : index
    %c1_341 = arith.constant 1 : index
    %c1_342 = arith.constant 1 : index
    %c0_343 = arith.constant 0 : index
    %277 = vector.load %arg7[%c0_338, %c1_339, %c1_340, %c1_341, %c1_342, %c0_343] : memref<1x2x2x9x9x64xf32, #tpu.memory_space<vmem>>, vector<1x1x1x8x8x64xf32>
    %278 = vector.shape_cast %277 : vector<1x1x1x8x8x64xf32> to vector<1x8x8x64xf32>
    %279 = vector.shape_cast %278 : vector<1x8x8x64xf32> to vector<64x64xf32>
    %280 = arith.truncf %279 : vector<64x64xf32> to vector<64x64xbf16>
    %cst_344 = arith.constant dense<0.000000e+00> : vector<64x128xf32>
    %281 = tpu.matmul %280, %68, %cst_344 {dimension_numbers = #tpu.dot_dimension_numbers<[1], [0], [0], [1], [0, 0, 1, 1], [], []>} : vector<64x64xbf16>, vector<64x128xbf16>, vector<64x128xf32> -> vector<64x128xf32>
    %282 = arith.addf %276, %281 : vector<64x128xf32>
    %283 = arith.maximumf %229, %282 : vector<64x128xf32>
    %c0_345 = arith.constant 0 : index
    %c0_346 = arith.constant 0 : index
    %284 = vector.load %arg5[%c0_345, %c0_346] : memref<1x128xf32, #tpu.memory_space<vmem>>, vector<1x128xf32>
    %285 = vector.broadcast %284 : vector<1x128xf32> to vector<64x128xf32>
    %286 = arith.addf %283, %285 : vector<64x128xf32>
    %cst_347 = arith.constant 0.000000e+00 : f32
    %287 = vector.broadcast %cst_347 : f32 to vector<64x128xf32>
    %288 = arith.maximumf %286, %287 : vector<64x128xf32>
    %289 = vector.shape_cast %288 : vector<64x128xf32> to vector<1x64x128xf32>
    %290 = arith.truncf %289 : vector<1x64x128xf32> to vector<1x64x128xbf16>
    %c0_348 = arith.constant 0 : index
    %c0_349 = arith.constant 0 : index
    %c0_350 = arith.constant 0 : index
    %291 = vector.load %arg6[%c0_348, %c0_349, %c0_350] : memref<1x64x128xbf16, #tpu.memory_space<vmem>>, vector<1x64x128xbf16>
    tpu.vector_store %arg6[%c0_348, %c0_349, %c0_350], %290 {strides = array<i32>} : memref<1x64x128xbf16, #tpu.memory_space<vmem>>, vector<1x64x128xbf16>,
    return
  }
  func.func @transform_0(%arg0: i32) -> (i32, i32, i32, i32) {
    %c0_i32 = arith.constant 0 : i32
    %c0_i32_0 = arith.constant 0 : i32
    %c0_i32_1 = arith.constant 0 : i32
    %c0_i32_2 = arith.constant 0 : i32
    return %c0_i32, %arg0, %c0_i32_0, %c0_i32_1 : i32, i32, i32, i32
  }
  func.func @transform_1(%arg0: i32) -> (i32, i32) {
    %c0_i32 = arith.constant 0 : i32
    %c0_i32_0 = arith.constant 0 : i32
    %c0_i32_1 = arith.constant 0 : i32
    return %c0_i32, %c0_i32_0 : i32, i32
  }
  func.func @transform_2(%arg0: i32) -> (i32, i32) {
    %c0_i32 = arith.constant 0 : i32
    %c0_i32_0 = arith.constant 0 : i32
    %c0_i32_1 = arith.constant 0 : i32
    return %c0_i32, %c0_i32_0 : i32, i32
  }
  func.func @transform_3(%arg0: i32) -> (i32, i32, i32, i32) {
    %c0_i32 = arith.constant 0 : i32
    %c0_i32_0 = arith.constant 0 : i32
    %c0_i32_1 = arith.constant 0 : i32
    %c0_i32_2 = arith.constant 0 : i32
    %c0_i32_3 = arith.constant 0 : i32
    return %c0_i32, %c0_i32_0, %c0_i32_1, %c0_i32_2 : i32, i32, i32, i32
  }
  func.func @transform_4(%arg0: i32) -> (i32, i32) {
    %c0_i32 = arith.constant 0 : i32
    %c0_i32_0 = arith.constant 0 : i32
    %c0_i32_1 = arith.constant 0 : i32
    return %c0_i32, %c0_i32_0 : i32, i32
  }
  func.func @transform_5(%arg0: i32) -> (i32, i32, i32) {
    %c0_i32 = arith.constant 0 : i32
    %c0_i32_0 = arith.constant 0 : i32
    %c0_i32_1 = arith.constant 0 : i32
    return %arg0, %c0_i32, %c0_i32_0 : i32, i32, i32
  }
}

module attributes {stable_mosaic.version = 11 : i64} {
  func.func @_matmul_bias_kernel(%arg0: i32, %arg1: memref<2x8192xbf16, #tpu.memory_space<vmem>>, %arg2: memref<8192x128xbf16, #tpu.memory_space<vmem>>, %arg3: memref<1x128xf32, #tpu.memory_space<vmem>>, %arg4: memref<2x128xf32, #tpu.memory_space<vmem>>) attributes {dimension_semantics = [#tpu.dimension_semantics<parallel>], iteration_bounds = array<i64: 1>, scalar_prefetch = 0 : i64, scratch_operands = 0 : i64, tpu.core_type = #tpu.core_type<tc>, window_params = [{transform_indices = @transform_0, window_bounds = array<i64: 2, 8192>}, {pipeline_mode = #tpu.pipeline_mode<synchronous>, transform_indices = @transform_1, window_bounds = array<i64: 8192, 128>}, {pipeline_mode = #tpu.pipeline_mode<synchronous>, transform_indices = @transform_2, window_bounds = array<i64: 1, 128>}, {transform_indices = @transform_3, window_bounds = array<i64: 2, 128>}]} {
    %c0 = arith.constant 0 : index
    %c0_0 = arith.constant 0 : index
    %0 = vector.load %arg1[%c0, %c0_0] : memref<2x8192xbf16, #tpu.memory_space<vmem>>, vector<2x8192xbf16>
    %c0_1 = arith.constant 0 : index
    %c0_2 = arith.constant 0 : index
    %1 = vector.load %arg2[%c0_1, %c0_2] : memref<8192x128xbf16, #tpu.memory_space<vmem>>, vector<8192x128xbf16>
    %cst = arith.constant dense<0.000000e+00> : vector<2x128xf32>
    %2 = tpu.matmul %0, %1, %cst {dimension_numbers = #tpu.dot_dimension_numbers<[1], [0], [0], [1], [0, 0, 1, 1], [], []>} : vector<2x8192xbf16>, vector<8192x128xbf16>, vector<2x128xf32> -> vector<2x128xf32>
    %c0_3 = arith.constant 0 : index
    %c0_4 = arith.constant 0 : index
    %3 = vector.load %arg3[%c0_3, %c0_4] : memref<1x128xf32, #tpu.memory_space<vmem>>, vector<1x128xf32>
    %4 = vector.broadcast %3 : vector<1x128xf32> to vector<2x128xf32>
    %5 = arith.addf %2, %4 : vector<2x128xf32>
    %c0_5 = arith.constant 0 : index
    %c0_6 = arith.constant 0 : index
    %6 = vector.load %arg4[%c0_5, %c0_6] : memref<2x128xf32, #tpu.memory_space<vmem>>, vector<2x128xf32>
    tpu.vector_store %arg4[%c0_5, %c0_6], %5 {strides = array<i32>} : memref<2x128xf32, #tpu.memory_space<vmem>>, vector<2x128xf32>,
    return
  }
  func.func @transform_0(%arg0: i32) -> (i32, i32) {
    %c0_i32 = arith.constant 0 : i32
    %c0_i32_0 = arith.constant 0 : i32
    return %arg0, %c0_i32 : i32, i32
  }
  func.func @transform_1(%arg0: i32) -> (i32, i32) {
    %c0_i32 = arith.constant 0 : i32
    %c0_i32_0 = arith.constant 0 : i32
    %c0_i32_1 = arith.constant 0 : i32
    return %c0_i32, %c0_i32_0 : i32, i32
  }
  func.func @transform_2(%arg0: i32) -> (i32, i32) {
    %c0_i32 = arith.constant 0 : i32
    %c0_i32_0 = arith.constant 0 : i32
    %c0_i32_1 = arith.constant 0 : i32
    return %c0_i32, %c0_i32_0 : i32, i32
  }
  func.func @transform_3(%arg0: i32) -> (i32, i32) {
    %c0_i32 = arith.constant 0 : i32
    %c0_i32_0 = arith.constant 0 : i32
    return %arg0, %c0_i32 : i32, i32
  }
}

</mosaic_0001>

<llo_original>
// kernel: cifar10_forward.2
$region0: #{cifar10_forward.2}
  #allocation0 [shape = 'u32[]', space=smem, size = 0x4, offset = 0x4, fixed_abs, tag = 'smem constant byte address 0x4 - core index']
  #allocation1 [shape = 'u32[144,128]{1,0:T(1,128)}', space=vmem, size = 0x12000, scoped, tag = 'internal scratch']
  #allocation2 [shape = 'f32[1,2,2,9,9,64]{5,4,3,2,1,0:T(8,128)}', space=vmem, size = 0x48000, scoped, tag = 'scratch operand']
  %s0 = inlined_call_operand.vmem [shape: bf16[4,2,256,32], index: 0, kind: input, shape index: {}]
  %s1 = inlined_call_operand.vmem [shape: bf16[32,64], index: 1, kind: input, shape index: {}]
  %s2 = inlined_call_operand.vmem [shape: f32[1,64], index: 2, kind: input, shape index: {}]
  %s3 = inlined_call_operand.vmem [shape: bf16[3,3,64,128], index: 3, kind: input, shape index: {}]
  %s4 = inlined_call_operand.vmem [shape: f32[1,128], index: 4, kind: input, shape index: {}]
  %s5 = inlined_call_operand.vmem [shape: bf16[2,64,128], index: 5, kind: output, shape index: {}]
  %s6 = sld [smem:[#allocation0]]
  $region94: #{cifar10_forward.2} parent=0
    _
  %s8 = ssub.s32 1, %s6
  %s9 = scalar_select 0, %s8, %s6
  $region1: #{cifar10_forward.2} parent=0
    #allocation3 [shape = 'u8[524288]{0}', space=vmem, size = 0x80000, scoped, tag = 'input window, operand 0']
    loop: start=0, step=1, limit=4
    $region2: #{cifar10_forward.2} parent=1 // loop_pre_header
      _
    $region3: #{cifar10_forward.2} parent=1 // loop_header
      %s11 = sphi 0, %s15
      %p12 = scmp.ge.s32.totalorder %s11, 4
      %s21 = sphi 0, %s23
      %s24 = sphi 0, %s21
      %s25 = sphi 0, %s24
      %s41 = sphi 0, %s25
      %s45 = sphi 0, %s45
      %s47 = sphi 0, %s45
      %s48 = sphi 0, %s47
      %s62 = sphi 0, %s48
      %s66 = sphi 0, %s66
      %s68 = sphi 0, %s66
      %s69 = sphi 0, %s68
      %s83 = sphi 0, %s69
      %s87 = sphi 0, %s87
      %s89 = sphi 0, %s87
      %s90 = sphi 0, %s89
      %s104 = sphi 0, %s90
      %s108 = sphi 0, %s108
      %s110 = sphi 0, %s108
      %s111 = sphi 0, %s110
      %s125 = sphi 0, %s111
      %s131 = sphi 0, %s133
      %s134 = sphi 0, %s131
      %s135 = sphi 0, %s134
      %s151 = sphi 0, %s135
    $region4: #{cifar10_forward.2} parent=1 // loop_header_branch
      %14 = sbr.rel (%p12) target = $region8
    $region5: #{cifar10_forward.2} parent=1 // loop_body
      %s16 = ssub.s32 %s11, 1
      %s17 = ssub.s32 %s11, 2
      %s18 = sadd.s32 %s11, 1
      %s19 = ssub.s32 %s11, %s18
      %p20 = scmp.eq.s32.totalorder %s19, 0
      %s22 = sadd.s32 %s21, 1
      %s23 = scalar_select %p20, %s21, %s22
      %p26 = pneg %p20
      %p27 = scmp.eq.s32.totalorder %s11, 1
      %p28 = por %p26, %p27
      %p29 = scmp.ne.s32.totalorder %s21, %s24
      %p30 = scmp.eq.s32.totalorder %s11, 0
      %p31 = por %p29, %p30
      %p32 = scmp.ne.s32.totalorder %s21, %s24
      %p33 = scmp.eq.s32.totalorder %s16, 1
      %p34 = por %p32, %p33
      %p35 = scmp.ne.s32.totalorder %s24, %s25
      %p36 = scmp.eq.s32.totalorder %s16, 0
      %p37 = por %p35, %p36
      %p38 = scmp.ne.s32.totalorder %s24, %s25
      %p39 = scmp.eq.s32.totalorder %s17, 1
      %p40 = por %p38, %p39
      %p42 = scmp.ne.s32.totalorder %s25, %s41
      %p43 = scmp.eq.s32.totalorder %s17, 0
      %p44 = por %p42, %p43
      %s46 = sadd.s32 %s45, 1
      %p49 = scmp.eq.s32.totalorder %s11, 1
      %p50 = scmp.ne.s32.totalorder %s45, %s47
      %p51 = scmp.eq.s32.totalorder %s11, 0
      %p52 = por %p50, %p51
      %p53 = scmp.ne.s32.totalorder %s45, %s47
      %p54 = scmp.eq.s32.totalorder %s16, 1
      %p55 = por %p53, %p54
      %p56 = scmp.ne.s32.totalorder %s47, %s48
      %p57 = scmp.eq.s32.totalorder %s16, 0
      %p58 = por %p56, %p57
      %p59 = scmp.ne.s32.totalorder %s47, %s48
      %p60 = scmp.eq.s32.totalorder %s17, 1
      %p61 = por %p59, %p60
      %p63 = scmp.ne.s32.totalorder %s48, %s62
      %p64 = scmp.eq.s32.totalorder %s17, 0
      %p65 = por %p63, %p64
      %s67 = sadd.s32 %s66, 1
      %p70 = scmp.eq.s32.totalorder %s11, 1
      %p71 = scmp.ne.s32.totalorder %s66, %s68
      %p72 = scmp.eq.s32.totalorder %s11, 0
      %p73 = por %p71, %p72
      %p74 = scmp.ne.s32.totalorder %s66, %s68
      %p75 = scmp.eq.s32.totalorder %s16, 1
      %p76 = por %p74, %p75
      %p77 = scmp.ne.s32.totalorder %s68, %s69
      %p78 = scmp.eq.s32.totalorder %s16, 0
      %p79 = por %p77, %p78
      %p80 = scmp.ne.s32.totalorder %s68, %s69
      %p81 = scmp.eq.s32.totalorder %s17, 1
      %p82 = por %p80, %p81
      %p84 = scmp.ne.s32.totalorder %s69, %s83
      %p85 = scmp.eq.s32.totalorder %s17, 0
      %p86 = por %p84, %p85
      %s88 = sadd.s32 %s87, 1
      %p91 = scmp.eq.s32.totalorder %s11, 1
      %p92 = scmp.ne.s32.totalorder %s87, %s89
      %p93 = scmp.eq.s32.totalorder %s11, 0
      %p94 = por %p92, %p93
      %p95 = scmp.ne.s32.totalorder %s87, %s89
      %p96 = scmp.eq.s32.totalorder %s16, 1
      %p97 = por %p95, %p96
      %p98 = scmp.ne.s32.totalorder %s89, %s90
      %p99 = scmp.eq.s32.totalorder %s16, 0
      %p100 = por %p98, %p99
      %p101 = scmp.ne.s32.totalorder %s89, %s90
      %p102 = scmp.eq.s32.totalorder %s17, 1
      %p103 = por %p101, %p102
      %p105 = scmp.ne.s32.totalorder %s90, %s104
      %p106 = scmp.eq.s32.totalorder %s17, 0
      %p107 = por %p105, %p106
      %s109 = sadd.s32 %s108, 1
      %p112 = scmp.eq.s32.totalorder %s11, 1
      %p113 = scmp.ne.s32.totalorder %s108, %s110
      %p114 = scmp.eq.s32.totalorder %s11, 0
      %p115 = por %p113, %p114
      %p116 = scmp.ne.s32.totalorder %s108, %s110
      %p117 = scmp.eq.s32.totalorder %s16, 1
      %p118 = por %p116, %p117
      %p119 = scmp.ne.s32.totalorder %s110, %s111
      %p120 = scmp.eq.s32.totalorder %s16, 0
      %p121 = por %p119, %p120
      %p122 = scmp.ne.s32.totalorder %s110, %s111
      %p123 = scmp.eq.s32.totalorder %s17, 1
      %p124 = por %p122, %p123
      %p126 = scmp.ne.s32.totalorder %s111, %s125
      %p127 = scmp.eq.s32.totalorder %s17, 0
      %p128 = por %p126, %p127
      %s129 = ssub.s32 %s11, %s18
      %p130 = scmp.eq.s32.totalorder %s129, 0
      %s132 = sadd.s32 %s131, 1
      %s133 = scalar_select %p130, %s131, %s132
      %p136 = pneg %p130
      %p137 = scmp.eq.s32.totalorder %s11, 1
      %p138 = por %p136, %p137
      %p139 = scmp.ne.s32.totalorder %s131, %s134
      %p140 = scmp.eq.s32.totalorder %s11, 0
      %p141 = por %p139, %p140
      %p142 = scmp.ne.s32.totalorder %s131, %s134
      %p143 = scmp.eq.s32.totalorder %s16, 1
      %p144 = por %p142, %p143
      %p145 = scmp.ne.s32.totalorder %s134, %s135
      %p146 = scmp.eq.s32.totalorder %s16, 0
      %p147 = por %p145, %p146
      %p148 = scmp.ne.s32.totalorder %s134, %s135
      %p149 = scmp.eq.s32.totalorder %s17, 1
      %p150 = por %p148, %p149
      %p152 = scmp.ne.s32.totalorder %s135, %s151
      %p153 = scmp.eq.s32.totalorder %s17, 0
      %p154 = por %p152, %p153
      %p155 = scmp.le.s32.totalorder 1, %s11
      %p156 = scmp.lt.s32.totalorder %s11, 3
      %p157 = pnand %p155, %p156
      %p158 = pneg %p157
      // Predicated region
      $region9: #{cifar10_forward.2} parent=5 // pred_check
        _
      $region10: #{cifar10_forward.2} parent=5 // pred_check_branch
        %160 = sbr.rel (%p157) target = $region12
      $region11: #{cifar10_forward.2} parent=5 // pred_region
        %s161 = ssub.s32 %s11, 1
        // Predicated region
        $region13: #{cifar10_forward.2} parent=11 // pred_check
          %p162 = pneg %p58
        $region14: #{cifar10_forward.2} parent=11 // pred_check_branch
          %164 = sbr.rel (%p162) target = $region16
        $region15: #{cifar10_forward.2} parent=11 // pred_region
          _
        $region16: #{cifar10_forward.2} parent=11 // pred_fallthru
          _
        // Predicated region
        $region17: #{cifar10_forward.2} parent=11 // pred_check
          %p165 = pneg %p79
        $region18: #{cifar10_forward.2} parent=11 // pred_check_branch
          %167 = sbr.rel (%p165) target = $region20
        $region19: #{cifar10_forward.2} parent=11 // pred_region
          _
        $region20: #{cifar10_forward.2} parent=11 // pred_fallthru
          _
        // Predicated region
        $region21: #{cifar10_forward.2} parent=11 // pred_check
          %p168 = pneg %p100
        $region22: #{cifar10_forward.2} parent=11 // pred_check_branch
          %170 = sbr.rel (%p168) target = $region24
        $region23: #{cifar10_forward.2} parent=11 // pred_region
          _
        $region24: #{cifar10_forward.2} parent=11 // pred_fallthru
          _
        // Predicated region
        $region25: #{cifar10_forward.2} parent=11 // pred_check
          %p171 = pneg %p121
        $region26: #{cifar10_forward.2} parent=11 // pred_check_branch
          %173 = sbr.rel (%p171) target = $region28
        $region27: #{cifar10_forward.2} parent=11 // pred_region
          _
        $region28: #{cifar10_forward.2} parent=11 // pred_fallthru
          _
      $region12: #{cifar10_forward.2} parent=5 // pred_fallthru
        _
      %p174 = scmp.lt.s32.totalorder %s11, 2
      // Predicated region
      $region29: #{cifar10_forward.2} parent=5 // pred_check
        %p175 = pneg %p174
      $region30: #{cifar10_forward.2} parent=5 // pred_check_branch
        %177 = sbr.rel (%p175) target = $region32
      $region31: #{cifar10_forward.2} parent=5 // pred_region
        // Predicated region
        $region33: #{cifar10_forward.2} parent=31 // pred_check
          %p178 = pneg %p31
        $region34: #{cifar10_forward.2} parent=31 // pred_check_branch
          %180 = sbr.rel (%p178) target = $region36
        $region35: #{cifar10_forward.2} parent=31 // pred_region
          %s181 = sand.u32 %s21, 1
          %s182 = sand.u32 %s21, 1
          %s183 = smul.addr %s182, 512
          %s184 = scalar_lea.vmem [#allocation3], %s183
          %s185 = smul.addr %s11, 32
          %s186 = smul.addr %s185, 4
          %s187 = scalar_lea.vmem %s0, %s186
          // Predicated region
          $region37: #{cifar10_forward.2} parent=35 // pred_check
            _
          $region38: #{cifar10_forward.2} parent=35 // pred_check_branch
            %189 = sbr.rel (0) target = $region40
          $region39: #{cifar10_forward.2} parent=35 // pred_region
            // Predicated region
            $region41: #{cifar10_forward.2} parent=39 // pred_check
              _
            $region42: #{cifar10_forward.2} parent=39 // pred_check_branch
              %191 = sbr.rel target = $region44
            $region43: #{cifar10_forward.2} parent=39 // pred_region
              // Predicated region
              $region56: #{cifar10_forward.2} parent=43 // pred_check
                _
              $region57: #{cifar10_forward.2} parent=43 // pred_check_branch
                %460 = sbr.rel (0) target = $region59
              $region58: #{cifar10_forward.2} parent=43 // pred_region
                loop: start=0, step=1, limit=1
                $region60: #{cifar10_forward.2} parent=58 // loop_pre_header
                  _
                $region61: #{cifar10_forward.2} parent=58 // loop_header
                  %s462 = sphi 0, %s466
                  %p463 = scmp.ge.s32.totalorder %s462, 1
                  %s467 = sphi %s187, %s187
                  %s468 = sphi %s184, %s184
                $region62: #{cifar10_forward.2} parent=58 // loop_header_branch
                  %465 = sbr.rel (%p463) target = $region66
                $region63: #{cifar10_forward.2} parent=58 // loop_body
                  _
                $region64: #{cifar10_forward.2} parent=58 // loop_footer
                  %s466 = sadd.s32 1, %s462
                $region65: #{cifar10_forward.2} parent=58 // loop_footer_branch
                  %461 = sbr.rel target = $region61
                $region66: #{cifar10_forward.2} parent=58 // loop_exit
                  _
                loop: start=0, step=1, limit=1
                $region67: #{cifar10_forward.2} parent=58 // loop_pre_header
                  _
                $region68: #{cifar10_forward.2} parent=58 // loop_header
                  %s471 = sphi 0, %s475
                  %p472 = scmp.ge.s32.totalorder %s471, 1
                  %s476 = sphi %s187, %s187
                  %s477 = sphi %s184, %s184
                $region69: #{cifar10_forward.2} parent=58 // loop_header_branch
                  %474 = sbr.rel (%p472) target = $region73
                $region70: #{cifar10_forward.2} parent=58 // loop_body
                  %v478 = vld [vmem:[%s476] sm:$0xf]
                  %479 = vst [vmem:[%s477] sm:$0xf] %v478
                  %v480 = vld [vmem:[%s476 + $0x4] sm:$0xf]
                  %481 = vst [vmem:[%s477 + $0x4] sm:$0xf] %v480
                  %v482 = vld [vmem:[%s476 + $0x8] sm:$0xf]
                  %483 = vst [vmem:[%s477 + $0x8] sm:$0xf] %v482
                  %v484 = vld [vmem:[%s476 + $0xc] sm:$0xf]
                  %485 = vst [vmem:[%s477 + $0xc] sm:$0xf] %v484
                  %v486 = vld [vmem:[%s476 + $0x10] sm:$0xf]
                  %487 = vst [vmem:[%s477 + $0x10] sm:$0xf] %v486
                  %v488 = vld [vmem:[%s476 + $0x14] sm:$0xf]
                  %489 = vst [vmem:[%s477 + $0x14] sm:$0xf] %v488
                  %v490 = vld [vmem:[%s476 + $0x18] sm:$0xf]
                  %491 = vst [vmem:[%s477 + $0x18] sm:$0xf] %v490
                  %v492 = vld [vmem:[%s476 + $0x1c] sm:$0xf]
                  %493 = vst [vmem:[%s477 + $0x1c] sm:$0xf] %v492
                  %v494 = vld [vmem:[%s476 + $0x20] sm:$0xf]
                  %495 = vst [vmem:[%s477 + $0x20] sm:$0xf] %v494
                  %v496 = vld [vmem:[%s476 + $0x24] sm:$0xf]
                  %497 = vst [vmem:[%s477 + $0x24] sm:$0xf] %v496
                  %v498 = vld [vmem:[%s476 + $0x28] sm:$0xf]
                  %499 = vst [vmem:[%s477 + $0x28] sm:$0xf] %v498
                  %v500 = vld [vmem:[%s476 + $0x2c] sm:$0xf]
                  %501 = vst [vmem:[%s477 + $0x2c] sm:$0xf] %v500
                  %v502 = vld [vmem:[%s476 + $0x30] sm:$0xf]
                  %503 = vst [vmem:[%s477 + $0x30] sm:$0xf] %v502
                  %v504 = vld [vmem:[%s476 + $0x34] sm:$0xf]
                  %505 = vst [vmem:[%s477 + $0x34] sm:$0xf] %v504
                  %v506 = vld [vmem:[%s476 + $0x38] sm:$0xf]
                  %507 = vst [vmem:[%s477 + $0x38] sm:$0xf] %v506
                  %v508 = vld [vmem:[%s476 + $0x3c] sm:$0xf]
                  %509 = vst [vmem:[%s477 + $0x3c] sm:$0xf] %v508
                  %v510 = vld [vmem:[%s476 + $0x40] sm:$0xf]
                  %511 = vst [vmem:[%s477 + $0x40] sm:$0xf] %v510
                  %v512 = vld [vmem:[%s476 + $0x44] sm:$0xf]
                  %513 = vst [vmem:[%s477 + $0x44] sm:$0xf] %v512
                  %v514 = vld [vmem:[%s476 + $0x48] sm:$0xf]
                  %515 = vst [vmem:[%s477 + $0x48] sm:$0xf] %v514
                  %v516 = vld [vmem:[%s476 + $0x4c] sm:$0xf]
                  %517 = vst [vmem:[%s477 + $0x4c] sm:$0xf] %v516
                  %v518 = vld [vmem:[%s476 + $0x50] sm:$0xf]
                  %519 = vst [vmem:[%s477 + $0x50] sm:$0xf] %v518
                  %v520 = vld [vmem:[%s476 + $0x54] sm:$0xf]
                  %521 = vst [vmem:[%s477 + $0x54] sm:$0xf] %v520
                  %v522 = vld [vmem:[%s476 + $0x58] sm:$0xf]
                  %523 = vst [vmem:[%s477 + $0x58] sm:$0xf] %v522
                  %v524 = vld [vmem:[%s476 + $0x5c] sm:$0xf]
                  %525 = vst [vmem:[%s477 + $0x5c] sm:$0xf] %v524
                  %v526 = vld [vmem:[%s476 + $0x60] sm:$0xf]
                  %527 = vst [vmem:[%s477 + $0x60] sm:$0xf] %v526
                  %v528 = vld [vmem:[%s476 + $0x64] sm:$0xf]
                  %529 = vst [vmem:[%s477 + $0x64] sm:$0xf] %v528
                  %v530 = vld [vmem:[%s476 + $0x68] sm:$0xf]
                  %531 = vst [vmem:[%s477 + $0x68] sm:$0xf] %v530
                  %v532 = vld [vmem:[%s476 + $0x6c] sm:$0xf]
                  %533 = vst [vmem:[%s477 + $0x6c] sm:$0xf] %v532
                  %v534 = vld [vmem:[%s476 + $0x70] sm:$0xf]
                  %535 = vst [vmem:[%s477 + $0x70] sm:$0xf] %v534
                  %v536 = vld [vmem:[%s476 + $0x74] sm:$0xf]
                  %537 = vst [vmem:[%s477 + $0x74] sm:$0xf] %v536
                  %v538 = vld [vmem:[%s476 + $0x78] sm:$0xf]
                  %539 = vst [vmem:[%s477 + $0x78] sm:$0xf] %v538
                  %v540 = vld [vmem:[%s476 + $0x7c] sm:$0xf]
                  %541 = vst [vmem:[%s477 + $0x7c] sm:$0xf] %v540
                  %v542 = vld [vmem:[%s476 + $0x100] sm:$0xf]
                  %543 = vst [vmem:[%s477 + $0x80] sm:$0xf] %v542
                  %v544 = vld [vmem:[%s476 + $0x104] sm:$0xf]
                  %545 = vst [vmem:[%s477 + $0x84] sm:$0xf] %v544
                  %v546 = vld [vmem:[%s476 + $0x108] sm:$0xf]
                  %547 = vst [vmem:[%s477 + $0x88] sm:$0xf] %v546
                  %v548 = vld [vmem:[%s476 + $0x10c] sm:$0xf]
                  %549 = vst [vmem:[%s477 + $0x8c] sm:$0xf] %v548
                  %v550 = vld [vmem:[%s476 + $0x110] sm:$0xf]
                  %551 = vst [vmem:[%s477 + $0x90] sm:$0xf] %v550
                  %v552 = vld [vmem:[%s476 + $0x114] sm:$0xf]
                  %553 = vst [vmem:[%s477 + $0x94] sm:$0xf] %v552
                  %v554 = vld [vmem:[%s476 + $0x118] sm:$0xf]
                  %555 = vst [vmem:[%s477 + $0x98] sm:$0xf] %v554
                  %v556 = vld [vmem:[%s476 + $0x11c] sm:$0xf]
                  %557 = vst [vmem:[%s477 + $0x9c] sm:$0xf] %v556
                  %v558 = vld [vmem:[%s476 + $0x120] sm:$0xf]
                  %559 = vst [vmem:[%s477 + $0xa0] sm:$0xf] %v558
                  %v560 = vld [vmem:[%s476 + $0x124] sm:$0xf]
                  %561 = vst [vmem:[%s477 + $0xa4] sm:$0xf] %v560
                  %v562 = vld [vmem:[%s476 + $0x128] sm:$0xf]
                  %563 = vst [vmem:[%s477 + $0xa8] sm:$0xf] %v562
                  %v564 = vld [vmem:[%s476 + $0x12c] sm:$0xf]
                  %565 = vst [vmem:[%s477 + $0xac] sm:$0xf] %v564
                  %v566 = vld [vmem:[%s476 + $0x130] sm:$0xf]
                  %567 = vst [vmem:[%s477 + $0xb0] sm:$0xf] %v566
                  %v568 = vld [vmem:[%s476 + $0x134] sm:$0xf]
                  %569 = vst [vmem:[%s477 + $0xb4] sm:$0xf] %v568
                  %v570 = vld [vmem:[%s476 + $0x138] sm:$0xf]
                  %571 = vst [vmem:[%s477 + $0xb8] sm:$0xf] %v570
                  %v572 = vld [vmem:[%s476 + $0x13c] sm:$0xf]
                  %573 = vst [vmem:[%s477 + $0xbc] sm:$0xf] %v572
                  %v574 = vld [vmem:[%s476 + $0x140] sm:$0xf]
                  %575 = vst [vmem:[%s477 + $0xc0] sm:$0xf] %v574
                  %v576 = vld [vmem:[%s476 + $0x144] sm:$0xf]
                  %577 = vst [vmem:[%s477 + $0xc4] sm:$0xf] %v576
                  %v578 = vld [vmem:[%s476 + $0x148] sm:$0xf]
                  %579 = vst [vmem:[%s477 + $0xc8] sm:$0xf] %v578
                  %v580 = vld [vmem:[%s476 + $0x14c] sm:$0xf]
                  %581 = vst [vmem:[%s477 + $0xcc] sm:$0xf] %v580
                  %v582 = vld [vmem:[%s476 + $0x150] sm:$0xf]
                  %583 = vst [vmem:[%s477 + $0xd0] sm:$0xf] %v582
                  %v584 = vld [vmem:[%s476 + $0x154] sm:$0xf]
                  %585 = vst [vmem:[%s477 + $0xd4] sm:$0xf] %v584
                  %v586 = vld [vmem:[%s476 + $0x158] sm:$0xf]
                  %587 = vst [vmem:[%s477 + $0xd8] sm:$0xf] %v586
                  %v588 = vld [vmem:[%s476 + $0x15c] sm:$0xf]
                  %589 = vst [vmem:[%s477 + $0xdc] sm:$0xf] %v588
                  %v590 = vld [vmem:[%s476 + $0x160] sm:$0xf]
                  %591 = vst [vmem:[%s477 + $0xe0] sm:$0xf] %v590
                  %v592 = vld [vmem:[%s476 + $0x164] sm:$0xf]
                  %593 = vst [vmem:[%s477 + $0xe4] sm:$0xf] %v592
                  %v594 = vld [vmem:[%s476 + $0x168] sm:$0xf]
                  %595 = vst [vmem:[%s477 + $0xe8] sm:$0xf] %v594
                  %v596 = vld [vmem:[%s476 + $0x16c] sm:$0xf]
                  %597 = vst [vmem:[%s477 + $0xec] sm:$0xf] %v596
                  %v598 = vld [vmem:[%s476 + $0x170] sm:$0xf]
                  %599 = vst [vmem:[%s477 + $0xf0] sm:$0xf] %v598
                  %v600 = vld [vmem:[%s476 + $0x174] sm:$0xf]
                  %601 = vst [vmem:[%s477 + $0xf4] sm:$0xf] %v600
                  %v602 = vld [vmem:[%s476 + $0x178] sm:$0xf]
                  %603 = vst [vmem:[%s477 + $0xf8] sm:$0xf] %v602
                  %v604 = vld [vmem:[%s476 + $0x17c] sm:$0xf]
                  %605 = vst [vmem:[%s477 + $0xfc] sm:$0xf] %v604
                  %v606 = vld [vmem:[%s476 + $0x200] sm:$0xf]
                  %607 = vst [vmem:[%s477 + $0x100] sm:$0xf] %v606
                  %v608 = vld [vmem:[%s476 + $0x204] sm:$0xf]
                  %609 = vst [vmem:[%s477 + $0x104] sm:$0xf] %v608
                  %v610 = vld [vmem:[%s476 + $0x208] sm:$0xf]
                  %611 = vst [vmem:[%s477 + $0x108] sm:$0xf] %v610
                  %v612 = vld [vmem:[%s476 + $0x20c] sm:$0xf]
                  %613 = vst [vmem:[%s477 + $0x10c] sm:$0xf] %v612
                  %v614 = vld [vmem:[%s476 + $0x210] sm:$0xf]
                  %615 = vst [vmem:[%s477 + $0x110] sm:$0xf] %v614
                  %v616 = vld [vmem:[%s476 + $0x214] sm:$0xf]
                  %617 = vst [vmem:[%s477 + $0x114] sm:$0xf] %v616
                  %v618 = vld [vmem:[%s476 + $0x218] sm:$0xf]
                  %619 = vst [vmem:[%s477 + $0x118] sm:$0xf] %v618
                  %v620 = vld [vmem:[%s476 + $0x21c] sm:$0xf]
                  %621 = vst [vmem:[%s477 + $0x11c] sm:$0xf] %v620
                  %v622 = vld [vmem:[%s476 + $0x220] sm:$0xf]
                  %623 = vst [vmem:[%s477 + $0x120] sm:$0xf] %v622
                  %v624 = vld [vmem:[%s476 + $0x224] sm:$0xf]
                  %625 = vst [vmem:[%s477 + $0x124] sm:$0xf] %v624
                  %v626 = vld [vmem:[%s476 + $0x228] sm:$0xf]
                  %627 = vst [vmem:[%s477 + $0x128] sm:$0xf] %v626
                  %v628 = vld [vmem:[%s476 + $0x22c] sm:$0xf]
                  %629 = vst [vmem:[%s477 + $0x12c] sm:$0xf] %v628
                  %v630 = vld [vmem:[%s476 + $0x230] sm:$0xf]
                  %631 = vst [vmem:[%s477 + $0x130] sm:$0xf] %v630
                  %v632 = vld [vmem:[%s476 + $0x234] sm:$0xf]
                  %633 = vst [vmem:[%s477 + $0x134] sm:$0xf] %v632
                  %v634 = vld [vmem:[%s476 + $0x238] sm:$0xf]
                  %635 = vst [vmem:[%s477 + $0x138] sm:$0xf] %v634
                  %v636 = vld [vmem:[%s476 + $0x23c] sm:$0xf]
                  %637 = vst [vmem:[%s477 + $0x13c] sm:$0xf] %v636
                  %v638 = vld [vmem:[%s476 + $0x240] sm:$0xf]
                  %639 = vst [vmem:[%s477 + $0x140] sm:$0xf] %v638
                  %v640 = vld [vmem:[%s476 + $0x244] sm:$0xf]
                  %641 = vst [vmem:[%s477 + $0x144] sm:$0xf] %v640
                  %v642 = vld [vmem:[%s476 + $0x248] sm:$0xf]
                  %643 = vst [vmem:[%s477 + $0x148] sm:$0xf] %v642
                  %v644 = vld [vmem:[%s476 + $0x24c] sm:$0xf]
                  %645 = vst [vmem:[%s477 + $0x14c] sm:$0xf] %v644
                  %v646 = vld [vmem:[%s476 + $0x250] sm:$0xf]
                  %647 = vst [vmem:[%s477 + $0x150] sm:$0xf] %v646
                  %v648 = vld [vmem:[%s476 + $0x254] sm:$0xf]
                  %649 = vst [vmem:[%s477 + $0x154] sm:$0xf] %v648
                  %v650 = vld [vmem:[%s476 + $0x258] sm:$0xf]
                  %651 = vst [vmem:[%s477 + $0x158] sm:$0xf] %v650
                  %v652 = vld [vmem:[%s476 + $0x25c] sm:$0xf]
                  %653 = vst [vmem:[%s477 + $0x15c] sm:$0xf] %v652
                  %v654 = vld [vmem:[%s476 + $0x260] sm:$0xf]
                  %655 = vst [vmem:[%s477 + $0x160] sm:$0xf] %v654
                  %v656 = vld [vmem:[%s476 + $0x264] sm:$0xf]
                  %657 = vst [vmem:[%s477 + $0x164] sm:$0xf] %v656
                  %v658 = vld [vmem:[%s476 + $0x268] sm:$0xf]
                  %659 = vst [vmem:[%s477 + $0x168] sm:$0xf] %v658
                  %v660 = vld [vmem:[%s476 + $0x26c] sm:$0xf]
                  %661 = vst [vmem:[%s477 + $0x16c] sm:$0xf] %v660
                  %v662 = vld [vmem:[%s476 + $0x270] sm:$0xf]
                  %663 = vst [vmem:[%s477 + $0x170] sm:$0xf] %v662
                  %v664 = vld [vmem:[%s476 + $0x274] sm:$0xf]
                  %665 = vst [vmem:[%s477 + $0x174] sm:$0xf] %v664
                  %v666 = vld [vmem:[%s476 + $0x278] sm:$0xf]
                  %667 = vst [vmem:[%s477 + $0x178] sm:$0xf] %v666
                  %v668 = vld [vmem:[%s476 + $0x27c] sm:$0xf]
                  %669 = vst [vmem:[%s477 + $0x17c] sm:$0xf] %v668
                  %v670 = vld [vmem:[%s476 + $0x300] sm:$0xf]
                  %671 = vst [vmem:[%s477 + $0x180] sm:$0xf] %v670
                  %v672 = vld [vmem:[%s476 + $0x304] sm:$0xf]
                  %673 = vst [vmem:[%s477 + $0x184] sm:$0xf] %v672
                  %v674 = vld [vmem:[%s476 + $0x308] sm:$0xf]
                  %675 = vst [vmem:[%s477 + $0x188] sm:$0xf] %v674
                  %v676 = vld [vmem:[%s476 + $0x30c] sm:$0xf]
                  %677 = vst [vmem:[%s477 + $0x18c] sm:$0xf] %v676
                  %v678 = vld [vmem:[%s476 + $0x310] sm:$0xf]
                  %679 = vst [vmem:[%s477 + $0x190] sm:$0xf] %v678
                  %v680 = vld [vmem:[%s476 + $0x314] sm:$0xf]
                  %681 = vst [vmem:[%s477 + $0x194] sm:$0xf] %v680
                  %v682 = vld [vmem:[%s476 + $0x318] sm:$0xf]
                  %683 = vst [vmem:[%s477 + $0x198] sm:$0xf] %v682
                  %v684 = vld [vmem:[%s476 + $0x31c] sm:$0xf]
                  %685 = vst [vmem:[%s477 + $0x19c] sm:$0xf] %v684
                  %v686 = vld [vmem:[%s476 + $0x320] sm:$0xf]
                  %687 = vst [vmem:[%s477 + $0x1a0] sm:$0xf] %v686
                  %v688 = vld [vmem:[%s476 + $0x324] sm:$0xf]
                  %689 = vst [vmem:[%s477 + $0x1a4] sm:$0xf] %v688
                  %v690 = vld [vmem:[%s476 + $0x328] sm:$0xf]
                  %691 = vst [vmem:[%s477 + $0x1a8] sm:$0xf] %v690
                  %v692 = vld [vmem:[%s476 + $0x32c] sm:$0xf]
                  %693 = vst [vmem:[%s477 + $0x1ac] sm:$0xf] %v692
                  %v694 = vld [vmem:[%s476 + $0x330] sm:$0xf]
                  %695 = vst [vmem:[%s477 + $0x1b0] sm:$0xf] %v694
                  %v696 = vld [vmem:[%s476 + $0x334] sm:$0xf]
                  %697 = vst [vmem:[%s477 + $0x1b4] sm:$0xf] %v696
                  %v698 = vld [vmem:[%s476 + $0x338] sm:$0xf]
                  %699 = vst [vmem:[%s477 + $0x1b8] sm:$0xf] %v698
                  %v700 = vld [vmem:[%s476 + $0x33c] sm:$0xf]
                  %701 = vst [vmem:[%s477 + $0x1bc] sm:$0xf] %v700
                  %v702 = vld [vmem:[%s476 + $0x340] sm:$0xf]
                  %703 = vst [vmem:[%s477 + $0x1c0] sm:$0xf] %v702
                  %v704 = vld [vmem:[%s476 + $0x344] sm:$0xf]
                  %705 = vst [vmem:[%s477 + $0x1c4] sm:$0xf] %v704
                  %v706 = vld [vmem:[%s476 + $0x348] sm:$0xf]
                  %707 = vst [vmem:[%s477 + $0x1c8] sm:$0xf] %v706
                  %v708 = vld [vmem:[%s476 + $0x34c] sm:$0xf]
                  %709 = vst [vmem:[%s477 + $0x1cc] sm:$0xf] %v708
                  %v710 = vld [vmem:[%s476 + $0x350] sm:$0xf]
                  %711 = vst [vmem:[%s477 + $0x1d0] sm:$0xf] %v710
                  %v712 = vld [vmem:[%s476 + $0x354] sm:$0xf]
                  %713 = vst [vmem:[%s477 + $0x1d4] sm:$0xf] %v712
                  %v714 = vld [vmem:[%s476 + $0x358] sm:$0xf]
                  %715 = vst [vmem:[%s477 + $0x1d8] sm:$0xf] %v714
                  %v716 = vld [vmem:[%s476 + $0x35c] sm:$0xf]
                  %717 = vst [vmem:[%s477 + $0x1dc] sm:$0xf] %v716
                  %v718 = vld [vmem:[%s476 + $0x360] sm:$0xf]
                  %719 = vst [vmem:[%s477 + $0x1e0] sm:$0xf] %v718
                  %v720 = vld [vmem:[%s476 + $0x364] sm:$0xf]
                  %721 = vst [vmem:[%s477 + $0x1e4] sm:$0xf] %v720
                  %v722 = vld [vmem:[%s476 + $0x368] sm:$0xf]
                  %723 = vst [vmem:[%s477 + $0x1e8] sm:$0xf] %v722
                  %v724 = vld [vmem:[%s476 + $0x36c] sm:$0xf]
                  %725 = vst [vmem:[%s477 + $0x1ec] sm:$0xf] %v724
                  %v726 = vld [vmem:[%s476 + $0x370] sm:$0xf]
                  %727 = vst [vmem:[%s477 + $0x1f0] sm:$0xf] %v726
                  %v728 = vld [vmem:[%s476 + $0x374] sm:$0xf]
                  %729 = vst [vmem:[%s477 + $0x1f4] sm:$0xf] %v728
                  %v730 = vld [vmem:[%s476 + $0x378] sm:$0xf]
                  %731 = vst [vmem:[%s477 + $0x1f8] sm:$0xf] %v730
                  %v732 = vld [vmem:[%s476 + $0x37c] sm:$0xf]
                  %733 = vst [vmem:[%s477 + $0x1fc] sm:$0xf] %v732
                $region71: #{cifar10_forward.2} parent=58 // loop_footer
                  %s475 = sadd.s32 1, %s471
                $region72: #{cifar10_forward.2} parent=58 // loop_footer_branch
                  %470 = sbr.rel target = $region68
                $region73: #{cifar10_forward.2} parent=58 // loop_exit
                  _
              $region59: #{cifar10_forward.2} parent=43 // pred_fallthru
                _
            $region44: #{cifar10_forward.2} parent=39 // pred_fallthru
              _
            // Predicated region
            $region45: #{cifar10_forward.2} parent=39 // pred_check
              _
            $region46: #{cifar10_forward.2} parent=39 // pred_check_branch
              %193 = sbr.rel (0) target = $region48
            $region47: #{cifar10_forward.2} parent=39 // pred_region
              loop: start=0, step=1, limit=1
              $region49: #{cifar10_forward.2} parent=47 // loop_pre_header
                _
              $region50: #{cifar10_forward.2} parent=47 // loop_header
                %s196 = sphi 0, %s200
                %p197 = scmp.ge.s32.totalorder %s196, 1
                %s201 = sphi %s187, %s187
                %s202 = sphi %s184, %s184
              $region51: #{cifar10_forward.2} parent=47 // loop_header_branch
                %199 = sbr.rel (%p197) target = $region55
              $region52: #{cifar10_forward.2} parent=47 // loop_body
                %v203 = vld [vmem:[%s201] sm:$0xf]
                %204 = vst [vmem:[%s202] sm:$0xf] %v203
                %v205 = vld [vmem:[%s201 + $0x4] sm:$0xf]
                %206 = vst [vmem:[%s202 + $0x4] sm:$0xf] %v205
                %v207 = vld [vmem:[%s201 + $0x8] sm:$0xf]
                %208 = vst [vmem:[%s202 + $0x8] sm:$0xf] %v207
                %v209 = vld [vmem:[%s201 + $0xc] sm:$0xf]
                %210 = vst [vmem:[%s202 + $0xc] sm:$0xf] %v209
                %v211 = vld [vmem:[%s201 + $0x10] sm:$0xf]
                %212 = vst [vmem:[%s202 + $0x10] sm:$0xf] %v211
                %v213 = vld [vmem:[%s201 + $0x14] sm:$0xf]
                %214 = vst [vmem:[%s202 + $0x14] sm:$0xf] %v213
                %v215 = vld [vmem:[%s201 + $0x18] sm:$0xf]
                %216 = vst [vmem:[%s202 + $0x18] sm:$0xf] %v215
                %v217 = vld [vmem:[%s201 + $0x1c] sm:$0xf]
                %218 = vst [vmem:[%s202 + $0x1c] sm:$0xf] %v217
                %v219 = vld [vmem:[%s201 + $0x20] sm:$0xf]
                %220 = vst [vmem:[%s202 + $0x20] sm:$0xf] %v219
                %v221 = vld [vmem:[%s201 + $0x24] sm:$0xf]
                %222 = vst [vmem:[%s202 + $0x24] sm:$0xf] %v221
                %v223 = vld [vmem:[%s201 + $0x28] sm:$0xf]
                %224 = vst [vmem:[%s202 + $0x28] sm:$0xf] %v223
                %v225 = vld [vmem:[%s201 + $0x2c] sm:$0xf]
                %226 = vst [vmem:[%s202 + $0x2c] sm:$0xf] %v225
                %v227 = vld [vmem:[%s201 + $0x30] sm:$0xf]
                %228 = vst [vmem:[%s202 + $0x30] sm:$0xf] %v227
                %v229 = vld [vmem:[%s201 + $0x34] sm:$0xf]
                %230 = vst [vmem:[%s202 + $0x34] sm:$0xf] %v229
                %v231 = vld [vmem:[%s201 + $0x38] sm:$0xf]
                %232 = vst [vmem:[%s202 + $0x38] sm:$0xf] %v231
                %v233 = vld [vmem:[%s201 + $0x3c] sm:$0xf]
                %234 = vst [vmem:[%s202 + $0x3c] sm:$0xf] %v233
                %v235 = vld [vmem:[%s201 + $0x40] sm:$0xf]
                %236 = vst [vmem:[%s202 + $0x40] sm:$0xf] %v235
                %v237 = vld [vmem:[%s201 + $0x44] sm:$0xf]
                %238 = vst [vmem:[%s202 + $0x44] sm:$0xf] %v237
                %v239 = vld [vmem:[%s201 + $0x48] sm:$0xf]
                %240 = vst [vmem:[%s202 + $0x48] sm:$0xf] %v239
                %v241 = vld [vmem:[%s201 + $0x4c] sm:$0xf]
                %242 = vst [vmem:[%s202 + $0x4c] sm:$0xf] %v241
                %v243 = vld [vmem:[%s201 + $0x50] sm:$0xf]
                %244 = vst [vmem:[%s202 + $0x50] sm:$0xf] %v243
                %v245 = vld [vmem:[%s201 + $0x54] sm:$0xf]
                %246 = vst [vmem:[%s202 + $0x54] sm:$0xf] %v245
                %v247 = vld [vmem:[%s201 + $0x58] sm:$0xf]
                %248 = vst [vmem:[%s202 + $0x58] sm:$0xf] %v247
                %v249 = vld [vmem:[%s201 + $0x5c] sm:$0xf]
                %250 = vst [vmem:[%s202 + $0x5c] sm:$0xf] %v249
                %v251 = vld [vmem:[%s201 + $0x60] sm:$0xf]
                %252 = vst [vmem:[%s202 + $0x60] sm:$0xf] %v251
                %v253 = vld [vmem:[%s201 + $0x64] sm:$0xf]
                %254 = vst [vmem:[%s202 + $0x64] sm:$0xf] %v253
                %v255 = vld [vmem:[%s201 + $0x68] sm:$0xf]
                %256 = vst [vmem:[%s202 + $0x68] sm:$0xf] %v255
                %v257 = vld [vmem:[%s201 + $0x6c] sm:$0xf]
                %258 = vst [vmem:[%s202 + $0x6c] sm:$0xf] %v257
                %v259 = vld [vmem:[%s201 + $0x70] sm:$0xf]
                %260 = vst [vmem:[%s202 + $0x70] sm:$0xf] %v259
                %v261 = vld [vmem:[%s201 + $0x74] sm:$0xf]
                %262 = vst [vmem:[%s202 + $0x74] sm:$0xf] %v261
                %v263 = vld [vmem:[%s201 + $0x78] sm:$0xf]
                %264 = vst [vmem:[%s202 + $0x78] sm:$0xf] %v263
                %v265 = vld [vmem:[%s201 + $0x7c] sm:$0xf]
                %266 = vst [vmem:[%s202 + $0x7c] sm:$0xf] %v265
                %v267 = vld [vmem:[%s201 + $0x100] sm:$0xf]
                %268 = vst [vmem:[%s202 + $0x80] sm:$0xf] %v267
                %v269 = vld [vmem:[%s201 + $0x104] sm:$0xf]
                %270 = vst [vmem:[%s202 + $0x84] sm:$0xf] %v269
                %v271 = vld [vmem:[%s201 + $0x108] sm:$0xf]
                %272 = vst [vmem:[%s202 + $0x88] sm:$0xf] %v271
                %v273 = vld [vmem:[%s201 + $0x10c] sm:$0xf]
                %274 = vst [vmem:[%s202 + $0x8c] sm:$0xf] %v273
                %v275 = vld [vmem:[%s201 + $0x110] sm:$0xf]
                %276 = vst [vmem:[%s202 + $0x90] sm:$0xf] %v275
                %v277 = vld [vmem:[%s201 + $0x114] sm:$0xf]
                %278 = vst [vmem:[%s202 + $0x94] sm:$0xf] %v277
                %v279 = vld [vmem:[%s201 + $0x118] sm:$0xf]
                %280 = vst [vmem:[%s202 + $0x98] sm:$0xf] %v279
                %v281 = vld [vmem:[%s201 + $0x11c] sm:$0xf]
                %282 = vst [vmem:[%s202 + $0x9c] sm:$0xf] %v281
                %v283 = vld [vmem:[%s201 + $0x120] sm:$0xf]
                %284 = vst [vmem:[%s202 + $0xa0] sm:$0xf] %v283
                %v285 = vld [vmem:[%s201 + $0x124] sm:$0xf]
                %286 = vst [vmem:[%s202 + $0xa4] sm:$0xf] %v285
                %v287 = vld [vmem:[%s201 + $0x128] sm:$0xf]
                %288 = vst [vmem:[%s202 + $0xa8] sm:$0xf] %v287
                %v289 = vld [vmem:[%s201 + $0x12c] sm:$0xf]
                %290 = vst [vmem:[%s202 + $0xac] sm:$0xf] %v289
                %v291 = vld [vmem:[%s201 + $0x130] sm:$0xf]
                %292 = vst [vmem:[%s202 + $0xb0] sm:$0xf] %v291
                %v293 = vld [vmem:[%s201 + $0x134] sm:$0xf]
                %294 = vst [vmem:[%s202 + $0xb4] sm:$0xf] %v293
                %v295 = vld [vmem:[%s201 + $0x138] sm:$0xf]
                %296 = vst [vmem:[%s202 + $0xb8] sm:$0xf] %v295
                %v297 = vld [vmem:[%s201 + $0x13c] sm:$0xf]
                %298 = vst [vmem:[%s202 + $0xbc] sm:$0xf] %v297
                %v299 = vld [vmem:[%s201 + $0x140] sm:$0xf]
                %300 = vst [vmem:[%s202 + $0xc0] sm:$0xf] %v299
                %v301 = vld [vmem:[%s201 + $0x144] sm:$0xf]
                %302 = vst [vmem:[%s202 + $0xc4] sm:$0xf] %v301
                %v303 = vld [vmem:[%s201 + $0x148] sm:$0xf]
                %304 = vst [vmem:[%s202 + $0xc8] sm:$0xf] %v303
                %v305 = vld [vmem:[%s201 + $0x14c] sm:$0xf]
                %306 = vst [vmem:[%s202 + $0xcc] sm:$0xf] %v305
                %v307 = vld [vmem:[%s201 + $0x150] sm:$0xf]
                %308 = vst [vmem:[%s202 + $0xd0] sm:$0xf] %v307
                %v309 = vld [vmem:[%s201 + $0x154] sm:$0xf]
                %310 = vst [vmem:[%s202 + $0xd4] sm:$0xf] %v309
                %v311 = vld [vmem:[%s201 + $0x158] sm:$0xf]
                %312 = vst [vmem:[%s202 + $0xd8] sm:$0xf] %v311
                %v313 = vld [vmem:[%s201 + $0x15c] sm:$0xf]
                %314 = vst [vmem:[%s202 + $0xdc] sm:$0xf] %v313
                %v315 = vld [vmem:[%s201 + $0x160] sm:$0xf]
                %316 = vst [vmem:[%s202 + $0xe0] sm:$0xf] %v315
                %v317 = vld [vmem:[%s201 + $0x164] sm:$0xf]
                %318 = vst [vmem:[%s202 + $0xe4] sm:$0xf] %v317
                %v319 = vld [vmem:[%s201 + $0x168] sm:$0xf]
                %320 = vst [vmem:[%s202 + $0xe8] sm:$0xf] %v319
                %v321 = vld [vmem:[%s201 + $0x16c] sm:$0xf]
                %322 = vst [vmem:[%s202 + $0xec] sm:$0xf] %v321
                %v323 = vld [vmem:[%s201 + $0x170] sm:$0xf]
                %324 = vst [vmem:[%s202 + $0xf0] sm:$0xf] %v323
                %v325 = vld [vmem:[%s201 + $0x174] sm:$0xf]
                %326 = vst [vmem:[%s202 + $0xf4] sm:$0xf] %v325
                %v327 = vld [vmem:[%s201 + $0x178] sm:$0xf]
                %328 = vst [vmem:[%s202 + $0xf8] sm:$0xf] %v327
                %v329 = vld [vmem:[%s201 + $0x17c] sm:$0xf]
                %330 = vst [vmem:[%s202 + $0xfc] sm:$0xf] %v329
                %v331 = vld [vmem:[%s201 + $0x200] sm:$0xf]
                %332 = vst [vmem:[%s202 + $0x100] sm:$0xf] %v331
                %v333 = vld [vmem:[%s201 + $0x204] sm:$0xf]
                %334 = vst [vmem:[%s202 + $0x104] sm:$0xf] %v333
                %v335 = vld [vmem:[%s201 + $0x208] sm:$0xf]
                %336 = vst [vmem:[%s202 + $0x108] sm:$0xf] %v335
                %v337 = vld [vmem:[%s201 + $0x20c] sm:$0xf]
                %338 = vst [vmem:[%s202 + $0x10c] sm:$0xf] %v337
                %v339 = vld [vmem:[%s201 + $0x210] sm:$0xf]
                %340 = vst [vmem:[%s202 + $0x110] sm:$0xf] %v339
                %v341 = vld [vmem:[%s201 + $0x214] sm:$0xf]
                %342 = vst [vmem:[%s202 + $0x114] sm:$0xf] %v341
                %v343 = vld [vmem:[%s201 + $0x218] sm:$0xf]
                %344 = vst [vmem:[%s202 + $0x118] sm:$0xf] %v343
                %v345 = vld [vmem:[%s201 + $0x21c] sm:$0xf]
                %346 = vst [vmem:[%s202 + $0x11c] sm:$0xf] %v345
                %v347 = vld [vmem:[%s201 + $0x220] sm:$0xf]
                %348 = vst [vmem:[%s202 + $0x120] sm:$0xf] %v347
                %v349 = vld [vmem:[%s201 + $0x224] sm:$0xf]
                %350 = vst [vmem:[%s202 + $0x124] sm:$0xf] %v349
                %v351 = vld [vmem:[%s201 + $0x228] sm:$0xf]
                %352 = vst [vmem:[%s202 + $0x128] sm:$0xf] %v351
                %v353 = vld [vmem:[%s201 + $0x22c] sm:$0xf]
                %354 = vst [vmem:[%s202 + $0x12c] sm:$0xf] %v353
                %v355 = vld [vmem:[%s201 + $0x230] sm:$0xf]
                %356 = vst [vmem:[%s202 + $0x130] sm:$0xf] %v355
                %v357 = vld [vmem:[%s201 + $0x234] sm:$0xf]
                %358 = vst [vmem:[%s202 + $0x134] sm:$0xf] %v357
                %v359 = vld [vmem:[%s201 + $0x238] sm:$0xf]
                %360 = vst [vmem:[%s202 + $0x138] sm:$0xf] %v359
                %v361 = vld [vmem:[%s201 + $0x23c] sm:$0xf]
                %362 = vst [vmem:[%s202 + $0x13c] sm:$0xf] %v361
                %v363 = vld [vmem:[%s201 + $0x240] sm:$0xf]
                %364 = vst [vmem:[%s202 + $0x140] sm:$0xf] %v363
                %v365 = vld [vmem:[%s201 + $0x244] sm:$0xf]
                %366 = vst [vmem:[%s202 + $0x144] sm:$0xf] %v365
                %v367 = vld [vmem:[%s201 + $0x248] sm:$0xf]
                %368 = vst [vmem:[%s202 + $0x148] sm:$0xf] %v367
                %v369 = vld [vmem:[%s201 + $0x24c] sm:$0xf]
                %370 = vst [vmem:[%s202 + $0x14c] sm:$0xf] %v369
                %v371 = vld [vmem:[%s201 + $0x250] sm:$0xf]
                %372 = vst [vmem:[%s202 + $0x150] sm:$0xf] %v371
                %v373 = vld [vmem:[%s201 + $0x254] sm:$0xf]
                %374 = vst [vmem:[%s202 + $0x154] sm:$0xf] %v373
                %v375 = vld [vmem:[%s201 + $0x258] sm:$0xf]
                %376 = vst [vmem:[%s202 + $0x158] sm:$0xf] %v375
                %v377 = vld [vmem:[%s201 + $0x25c] sm:$0xf]
                %378 = vst [vmem:[%s202 + $0x15c] sm:$0xf] %v377
                %v379 = vld [vmem:[%s201 + $0x260] sm:$0xf]
                %380 = vst [vmem:[%s202 + $0x160] sm:$0xf] %v379
                %v381 = vld [vmem:[%s201 + $0x264] sm:$0xf]
                %382 = vst [vmem:[%s202 + $0x164] sm:$0xf] %v381
                %v383 = vld [vmem:[%s201 + $0x268] sm:$0xf]
                %384 = vst [vmem:[%s202 + $0x168] sm:$0xf] %v383
                %v385 = vld [vmem:[%s201 + $0x26c] sm:$0xf]
                %386 = vst [vmem:[%s202 + $0x16c] sm:$0xf] %v385
                %v387 = vld [vmem:[%s201 + $0x270] sm:$0xf]
                %388 = vst [vmem:[%s202 + $0x170] sm:$0xf] %v387
                %v389 = vld [vmem:[%s201 + $0x274] sm:$0xf]
                %390 = vst [vmem:[%s202 + $0x174] sm:$0xf] %v389
                %v391 = vld [vmem:[%s201 + $0x278] sm:$0xf]
                %392 = vst [vmem:[%s202 + $0x178] sm:$0xf] %v391
                %v393 = vld [vmem:[%s201 + $0x27c] sm:$0xf]
                %394 = vst [vmem:[%s202 + $0x17c] sm:$0xf] %v393
                %v395 = vld [vmem:[%s201 + $0x300] sm:$0xf]
                %396 = vst [vmem:[%s202 + $0x180] sm:$0xf] %v395
                %v397 = vld [vmem:[%s201 + $0x304] sm:$0xf]
                %398 = vst [vmem:[%s202 + $0x184] sm:$0xf] %v397
                %v399 = vld [vmem:[%s201 + $0x308] sm:$0xf]
                %400 = vst [vmem:[%s202 + $0x188] sm:$0xf] %v399
                %v401 = vld [vmem:[%s201 + $0x30c] sm:$0xf]
                %402 = vst [vmem:[%s202 + $0x18c] sm:$0xf] %v401
                %v403 = vld [vmem:[%s201 + $0x310] sm:$0xf]
                %404 = vst [vmem:[%s202 + $0x190] sm:$0xf] %v403
                %v405 = vld [vmem:[%s201 + $0x314] sm:$0xf]
                %406 = vst [vmem:[%s202 + $0x194] sm:$0xf] %v405
                %v407 = vld [vmem:[%s201 + $0x318] sm:$0xf]
                %408 = vst [vmem:[%s202 + $0x198] sm:$0xf] %v407
                %v409 = vld [vmem:[%s201 + $0x31c] sm:$0xf]
                %410 = vst [vmem:[%s202 + $0x19c] sm:$0xf] %v409
                %v411 = vld [vmem:[%s201 + $0x320] sm:$0xf]
                %412 = vst [vmem:[%s202 + $0x1a0] sm:$0xf] %v411
                %v413 = vld [vmem:[%s201 + $0x324] sm:$0xf]
                %414 = vst [vmem:[%s202 + $0x1a4] sm:$0xf] %v413
                %v415 = vld [vmem:[%s201 + $0x328] sm:$0xf]
                %416 = vst [vmem:[%s202 + $0x1a8] sm:$0xf] %v415
                %v417 = vld [vmem:[%s201 + $0x32c] sm:$0xf]
                %418 = vst [vmem:[%s202 + $0x1ac] sm:$0xf] %v417
                %v419 = vld [vmem:[%s201 + $0x330] sm:$0xf]
                %420 = vst [vmem:[%s202 + $0x1b0] sm:$0xf] %v419
                %v421 = vld [vmem:[%s201 + $0x334] sm:$0xf]
                %422 = vst [vmem:[%s202 + $0x1b4] sm:$0xf] %v421
                %v423 = vld [vmem:[%s201 + $0x338] sm:$0xf]
                %424 = vst [vmem:[%s202 + $0x1b8] sm:$0xf] %v423
                %v425 = vld [vmem:[%s201 + $0x33c] sm:$0xf]
                %426 = vst [vmem:[%s202 + $0x1bc] sm:$0xf] %v425
                %v427 = vld [vmem:[%s201 + $0x340] sm:$0xf]
                %428 = vst [vmem:[%s202 + $0x1c0] sm:$0xf] %v427
                %v429 = vld [vmem:[%s201 + $0x344] sm:$0xf]
                %430 = vst [vmem:[%s202 + $0x1c4] sm:$0xf] %v429
                %v431 = vld [vmem:[%s201 + $0x348] sm:$0xf]
                %432 = vst [vmem:[%s202 + $0x1c8] sm:$0xf] %v431
                %v433 = vld [vmem:[%s201 + $0x34c] sm:$0xf]
                %434 = vst [vmem:[%s202 + $0x1cc] sm:$0xf] %v433
                %v435 = vld [vmem:[%s201 + $0x350] sm:$0xf]
                %436 = vst [vmem:[%s202 + $0x1d0] sm:$0xf] %v435
                %v437 = vld [vmem:[%s201 + $0x354] sm:$0xf]
                %438 = vst [vmem:[%s202 + $0x1d4] sm:$0xf] %v437
                %v439 = vld [vmem:[%s201 + $0x358] sm:$0xf]
                %440 = vst [vmem:[%s202 + $0x1d8] sm:$0xf] %v439
                %v441 = vld [vmem:[%s201 + $0x35c] sm:$0xf]
                %442 = vst [vmem:[%s202 + $0x1dc] sm:$0xf] %v441
                %v443 = vld [vmem:[%s201 + $0x360] sm:$0xf]
                %444 = vst [vmem:[%s202 + $0x1e0] sm:$0xf] %v443
                %v445 = vld [vmem:[%s201 + $0x364] sm:$0xf]
                %446 = vst [vmem:[%s202 + $0x1e4] sm:$0xf] %v445
                %v447 = vld [vmem:[%s201 + $0x368] sm:$0xf]
                %448 = vst [vmem:[%s202 + $0x1e8] sm:$0xf] %v447
                %v449 = vld [vmem:[%s201 + $0x36c] sm:$0xf]
                %450 = vst [vmem:[%s202 + $0x1ec] sm:$0xf] %v449
                %v451 = vld [vmem:[%s201 + $0x370] sm:$0xf]
                %452 = vst [vmem:[%s202 + $0x1f0] sm:$0xf] %v451
                %v453 = vld [vmem:[%s201 + $0x374] sm:$0xf]
                %454 = vst [vmem:[%s202 + $0x1f4] sm:$0xf] %v453
                %v455 = vld [vmem:[%s201 + $0x378] sm:$0xf]
                %456 = vst [vmem:[%s202 + $0x1f8] sm:$0xf] %v455
                %v457 = vld [vmem:[%s201 + $0x37c] sm:$0xf]
                %458 = vst [vmem:[%s202 + $0x1fc] sm:$0xf] %v457
              $region53: #{cifar10_forward.2} parent=47 // loop_footer
                %s200 = sadd.s32 1, %s196
              $region54: #{cifar10_forward.2} parent=47 // loop_footer_branch
                %195 = sbr.rel target = $region50
              $region55: #{cifar10_forward.2} parent=47 // loop_exit
                _
            $region48: #{cifar10_forward.2} parent=39 // pred_fallthru
              _
          $region40: #{cifar10_forward.2} parent=35 // pred_fallthru
            _
          %734 = vnop
        $region36: #{cifar10_forward.2} parent=31 // pred_fallthru
          _
      $region32: #{cifar10_forward.2} parent=5 // pred_fallthru
        _
      %p735 = scmp.le.s32.totalorder 1, %s11
      %p736 = scmp.lt.s32.totalorder %s11, 3
      %p737 = pnand %p735, %p736
      %p738 = pneg %p737
      // Predicated region
      $region74: #{cifar10_forward.2} parent=5 // pred_check
        _
      $region75: #{cifar10_forward.2} parent=5 // pred_check_branch
        %740 = sbr.rel (%p737) target = $region77
      $region76: #{cifar10_forward.2} parent=5 // pred_region
        %s741 = ssub.s32 %s11, 1
        %s742 = sand.u32 %s24, 1
        %s743 = sand.u32 %s24, 1
        %s744 = smul.addr %s743, 512
        %s745 = scalar_lea.vmem [#allocation3], %s744
        // Predicated region
        $region78: #{cifar10_forward.2} parent=76 // pred_check
          %p746 = pneg %p37
        $region79: #{cifar10_forward.2} parent=76 // pred_check_branch
          %748 = sbr.rel (%p746) target = $region81
        $region80: #{cifar10_forward.2} parent=76 // pred_region
          _
        $region81: #{cifar10_forward.2} parent=76 // pred_fallthru
          _
        %s749 = sand.u32 %s24, 1
        %s750 = sand.u32 %s24, 1
        %s751 = smul.addr %s750, 512
        %s752 = scalar_lea.vmem [#allocation3], %s751
        %p753 = pneg %p37
        %p754 = pneg %p34
        %p755 = pneg %p58
        %p756 = pneg %p55
        %p757 = pneg %p79
        %p758 = pneg %p76
        %p759 = pneg %p100
        %p760 = pneg %p97
        %p761 = pneg %p121
        %p762 = pneg %p118
        %p763 = pneg %p147
        %p764 = pneg %p144
        %p765 = scmp.lt.s32.totalorder %s16, 1
        %s766 = scalar_select %p765, %s16, 1
        %s767 = smul.addr %s766, 8
        %s768 = smul.addr %s767, 4
        %s769 = scalar_lea.vmem %s5, %s768
        %p770 = scmp.lt.s32.totalorder %s16, 1
        %s771 = scalar_select %p770, %s16, 1
        %s772 = smul.addr %s771, 8
        %s773 = smul.addr %s772, 4
        %s774 = scalar_lea.vmem %s5, %s773
        %v776 = vld [vmem:[%s745] sm:$0xf]
        %v777 = vld [vmem:[%s745 + $0x4] sm:$0xf]
        %v778 = vld [vmem:[%s745 + $0x8] sm:$0xf]
        %v779 = vld [vmem:[%s745 + $0xc] sm:$0xf]
        %v780 = vld [vmem:[%s745 + $0x10] sm:$0xf]
        %v781 = vld [vmem:[%s745 + $0x14] sm:$0xf]
        %v782 = vld [vmem:[%s745 + $0x18] sm:$0xf]
        %v783 = vld [vmem:[%s745 + $0x1c] sm:$0xf]
        %v784 = vld [vmem:[%s745 + $0x20] sm:$0xf]
        %v785 = vld [vmem:[%s745 + $0x24] sm:$0xf]
        %v786 = vld [vmem:[%s745 + $0x28] sm:$0xf]
        %v787 = vld [vmem:[%s745 + $0x2c] sm:$0xf]
        %v788 = vld [vmem:[%s745 + $0x30] sm:$0xf]
        %v789 = vld [vmem:[%s745 + $0x34] sm:$0xf]
        %v790 = vld [vmem:[%s745 + $0x38] sm:$0xf]
        %v791 = vld [vmem:[%s745 + $0x3c] sm:$0xf]
        %v792 = vld [vmem:[%s745 + $0x40] sm:$0xf]
        %v793 = vld [vmem:[%s745 + $0x44] sm:$0xf]
        %v794 = vld [vmem:[%s745 + $0x48] sm:$0xf]
        %v795 = vld [vmem:[%s745 + $0x4c] sm:$0xf]
        %v796 = vld [vmem:[%s745 + $0x50] sm:$0xf]
        %v797 = vld [vmem:[%s745 + $0x54] sm:$0xf]
        %v798 = vld [vmem:[%s745 + $0x58] sm:$0xf]
        %v799 = vld [vmem:[%s745 + $0x5c] sm:$0xf]
        %v800 = vld [vmem:[%s745 + $0x60] sm:$0xf]
        %v801 = vld [vmem:[%s745 + $0x64] sm:$0xf]
        %v802 = vld [vmem:[%s745 + $0x68] sm:$0xf]
        %v803 = vld [vmem:[%s745 + $0x6c] sm:$0xf]
        %v804 = vld [vmem:[%s745 + $0x70] sm:$0xf]
        %v805 = vld [vmem:[%s745 + $0x74] sm:$0xf]
        %v806 = vld [vmem:[%s745 + $0x78] sm:$0xf]
        %v807 = vld [vmem:[%s745 + $0x7c] sm:$0xf]
        %v808 = vld [vmem:[%s1] sm:$0xf]
        %v809 = vld [vmem:[%s1 + $0x4] sm:$0xf]
        %v810 = vld [vmem:[%s1 + $0x8] sm:$0xf]
        %v811 = vld [vmem:[%s1 + $0xc] sm:$0xf]
        %v844 = vunpack.c.l.b16 %v776
        %v845 = vunpack.c.l.b16 %v777
        %v846 = vunpack.c.l.b16 %v778
        %v847 = vunpack.c.l.b16 %v779
        %v848 = vunpack.c.l.b16 %v780
        %v849 = vunpack.c.l.b16 %v781
        %v850 = vunpack.c.l.b16 %v782
        %v851 = vunpack.c.l.b16 %v783
        %v852 = vunpack.c.l.b16 %v784
        %v853 = vunpack.c.l.b16 %v785
        %v854 = vunpack.c.l.b16 %v786
        %v855 = vunpack.c.l.b16 %v787
        %v856 = vunpack.c.l.b16 %v788
        %v857 = vunpack.c.l.b16 %v789
        %v858 = vunpack.c.l.b16 %v790
        %v859 = vunpack.c.l.b16 %v791
        %v860 = vunpack.c.l.b16 %v792
        %v861 = vunpack.c.l.b16 %v793
        %v862 = vunpack.c.l.b16 %v794
        %v863 = vunpack.c.l.b16 %v795
        %v864 = vunpack.c.l.b16 %v796
        %v865 = vunpack.c.l.b16 %v797
        %v866 = vunpack.c.l.b16 %v798
        %v867 = vunpack.c.l.b16 %v799
        %v868 = vunpack.c.l.b16 %v800
        %v869 = vunpack.c.l.b16 %v801
        %v870 = vunpack.c.l.b16 %v802
        %v871 = vunpack.c.l.b16 %v803
        %v872 = vunpack.c.l.b16 %v804
        %v873 = vunpack.c.l.b16 %v805
        %v874 = vunpack.c.l.b16 %v806
        %v875 = vunpack.c.l.b16 %v807
        %v876 = vpack.c.b16 %v845, %v844
        %v877 = vpack.c.b16 %v847, %v846
        %v878 = vpack.c.b16 %v849, %v848
        %v879 = vpack.c.b16 %v851, %v850
        %v880 = vpack.c.b16 %v853, %v852
        %v881 = vpack.c.b16 %v855, %v854
        %v882 = vpack.c.b16 %v857, %v856
        %v883 = vpack.c.b16 %v859, %v858
        %v884 = vpack.c.b16 %v861, %v860
        %v885 = vpack.c.b16 %v863, %v862
        %v886 = vpack.c.b16 %v865, %v864
        %v887 = vpack.c.b16 %v867, %v866
        %v888 = vpack.c.b16 %v869, %v868
        %v889 = vpack.c.b16 %v871, %v870
        %v890 = vpack.c.b16 %v873, %v872
        %v891 = vpack.c.b16 %v875, %v874
        %v896 = vunpack.c.l.b16 %v808
        %v897 = vunpack.c.l.b16 %v809
        %v898 = vunpack.c.l.b16 %v810
        %v899 = vunpack.c.l.b16 %v811
        %v900 = vpack.c.b16 %v897, %v896
        %v901 = vpack.c.b16 %v899, %v898
        %vm904 = vcmask 261120
        %v906 = vsel %vm904, %v876, 0
        %v909 = vsel %vm904, %v877, 0
        %v912 = vsel %vm904, %v878, 0
        %v915 = vsel %vm904, %v879, 0
        %v918 = vsel %vm904, %v880, 0
        %v921 = vsel %vm904, %v881, 0
        %v924 = vsel %vm904, %v882, 0
        %v927 = vsel %vm904, %v883, 0
        %v930 = vsel %vm904, %v884, 0
        %v933 = vsel %vm904, %v885, 0
        %v936 = vsel %vm904, %v886, 0
        %v939 = vsel %vm904, %v887, 0
        %v942 = vsel %vm904, %v888, 0
        %v945 = vsel %vm904, %v889, 0
        %v948 = vsel %vm904, %v890, 0
        %v951 = vsel %vm904, %v891, 0
        %953 = vmatprep.subr.bf16.mxu0 0
        %954 = vmatpush1.bf16.msra.mxu0 %v900
        %955 = vmatprep.subr.bf16.mxu0 0
        %956 = vmatpush1.bf16.msra.mxu0 %v901
        %957 = vmatprep.subr.bf16.mxu0 0
        %958 = vmatpush1.bf16.msra.mxu0 0
        %959 = vmatprep.subr.bf16.mxu0 0
        %960 = vmatpush1.bf16.msra.mxu0 0
        %961 = vmatprep.subr.bf16.mxu0 0
        %962 = vmatpush1.bf16.msra.mxu0 0
        %963 = vmatprep.subr.bf16.mxu0 0
        %964 = vmatpush1.bf16.msra.mxu0 0
        %965 = vmatprep.subr.bf16.mxu0 0
        %966 = vmatpush1.bf16.msra.mxu0 0
        %967 = vmatprep.subr.bf16.mxu0 0
        %968 = vmatpush1.bf16.msra.mxu0 0
        %969 = vmatprep.subr.bf16.mxu0 0
        %970 = vmatpush1.bf16.msra.mxu0 0
        %971 = vmatprep.subr.bf16.mxu0 0
        %972 = vmatpush1.bf16.msra.mxu0 0
        %973 = vmatprep.subr.bf16.mxu0 0
        %974 = vmatpush1.bf16.msra.mxu0 0
        %975 = vmatprep.subr.bf16.mxu0 0
        %976 = vmatpush1.bf16.msra.mxu0 0
        %977 = vmatprep.subr.bf16.mxu0 0
        %978 = vmatpush1.bf16.msra.mxu0 0
        %979 = vmatprep.subr.bf16.mxu0 0
        %980 = vmatpush1.bf16.msra.mxu0 0
        %981 = vmatprep.subr.bf16.mxu0 0
        %982 = vmatpush1.bf16.msra.mxu0 0
        %983 = vmatprep.subr.bf16.mxu0 0
        %984 = vmatpush1.bf16.msra.mxu0 0
        %985 = vmatprep.mubr.bf16.mxu0 0
        %986 = vmatmul.mubr.bf16.gmra.mrb[0].mxu0 %v906
        %v987 = vpop.f32.mrb[0].mxu0
        %v988 = vadd.f32 0.0, %v987
        %v989 = vpop.f32.mrb[0].mxu0
        %v990 = vpop.f32.mrb[0].mxu0
        %v991 = vadd.f32 0.0, %v990
        %v992 = vpop.f32.mrb[0].mxu0
        %993 = vmatprep.mubr.bf16.mxu0 0
        %994 = vmatmul.mubr.bf16.gmra.mrb[0].mxu0 %v909
        %v995 = vpop.f32.mrb[0].mxu0
        %v996 = vadd.f32 0.0, %v995
        %v997 = vpop.f32.mrb[0].mxu0
        %v998 = vpop.f32.mrb[0].mxu0
        %v999 = vadd.f32 0.0, %v998
        %v1000 = vpop.f32.mrb[0].mxu0
        %1001 = vmatprep.mubr.bf16.mxu0 0
        %1002 = vmatmul.mubr.bf16.gmra.mrb[0].mxu0 %v912
        %v1003 = vpop.f32.mrb[0].mxu0
        %v1004 = vadd.f32 0.0, %v1003
        %v1005 = vpop.f32.mrb[0].mxu0
        %v1006 = vpop.f32.mrb[0].mxu0
        %v1007 = vadd.f32 0.0, %v1006
        %v1008 = vpop.f32.mrb[0].mxu0
        %1009 = vmatprep.mubr.bf16.mxu0 0
        %1010 = vmatmul.mubr.bf16.gmra.mrb[0].mxu0 %v915
        %v1011 = vpop.f32.mrb[0].mxu0
        %v1012 = vadd.f32 0.0, %v1011
        %v1013 = vpop.f32.mrb[0].mxu0
        %v1014 = vpop.f32.mrb[0].mxu0
        %v1015 = vadd.f32 0.0, %v1014
        %v1016 = vpop.f32.mrb[0].mxu0
        %1017 = vmatprep.mubr.bf16.mxu0 0
        %1018 = vmatmul.mubr.bf16.gmra.mrb[0].mxu0 %v918
        %v1019 = vpop.f32.mrb[0].mxu0
        %v1020 = vadd.f32 0.0, %v1019
        %v1021 = vpop.f32.mrb[0].mxu0
        %v1022 = vpop.f32.mrb[0].mxu0
        %v1023 = vadd.f32 0.0, %v1022
        %v1024 = vpop.f32.mrb[0].mxu0
        %1025 = vmatprep.mubr.bf16.mxu0 0
        %1026 = vmatmul.mubr.bf16.gmra.mrb[0].mxu0 %v921
        %v1027 = vpop.f32.mrb[0].mxu0
        %v1028 = vadd.f32 0.0, %v1027
        %v1029 = vpop.f32.mrb[0].mxu0
        %v1030 = vpop.f32.mrb[0].mxu0
        %v1031 = vadd.f32 0.0, %v1030
        %v1032 = vpop.f32.mrb[0].mxu0
        %1033 = vmatprep.mubr.bf16.mxu0 0
        %1034 = vmatmul.mubr.bf16.gmra.mrb[0].mxu0 %v924
        %v1035 = vpop.f32.mrb[0].mxu0
        %v1036 = vadd.f32 0.0, %v1035
        %v1037 = vpop.f32.mrb[0].mxu0
        %v1038 = vpop.f32.mrb[0].mxu0
        %v1039 = vadd.f32 0.0, %v1038
        %v1040 = vpop.f32.mrb[0].mxu0
        %1041 = vmatprep.mubr.bf16.mxu0 0
        %1042 = vmatmul.mubr.bf16.gmra.mrb[0].mxu0 %v927
        %v1043 = vpop.f32.mrb[0].mxu0
        %v1044 = vadd.f32 0.0, %v1043
        %v1045 = vpop.f32.mrb[0].mxu0
        %v1046 = vpop.f32.mrb[0].mxu0
        %v1047 = vadd.f32 0.0, %v1046
        %v1048 = vpop.f32.mrb[0].mxu0
        %1049 = vmatprep.mubr.bf16.mxu0 0
        %1050 = vmatmul.mubr.bf16.gmra.mrb[0].mxu0 %v930
        %v1051 = vpop.f32.mrb[0].mxu0
        %v1052 = vadd.f32 0.0, %v1051
        %v1053 = vpop.f32.mrb[0].mxu0
        %v1054 = vpop.f32.mrb[0].mxu0
        %v1055 = vadd.f32 0.0, %v1054
        %v1056 = vpop.f32.mrb[0].mxu0
        %1057 = vmatprep.mubr.bf16.mxu0 0
        %1058 = vmatmul.mubr.bf16.gmra.mrb[0].mxu0 %v933
        %v1059 = vpop.f32.mrb[0].mxu0
        %v1060 = vadd.f32 0.0, %v1059
        %v1061 = vpop.f32.mrb[0].mxu0
        %v1062 = vpop.f32.mrb[0].mxu0
        %v1063 = vadd.f32 0.0, %v1062
        %v1064 = vpop.f32.mrb[0].mxu0
        %1065 = vmatprep.mubr.bf16.mxu0 0
        %1066 = vmatmul.mubr.bf16.gmra.mrb[0].mxu0 %v936
        %v1067 = vpop.f32.mrb[0].mxu0
        %v1068 = vadd.f32 0.0, %v1067
        %v1069 = vpop.f32.mrb[0].mxu0
        %v1070 = vpop.f32.mrb[0].mxu0
        %v1071 = vadd.f32 0.0, %v1070
        %v1072 = vpop.f32.mrb[0].mxu0
        %1073 = vmatprep.mubr.bf16.mxu0 0
        %1074 = vmatmul.mubr.bf16.gmra.mrb[0].mxu0 %v939
        %v1075 = vpop.f32.mrb[0].mxu0
        %v1076 = vadd.f32 0.0, %v1075
        %v1077 = vpop.f32.mrb[0].mxu0
        %v1078 = vpop.f32.mrb[0].mxu0
        %v1079 = vadd.f32 0.0, %v1078
        %v1080 = vpop.f32.mrb[0].mxu0
        %1081 = vmatprep.mubr.bf16.mxu0 0
        %1082 = vmatmul.mubr.bf16.gmra.mrb[0].mxu0 %v942
        %v1083 = vpop.f32.mrb[0].mxu0
        %v1084 = vadd.f32 0.0, %v1083
        %v1085 = vpop.f32.mrb[0].mxu0
        %v1086 = vpop.f32.mrb[0].mxu0
        %v1087 = vadd.f32 0.0, %v1086
        %v1088 = vpop.f32.mrb[0].mxu0
        %1089 = vmatprep.mubr.bf16.mxu0 0
        %1090 = vmatmul.mubr.bf16.gmra.mrb[0].mxu0 %v945
        %v1091 = vpop.f32.mrb[0].mxu0
        %v1092 = vadd.f32 0.0, %v1091
        %v1093 = vpop.f32.mrb[0].mxu0
        %v1094 = vpop.f32.mrb[0].mxu0
        %v1095 = vadd.f32 0.0, %v1094
        %v1096 = vpop.f32.mrb[0].mxu0
        %1097 = vmatprep.mubr.bf16.mxu0 0
        %1098 = vmatmul.mubr.bf16.gmra.mrb[0].mxu0 %v948
        %v1099 = vpop.f32.mrb[0].mxu0
        %v1100 = vadd.f32 0.0, %v1099
        %v1101 = vpop.f32.mrb[0].mxu0
        %v1102 = vpop.f32.mrb[0].mxu0
        %v1103 = vadd.f32 0.0, %v1102
        %v1104 = vpop.f32.mrb[0].mxu0
        %1105 = vmatprep.mubr.bf16.mxu0 0
        %1106 = vmatmul.mubr.bf16.gmra.mrb[0].mxu0 %v951
        %v1107 = vpop.f32.mrb[0].mxu0
        %v1108 = vadd.f32 0.0, %v1107
        %v1109 = vpop.f32.mrb[0].mxu0
        %v1110 = vpop.f32.mrb[0].mxu0
        %v1111 = vadd.f32 0.0, %v1110
        %v1112 = vpop.f32.mrb[0].mxu0
        %1113 = vdwg.mxu0
        %s1114 = scalar_lea.vmem %s745, 128 [#allocation3]
        %v1115 = vld [vmem:[%s1114] sm:$0xf]
        %v1116 = vld [vmem:[%s1114 + $0x4] sm:$0xf]
        %v1117 = vld [vmem:[%s1114 + $0x8] sm:$0xf]
        %v1118 = vld [vmem:[%s1114 + $0xc] sm:$0xf]
        %v1119 = vld [vmem:[%s1114 + $0x10] sm:$0xf]
        %v1120 = vld [vmem:[%s1114 + $0x14] sm:$0xf]
        %v1121 = vld [vmem:[%s1114 + $0x18] sm:$0xf]
        %v1122 = vld [vmem:[%s1114 + $0x1c] sm:$0xf]
        %v1123 = vld [vmem:[%s1114 + $0x20] sm:$0xf]
        %v1124 = vld [vmem:[%s1114 + $0x24] sm:$0xf]
        %v1125 = vld [vmem:[%s1114 + $0x28] sm:$0xf]
        %v1126 = vld [vmem:[%s1114 + $0x2c] sm:$0xf]
        %v1127 = vld [vmem:[%s1114 + $0x30] sm:$0xf]
        %v1128 = vld [vmem:[%s1114 + $0x34] sm:$0xf]
        %v1129 = vld [vmem:[%s1114 + $0x38] sm:$0xf]
        %v1130 = vld [vmem:[%s1114 + $0x3c] sm:$0xf]
        %v1131 = vld [vmem:[%s1114 + $0x40] sm:$0xf]
        %v1132 = vld [vmem:[%s1114 + $0x44] sm:$0xf]
        %v1133 = vld [vmem:[%s1114 + $0x48] sm:$0xf]
        %v1134 = vld [vmem:[%s1114 + $0x4c] sm:$0xf]
        %v1135 = vld [vmem:[%s1114 + $0x50] sm:$0xf]
        %v1136 = vld [vmem:[%s1114 + $0x54] sm:$0xf]
        %v1137 = vld [vmem:[%s1114 + $0x58] sm:$0xf]
        %v1138 = vld [vmem:[%s1114 + $0x5c] sm:$0xf]
        %v1139 = vld [vmem:[%s1114 + $0x60] sm:$0xf]
        %v1140 = vld [vmem:[%s1114 + $0x64] sm:$0xf]
        %v1141 = vld [vmem:[%s1114 + $0x68] sm:$0xf]
        %v1142 = vld [vmem:[%s1114 + $0x6c] sm:$0xf]
        %v1143 = vld [vmem:[%s1114 + $0x70] sm:$0xf]
        %v1144 = vld [vmem:[%s1114 + $0x74] sm:$0xf]
        %v1145 = vld [vmem:[%s1114 + $0x78] sm:$0xf]
        %v1146 = vld [vmem:[%s1114 + $0x7c] sm:$0xf]
        %v1179 = vunpack.c.l.b16 %v1115
        %v1180 = vunpack.c.l.b16 %v1116
        %v1181 = vunpack.c.l.b16 %v1117
        %v1182 = vunpack.c.l.b16 %v1118
        %v1183 = vunpack.c.l.b16 %v1119
        %v1184 = vunpack.c.l.b16 %v1120
        %v1185 = vunpack.c.l.b16 %v1121
        %v1186 = vunpack.c.l.b16 %v1122
        %v1187 = vunpack.c.l.b16 %v1123
        %v1188 = vunpack.c.l.b16 %v1124
        %v1189 = vunpack.c.l.b16 %v1125
        %v1190 = vunpack.c.l.b16 %v1126
        %v1191 = vunpack.c.l.b16 %v1127
        %v1192 = vunpack.c.l.b16 %v1128
        %v1193 = vunpack.c.l.b16 %v1129
        %v1194 = vunpack.c.l.b16 %v1130
        %v1195 = vunpack.c.l.b16 %v1131
        %v1196 = vunpack.c.l.b16 %v1132
        %v1197 = vunpack.c.l.b16 %v1133
        %v1198 = vunpack.c.l.b16 %v1134
        %v1199 = vunpack.c.l.b16 %v1135
        %v1200 = vunpack.c.l.b16 %v1136
        %v1201 = vunpack.c.l.b16 %v1137
        %v1202 = vunpack.c.l.b16 %v1138
        %v1203 = vunpack.c.l.b16 %v1139
        %v1204 = vunpack.c.l.b16 %v1140
        %v1205 = vunpack.c.l.b16 %v1141
        %v1206 = vunpack.c.l.b16 %v1142
        %v1207 = vunpack.c.l.b16 %v1143
        %v1208 = vunpack.c.l.b16 %v1144
        %v1209 = vunpack.c.l.b16 %v1145
        %v1210 = vunpack.c.l.b16 %v1146
        %v1211 = vpack.c.b16 %v1180, %v1179
        %v1212 = vpack.c.b16 %v1182, %v1181
        %v1213 = vpack.c.b16 %v1184, %v1183
        %v1214 = vpack.c.b16 %v1186, %v1185
        %v1215 = vpack.c.b16 %v1188, %v1187
        %v1216 = vpack.c.b16 %v1190, %v1189
        %v1217 = vpack.c.b16 %v1192, %v1191
        %v1218 = vpack.c.b16 %v1194, %v1193
        %v1219 = vpack.c.b16 %v1196, %v1195
        %v1220 = vpack.c.b16 %v1198, %v1197
        %v1221 = vpack.c.b16 %v1200, %v1199
        %v1222 = vpack.c.b16 %v1202, %v1201
        %v1223 = vpack.c.b16 %v1204, %v1203
        %v1224 = vpack.c.b16 %v1206, %v1205
        %v1225 = vpack.c.b16 %v1208, %v1207
        %v1226 = vpack.c.b16 %v1210, %v1209
        %v1228 = vsel %vm904, %v1211, 0
        %v1231 = vsel %vm904, %v1212, 0
        %v1234 = vsel %vm904, %v1213, 0
        %v1237 = vsel %vm904, %v1214, 0
        %v1240 = vsel %vm904, %v1215, 0
        %v1243 = vsel %vm904, %v1216, 0
        %v1246 = vsel %vm904, %v1217, 0
        %v1249 = vsel %vm904, %v1218, 0
        %v1252 = vsel %vm904, %v1219, 0
        %v1255 = vsel %vm904, %v1220, 0
        %v1258 = vsel %vm904, %v1221, 0
        %v1261 = vsel %vm904, %v1222, 0
        %v1264 = vsel %vm904, %v1223, 0
        %v1267 = vsel %vm904, %v1224, 0
        %v1270 = vsel %vm904, %v1225, 0
        %v1273 = vsel %vm904, %v1226, 0
        %1275 = vmatprep.subr.bf16.mxu0 0
        %1276 = vmatpush1.bf16.msra.mxu0 %v900
        %1277 = vmatprep.subr.bf16.mxu0 0
        %1278 = vmatpush1.bf16.msra.mxu0 %v901
        %1279 = vmatprep.subr.bf16.mxu0 0
        %1280 = vmatpush1.bf16.msra.mxu0 0
        %1281 = vmatprep.subr.bf16.mxu0 0
        %1282 = vmatpush1.bf16.msra.mxu0 0
        %1283 = vmatprep.subr.bf16.mxu0 0
        %1284 = vmatpush1.bf16.msra.mxu0 0
        %1285 = vmatprep.subr.bf16.mxu0 0
        %1286 = vmatpush1.bf16.msra.mxu0 0
        %1287 = vmatprep.subr.bf16.mxu0 0
        %1288 = vmatpush1.bf16.msra.mxu0 0
        %1289 = vmatprep.subr.bf16.mxu0 0
        %1290 = vmatpush1.bf16.msra.mxu0 0
        %1291 = vmatprep.subr.bf16.mxu0 0
        %1292 = vmatpush1.bf16.msra.mxu0 0
        %1293 = vmatprep.subr.bf16.mxu0 0
        %1294 = vmatpush1.bf16.msra.mxu0 0
        %1295 = vmatprep.subr.bf16.mxu0 0
        %1296 = vmatpush1.bf16.msra.mxu0 0
        %1297 = vmatprep.subr.bf16.mxu0 0
        %1298 = vmatpush1.bf16.msra.mxu0 0
        %1299 = vmatprep.subr.bf16.mxu0 0
        %1300 = vmatpush1.bf16.msra.mxu0 0
        %1301 = vmatprep.subr.bf16.mxu0 0
        %1302 = vmatpush1.bf16.msra.mxu0 0
        %1303 = vmatprep.subr.bf16.mxu0 0
        %1304 = vmatpush1.bf16.msra.mxu0 0
        %1305 = vmatprep.subr.bf16.mxu0 0
        %1306 = vmatpush1.bf16.msra.mxu0 0
        %1307 = vmatprep.mubr.bf16.mxu0 0
        %1308 = vmatmul.mubr.bf16.gmra.mrb[0].mxu0 %v1228
        %v1309 = vpop.f32.mrb[0].mxu0
        %v1310 = vadd.f32 0.0, %v1309
        %v1311 = vpop.f32.mrb[0].mxu0
        %v1312 = vpop.f32.mrb[0].mxu0
        %v1313 = vadd.f32 0.0, %v1312
        %v1314 = vpop.f32.mrb[0].mxu0
        %1315 = vmatprep.mubr.bf16.mxu0 0
        %1316 = vmatmul.mubr.bf16.gmra.mrb[0].mxu0 %v1231
        %v1317 = vpop.f32.mrb[0].mxu0
        %v1318 = vadd.f32 0.0, %v1317
        %v1319 = vpop.f32.mrb[0].mxu0
        %v1320 = vpop.f32.mrb[0].mxu0
        %v1321 = vadd.f32 0.0, %v1320
        %v1322 = vpop.f32.mrb[0].mxu0
        %1323 = vmatprep.mubr.bf16.mxu0 0
        %1324 = vmatmul.mubr.bf16.gmra.mrb[0].mxu0 %v1234
        %v1325 = vpop.f32.mrb[0].mxu0
        %v1326 = vadd.f32 0.0, %v1325
        %v1327 = vpop.f32.mrb[0].mxu0
        %v1328 = vpop.f32.mrb[0].mxu0
        %v1329 = vadd.f32 0.0, %v1328
        %v1330 = vpop.f32.mrb[0].mxu0
        %1331 = vmatprep.mubr.bf16.mxu0 0
        %1332 = vmatmul.mubr.bf16.gmra.mrb[0].mxu0 %v1237
        %v1333 = vpop.f32.mrb[0].mxu0
        %v1334 = vadd.f32 0.0, %v1333
        %v1335 = vpop.f32.mrb[0].mxu0
        %v1336 = vpop.f32.mrb[0].mxu0
        %v1337 = vadd.f32 0.0, %v1336
        %v1338 = vpop.f32.mrb[0].mxu0
        %1339 = vmatprep.mubr.bf16.mxu0 0
        %1340 = vmatmul.mubr.bf16.gmra.mrb[0].mxu0 %v1240
        %v1341 = vpop.f32.mrb[0].mxu0
        %v1342 = vadd.f32 0.0, %v1341
        %v1343 = vpop.f32.mrb[0].mxu0
        %v1344 = vpop.f32.mrb[0].mxu0
        %v1345 = vadd.f32 0.0, %v1344
        %v1346 = vpop.f32.mrb[0].mxu0
        %1347 = vmatprep.mubr.bf16.mxu0 0
        %1348 = vmatmul.mubr.bf16.gmra.mrb[0].mxu0 %v1243
        %v1349 = vpop.f32.mrb[0].mxu0
        %v1350 = vadd.f32 0.0, %v1349
        %v1351 = vpop.f32.mrb[0].mxu0
        %v1352 = vpop.f32.mrb[0].mxu0
        %v1353 = vadd.f32 0.0, %v1352
        %v1354 = vpop.f32.mrb[0].mxu0
        %1355 = vmatprep.mubr.bf16.mxu0 0
        %1356 = vmatmul.mubr.bf16.gmra.mrb[0].mxu0 %v1246
        %v1357 = vpop.f32.mrb[0].mxu0
        %v1358 = vadd.f32 0.0, %v1357
        %v1359 = vpop.f32.mrb[0].mxu0
        %v1360 = vpop.f32.mrb[0].mxu0
        %v1361 = vadd.f32 0.0, %v1360
        %v1362 = vpop.f32.mrb[0].mxu0
        %1363 = vmatprep.mubr.bf16.mxu0 0
        %1364 = vmatmul.mubr.bf16.gmra.mrb[0].mxu0 %v1249
        %v1365 = vpop.f32.mrb[0].mxu0
        %v1366 = vadd.f32 0.0, %v1365
        %v1367 = vpop.f32.mrb[0].mxu0
        %v1368 = vpop.f32.mrb[0].mxu0
        %v1369 = vadd.f32 0.0, %v1368
        %v1370 = vpop.f32.mrb[0].mxu0
        %1371 = vmatprep.mubr.bf16.mxu0 0
        %1372 = vmatmul.mubr.bf16.gmra.mrb[0].mxu0 %v1252
        %v1373 = vpop.f32.mrb[0].mxu0
        %v1374 = vadd.f32 0.0, %v1373
        %v1375 = vpop.f32.mrb[0].mxu0
        %v1376 = vpop.f32.mrb[0].mxu0
        %v1377 = vadd.f32 0.0, %v1376
        %v1378 = vpop.f32.mrb[0].mxu0
        %1379 = vmatprep.mubr.bf16.mxu0 0
        %1380 = vmatmul.mubr.bf16.gmra.mrb[0].mxu0 %v1255
        %v1381 = vpop.f32.mrb[0].mxu0
        %v1382 = vadd.f32 0.0, %v1381
        %v1383 = vpop.f32.mrb[0].mxu0
        %v1384 = vpop.f32.mrb[0].mxu0
        %v1385 = vadd.f32 0.0, %v1384
        %v1386 = vpop.f32.mrb[0].mxu0
        %1387 = vmatprep.mubr.bf16.mxu0 0
        %1388 = vmatmul.mubr.bf16.gmra.mrb[0].mxu0 %v1258
        %v1389 = vpop.f32.mrb[0].mxu0
        %v1390 = vadd.f32 0.0, %v1389
        %v1391 = vpop.f32.mrb[0].mxu0
        %v1392 = vpop.f32.mrb[0].mxu0
        %v1393 = vadd.f32 0.0, %v1392
        %v1394 = vpop.f32.mrb[0].mxu0
        %1395 = vmatprep.mubr.bf16.mxu0 0
        %1396 = vmatmul.mubr.bf16.gmra.mrb[0].mxu0 %v1261
        %v1397 = vpop.f32.mrb[0].mxu0
        %v1398 = vadd.f32 0.0, %v1397
        %v1399 = vpop.f32.mrb[0].mxu0
        %v1400 = vpop.f32.mrb[0].mxu0
        %v1401 = vadd.f32 0.0, %v1400
        %v1402 = vpop.f32.mrb[0].mxu0
        %1403 = vmatprep.mubr.bf16.mxu0 0
        %1404 = vmatmul.mubr.bf16.gmra.mrb[0].mxu0 %v1264
        %v1405 = vpop.f32.mrb[0].mxu0
        %v1406 = vadd.f32 0.0, %v1405
        %v1407 = vpop.f32.mrb[0].mxu0
        %v1408 = vpop.f32.mrb[0].mxu0
        %v1409 = vadd.f32 0.0, %v1408
        %v1410 = vpop.f32.mrb[0].mxu0
        %1411 = vmatprep.mubr.bf16.mxu0 0
        %1412 = vmatmul.mubr.bf16.gmra.mrb[0].mxu0 %v1267
        %v1413 = vpop.f32.mrb[0].mxu0
        %v1414 = vadd.f32 0.0, %v1413
        %v1415 = vpop.f32.mrb[0].mxu0
        %v1416 = vpop.f32.mrb[0].mxu0
        %v1417 = vadd.f32 0.0, %v1416
        %v1418 = vpop.f32.mrb[0].mxu0
        %1419 = vmatprep.mubr.bf16.mxu0 0
        %1420 = vmatmul.mubr.bf16.gmra.mrb[0].mxu0 %v1270
        %v1421 = vpop.f32.mrb[0].mxu0
        %v1422 = vadd.f32 0.0, %v1421
        %v1423 = vpop.f32.mrb[0].mxu0
        %v1424 = vpop.f32.mrb[0].mxu0
        %v1425 = vadd.f32 0.0, %v1424
        %v1426 = vpop.f32.mrb[0].mxu0
        %1427 = vmatprep.mubr.bf16.mxu0 0
        %1428 = vmatmul.mubr.bf16.gmra.mrb[0].mxu0 %v1273
        %v1429 = vpop.f32.mrb[0].mxu0
        %v1430 = vadd.f32 0.0, %v1429
        %v1431 = vpop.f32.mrb[0].mxu0
        %v1432 = vpop.f32.mrb[0].mxu0
        %v1433 = vadd.f32 0.0, %v1432
        %v1434 = vpop.f32.mrb[0].mxu0
        %1435 = vdwg.mxu0
        %v1436 = vmax.f32 %v988, %v1310
        %v1437 = vmax.f32 %v991, %v1313
        %v1438 = vmax.f32 %v996, %v1318
        %v1439 = vmax.f32 %v999, %v1321
        %v1440 = vmax.f32 %v1004, %v1326
        %v1441 = vmax.f32 %v1007, %v1329
        %v1442 = vmax.f32 %v1012, %v1334
        %v1443 = vmax.f32 %v1015, %v1337
        %v1444 = vmax.f32 %v1020, %v1342
        %v1445 = vmax.f32 %v1023, %v1345
        %v1446 = vmax.f32 %v1028, %v1350
        %v1447 = vmax.f32 %v1031, %v1353
        %v1448 = vmax.f32 %v1036, %v1358
        %v1449 = vmax.f32 %v1039, %v1361
        %v1450 = vmax.f32 %v1044, %v1366
        %v1451 = vmax.f32 %v1047, %v1369
        %v1452 = vmax.f32 %v1052, %v1374
        %v1453 = vmax.f32 %v1055, %v1377
        %v1454 = vmax.f32 %v1060, %v1382
        %v1455 = vmax.f32 %v1063, %v1385
        %v1456 = vmax.f32 %v1068, %v1390
        %v1457 = vmax.f32 %v1071, %v1393
        %v1458 = vmax.f32 %v1076, %v1398
        %v1459 = vmax.f32 %v1079, %v1401
        %v1460 = vmax.f32 %v1084, %v1406
        %v1461 = vmax.f32 %v1087, %v1409
        %v1462 = vmax.f32 %v1092, %v1414
        %v1463 = vmax.f32 %v1095, %v1417
        %v1464 = vmax.f32 %v1100, %v1422
        %v1465 = vmax.f32 %v1103, %v1425
        %v1466 = vmax.f32 %v1108, %v1430
        %v1467 = vmax.f32 %v1111, %v1433
        %s1468 = scalar_lea.vmem %s745, 256 [#allocation3]
        %v1469 = vld [vmem:[%s1468] sm:$0xf]
        %v1470 = vld [vmem:[%s1468 + $0x4] sm:$0xf]
        %v1471 = vld [vmem:[%s1468 + $0x8] sm:$0xf]
        %v1472 = vld [vmem:[%s1468 + $0xc] sm:$0xf]
        %v1473 = vld [vmem:[%s1468 + $0x10] sm:$0xf]
        %v1474 = vld [vmem:[%s1468 + $0x14] sm:$0xf]
        %v1475 = vld [vmem:[%s1468 + $0x18] sm:$0xf]
        %v1476 = vld [vmem:[%s1468 + $0x1c] sm:$0xf]
        %v1477 = vld [vmem:[%s1468 + $0x20] sm:$0xf]
        %v1478 = vld [vmem:[%s1468 + $0x24] sm:$0xf]
        %v1479 = vld [vmem:[%s1468 + $0x28] sm:$0xf]
        %v1480 = vld [vmem:[%s1468 + $0x2c] sm:$0xf]
        %v1481 = vld [vmem:[%s1468 + $0x30] sm:$0xf]
        %v1482 = vld [vmem:[%s1468 + $0x34] sm:$0xf]
        %v1483 = vld [vmem:[%s1468 + $0x38] sm:$0xf]
        %v1484 = vld [vmem:[%s1468 + $0x3c] sm:$0xf]
        %v1485 = vld [vmem:[%s1468 + $0x40] sm:$0xf]
        %v1486 = vld [vmem:[%s1468 + $0x44] sm:$0xf]
        %v1487 = vld [vmem:[%s1468 + $0x48] sm:$0xf]
        %v1488 = vld [vmem:[%s1468 + $0x4c] sm:$0xf]
        %v1489 = vld [vmem:[%s1468 + $0x50] sm:$0xf]
        %v1490 = vld [vmem:[%s1468 + $0x54] sm:$0xf]
        %v1491 = vld [vmem:[%s1468 + $0x58] sm:$0xf]
        %v1492 = vld [vmem:[%s1468 + $0x5c] sm:$0xf]
        %v1493 = vld [vmem:[%s1468 + $0x60] sm:$0xf]
        %v1494 = vld [vmem:[%s1468 + $0x64] sm:$0xf]
        %v1495 = vld [vmem:[%s1468 + $0x68] sm:$0xf]
        %v1496 = vld [vmem:[%s1468 + $0x6c] sm:$0xf]
        %v1497 = vld [vmem:[%s1468 + $0x70] sm:$0xf]
        %v1498 = vld [vmem:[%s1468 + $0x74] sm:$0xf]
        %v1499 = vld [vmem:[%s1468 + $0x78] sm:$0xf]
        %v1500 = vld [vmem:[%s1468 + $0x7c] sm:$0xf]
        %v1533 = vunpack.c.l.b16 %v1469
        %v1534 = vunpack.c.l.b16 %v1470
        %v1535 = vunpack.c.l.b16 %v1471
        %v1536 = vunpack.c.l.b16 %v1472
        %v1537 = vunpack.c.l.b16 %v1473
        %v1538 = vunpack.c.l.b16 %v1474
        %v1539 = vunpack.c.l.b16 %v1475
        %v1540 = vunpack.c.l.b16 %v1476
        %v1541 = vunpack.c.l.b16 %v1477
        %v1542 = vunpack.c.l.b16 %v1478
        %v1543 = vunpack.c.l.b16 %v1479
        %v1544 = vunpack.c.l.b16 %v1480
        %v1545 = vunpack.c.l.b16 %v1481
        %v1546 = vunpack.c.l.b16 %v1482
        %v1547 = vunpack.c.l.b16 %v1483
        %v1548 = vunpack.c.l.b16 %v1484
        %v1549 = vunpack.c.l.b16 %v1485
        %v1550 = vunpack.c.l.b16 %v1486
        %v1551 = vunpack.c.l.b16 %v1487
        %v1552 = vunpack.c.l.b16 %v1488
        %v1553 = vunpack.c.l.b16 %v1489
        %v1554 = vunpack.c.l.b16 %v1490
        %v1555 = vunpack.c.l.b16 %v1491
        %v1556 = vunpack.c.l.b16 %v1492
        %v1557 = vunpack.c.l.b16 %v1493
        %v1558 = vunpack.c.l.b16 %v1494
        %v1559 = vunpack.c.l.b16 %v1495
        %v1560 = vunpack.c.l.b16 %v1496
        %v1561 = vunpack.c.l.b16 %v1497
        %v1562 = vunpack.c.l.b16 %v1498
        %v1563 = vunpack.c.l.b16 %v1499
        %v1564 = vunpack.c.l.b16 %v1500
        %v1565 = vpack.c.b16 %v1534, %v1533
        %v1566 = vpack.c.b16 %v1536, %v1535
        %v1567 = vpack.c.b16 %v1538, %v1537
        %v1568 = vpack.c.b16 %v1540, %v1539
        %v1569 = vpack.c.b16 %v1542, %v1541
        %v1570 = vpack.c.b16 %v1544, %v1543
        %v1571 = vpack.c.b16 %v1546, %v1545
        %v1572 = vpack.c.b16 %v1548, %v1547
        %v1573 = vpack.c.b16 %v1550, %v1549
        %v1574 = vpack.c.b16 %v1552, %v1551
        %v1575 = vpack.c.b16 %v1554, %v1553
        %v1576 = vpack.c.b16 %v1556, %v1555
        %v1577 = vpack.c.b16 %v1558, %v1557
        %v1578 = vpack.c.b16 %v1560, %v1559
        %v1579 = vpack.c.b16 %v1562, %v1561
        %v1580 = vpack.c.b16 %v1564, %v1563
        %v1582 = vsel %vm904, %v1565, 0
        %v1585 = vsel %vm904, %v1566, 0
        %v1588 = vsel %vm904, %v1567, 0
        %v1591 = vsel %vm904, %v1568, 0
        %v1594 = vsel %vm904, %v1569, 0
        %v1597 = vsel %vm904, %v1570, 0
        %v1600 = vsel %vm904, %v1571, 0
        %v1603 = vsel %vm904, %v1572, 0
        %v1606 = vsel %vm904, %v1573, 0
        %v1609 = vsel %vm904, %v1574, 0
        %v1612 = vsel %vm904, %v1575, 0
        %v1615 = vsel %vm904, %v1576, 0
        %v1618 = vsel %vm904, %v1577, 0
        %v1621 = vsel %vm904, %v1578, 0
        %v1624 = vsel %vm904, %v1579, 0
        %v1627 = vsel %vm904, %v1580, 0
        %1629 = vmatprep.subr.bf16.mxu0 0
        %1630 = vmatpush1.bf16.msra.mxu0 %v900
        %1631 = vmatprep.subr.bf16.mxu0 0
        %1632 = vmatpush1.bf16.msra.mxu0 %v901
        %1633 = vmatprep.subr.bf16.mxu0 0
        %1634 = vmatpush1.bf16.msra.mxu0 0
        %1635 = vmatprep.subr.bf16.mxu0 0
        %1636 = vmatpush1.bf16.msra.mxu0 0
        %1637 = vmatprep.subr.bf16.mxu0 0
        %1638 = vmatpush1.bf16.msra.mxu0 0
        %1639 = vmatprep.subr.bf16.mxu0 0
        %1640 = vmatpush1.bf16.msra.mxu0 0
        %1641 = vmatprep.subr.bf16.mxu0 0
        %1642 = vmatpush1.bf16.msra.mxu0 0
        %1643 = vmatprep.subr.bf16.mxu0 0
        %1644 = vmatpush1.bf16.msra.mxu0 0
        %1645 = vmatprep.subr.bf16.mxu0 0
        %1646 = vmatpush1.bf16.msra.mxu0 0
        %1647 = vmatprep.subr.bf16.mxu0 0
        %1648 = vmatpush1.bf16.msra.mxu0 0
        %1649 = vmatprep.subr.bf16.mxu0 0
        %1650 = vmatpush1.bf16.msra.mxu0 0
        %1651 = vmatprep.subr.bf16.mxu0 0
        %1652 = vmatpush1.bf16.msra.mxu0 0
        %1653 = vmatprep.subr.bf16.mxu0 0
        %1654 = vmatpush1.bf16.msra.mxu0 0
        %1655 = vmatprep.subr.bf16.mxu0 0
        %1656 = vmatpush1.bf16.msra.mxu0 0
        %1657 = vmatprep.subr.bf16.mxu0 0
        %1658 = vmatpush1.bf16.msra.mxu0 0
        %1659 = vmatprep.subr.bf16.mxu0 0
        %1660 = vmatpush1.bf16.msra.mxu0 0
        %1661 = vmatprep.mubr.bf16.mxu0 0
        %1662 = vmatmul.mubr.bf16.gmra.mrb[0].mxu0 %v1582
        %v1663 = vpop.f32.mrb[0].mxu0
        %v1664 = vadd.f32 0.0, %v1663
        %v1665 = vpop.f32.mrb[0].mxu0
        %v1666 = vpop.f32.mrb[0].mxu0
        %v1667 = vadd.f32 0.0, %v1666
        %v1668 = vpop.f32.mrb[0].mxu0
        %1669 = vmatprep.mubr.bf16.mxu0 0
        %1670 = vmatmul.mubr.bf16.gmra.mrb[0].mxu0 %v1585
        %v1671 = vpop.f32.mrb[0].mxu0
        %v1672 = vadd.f32 0.0, %v1671
        %v1673 = vpop.f32.mrb[0].mxu0
        %v1674 = vpop.f32.mrb[0].mxu0
        %v1675 = vadd.f32 0.0, %v1674
        %v1676 = vpop.f32.mrb[0].mxu0
        %1677 = vmatprep.mubr.bf16.mxu0 0
        %1678 = vmatmul.mubr.bf16.gmra.mrb[0].mxu0 %v1588
        %v1679 = vpop.f32.mrb[0].mxu0
        %v1680 = vadd.f32 0.0, %v1679
        %v1681 = vpop.f32.mrb[0].mxu0
        %v1682 = vpop.f32.mrb[0].mxu0
        %v1683 = vadd.f32 0.0, %v1682
        %v1684 = vpop.f32.mrb[0].mxu0
        %1685 = vmatprep.mubr.bf16.mxu0 0
        %1686 = vmatmul.mubr.bf16.gmra.mrb[0].mxu0 %v1591
        %v1687 = vpop.f32.mrb[0].mxu0
        %v1688 = vadd.f32 0.0, %v1687
        %v1689 = vpop.f32.mrb[0].mxu0
        %v1690 = vpop.f32.mrb[0].mxu0
        %v1691 = vadd.f32 0.0, %v1690
        %v1692 = vpop.f32.mrb[0].mxu0
        %1693 = vmatprep.mubr.bf16.mxu0 0
        %1694 = vmatmul.mubr.bf16.gmra.mrb[0].mxu0 %v1594
        %v1695 = vpop.f32.mrb[0].mxu0
        %v1696 = vadd.f32 0.0, %v1695
        %v1697 = vpop.f32.mrb[0].mxu0
        %v1698 = vpop.f32.mrb[0].mxu0
        %v1699 = vadd.f32 0.0, %v1698
        %v1700 = vpop.f32.mrb[0].mxu0
        %1701 = vmatprep.mubr.bf16.mxu0 0
        %1702 = vmatmul.mubr.bf16.gmra.mrb[0].mxu0 %v1597
        %v1703 = vpop.f32.mrb[0].mxu0
        %v1704 = vadd.f32 0.0, %v1703
        %v1705 = vpop.f32.mrb[0].mxu0
        %v1706 = vpop.f32.mrb[0].mxu0
        %v1707 = vadd.f32 0.0, %v1706
        %v1708 = vpop.f32.mrb[0].mxu0
        %1709 = vmatprep.mubr.bf16.mxu0 0
        %1710 = vmatmul.mubr.bf16.gmra.mrb[0].mxu0 %v1600
        %v1711 = vpop.f32.mrb[0].mxu0
        %v1712 = vadd.f32 0.0, %v1711
        %v1713 = vpop.f32.mrb[0].mxu0
        %v1714 = vpop.f32.mrb[0].mxu0
        %v1715 = vadd.f32 0.0, %v1714
        %v1716 = vpop.f32.mrb[0].mxu0
        %1717 = vmatprep.mubr.bf16.mxu0 0
        %1718 = vmatmul.mubr.bf16.gmra.mrb[0].mxu0 %v1603
        %v1719 = vpop.f32.mrb[0].mxu0
        %v1720 = vadd.f32 0.0, %v1719
        %v1721 = vpop.f32.mrb[0].mxu0
        %v1722 = vpop.f32.mrb[0].mxu0
        %v1723 = vadd.f32 0.0, %v1722
        %v1724 = vpop.f32.mrb[0].mxu0
        %1725 = vmatprep.mubr.bf16.mxu0 0
        %1726 = vmatmul.mubr.bf16.gmra.mrb[0].mxu0 %v1606
        %v1727 = vpop.f32.mrb[0].mxu0
        %v1728 = vadd.f32 0.0, %v1727
        %v1729 = vpop.f32.mrb[0].mxu0
        %v1730 = vpop.f32.mrb[0].mxu0
        %v1731 = vadd.f32 0.0, %v1730
        %v1732 = vpop.f32.mrb[0].mxu0
        %1733 = vmatprep.mubr.bf16.mxu0 0
        %1734 = vmatmul.mubr.bf16.gmra.mrb[0].mxu0 %v1609
        %v1735 = vpop.f32.mrb[0].mxu0
        %v1736 = vadd.f32 0.0, %v1735
        %v1737 = vpop.f32.mrb[0].mxu0
        %v1738 = vpop.f32.mrb[0].mxu0
        %v1739 = vadd.f32 0.0, %v1738
        %v1740 = vpop.f32.mrb[0].mxu0
        %1741 = vmatprep.mubr.bf16.mxu0 0
        %1742 = vmatmul.mubr.bf16.gmra.mrb[0].mxu0 %v1612
        %v1743 = vpop.f32.mrb[0].mxu0
        %v1744 = vadd.f32 0.0, %v1743
        %v1745 = vpop.f32.mrb[0].mxu0
        %v1746 = vpop.f32.mrb[0].mxu0
        %v1747 = vadd.f32 0.0, %v1746
        %v1748 = vpop.f32.mrb[0].mxu0
        %1749 = vmatprep.mubr.bf16.mxu0 0
        %1750 = vmatmul.mubr.bf16.gmra.mrb[0].mxu0 %v1615
        %v1751 = vpop.f32.mrb[0].mxu0
        %v1752 = vadd.f32 0.0, %v1751
        %v1753 = vpop.f32.mrb[0].mxu0
        %v1754 = vpop.f32.mrb[0].mxu0
        %v1755 = vadd.f32 0.0, %v1754
        %v1756 = vpop.f32.mrb[0].mxu0
        %1757 = vmatprep.mubr.bf16.mxu0 0
        %1758 = vmatmul.mubr.bf16.gmra.mrb[0].mxu0 %v1618
        %v1759 = vpop.f32.mrb[0].mxu0
        %v1760 = vadd.f32 0.0, %v1759
        %v1761 = vpop.f32.mrb[0].mxu0
        %v1762 = vpop.f32.mrb[0].mxu0
        %v1763 = vadd.f32 0.0, %v1762
        %v1764 = vpop.f32.mrb[0].mxu0
        %1765 = vmatprep.mubr.bf16.mxu0 0
        %1766 = vmatmul.mubr.bf16.gmra.mrb[0].mxu0 %v1621
        %v1767 = vpop.f32.mrb[0].mxu0
        %v1768 = vadd.f32 0.0, %v1767
        %v1769 = vpop.f32.mrb[0].mxu0
        %v1770 = vpop.f32.mrb[0].mxu0
        %v1771 = vadd.f32 0.0, %v1770
        %v1772 = vpop.f32.mrb[0].mxu0
        %1773 = vmatprep.mubr.bf16.mxu0 0
        %1774 = vmatmul.mubr.bf16.gmra.mrb[0].mxu0 %v1624
        %v1775 = vpop.f32.mrb[0].mxu0
        %v1776 = vadd.f32 0.0, %v1775
        %v1777 = vpop.f32.mrb[0].mxu0
        %v1778 = vpop.f32.mrb[0].mxu0
        %v1779 = vadd.f32 0.0, %v1778
        %v1780 = vpop.f32.mrb[0].mxu0
        %1781 = vmatprep.mubr.bf16.mxu0 0
        %1782 = vmatmul.mubr.bf16.gmra.mrb[0].mxu0 %v1627
        %v1783 = vpop.f32.mrb[0].mxu0
        %v1784 = vadd.f32 0.0, %v1783
        %v1785 = vpop.f32.mrb[0].mxu0
        %v1786 = vpop.f32.mrb[0].mxu0
        %v1787 = vadd.f32 0.0, %v1786
        %v1788 = vpop.f32.mrb[0].mxu0
        %1789 = vdwg.mxu0
        %v1790 = vmax.f32 %v1436, %v1664
        %v1791 = vmax.f32 %v1437, %v1667
        %v1792 = vmax.f32 %v1438, %v1672
        %v1793 = vmax.f32 %v1439, %v1675
        %v1794 = vmax.f32 %v1440, %v1680
        %v1795 = vmax.f32 %v1441, %v1683
        %v1796 = vmax.f32 %v1442, %v1688
        %v1797 = vmax.f32 %v1443, %v1691
        %v1798 = vmax.f32 %v1444, %v1696
        %v1799 = vmax.f32 %v1445, %v1699
        %v1800 = vmax.f32 %v1446, %v1704
        %v1801 = vmax.f32 %v1447, %v1707
        %v1802 = vmax.f32 %v1448, %v1712
        %v1803 = vmax.f32 %v1449, %v1715
        %v1804 = vmax.f32 %v1450, %v1720
        %v1805 = vmax.f32 %v1451, %v1723
        %v1806 = vmax.f32 %v1452, %v1728
        %v1807 = vmax.f32 %v1453, %v1731
        %v1808 = vmax.f32 %v1454, %v1736
        %v1809 = vmax.f32 %v1455, %v1739
        %v1810 = vmax.f32 %v1456, %v1744
        %v1811 = vmax.f32 %v1457, %v1747
        %v1812 = vmax.f32 %v1458, %v1752
        %v1813 = vmax.f32 %v1459, %v1755
        %v1814 = vmax.f32 %v1460, %v1760
        %v1815 = vmax.f32 %v1461, %v1763
        %v1816 = vmax.f32 %v1462, %v1768
        %v1817 = vmax.f32 %v1463, %v1771
        %v1818 = vmax.f32 %v1464, %v1776
        %v1819 = vmax.f32 %v1465, %v1779
        %v1820 = vmax.f32 %v1466, %v1784
        %v1821 = vmax.f32 %v1467, %v1787
        %s1822 = scalar_lea.vmem %s745, 384 [#allocation3]
        %v1823 = vld [vmem:[%s1822] sm:$0xf]
        %v1824 = vld [vmem:[%s1822 + $0x4] sm:$0xf]
        %v1825 = vld [vmem:[%s1822 + $0x8] sm:$0xf]
        %v1826 = vld [vmem:[%s1822 + $0xc] sm:$0xf]
        %v1827 = vld [vmem:[%s1822 + $0x10] sm:$0xf]
        %v1828 = vld [vmem:[%s1822 + $0x14] sm:$0xf]
        %v1829 = vld [vmem:[%s1822 + $0x18] sm:$0xf]
        %v1830 = vld [vmem:[%s1822 + $0x1c] sm:$0xf]
        %v1831 = vld [vmem:[%s1822 + $0x20] sm:$0xf]
        %v1832 = vld [vmem:[%s1822 + $0x24] sm:$0xf]
        %v1833 = vld [vmem:[%s1822 + $0x28] sm:$0xf]
        %v1834 = vld [vmem:[%s1822 + $0x2c] sm:$0xf]
        %v1835 = vld [vmem:[%s1822 + $0x30] sm:$0xf]
        %v1836 = vld [vmem:[%s1822 + $0x34] sm:$0xf]
        %v1837 = vld [vmem:[%s1822 + $0x38] sm:$0xf]
        %v1838 = vld [vmem:[%s1822 + $0x3c] sm:$0xf]
        %v1839 = vld [vmem:[%s1822 + $0x40] sm:$0xf]
        %v1840 = vld [vmem:[%s1822 + $0x44] sm:$0xf]
        %v1841 = vld [vmem:[%s1822 + $0x48] sm:$0xf]
        %v1842 = vld [vmem:[%s1822 + $0x4c] sm:$0xf]
        %v1843 = vld [vmem:[%s1822 + $0x50] sm:$0xf]
        %v1844 = vld [vmem:[%s1822 + $0x54] sm:$0xf]
        %v1845 = vld [vmem:[%s1822 + $0x58] sm:$0xf]
        %v1846 = vld [vmem:[%s1822 + $0x5c] sm:$0xf]
        %v1847 = vld [vmem:[%s1822 + $0x60] sm:$0xf]
        %v1848 = vld [vmem:[%s1822 + $0x64] sm:$0xf]
        %v1849 = vld [vmem:[%s1822 + $0x68] sm:$0xf]
        %v1850 = vld [vmem:[%s1822 + $0x6c] sm:$0xf]
        %v1851 = vld [vmem:[%s1822 + $0x70] sm:$0xf]
        %v1852 = vld [vmem:[%s1822 + $0x74] sm:$0xf]
        %v1853 = vld [vmem:[%s1822 + $0x78] sm:$0xf]
        %v1854 = vld [vmem:[%s1822 + $0x7c] sm:$0xf]
        %v1887 = vunpack.c.l.b16 %v1823
        %v1888 = vunpack.c.l.b16 %v1824
        %v1889 = vunpack.c.l.b16 %v1825
        %v1890 = vunpack.c.l.b16 %v1826
        %v1891 = vunpack.c.l.b16 %v1827
        %v1892 = vunpack.c.l.b16 %v1828
        %v1893 = vunpack.c.l.b16 %v1829
        %v1894 = vunpack.c.l.b16 %v1830
        %v1895 = vunpack.c.l.b16 %v1831
        %v1896 = vunpack.c.l.b16 %v1832
        %v1897 = vunpack.c.l.b16 %v1833
        %v1898 = vunpack.c.l.b16 %v1834
        %v1899 = vunpack.c.l.b16 %v1835
        %v1900 = vunpack.c.l.b16 %v1836
        %v1901 = vunpack.c.l.b16 %v1837
        %v1902 = vunpack.c.l.b16 %v1838
        %v1903 = vunpack.c.l.b16 %v1839
        %v1904 = vunpack.c.l.b16 %v1840
        %v1905 = vunpack.c.l.b16 %v1841
        %v1906 = vunpack.c.l.b16 %v1842
        %v1907 = vunpack.c.l.b16 %v1843
        %v1908 = vunpack.c.l.b16 %v1844
        %v1909 = vunpack.c.l.b16 %v1845
        %v1910 = vunpack.c.l.b16 %v1846
        %v1911 = vunpack.c.l.b16 %v1847
        %v1912 = vunpack.c.l.b16 %v1848
        %v1913 = vunpack.c.l.b16 %v1849
        %v1914 = vunpack.c.l.b16 %v1850
        %v1915 = vunpack.c.l.b16 %v1851
        %v1916 = vunpack.c.l.b16 %v1852
        %v1917 = vunpack.c.l.b16 %v1853
        %v1918 = vunpack.c.l.b16 %v1854
        %v1919 = vpack.c.b16 %v1888, %v1887
        %v1920 = vpack.c.b16 %v1890, %v1889
        %v1921 = vpack.c.b16 %v1892, %v1891
        %v1922 = vpack.c.b16 %v1894, %v1893
        %v1923 = vpack.c.b16 %v1896, %v1895
        %v1924 = vpack.c.b16 %v1898, %v1897
        %v1925 = vpack.c.b16 %v1900, %v1899
        %v1926 = vpack.c.b16 %v1902, %v1901
        %v1927 = vpack.c.b16 %v1904, %v1903
        %v1928 = vpack.c.b16 %v1906, %v1905
        %v1929 = vpack.c.b16 %v1908, %v1907
        %v1930 = vpack.c.b16 %v1910, %v1909
        %v1931 = vpack.c.b16 %v1912, %v1911
        %v1932 = vpack.c.b16 %v1914, %v1913
        %v1933 = vpack.c.b16 %v1916, %v1915
        %v1934 = vpack.c.b16 %v1918, %v1917
        %v1936 = vsel %vm904, %v1919, 0
        %v1939 = vsel %vm904, %v1920, 0
        %v1942 = vsel %vm904, %v1921, 0
        %v1945 = vsel %vm904, %v1922, 0
        %v1948 = vsel %vm904, %v1923, 0
        %v1951 = vsel %vm904, %v1924, 0
        %v1954 = vsel %vm904, %v1925, 0
        %v1957 = vsel %vm904, %v1926, 0
        %v1960 = vsel %vm904, %v1927, 0
        %v1963 = vsel %vm904, %v1928, 0
        %v1966 = vsel %vm904, %v1929, 0
        %v1969 = vsel %vm904, %v1930, 0
        %v1972 = vsel %vm904, %v1931, 0
        %v1975 = vsel %vm904, %v1932, 0
        %v1978 = vsel %vm904, %v1933, 0
        %v1981 = vsel %vm904, %v1934, 0
        %1983 = vmatprep.subr.bf16.mxu0 0
        %1984 = vmatpush1.bf16.msra.mxu0 %v900
        %1985 = vmatprep.subr.bf16.mxu0 0
        %1986 = vmatpush1.bf16.msra.mxu0 %v901
        %1987 = vmatprep.subr.bf16.mxu0 0
        %1988 = vmatpush1.bf16.msra.mxu0 0
        %1989 = vmatprep.subr.bf16.mxu0 0
        %1990 = vmatpush1.bf16.msra.mxu0 0
        %1991 = vmatprep.subr.bf16.mxu0 0
        %1992 = vmatpush1.bf16.msra.mxu0 0
        %1993 = vmatprep.subr.bf16.mxu0 0
        %1994 = vmatpush1.bf16.msra.mxu0 0
        %1995 = vmatprep.subr.bf16.mxu0 0
        %1996 = vmatpush1.bf16.msra.mxu0 0
        %1997 = vmatprep.subr.bf16.mxu0 0
        %1998 = vmatpush1.bf16.msra.mxu0 0
        %1999 = vmatprep.subr.bf16.mxu0 0
        %2000 = vmatpush1.bf16.msra.mxu0 0
        %2001 = vmatprep.subr.bf16.mxu0 0
        %2002 = vmatpush1.bf16.msra.mxu0 0
        %2003 = vmatprep.subr.bf16.mxu0 0
        %2004 = vmatpush1.bf16.msra.mxu0 0
        %2005 = vmatprep.subr.bf16.mxu0 0
        %2006 = vmatpush1.bf16.msra.mxu0 0
        %2007 = vmatprep.subr.bf16.mxu0 0
        %2008 = vmatpush1.bf16.msra.mxu0 0
        %2009 = vmatprep.subr.bf16.mxu0 0
        %2010 = vmatpush1.bf16.msra.mxu0 0
        %2011 = vmatprep.subr.bf16.mxu0 0
        %2012 = vmatpush1.bf16.msra.mxu0 0
        %2013 = vmatprep.subr.bf16.mxu0 0
        %2014 = vmatpush1.bf16.msra.mxu0 0
        %2015 = vmatprep.mubr.bf16.mxu0 0
        %2016 = vmatmul.mubr.bf16.gmra.mrb[0].mxu0 %v1936
        %v2017 = vpop.f32.mrb[0].mxu0
        %v2018 = vadd.f32 0.0, %v2017
        %v2019 = vpop.f32.mrb[0].mxu0
        %v2020 = vpop.f32.mrb[0].mxu0
        %v2021 = vadd.f32 0.0, %v2020
        %v2022 = vpop.f32.mrb[0].mxu0
        %2023 = vmatprep.mubr.bf16.mxu0 0
        %2024 = vmatmul.mubr.bf16.gmra.mrb[0].mxu0 %v1939
        %v2025 = vpop.f32.mrb[0].mxu0
        %v2026 = vadd.f32 0.0, %v2025
        %v2027 = vpop.f32.mrb[0].mxu0
        %v2028 = vpop.f32.mrb[0].mxu0
        %v2029 = vadd.f32 0.0, %v2028
        %v2030 = vpop.f32.mrb[0].mxu0
        %2031 = vmatprep.mubr.bf16.mxu0 0
        %2032 = vmatmul.mubr.bf16.gmra.mrb[0].mxu0 %v1942
        %v2033 = vpop.f32.mrb[0].mxu0
        %v2034 = vadd.f32 0.0, %v2033
        %v2035 = vpop.f32.mrb[0].mxu0
        %v2036 = vpop.f32.mrb[0].mxu0
        %v2037 = vadd.f32 0.0, %v2036
        %v2038 = vpop.f32.mrb[0].mxu0
        %2039 = vmatprep.mubr.bf16.mxu0 0
        %2040 = vmatmul.mubr.bf16.gmra.mrb[0].mxu0 %v1945
        %v2041 = vpop.f32.mrb[0].mxu0
        %v2042 = vadd.f32 0.0, %v2041
        %v2043 = vpop.f32.mrb[0].mxu0
        %v2044 = vpop.f32.mrb[0].mxu0
        %v2045 = vadd.f32 0.0, %v2044
        %v2046 = vpop.f32.mrb[0].mxu0
        %2047 = vmatprep.mubr.bf16.mxu0 0
        %2048 = vmatmul.mubr.bf16.gmra.mrb[0].mxu0 %v1948
        %v2049 = vpop.f32.mrb[0].mxu0
        %v2050 = vadd.f32 0.0, %v2049
        %v2051 = vpop.f32.mrb[0].mxu0
        %v2052 = vpop.f32.mrb[0].mxu0
        %v2053 = vadd.f32 0.0, %v2052
        %v2054 = vpop.f32.mrb[0].mxu0
        %2055 = vmatprep.mubr.bf16.mxu0 0
        %2056 = vmatmul.mubr.bf16.gmra.mrb[0].mxu0 %v1951
        %v2057 = vpop.f32.mrb[0].mxu0
        %v2058 = vadd.f32 0.0, %v2057
        %v2059 = vpop.f32.mrb[0].mxu0
        %v2060 = vpop.f32.mrb[0].mxu0
        %v2061 = vadd.f32 0.0, %v2060
        %v2062 = vpop.f32.mrb[0].mxu0
        %2063 = vmatprep.mubr.bf16.mxu0 0
        %2064 = vmatmul.mubr.bf16.gmra.mrb[0].mxu0 %v1954
        %v2065 = vpop.f32.mrb[0].mxu0
        %v2066 = vadd.f32 0.0, %v2065
        %v2067 = vpop.f32.mrb[0].mxu0
        %v2068 = vpop.f32.mrb[0].mxu0
        %v2069 = vadd.f32 0.0, %v2068
        %v2070 = vpop.f32.mrb[0].mxu0
        %2071 = vmatprep.mubr.bf16.mxu0 0
        %2072 = vmatmul.mubr.bf16.gmra.mrb[0].mxu0 %v1957
        %v2073 = vpop.f32.mrb[0].mxu0
        %v2074 = vadd.f32 0.0, %v2073
        %v2075 = vpop.f32.mrb[0].mxu0
        %v2076 = vpop.f32.mrb[0].mxu0
        %v2077 = vadd.f32 0.0, %v2076
        %v2078 = vpop.f32.mrb[0].mxu0
        %2079 = vmatprep.mubr.bf16.mxu0 0
        %2080 = vmatmul.mubr.bf16.gmra.mrb[0].mxu0 %v1960
        %v2081 = vpop.f32.mrb[0].mxu0
        %v2082 = vadd.f32 0.0, %v2081
        %v2083 = vpop.f32.mrb[0].mxu0
        %v2084 = vpop.f32.mrb[0].mxu0
        %v2085 = vadd.f32 0.0, %v2084
        %v2086 = vpop.f32.mrb[0].mxu0
        %2087 = vmatprep.mubr.bf16.mxu0 0
        %2088 = vmatmul.mubr.bf16.gmra.mrb[0].mxu0 %v1963
        %v2089 = vpop.f32.mrb[0].mxu0
        %v2090 = vadd.f32 0.0, %v2089
        %v2091 = vpop.f32.mrb[0].mxu0
        %v2092 = vpop.f32.mrb[0].mxu0
        %v2093 = vadd.f32 0.0, %v2092
        %v2094 = vpop.f32.mrb[0].mxu0
        %2095 = vmatprep.mubr.bf16.mxu0 0
        %2096 = vmatmul.mubr.bf16.gmra.mrb[0].mxu0 %v1966
        %v2097 = vpop.f32.mrb[0].mxu0
        %v2098 = vadd.f32 0.0, %v2097
        %v2099 = vpop.f32.mrb[0].mxu0
        %v2100 = vpop.f32.mrb[0].mxu0
        %v2101 = vadd.f32 0.0, %v2100
        %v2102 = vpop.f32.mrb[0].mxu0
        %2103 = vmatprep.mubr.bf16.mxu0 0
        %2104 = vmatmul.mubr.bf16.gmra.mrb[0].mxu0 %v1969
        %v2105 = vpop.f32.mrb[0].mxu0
        %v2106 = vadd.f32 0.0, %v2105
        %v2107 = vpop.f32.mrb[0].mxu0
        %v2108 = vpop.f32.mrb[0].mxu0
        %v2109 = vadd.f32 0.0, %v2108
        %v2110 = vpop.f32.mrb[0].mxu0
        %2111 = vmatprep.mubr.bf16.mxu0 0
        %2112 = vmatmul.mubr.bf16.gmra.mrb[0].mxu0 %v1972
        %v2113 = vpop.f32.mrb[0].mxu0
        %v2114 = vadd.f32 0.0, %v2113
        %v2115 = vpop.f32.mrb[0].mxu0
        %v2116 = vpop.f32.mrb[0].mxu0
        %v2117 = vadd.f32 0.0, %v2116
        %v2118 = vpop.f32.mrb[0].mxu0
        %2119 = vmatprep.mubr.bf16.mxu0 0
        %2120 = vmatmul.mubr.bf16.gmra.mrb[0].mxu0 %v1975
        %v2121 = vpop.f32.mrb[0].mxu0
        %v2122 = vadd.f32 0.0, %v2121
        %v2123 = vpop.f32.mrb[0].mxu0
        %v2124 = vpop.f32.mrb[0].mxu0
        %v2125 = vadd.f32 0.0, %v2124
        %v2126 = vpop.f32.mrb[0].mxu0
        %2127 = vmatprep.mubr.bf16.mxu0 0
        %2128 = vmatmul.mubr.bf16.gmra.mrb[0].mxu0 %v1978
        %v2129 = vpop.f32.mrb[0].mxu0
        %v2130 = vadd.f32 0.0, %v2129
        %v2131 = vpop.f32.mrb[0].mxu0
        %v2132 = vpop.f32.mrb[0].mxu0
        %v2133 = vadd.f32 0.0, %v2132
        %v2134 = vpop.f32.mrb[0].mxu0
        %2135 = vmatprep.mubr.bf16.mxu0 0
        %2136 = vmatmul.mubr.bf16.gmra.mrb[0].mxu0 %v1981
        %v2137 = vpop.f32.mrb[0].mxu0
        %v2138 = vadd.f32 0.0, %v2137
        %v2139 = vpop.f32.mrb[0].mxu0
        %v2140 = vpop.f32.mrb[0].mxu0
        %v2141 = vadd.f32 0.0, %v2140
        %v2142 = vpop.f32.mrb[0].mxu0
        %2143 = vdwg.mxu0
        %v2144 = vmax.f32 %v1790, %v2018
        %v2145 = vmax.f32 %v1791, %v2021
        %v2146 = vmax.f32 %v1792, %v2026
        %v2147 = vmax.f32 %v1793, %v2029
        %v2148 = vmax.f32 %v1794, %v2034
        %v2149 = vmax.f32 %v1795, %v2037
        %v2150 = vmax.f32 %v1796, %v2042
        %v2151 = vmax.f32 %v1797, %v2045
        %v2152 = vmax.f32 %v1798, %v2050
        %v2153 = vmax.f32 %v1799, %v2053
        %v2154 = vmax.f32 %v1800, %v2058
        %v2155 = vmax.f32 %v1801, %v2061
        %v2156 = vmax.f32 %v1802, %v2066
        %v2157 = vmax.f32 %v1803, %v2069
        %v2158 = vmax.f32 %v1804, %v2074
        %v2159 = vmax.f32 %v1805, %v2077
        %v2160 = vmax.f32 %v1806, %v2082
        %v2161 = vmax.f32 %v1807, %v2085
        %v2162 = vmax.f32 %v1808, %v2090
        %v2163 = vmax.f32 %v1809, %v2093
        %v2164 = vmax.f32 %v1810, %v2098
        %v2165 = vmax.f32 %v1811, %v2101
        %v2166 = vmax.f32 %v1812, %v2106
        %v2167 = vmax.f32 %v1813, %v2109
        %v2168 = vmax.f32 %v1814, %v2114
        %v2169 = vmax.f32 %v1815, %v2117
        %v2170 = vmax.f32 %v1816, %v2122
        %v2171 = vmax.f32 %v1817, %v2125
        %v2172 = vmax.f32 %v1818, %v2130
        %v2173 = vmax.f32 %v1819, %v2133
        %v2174 = vmax.f32 %v1820, %v2138
        %v2175 = vmax.f32 %v1821, %v2141
        %v2176 = vld [vmem:[%s2] sm:$0x1]
        %v2178 = vlaneseq
        %v2179 = vshrl.u32 %v2178, 7
        %v2180 = vsub.s32 0, %v2179
        %v2181 = vrot.slane %v2176, %v2180
        %v2183 = vadd.f32 %v2144, %v2181
        %v2184 = vadd.f32 %v2145, %v2181
        %v2185 = vadd.f32 %v2146, %v2181
        %v2186 = vadd.f32 %v2147, %v2181
        %v2187 = vadd.f32 %v2148, %v2181
        %v2188 = vadd.f32 %v2149, %v2181
        %v2189 = vadd.f32 %v2150, %v2181
        %v2190 = vadd.f32 %v2151, %v2181
        %v2191 = vadd.f32 %v2152, %v2181
        %v2192 = vadd.f32 %v2153, %v2181
        %v2193 = vadd.f32 %v2154, %v2181
        %v2194 = vadd.f32 %v2155, %v2181
        %v2195 = vadd.f32 %v2156, %v2181
        %v2196 = vadd.f32 %v2157, %v2181
        %v2197 = vadd.f32 %v2158, %v2181
        %v2198 = vadd.f32 %v2159, %v2181
        %v2199 = vadd.f32 %v2160, %v2181
        %v2200 = vadd.f32 %v2161, %v2181
        %v2201 = vadd.f32 %v2162, %v2181
        %v2202 = vadd.f32 %v2163, %v2181
        %v2203 = vadd.f32 %v2164, %v2181
        %v2204 = vadd.f32 %v2165, %v2181
        %v2205 = vadd.f32 %v2166, %v2181
        %v2206 = vadd.f32 %v2167, %v2181
        %v2207 = vadd.f32 %v2168, %v2181
        %v2208 = vadd.f32 %v2169, %v2181
        %v2209 = vadd.f32 %v2170, %v2181
        %v2210 = vadd.f32 %v2171, %v2181
        %v2211 = vadd.f32 %v2172, %v2181
        %v2212 = vadd.f32 %v2173, %v2181
        %v2213 = vadd.f32 %v2174, %v2181
        %v2214 = vadd.f32 %v2175, %v2181
        %v2215 = vmax.f32 %v2183, 0.0
        %v2216 = vmax.f32 %v2184, 0.0
        %v2217 = vmax.f32 %v2185, 0.0
        %v2218 = vmax.f32 %v2186, 0.0
        %v2219 = vmax.f32 %v2187, 0.0
        %v2220 = vmax.f32 %v2188, 0.0
        %v2221 = vmax.f32 %v2189, 0.0
        %v2222 = vmax.f32 %v2190, 0.0
        %v2223 = vmax.f32 %v2191, 0.0
        %v2224 = vmax.f32 %v2192, 0.0
        %v2225 = vmax.f32 %v2193, 0.0
        %v2226 = vmax.f32 %v2194, 0.0
        %v2227 = vmax.f32 %v2195, 0.0
        %v2228 = vmax.f32 %v2196, 0.0
        %v2229 = vmax.f32 %v2197, 0.0
        %v2230 = vmax.f32 %v2198, 0.0
        %v2231 = vmax.f32 %v2199, 0.0
        %v2232 = vmax.f32 %v2200, 0.0
        %v2233 = vmax.f32 %v2201, 0.0
        %v2234 = vmax.f32 %v2202, 0.0
        %v2235 = vmax.f32 %v2203, 0.0
        %v2236 = vmax.f32 %v2204, 0.0
        %v2237 = vmax.f32 %v2205, 0.0
        %v2238 = vmax.f32 %v2206, 0.0
        %v2239 = vmax.f32 %v2207, 0.0
        %v2240 = vmax.f32 %v2208, 0.0
        %v2241 = vmax.f32 %v2209, 0.0
        %v2242 = vmax.f32 %v2210, 0.0
        %v2243 = vmax.f32 %v2211, 0.0
        %v2244 = vmax.f32 %v2212, 0.0
        %v2245 = vmax.f32 %v2213, 0.0
        %v2246 = vmax.f32 %v2214, 0.0
        %vm2247 = vcmask 523264
        %2248 = vst.msk [vmem:[#allocation2] sm:$0xff] %vm2247, 0.0
        %vm2249 = vcmask 516096
        %2250 = vst.msk [vmem:[#allocation2 + $0x8] sm:$0x1] %vm2249, 0.0
        %2251 = vst.msk [vmem:[#allocation2 + $0x10] sm:$0xff] %vm2247, 0.0
        %2252 = vst.msk [vmem:[#allocation2 + $0x18] sm:$0x1] %vm2249, 0.0
        %2253 = vst.msk [vmem:[#allocation2 + $0x20] sm:$0xff] %vm2247, 0.0
        %2254 = vst.msk [vmem:[#allocation2 + $0x28] sm:$0x1] %vm2249, 0.0
        %2255 = vst.msk [vmem:[#allocation2 + $0x30] sm:$0xff] %vm2247, 0.0
        %2256 = vst.msk [vmem:[#allocation2 + $0x38] sm:$0x1] %vm2249, 0.0
        %2257 = vst.msk [vmem:[#allocation2 + $0x40] sm:$0xff] %vm2247, 0.0
        %2258 = vst.msk [vmem:[#allocation2 + $0x48] sm:$0x1] %vm2249, 0.0
        %2259 = vst.msk [vmem:[#allocation2 + $0x50] sm:$0xff] %vm2247, 0.0
        %2260 = vst.msk [vmem:[#allocation2 + $0x58] sm:$0x1] %vm2249, 0.0
        %2261 = vst.msk [vmem:[#allocation2 + $0x60] sm:$0xff] %vm2247, 0.0
        %2262 = vst.msk [vmem:[#allocation2 + $0x68] sm:$0x1] %vm2249, 0.0
        %2263 = vst.msk [vmem:[#allocation2 + $0x70] sm:$0xff] %vm2247, 0.0
        %2264 = vst.msk [vmem:[#allocation2 + $0x78] sm:$0x1] %vm2249, 0.0
        %2265 = vst.msk [vmem:[#allocation2 + $0x80] sm:$0xff] %vm2247, 0.0
        %2266 = vst.msk [vmem:[#allocation2 + $0x88] sm:$0x1] %vm2249, 0.0
        %2267 = vst.msk [vmem:[#allocation2 + $0x90] sm:$0xff] %vm2247, 0.0
        %2268 = vst.msk [vmem:[#allocation2 + $0x98] sm:$0x1] %vm2249, 0.0
        %2269 = vst.msk [vmem:[#allocation2 + $0xa0] sm:$0xff] %vm2247, 0.0
        %2270 = vst.msk [vmem:[#allocation2 + $0xa8] sm:$0x1] %vm2249, 0.0
        %2271 = vst.msk [vmem:[#allocation2 + $0xb0] sm:$0xff] %vm2247, 0.0
        %2272 = vst.msk [vmem:[#allocation2 + $0xb8] sm:$0x1] %vm2249, 0.0
        %2273 = vst.msk [vmem:[#allocation2 + $0xc0] sm:$0xff] %vm2247, 0.0
        %2274 = vst.msk [vmem:[#allocation2 + $0xc8] sm:$0x1] %vm2249, 0.0
        %2275 = vst.msk [vmem:[#allocation2 + $0xd0] sm:$0xff] %vm2247, 0.0
        %2276 = vst.msk [vmem:[#allocation2 + $0xd8] sm:$0x1] %vm2249, 0.0
        %2277 = vst.msk [vmem:[#allocation2 + $0xe0] sm:$0xff] %vm2247, 0.0
        %2278 = vst.msk [vmem:[#allocation2 + $0xe8] sm:$0x1] %vm2249, 0.0
        %2279 = vst.msk [vmem:[#allocation2 + $0xf0] sm:$0xff] %vm2247, 0.0
        %2280 = vst.msk [vmem:[#allocation2 + $0xf8] sm:$0x1] %vm2249, 0.0
        %2281 = vst.msk [vmem:[#allocation2 + $0x100] sm:$0xff] %vm2247, 0.0
        %2282 = vst.msk [vmem:[#allocation2 + $0x108] sm:$0x1] %vm2249, 0.0
        %2283 = vst.msk [vmem:[#allocation2 + $0x110] sm:$0xff] %vm2247, 0.0
        %2284 = vst.msk [vmem:[#allocation2 + $0x118] sm:$0x1] %vm2249, 0.0
        %2285 = vst.msk [vmem:[#allocation2 + $0x120] sm:$0xff] %vm2247, 0.0
        %2286 = vst.msk [vmem:[#allocation2 + $0x128] sm:$0x1] %vm2249, 0.0
        %2287 = vst.msk [vmem:[#allocation2 + $0x130] sm:$0xff] %vm2247, 0.0
        %2288 = vst.msk [vmem:[#allocation2 + $0x138] sm:$0x1] %vm2249, 0.0
        %2289 = vst.msk [vmem:[#allocation2 + $0x140] sm:$0xff] %vm2247, 0.0
        %2290 = vst.msk [vmem:[#allocation2 + $0x148] sm:$0x1] %vm2249, 0.0
        %2291 = vst.msk [vmem:[#allocation2 + $0x150] sm:$0xff] %vm2247, 0.0
        %2292 = vst.msk [vmem:[#allocation2 + $0x158] sm:$0x1] %vm2249, 0.0
        %2293 = vst.msk [vmem:[#allocation2 + $0x160] sm:$0xff] %vm2247, 0.0
        %2294 = vst.msk [vmem:[#allocation2 + $0x168] sm:$0x1] %vm2249, 0.0
        %2295 = vst.msk [vmem:[#allocation2 + $0x170] sm:$0xff] %vm2247, 0.0
        %2296 = vst.msk [vmem:[#allocation2 + $0x178] sm:$0x1] %vm2249, 0.0
        %2297 = vst.msk [vmem:[#allocation2 + $0x180] sm:$0xff] %vm2247, 0.0
        %2298 = vst.msk [vmem:[#allocation2 + $0x188] sm:$0x1] %vm2249, 0.0
        %2299 = vst.msk [vmem:[#allocation2 + $0x190] sm:$0xff] %vm2247, 0.0
        %2300 = vst.msk [vmem:[#allocation2 + $0x198] sm:$0x1] %vm2249, 0.0
        %2301 = vst.msk [vmem:[#allocation2 + $0x1a0] sm:$0xff] %vm2247, 0.0
        %2302 = vst.msk [vmem:[#allocation2 + $0x1a8] sm:$0x1] %vm2249, 0.0
        %2303 = vst.msk [vmem:[#allocation2 + $0x1b0] sm:$0xff] %vm2247, 0.0
        %2304 = vst.msk [vmem:[#allocation2 + $0x1b8] sm:$0x1] %vm2249, 0.0
        %2305 = vst.msk [vmem:[#allocation2 + $0x1c0] sm:$0xff] %vm2247, 0.0
        %2306 = vst.msk [vmem:[#allocation2 + $0x1c8] sm:$0x1] %vm2249, 0.0
        %2307 = vst.msk [vmem:[#allocation2 + $0x1d0] sm:$0xff] %vm2247, 0.0
        %2308 = vst.msk [vmem:[#allocation2 + $0x1d8] sm:$0x1] %vm2249, 0.0
        %2309 = vst.msk [vmem:[#allocation2 + $0x1e0] sm:$0xff] %vm2247, 0.0
        %2310 = vst.msk [vmem:[#allocation2 + $0x1e8] sm:$0x1] %vm2249, 0.0
        %2311 = vst.msk [vmem:[#allocation2 + $0x1f0] sm:$0xff] %vm2247, 0.0
        %2312 = vst.msk [vmem:[#allocation2 + $0x1f8] sm:$0x1] %vm2249, 0.0
        %2313 = vst.msk [vmem:[#allocation2 + $0x200] sm:$0xff] %vm2247, 0.0
        %2314 = vst.msk [vmem:[#allocation2 + $0x208] sm:$0x1] %vm2249, 0.0
        %2315 = vst.msk [vmem:[#allocation2 + $0x210] sm:$0xff] %vm2247, 0.0
        %2316 = vst.msk [vmem:[#allocation2 + $0x218] sm:$0x1] %vm2249, 0.0
        %2317 = vst.msk [vmem:[#allocation2 + $0x220] sm:$0xff] %vm2247, 0.0
        %2318 = vst.msk [vmem:[#allocation2 + $0x228] sm:$0x1] %vm2249, 0.0
        %2319 = vst.msk [vmem:[#allocation2 + $0x230] sm:$0xff] %vm2247, 0.0
        %2320 = vst.msk [vmem:[#allocation2 + $0x238] sm:$0x1] %vm2249, 0.0
        %s2321 = scalar_lea.vmem [#allocation2], 432
        %2322 = vst.msk [vmem:[%s2321] sm:$0xff] %vm2247, %v2215
        %2323 = vst.msk [vmem:[%s2321 + $0x10] sm:$0xff] %vm2247, %v2216
        %2324 = vst.msk [vmem:[%s2321 + $0x20] sm:$0xff] %vm2247, %v2217
        %2325 = vst.msk [vmem:[%s2321 + $0x30] sm:$0xff] %vm2247, %v2218
        %2326 = vst.msk [vmem:[%s2321 + $0x40] sm:$0xff] %vm2247, %v2219
        %2327 = vst.msk [vmem:[%s2321 + $0x50] sm:$0xff] %vm2247, %v2220
        %2328 = vst.msk [vmem:[%s2321 + $0x60] sm:$0xff] %vm2247, %v2221
        %2329 = vst.msk [vmem:[%s2321 + $0x70] sm:$0xff] %vm2247, %v2222
        %s2330 = scalar_lea.vmem [#allocation2], 288
        %2331 = vst.msk [vmem:[%s2330 + $0x1] sm:$0xff] %vm2247, %v2223
        %2332 = vst.msk [vmem:[%s2330 + $0x11] sm:$0xff] %vm2247, %v2224
        %2333 = vst.msk [vmem:[%s2330 + $0x21] sm:$0xff] %vm2247, %v2225
        %2334 = vst.msk [vmem:[%s2330 + $0x31] sm:$0xff] %vm2247, %v2226
        %2335 = vst.msk [vmem:[%s2330 + $0x41] sm:$0xff] %vm2247, %v2227
        %2336 = vst.msk [vmem:[%s2330 + $0x51] sm:$0xff] %vm2247, %v2228
        %2337 = vst.msk [vmem:[%s2330 + $0x61] sm:$0xff] %vm2247, %v2229
        %2338 = vst.msk [vmem:[%s2330 + $0x71] sm:$0xff] %vm2247, %v2230
        %s2339 = scalar_lea.vmem [#allocation2], 160
        %2340 = vst.msk [vmem:[%s2339] sm:$0xff] %vm2247, %v2231
        %2341 = vst.msk [vmem:[%s2339 + $0x10] sm:$0xff] %vm2247, %v2232
        %2342 = vst.msk [vmem:[%s2339 + $0x20] sm:$0xff] %vm2247, %v2233
        %2343 = vst.msk [vmem:[%s2339 + $0x30] sm:$0xff] %vm2247, %v2234
        %2344 = vst.msk [vmem:[%s2339 + $0x40] sm:$0xff] %vm2247, %v2235
        %2345 = vst.msk [vmem:[%s2339 + $0x50] sm:$0xff] %vm2247, %v2236
        %2346 = vst.msk [vmem:[%s2339 + $0x60] sm:$0xff] %vm2247, %v2237
        %2347 = vst.msk [vmem:[%s2339 + $0x70] sm:$0xff] %vm2247, %v2238
        %s2348 = scalar_lea.vmem [#allocation2], 16
        %2349 = vst.msk [vmem:[%s2348 + $0x1] sm:$0xff] %vm2247, %v2239
        %2350 = vst.msk [vmem:[%s2348 + $0x11] sm:$0xff] %vm2247, %v2240
        %2351 = vst.msk [vmem:[%s2348 + $0x21] sm:$0xff] %vm2247, %v2241
        %2352 = vst.msk [vmem:[%s2348 + $0x31] sm:$0xff] %vm2247, %v2242
        %2353 = vst.msk [vmem:[%s2348 + $0x41] sm:$0xff] %vm2247, %v2243
        %2354 = vst.msk [vmem:[%s2348 + $0x51] sm:$0xff] %vm2247, %v2244
        %2355 = vst.msk [vmem:[%s2348 + $0x61] sm:$0xff] %vm2247, %v2245
        %2356 = vst.msk [vmem:[%s2348 + $0x71] sm:$0xff] %vm2247, %v2246
        %v2357 = vld [vmem:[%s3] sm:$0xf]
        %v2358 = vld [vmem:[%s3 + $0x4] sm:$0xf]
        %v2359 = vld [vmem:[%s3 + $0x8] sm:$0xf]
        %v2360 = vld [vmem:[%s3 + $0xc] sm:$0xf]
        %v2361 = vld [vmem:[%s3 + $0x10] sm:$0xf]
        %v2362 = vld [vmem:[%s3 + $0x14] sm:$0xf]
        %v2363 = vld [vmem:[%s3 + $0x18] sm:$0xf]
        %v2364 = vld [vmem:[%s3 + $0x1c] sm:$0xf]
        %s2365 = scalar_lea.vmem %s3, 32
        %v2366 = vld [vmem:[%s2365] sm:$0xf]
        %v2367 = vld [vmem:[%s2365 + $0x4] sm:$0xf]
        %v2368 = vld [vmem:[%s2365 + $0x8] sm:$0xf]
        %v2369 = vld [vmem:[%s2365 + $0xc] sm:$0xf]
        %v2370 = vld [vmem:[%s2365 + $0x10] sm:$0xf]
        %v2371 = vld [vmem:[%s2365 + $0x14] sm:$0xf]
        %v2372 = vld [vmem:[%s2365 + $0x18] sm:$0xf]
        %v2373 = vld [vmem:[%s2365 + $0x1c] sm:$0xf]
        %s2374 = scalar_lea.vmem %s3, 64
        %v2375 = vld [vmem:[%s2374] sm:$0xf]
        %v2376 = vld [vmem:[%s2374 + $0x4] sm:$0xf]
        %v2377 = vld [vmem:[%s2374 + $0x8] sm:$0xf]
        %v2378 = vld [vmem:[%s2374 + $0xc] sm:$0xf]
        %v2379 = vld [vmem:[%s2374 + $0x10] sm:$0xf]
        %v2380 = vld [vmem:[%s2374 + $0x14] sm:$0xf]
        %v2381 = vld [vmem:[%s2374 + $0x18] sm:$0xf]
        %v2382 = vld [vmem:[%s2374 + $0x1c] sm:$0xf]
        %s2383 = scalar_lea.vmem %s3, 96
        %v2384 = vld [vmem:[%s2383] sm:$0xf]
        %v2385 = vld [vmem:[%s2383 + $0x4] sm:$0xf]
        %v2386 = vld [vmem:[%s2383 + $0x8] sm:$0xf]
        %v2387 = vld [vmem:[%s2383 + $0xc] sm:$0xf]
        %v2388 = vld [vmem:[%s2383 + $0x10] sm:$0xf]
        %v2389 = vld [vmem:[%s2383 + $0x14] sm:$0xf]
        %v2390 = vld [vmem:[%s2383 + $0x18] sm:$0xf]
        %v2391 = vld [vmem:[%s2383 + $0x1c] sm:$0xf]
        %s2392 = scalar_lea.vmem %s3, 128
        %v2393 = vld [vmem:[%s2392] sm:$0xf]
        %v2394 = vld [vmem:[%s2392 + $0x4] sm:$0xf]
        %v2395 = vld [vmem:[%s2392 + $0x8] sm:$0xf]
        %v2396 = vld [vmem:[%s2392 + $0xc] sm:$0xf]
        %v2397 = vld [vmem:[%s2392 + $0x10] sm:$0xf]
        %v2398 = vld [vmem:[%s2392 + $0x14] sm:$0xf]
        %v2399 = vld [vmem:[%s2392 + $0x18] sm:$0xf]
        %v2400 = vld [vmem:[%s2392 + $0x1c] sm:$0xf]
        %s2401 = scalar_lea.vmem %s3, 160
        %v2402 = vld [vmem:[%s2401] sm:$0xf]
        %v2403 = vld [vmem:[%s2401 + $0x4] sm:$0xf]
        %v2404 = vld [vmem:[%s2401 + $0x8] sm:$0xf]
        %v2405 = vld [vmem:[%s2401 + $0xc] sm:$0xf]
        %v2406 = vld [vmem:[%s2401 + $0x10] sm:$0xf]
        %v2407 = vld [vmem:[%s2401 + $0x14] sm:$0xf]
        %v2408 = vld [vmem:[%s2401 + $0x18] sm:$0xf]
        %v2409 = vld [vmem:[%s2401 + $0x1c] sm:$0xf]
        %s2410 = scalar_lea.vmem %s3, 192
        %v2411 = vld [vmem:[%s2410] sm:$0xf]
        %v2412 = vld [vmem:[%s2410 + $0x4] sm:$0xf]
        %v2413 = vld [vmem:[%s2410 + $0x8] sm:$0xf]
        %v2414 = vld [vmem:[%s2410 + $0xc] sm:$0xf]
        %v2415 = vld [vmem:[%s2410 + $0x10] sm:$0xf]
        %v2416 = vld [vmem:[%s2410 + $0x14] sm:$0xf]
        %v2417 = vld [vmem:[%s2410 + $0x18] sm:$0xf]
        %v2418 = vld [vmem:[%s2410 + $0x1c] sm:$0xf]
        %s2419 = scalar_lea.vmem %s3, 224
        %v2420 = vld [vmem:[%s2419] sm:$0xf]
        %v2421 = vld [vmem:[%s2419 + $0x4] sm:$0xf]
        %v2422 = vld [vmem:[%s2419 + $0x8] sm:$0xf]
        %v2423 = vld [vmem:[%s2419 + $0xc] sm:$0xf]
        %v2424 = vld [vmem:[%s2419 + $0x10] sm:$0xf]
        %v2425 = vld [vmem:[%s2419 + $0x14] sm:$0xf]
        %v2426 = vld [vmem:[%s2419 + $0x18] sm:$0xf]
        %v2427 = vld [vmem:[%s2419 + $0x1c] sm:$0xf]
        %s2428 = scalar_lea.vmem %s3, 256
        %v2429 = vld [vmem:[%s2428] sm:$0xf]
        %v2430 = vld [vmem:[%s2428 + $0x4] sm:$0xf]
        %v2431 = vld [vmem:[%s2428 + $0x8] sm:$0xf]
        %v2432 = vld [vmem:[%s2428 + $0xc] sm:$0xf]
        %v2433 = vld [vmem:[%s2428 + $0x10] sm:$0xf]
        %v2434 = vld [vmem:[%s2428 + $0x14] sm:$0xf]
        %v2435 = vld [vmem:[%s2428 + $0x18] sm:$0xf]
        %v2436 = vld [vmem:[%s2428 + $0x1c] sm:$0xf]
        %v2437 = vld [vmem:[#allocation2] sm:$0xff]
        %v2438 = vld [vmem:[#allocation2 + $0x10] sm:$0xff]
        %v2439 = vld [vmem:[#allocation2 + $0x20] sm:$0xff]
        %v2440 = vld [vmem:[#allocation2 + $0x30] sm:$0xff]
        %v2441 = vld [vmem:[#allocation2 + $0x40] sm:$0xff]
        %v2442 = vld [vmem:[#allocation2 + $0x50] sm:$0xff]
        %v2443 = vld [vmem:[#allocation2 + $0x60] sm:$0xff]
        %v2444 = vld [vmem:[#allocation2 + $0x70] sm:$0xff]
        %v2445 = vpack.c.bf16 %v2438, %v2437
        %v2446 = vpack.c.bf16 %v2440, %v2439
        %v2447 = vpack.c.bf16 %v2442, %v2441
        %v2448 = vpack.c.bf16 %v2444, %v2443
        %s2449 = scalar_lea.vmem [#allocation2], 144
        %v2450 = vld [vmem:[%s2449] sm:$0xff]
        %v2451 = vld [vmem:[%s2449 + $0x10] sm:$0xff]
        %v2452 = vld [vmem:[%s2449 + $0x20] sm:$0xff]
        %v2453 = vld [vmem:[%s2449 + $0x30] sm:$0xff]
        %v2454 = vld [vmem:[%s2449 + $0x40] sm:$0xff]
        %v2455 = vld [vmem:[%s2449 + $0x50] sm:$0xff]
        %v2456 = vld [vmem:[%s2449 + $0x60] sm:$0xff]
        %v2457 = vld [vmem:[%s2449 + $0x70] sm:$0xff]
        %v2458 = vpack.c.bf16 %v2451, %v2450
        %v2459 = vpack.c.bf16 %v2453, %v2452
        %v2460 = vpack.c.bf16 %v2455, %v2454
        %v2461 = vpack.c.bf16 %v2457, %v2456
        %v2470 = vunpack.c.l.b16 %v2366
        %v2471 = vunpack.c.l.b16 %v2367
        %v2472 = vunpack.c.l.b16 %v2368
        %v2473 = vunpack.c.l.b16 %v2369
        %v2474 = vunpack.c.l.b16 %v2370
        %v2475 = vunpack.c.l.b16 %v2371
        %v2476 = vunpack.c.l.b16 %v2372
        %v2477 = vunpack.c.l.b16 %v2373
        %v2478 = vpack.c.b16 %v2471, %v2470
        %v2479 = vpack.c.b16 %v2473, %v2472
        %v2480 = vpack.c.b16 %v2475, %v2474
        %v2481 = vpack.c.b16 %v2477, %v2476
        %v2487 = vsel %vm2247, %v2458, 0
        %v2490 = vsel %vm2247, %v2459, 0
        %v2493 = vsel %vm2247, %v2460, 0
        %v2496 = vsel %vm2247, %v2461, 0
        %2498 = vmatprep.subr.bf16.mxu0 0
        %2499 = vmatpush1.bf16.msra.mxu0 %v2478
        %2500 = vmatprep.subr.bf16.mxu0 0
        %2501 = vmatpush1.bf16.msra.mxu0 %v2479
        %2502 = vmatprep.subr.bf16.mxu0 0
        %2503 = vmatpush1.bf16.msra.mxu0 %v2480
        %2504 = vmatprep.subr.bf16.mxu0 0
        %2505 = vmatpush1.bf16.msra.mxu0 %v2481
        %2506 = vmatprep.subr.bf16.mxu0 0
        %2507 = vmatpush1.bf16.msra.mxu0 0
        %2508 = vmatprep.subr.bf16.mxu0 0
        %2509 = vmatpush1.bf16.msra.mxu0 0
        %2510 = vmatprep.subr.bf16.mxu0 0
        %2511 = vmatpush1.bf16.msra.mxu0 0
        %2512 = vmatprep.subr.bf16.mxu0 0
        %2513 = vmatpush1.bf16.msra.mxu0 0
        %2514 = vmatprep.subr.bf16.mxu0 0
        %2515 = vmatpush1.bf16.msra.mxu0 0
        %2516 = vmatprep.subr.bf16.mxu0 0
        %2517 = vmatpush1.bf16.msra.mxu0 0
        %2518 = vmatprep.subr.bf16.mxu0 0
        %2519 = vmatpush1.bf16.msra.mxu0 0
        %2520 = vmatprep.subr.bf16.mxu0 0
        %2521 = vmatpush1.bf16.msra.mxu0 0
        %2522 = vmatprep.subr.bf16.mxu0 0
        %2523 = vmatpush1.bf16.msra.mxu0 0
        %2524 = vmatprep.subr.bf16.mxu0 0
        %2525 = vmatpush1.bf16.msra.mxu0 0
        %2526 = vmatprep.subr.bf16.mxu0 0
        %2527 = vmatpush1.bf16.msra.mxu0 0
        %2528 = vmatprep.subr.bf16.mxu0 0
        %2529 = vmatpush1.bf16.msra.mxu0 0
        %2530 = vmatprep.mubr.bf16.mxu0 0
        %2531 = vmatmul.mubr.bf16.gmra.mrb[0].mxu0 %v2487
        %v2532 = vpop.f32.mrb[0].mxu0
        %v2533 = vadd.f32 0.0, %v2532
        %v2534 = vpop.f32.mrb[0].mxu0
        %v2535 = vpop.f32.mrb[0].mxu0
        %v2536 = vadd.f32 0.0, %v2535
        %v2537 = vpop.f32.mrb[0].mxu0
        %2538 = vmatprep.mubr.bf16.mxu0 0
        %2539 = vmatmul.mubr.bf16.gmra.mrb[0].mxu0 %v2490
        %v2540 = vpop.f32.mrb[0].mxu0
        %v2541 = vadd.f32 0.0, %v2540
        %v2542 = vpop.f32.mrb[0].mxu0
        %v2543 = vpop.f32.mrb[0].mxu0
        %v2544 = vadd.f32 0.0, %v2543
        %v2545 = vpop.f32.mrb[0].mxu0
        %2546 = vmatprep.mubr.bf16.mxu0 0
        %2547 = vmatmul.mubr.bf16.gmra.mrb[0].mxu0 %v2493
        %v2548 = vpop.f32.mrb[0].mxu0
        %v2549 = vadd.f32 0.0, %v2548
        %v2550 = vpop.f32.mrb[0].mxu0
        %v2551 = vpop.f32.mrb[0].mxu0
        %v2552 = vadd.f32 0.0, %v2551
        %v2553 = vpop.f32.mrb[0].mxu0
        %2554 = vmatprep.mubr.bf16.mxu0 0
        %2555 = vmatmul.mubr.bf16.gmra.mrb[0].mxu0 %v2496
        %v2556 = vpop.f32.mrb[0].mxu0
        %v2557 = vadd.f32 0.0, %v2556
        %v2558 = vpop.f32.mrb[0].mxu0
        %v2559 = vpop.f32.mrb[0].mxu0
        %v2560 = vadd.f32 0.0, %v2559
        %v2561 = vpop.f32.mrb[0].mxu0
        %2562 = vdwg.mxu0
        %v2571 = vunpack.c.l.b16 %v2357
        %v2572 = vunpack.c.l.b16 %v2358
        %v2573 = vunpack.c.l.b16 %v2359
        %v2574 = vunpack.c.l.b16 %v2360
        %v2575 = vunpack.c.l.b16 %v2361
        %v2576 = vunpack.c.l.b16 %v2362
        %v2577 = vunpack.c.l.b16 %v2363
        %v2578 = vunpack.c.l.b16 %v2364
        %v2579 = vpack.c.b16 %v2572, %v2571
        %v2580 = vpack.c.b16 %v2574, %v2573
        %v2581 = vpack.c.b16 %v2576, %v2575
        %v2582 = vpack.c.b16 %v2578, %v2577
        %v2588 = vsel %vm2247, %v2445, 0
        %v2591 = vsel %vm2247, %v2446, 0
        %v2594 = vsel %vm2247, %v2447, 0
        %v2597 = vsel %vm2247, %v2448, 0
        %2599 = vmatprep.subr.bf16.mxu0 0
        %2600 = vmatpush1.bf16.msra.mxu0 %v2579
        %2601 = vmatprep.subr.bf16.mxu0 0
        %2602 = vmatpush1.bf16.msra.mxu0 %v2580
        %2603 = vmatprep.subr.bf16.mxu0 0
        %2604 = vmatpush1.bf16.msra.mxu0 %v2581
        %2605 = vmatprep.subr.bf16.mxu0 0
        %2606 = vmatpush1.bf16.msra.mxu0 %v2582
        %2607 = vmatprep.subr.bf16.mxu0 0
        %2608 = vmatpush1.bf16.msra.mxu0 0
        %2609 = vmatprep.subr.bf16.mxu0 0
        %2610 = vmatpush1.bf16.msra.mxu0 0
        %2611 = vmatprep.subr.bf16.mxu0 0
        %2612 = vmatpush1.bf16.msra.mxu0 0
        %2613 = vmatprep.subr.bf16.mxu0 0
        %2614 = vmatpush1.bf16.msra.mxu0 0
        %2615 = vmatprep.subr.bf16.mxu0 0
        %2616 = vmatpush1.bf16.msra.mxu0 0
        %2617 = vmatprep.subr.bf16.mxu0 0
        %2618 = vmatpush1.bf16.msra.mxu0 0
        %2619 = vmatprep.subr.bf16.mxu0 0
        %2620 = vmatpush1.bf16.msra.mxu0 0
        %2621 = vmatprep.subr.bf16.mxu0 0
        %2622 = vmatpush1.bf16.msra.mxu0 0
        %2623 = vmatprep.subr.bf16.mxu0 0
        %2624 = vmatpush1.bf16.msra.mxu0 0
        %2625 = vmatprep.subr.bf16.mxu0 0
        %2626 = vmatpush1.bf16.msra.mxu0 0
        %2627 = vmatprep.subr.bf16.mxu0 0
        %2628 = vmatpush1.bf16.msra.mxu0 0
        %2629 = vmatprep.subr.bf16.mxu0 0
        %2630 = vmatpush1.bf16.msra.mxu0 0
        %2631 = vmatprep.mubr.bf16.mxu0 0
        %2632 = vmatmul.mubr.bf16.gmra.mrb[0].mxu0 %v2588
        %v2633 = vpop.f32.mrb[0].mxu0
        %v2634 = vadd.f32 %v2533, %v2633
        %v2635 = vpop.f32.mrb[0].mxu0
        %v2636 = vpop.f32.mrb[0].mxu0
        %v2637 = vadd.f32 %v2536, %v2636
        %v2638 = vpop.f32.mrb[0].mxu0
        %2639 = vmatprep.mubr.bf16.mxu0 0
        %2640 = vmatmul.mubr.bf16.gmra.mrb[0].mxu0 %v2591
        %v2641 = vpop.f32.mrb[0].mxu0
        %v2642 = vadd.f32 %v2541, %v2641
        %v2643 = vpop.f32.mrb[0].mxu0
        %v2644 = vpop.f32.mrb[0].mxu0
        %v2645 = vadd.f32 %v2544, %v2644
        %v2646 = vpop.f32.mrb[0].mxu0
        %2647 = vmatprep.mubr.bf16.mxu0 0
        %2648 = vmatmul.mubr.bf16.gmra.mrb[0].mxu0 %v2594
        %v2649 = vpop.f32.mrb[0].mxu0
        %v2650 = vadd.f32 %v2549, %v2649
        %v2651 = vpop.f32.mrb[0].mxu0
        %v2652 = vpop.f32.mrb[0].mxu0
        %v2653 = vadd.f32 %v2552, %v2652
        %v2654 = vpop.f32.mrb[0].mxu0
        %2655 = vmatprep.mubr.bf16.mxu0 0
        %2656 = vmatmul.mubr.bf16.gmra.mrb[0].mxu0 %v2597
        %v2657 = vpop.f32.mrb[0].mxu0
        %v2658 = vadd.f32 %v2557, %v2657
        %v2659 = vpop.f32.mrb[0].mxu0
        %v2660 = vpop.f32.mrb[0].mxu0
        %v2661 = vadd.f32 %v2560, %v2660
        %v2662 = vpop.f32.mrb[0].mxu0
        %2663 = vdwg.mxu0
        %v2664 = vld [vmem:[#allocation2 + $0x1] sm:$0xff]
        %v2665 = vld [vmem:[#allocation2 + $0x11] sm:$0xff]
        %v2666 = vld [vmem:[#allocation2 + $0x21] sm:$0xff]
        %v2667 = vld [vmem:[#allocation2 + $0x31] sm:$0xff]
        %v2668 = vld [vmem:[#allocation2 + $0x41] sm:$0xff]
        %v2669 = vld [vmem:[#allocation2 + $0x51] sm:$0xff]
        %v2670 = vld [vmem:[#allocation2 + $0x61] sm:$0xff]
        %v2671 = vld [vmem:[#allocation2 + $0x71] sm:$0xff]
        %v2672 = vpack.c.bf16 %v2665, %v2664
        %v2673 = vpack.c.bf16 %v2667, %v2666
        %v2674 = vpack.c.bf16 %v2669, %v2668
        %v2675 = vpack.c.bf16 %v2671, %v2670
        %v2684 = vunpack.c.l.b16 %v2375
        %v2685 = vunpack.c.l.b16 %v2376
        %v2686 = vunpack.c.l.b16 %v2377
        %v2687 = vunpack.c.l.b16 %v2378
        %v2688 = vunpack.c.l.b16 %v2379
        %v2689 = vunpack.c.l.b16 %v2380
        %v2690 = vunpack.c.l.b16 %v2381
        %v2691 = vunpack.c.l.b16 %v2382
        %v2692 = vpack.c.b16 %v2685, %v2684
        %v2693 = vpack.c.b16 %v2687, %v2686
        %v2694 = vpack.c.b16 %v2689, %v2688
        %v2695 = vpack.c.b16 %v2691, %v2690
        %v2701 = vsel %vm2247, %v2672, 0
        %v2704 = vsel %vm2247, %v2673, 0
        %v2707 = vsel %vm2247, %v2674, 0
        %v2710 = vsel %vm2247, %v2675, 0
        %2712 = vmatprep.subr.bf16.mxu0 0
        %2713 = vmatpush1.bf16.msra.mxu0 %v2692
        %2714 = vmatprep.subr.bf16.mxu0 0
        %2715 = vmatpush1.bf16.msra.mxu0 %v2693
        %2716 = vmatprep.subr.bf16.mxu0 0
        %2717 = vmatpush1.bf16.msra.mxu0 %v2694
        %2718 = vmatprep.subr.bf16.mxu0 0
        %2719 = vmatpush1.bf16.msra.mxu0 %v2695
        %2720 = vmatprep.subr.bf16.mxu0 0
        %2721 = vmatpush1.bf16.msra.mxu0 0
        %2722 = vmatprep.subr.bf16.mxu0 0
        %2723 = vmatpush1.bf16.msra.mxu0 0
        %2724 = vmatprep.subr.bf16.mxu0 0
        %2725 = vmatpush1.bf16.msra.mxu0 0
        %2726 = vmatprep.subr.bf16.mxu0 0
        %2727 = vmatpush1.bf16.msra.mxu0 0
        %2728 = vmatprep.subr.bf16.mxu0 0
        %2729 = vmatpush1.bf16.msra.mxu0 0
        %2730 = vmatprep.subr.bf16.mxu0 0
        %2731 = vmatpush1.bf16.msra.mxu0 0
        %2732 = vmatprep.subr.bf16.mxu0 0
        %2733 = vmatpush1.bf16.msra.mxu0 0
        %2734 = vmatprep.subr.bf16.mxu0 0
        %2735 = vmatpush1.bf16.msra.mxu0 0
        %2736 = vmatprep.subr.bf16.mxu0 0
        %2737 = vmatpush1.bf16.msra.mxu0 0
        %2738 = vmatprep.subr.bf16.mxu0 0
        %2739 = vmatpush1.bf16.msra.mxu0 0
        %2740 = vmatprep.subr.bf16.mxu0 0
        %2741 = vmatpush1.bf16.msra.mxu0 0
        %2742 = vmatprep.subr.bf16.mxu0 0
        %2743 = vmatpush1.bf16.msra.mxu0 0
        %2744 = vmatprep.mubr.bf16.mxu0 0
        %2745 = vmatmul.mubr.bf16.gmra.mrb[0].mxu0 %v2701
        %v2746 = vpop.f32.mrb[0].mxu0
        %v2747 = vadd.f32 0.0, %v2746
        %v2748 = vpop.f32.mrb[0].mxu0
        %v2749 = vpop.f32.mrb[0].mxu0
        %v2750 = vadd.f32 0.0, %v2749
        %v2751 = vpop.f32.mrb[0].mxu0
        %2752 = vmatprep.mubr.bf16.mxu0 0
        %2753 = vmatmul.mubr.bf16.gmra.mrb[0].mxu0 %v2704
        %v2754 = vpop.f32.mrb[0].mxu0
        %v2755 = vadd.f32 0.0, %v2754
        %v2756 = vpop.f32.mrb[0].mxu0
        %v2757 = vpop.f32.mrb[0].mxu0
        %v2758 = vadd.f32 0.0, %v2757
        %v2759 = vpop.f32.mrb[0].mxu0
        %2760 = vmatprep.mubr.bf16.mxu0 0
        %2761 = vmatmul.mubr.bf16.gmra.mrb[0].mxu0 %v2707
        %v2762 = vpop.f32.mrb[0].mxu0
        %v2763 = vadd.f32 0.0, %v2762
        %v2764 = vpop.f32.mrb[0].mxu0
        %v2765 = vpop.f32.mrb[0].mxu0
        %v2766 = vadd.f32 0.0, %v2765
        %v2767 = vpop.f32.mrb[0].mxu0
        %2768 = vmatprep.mubr.bf16.mxu0 0
        %2769 = vmatmul.mubr.bf16.gmra.mrb[0].mxu0 %v2710
        %v2770 = vpop.f32.mrb[0].mxu0
        %v2771 = vadd.f32 0.0, %v2770
        %v2772 = vpop.f32.mrb[0].mxu0
        %v2773 = vpop.f32.mrb[0].mxu0
        %v2774 = vadd.f32 0.0, %v2773
        %v2775 = vpop.f32.mrb[0].mxu0
        %2776 = vdwg.mxu0
        %v2777 = vadd.f32 %v2634, %v2747
        %v2778 = vadd.f32 %v2637, %v2750
        %v2779 = vadd.f32 %v2642, %v2755
        %v2780 = vadd.f32 %v2645, %v2758
        %v2781 = vadd.f32 %v2650, %v2763
        %v2782 = vadd.f32 %v2653, %v2766
        %v2783 = vadd.f32 %v2658, %v2771
        %v2784 = vadd.f32 %v2661, %v2774
        %v2785 = vld [vmem:[%s2330] sm:$0xff]
        %v2786 = vld [vmem:[%s2330 + $0x10] sm:$0xff]
        %v2787 = vld [vmem:[%s2330 + $0x20] sm:$0xff]
        %v2788 = vld [vmem:[%s2330 + $0x30] sm:$0xff]
        %v2789 = vld [vmem:[%s2330 + $0x40] sm:$0xff]
        %v2790 = vld [vmem:[%s2330 + $0x50] sm:$0xff]
        %v2791 = vld [vmem:[%s2330 + $0x60] sm:$0xff]
        %v2792 = vld [vmem:[%s2330 + $0x70] sm:$0xff]
        %v2793 = vpack.c.bf16 %v2786, %v2785
        %v2794 = vpack.c.bf16 %v2788, %v2787
        %v2795 = vpack.c.bf16 %v2790, %v2789
        %v2796 = vpack.c.bf16 %v2792, %v2791
        %v2805 = vunpack.c.l.b16 %v2384
        %v2806 = vunpack.c.l.b16 %v2385
        %v2807 = vunpack.c.l.b16 %v2386
        %v2808 = vunpack.c.l.b16 %v2387
        %v2809 = vunpack.c.l.b16 %v2388
        %v2810 = vunpack.c.l.b16 %v2389
        %v2811 = vunpack.c.l.b16 %v2390
        %v2812 = vunpack.c.l.b16 %v2391
        %v2813 = vpack.c.b16 %v2806, %v2805
        %v2814 = vpack.c.b16 %v2808, %v2807
        %v2815 = vpack.c.b16 %v2810, %v2809
        %v2816 = vpack.c.b16 %v2812, %v2811
        %v2822 = vsel %vm2247, %v2793, 0
        %v2825 = vsel %vm2247, %v2794, 0
        %v2828 = vsel %vm2247, %v2795, 0
        %v2831 = vsel %vm2247, %v2796, 0
        %2833 = vmatprep.subr.bf16.mxu0 0
        %2834 = vmatpush1.bf16.msra.mxu0 %v2813
        %2835 = vmatprep.subr.bf16.mxu0 0
        %2836 = vmatpush1.bf16.msra.mxu0 %v2814
        %2837 = vmatprep.subr.bf16.mxu0 0
        %2838 = vmatpush1.bf16.msra.mxu0 %v2815
        %2839 = vmatprep.subr.bf16.mxu0 0
        %2840 = vmatpush1.bf16.msra.mxu0 %v2816
        %2841 = vmatprep.subr.bf16.mxu0 0
        %2842 = vmatpush1.bf16.msra.mxu0 0
        %2843 = vmatprep.subr.bf16.mxu0 0
        %2844 = vmatpush1.bf16.msra.mxu0 0
        %2845 = vmatprep.subr.bf16.mxu0 0
        %2846 = vmatpush1.bf16.msra.mxu0 0
        %2847 = vmatprep.subr.bf16.mxu0 0
        %2848 = vmatpush1.bf16.msra.mxu0 0
        %2849 = vmatprep.subr.bf16.mxu0 0
        %2850 = vmatpush1.bf16.msra.mxu0 0
        %2851 = vmatprep.subr.bf16.mxu0 0
        %2852 = vmatpush1.bf16.msra.mxu0 0
        %2853 = vmatprep.subr.bf16.mxu0 0
        %2854 = vmatpush1.bf16.msra.mxu0 0
        %2855 = vmatprep.subr.bf16.mxu0 0
        %2856 = vmatpush1.bf16.msra.mxu0 0
        %2857 = vmatprep.subr.bf16.mxu0 0
        %2858 = vmatpush1.bf16.msra.mxu0 0
        %2859 = vmatprep.subr.bf16.mxu0 0
        %2860 = vmatpush1.bf16.msra.mxu0 0
        %2861 = vmatprep.subr.bf16.mxu0 0
        %2862 = vmatpush1.bf16.msra.mxu0 0
        %2863 = vmatprep.subr.bf16.mxu0 0
        %2864 = vmatpush1.bf16.msra.mxu0 0
        %2865 = vmatprep.mubr.bf16.mxu0 0
        %2866 = vmatmul.mubr.bf16.gmra.mrb[0].mxu0 %v2822
        %v2867 = vpop.f32.mrb[0].mxu0
        %v2868 = vadd.f32 0.0, %v2867
        %v2869 = vpop.f32.mrb[0].mxu0
        %v2870 = vpop.f32.mrb[0].mxu0
        %v2871 = vadd.f32 0.0, %v2870
        %v2872 = vpop.f32.mrb[0].mxu0
        %2873 = vmatprep.mubr.bf16.mxu0 0
        %2874 = vmatmul.mubr.bf16.gmra.mrb[0].mxu0 %v2825
        %v2875 = vpop.f32.mrb[0].mxu0
        %v2876 = vadd.f32 0.0, %v2875
        %v2877 = vpop.f32.mrb[0].mxu0
        %v2878 = vpop.f32.mrb[0].mxu0
        %v2879 = vadd.f32 0.0, %v2878
        %v2880 = vpop.f32.mrb[0].mxu0
        %2881 = vmatprep.mubr.bf16.mxu0 0
        %2882 = vmatmul.mubr.bf16.gmra.mrb[0].mxu0 %v2828
        %v2883 = vpop.f32.mrb[0].mxu0
        %v2884 = vadd.f32 0.0, %v2883
        %v2885 = vpop.f32.mrb[0].mxu0
        %v2886 = vpop.f32.mrb[0].mxu0
        %v2887 = vadd.f32 0.0, %v2886
        %v2888 = vpop.f32.mrb[0].mxu0
        %2889 = vmatprep.mubr.bf16.mxu0 0
        %2890 = vmatmul.mubr.bf16.gmra.mrb[0].mxu0 %v2831
        %v2891 = vpop.f32.mrb[0].mxu0
        %v2892 = vadd.f32 0.0, %v2891
        %v2893 = vpop.f32.mrb[0].mxu0
        %v2894 = vpop.f32.mrb[0].mxu0
        %v2895 = vadd.f32 0.0, %v2894
        %v2896 = vpop.f32.mrb[0].mxu0
        %2897 = vdwg.mxu0
        %v2898 = vadd.f32 %v2777, %v2868
        %v2899 = vadd.f32 %v2778, %v2871
        %v2900 = vadd.f32 %v2779, %v2876
        %v2901 = vadd.f32 %v2780, %v2879
        %v2902 = vadd.f32 %v2781, %v2884
        %v2903 = vadd.f32 %v2782, %v2887
        %v2904 = vadd.f32 %v2783, %v2892
        %v2905 = vadd.f32 %v2784, %v2895
        %v2906 = vld [vmem:[%s2321] sm:$0xff]
        %v2907 = vld [vmem:[%s2321 + $0x10] sm:$0xff]
        %v2908 = vld [vmem:[%s2321 + $0x20] sm:$0xff]
        %v2909 = vld [vmem:[%s2321 + $0x30] sm:$0xff]
        %v2910 = vld [vmem:[%s2321 + $0x40] sm:$0xff]
        %v2911 = vld [vmem:[%s2321 + $0x50] sm:$0xff]
        %v2912 = vld [vmem:[%s2321 + $0x60] sm:$0xff]
        %v2913 = vld [vmem:[%s2321 + $0x70] sm:$0xff]
        %v2914 = vpack.c.bf16 %v2907, %v2906
        %v2915 = vpack.c.bf16 %v2909, %v2908
        %v2916 = vpack.c.bf16 %v2911, %v2910
        %v2917 = vpack.c.bf16 %v2913, %v2912
        %v2926 = vunpack.c.l.b16 %v2393
        %v2927 = vunpack.c.l.b16 %v2394
        %v2928 = vunpack.c.l.b16 %v2395
        %v2929 = vunpack.c.l.b16 %v2396
        %v2930 = vunpack.c.l.b16 %v2397
        %v2931 = vunpack.c.l.b16 %v2398
        %v2932 = vunpack.c.l.b16 %v2399
        %v2933 = vunpack.c.l.b16 %v2400
        %v2934 = vpack.c.b16 %v2927, %v2926
        %v2935 = vpack.c.b16 %v2929, %v2928
        %v2936 = vpack.c.b16 %v2931, %v2930
        %v2937 = vpack.c.b16 %v2933, %v2932
        %v2943 = vsel %vm2247, %v2914, 0
        %v2946 = vsel %vm2247, %v2915, 0
        %v2949 = vsel %vm2247, %v2916, 0
        %v2952 = vsel %vm2247, %v2917, 0
        %2954 = vmatprep.subr.bf16.mxu0 0
        %2955 = vmatpush1.bf16.msra.mxu0 %v2934
        %2956 = vmatprep.subr.bf16.mxu0 0
        %2957 = vmatpush1.bf16.msra.mxu0 %v2935
        %2958 = vmatprep.subr.bf16.mxu0 0
        %2959 = vmatpush1.bf16.msra.mxu0 %v2936
        %2960 = vmatprep.subr.bf16.mxu0 0
        %2961 = vmatpush1.bf16.msra.mxu0 %v2937
        %2962 = vmatprep.subr.bf16.mxu0 0
        %2963 = vmatpush1.bf16.msra.mxu0 0
        %2964 = vmatprep.subr.bf16.mxu0 0
        %2965 = vmatpush1.bf16.msra.mxu0 0
        %2966 = vmatprep.subr.bf16.mxu0 0
        %2967 = vmatpush1.bf16.msra.mxu0 0
        %2968 = vmatprep.subr.bf16.mxu0 0
        %2969 = vmatpush1.bf16.msra.mxu0 0
        %2970 = vmatprep.subr.bf16.mxu0 0
        %2971 = vmatpush1.bf16.msra.mxu0 0
        %2972 = vmatprep.subr.bf16.mxu0 0
        %2973 = vmatpush1.bf16.msra.mxu0 0
        %2974 = vmatprep.subr.bf16.mxu0 0
        %2975 = vmatpush1.bf16.msra.mxu0 0
        %2976 = vmatprep.subr.bf16.mxu0 0
        %2977 = vmatpush1.bf16.msra.mxu0 0
        %2978 = vmatprep.subr.bf16.mxu0 0
        %2979 = vmatpush1.bf16.msra.mxu0 0
        %2980 = vmatprep.subr.bf16.mxu0 0
        %2981 = vmatpush1.bf16.msra.mxu0 0
        %2982 = vmatprep.subr.bf16.mxu0 0
        %2983 = vmatpush1.bf16.msra.mxu0 0
        %2984 = vmatprep.subr.bf16.mxu0 0
        %2985 = vmatpush1.bf16.msra.mxu0 0
        %2986 = vmatprep.mubr.bf16.mxu0 0
        %2987 = vmatmul.mubr.bf16.gmra.mrb[0].mxu0 %v2943
        %v2988 = vpop.f32.mrb[0].mxu0
        %v2989 = vadd.f32 0.0, %v2988
        %v2990 = vpop.f32.mrb[0].mxu0
        %v2991 = vpop.f32.mrb[0].mxu0
        %v2992 = vadd.f32 0.0, %v2991
        %v2993 = vpop.f32.mrb[0].mxu0
        %2994 = vmatprep.mubr.bf16.mxu0 0
        %2995 = vmatmul.mubr.bf16.gmra.mrb[0].mxu0 %v2946
        %v2996 = vpop.f32.mrb[0].mxu0
        %v2997 = vadd.f32 0.0, %v2996
        %v2998 = vpop.f32.mrb[0].mxu0
        %v2999 = vpop.f32.mrb[0].mxu0
        %v3000 = vadd.f32 0.0, %v2999
        %v3001 = vpop.f32.mrb[0].mxu0
        %3002 = vmatprep.mubr.bf16.mxu0 0
        %3003 = vmatmul.mubr.bf16.gmra.mrb[0].mxu0 %v2949
        %v3004 = vpop.f32.mrb[0].mxu0
        %v3005 = vadd.f32 0.0, %v3004
        %v3006 = vpop.f32.mrb[0].mxu0
        %v3007 = vpop.f32.mrb[0].mxu0
        %v3008 = vadd.f32 0.0, %v3007
        %v3009 = vpop.f32.mrb[0].mxu0
        %3010 = vmatprep.mubr.bf16.mxu0 0
        %3011 = vmatmul.mubr.bf16.gmra.mrb[0].mxu0 %v2952
        %v3012 = vpop.f32.mrb[0].mxu0
        %v3013 = vadd.f32 0.0, %v3012
        %v3014 = vpop.f32.mrb[0].mxu0
        %v3015 = vpop.f32.mrb[0].mxu0
        %v3016 = vadd.f32 0.0, %v3015
        %v3017 = vpop.f32.mrb[0].mxu0
        %3018 = vdwg.mxu0
        %v3019 = vadd.f32 %v2898, %v2989
        %v3020 = vadd.f32 %v2899, %v2992
        %v3021 = vadd.f32 %v2900, %v2997
        %v3022 = vadd.f32 %v2901, %v3000
        %v3023 = vadd.f32 %v2902, %v3005
        %v3024 = vadd.f32 %v2903, %v3008
        %v3025 = vadd.f32 %v2904, %v3013
        %v3026 = vadd.f32 %v2905, %v3016
        %v3027 = vld [vmem:[%s2330 + $0x1] sm:$0xff]
        %v3028 = vld [vmem:[%s2330 + $0x11] sm:$0xff]
        %v3029 = vld [vmem:[%s2330 + $0x21] sm:$0xff]
        %v3030 = vld [vmem:[%s2330 + $0x31] sm:$0xff]
        %v3031 = vld [vmem:[%s2330 + $0x41] sm:$0xff]
        %v3032 = vld [vmem:[%s2330 + $0x51] sm:$0xff]
        %v3033 = vld [vmem:[%s2330 + $0x61] sm:$0xff]
        %v3034 = vld [vmem:[%s2330 + $0x71] sm:$0xff]
        %v3035 = vpack.c.bf16 %v3028, %v3027
        %v3036 = vpack.c.bf16 %v3030, %v3029
        %v3037 = vpack.c.bf16 %v3032, %v3031
        %v3038 = vpack.c.bf16 %v3034, %v3033
        %v3047 = vunpack.c.l.b16 %v2402
        %v3048 = vunpack.c.l.b16 %v2403
        %v3049 = vunpack.c.l.b16 %v2404
        %v3050 = vunpack.c.l.b16 %v2405
        %v3051 = vunpack.c.l.b16 %v2406
        %v3052 = vunpack.c.l.b16 %v2407
        %v3053 = vunpack.c.l.b16 %v2408
        %v3054 = vunpack.c.l.b16 %v2409
        %v3055 = vpack.c.b16 %v3048, %v3047
        %v3056 = vpack.c.b16 %v3050, %v3049
        %v3057 = vpack.c.b16 %v3052, %v3051
        %v3058 = vpack.c.b16 %v3054, %v3053
        %v3064 = vsel %vm2247, %v3035, 0
        %v3067 = vsel %vm2247, %v3036, 0
        %v3070 = vsel %vm2247, %v3037, 0
        %v3073 = vsel %vm2247, %v3038, 0
        %3075 = vmatprep.subr.bf16.mxu0 0
        %3076 = vmatpush1.bf16.msra.mxu0 %v3055
        %3077 = vmatprep.subr.bf16.mxu0 0
        %3078 = vmatpush1.bf16.msra.mxu0 %v3056
        %3079 = vmatprep.subr.bf16.mxu0 0
        %3080 = vmatpush1.bf16.msra.mxu0 %v3057
        %3081 = vmatprep.subr.bf16.mxu0 0
        %3082 = vmatpush1.bf16.msra.mxu0 %v3058
        %3083 = vmatprep.subr.bf16.mxu0 0
        %3084 = vmatpush1.bf16.msra.mxu0 0
        %3085 = vmatprep.subr.bf16.mxu0 0
        %3086 = vmatpush1.bf16.msra.mxu0 0
        %3087 = vmatprep.subr.bf16.mxu0 0
        %3088 = vmatpush1.bf16.msra.mxu0 0
        %3089 = vmatprep.subr.bf16.mxu0 0
        %3090 = vmatpush1.bf16.msra.mxu0 0
        %3091 = vmatprep.subr.bf16.mxu0 0
        %3092 = vmatpush1.bf16.msra.mxu0 0
        %3093 = vmatprep.subr.bf16.mxu0 0
        %3094 = vmatpush1.bf16.msra.mxu0 0
        %3095 = vmatprep.subr.bf16.mxu0 0
        %3096 = vmatpush1.bf16.msra.mxu0 0
        %3097 = vmatprep.subr.bf16.mxu0 0
        %3098 = vmatpush1.bf16.msra.mxu0 0
        %3099 = vmatprep.subr.bf16.mxu0 0
        %3100 = vmatpush1.bf16.msra.mxu0 0
        %3101 = vmatprep.subr.bf16.mxu0 0
        %3102 = vmatpush1.bf16.msra.mxu0 0
        %3103 = vmatprep.subr.bf16.mxu0 0
        %3104 = vmatpush1.bf16.msra.mxu0 0
        %3105 = vmatprep.subr.bf16.mxu0 0
        %3106 = vmatpush1.bf16.msra.mxu0 0
        %3107 = vmatprep.mubr.bf16.mxu0 0
        %3108 = vmatmul.mubr.bf16.gmra.mrb[0].mxu0 %v3064
        %v3109 = vpop.f32.mrb[0].mxu0
        %v3110 = vadd.f32 0.0, %v3109
        %v3111 = vpop.f32.mrb[0].mxu0
        %v3112 = vpop.f32.mrb[0].mxu0
        %v3113 = vadd.f32 0.0, %v3112
        %v3114 = vpop.f32.mrb[0].mxu0
        %3115 = vmatprep.mubr.bf16.mxu0 0
        %3116 = vmatmul.mubr.bf16.gmra.mrb[0].mxu0 %v3067
        %v3117 = vpop.f32.mrb[0].mxu0
        %v3118 = vadd.f32 0.0, %v3117
        %v3119 = vpop.f32.mrb[0].mxu0
        %v3120 = vpop.f32.mrb[0].mxu0
        %v3121 = vadd.f32 0.0, %v3120
        %v3122 = vpop.f32.mrb[0].mxu0
        %3123 = vmatprep.mubr.bf16.mxu0 0
        %3124 = vmatmul.mubr.bf16.gmra.mrb[0].mxu0 %v3070
        %v3125 = vpop.f32.mrb[0].mxu0
        %v3126 = vadd.f32 0.0, %v3125
        %v3127 = vpop.f32.mrb[0].mxu0
        %v3128 = vpop.f32.mrb[0].mxu0
        %v3129 = vadd.f32 0.0, %v3128
        %v3130 = vpop.f32.mrb[0].mxu0
        %3131 = vmatprep.mubr.bf16.mxu0 0
        %3132 = vmatmul.mubr.bf16.gmra.mrb[0].mxu0 %v3073
        %v3133 = vpop.f32.mrb[0].mxu0
        %v3134 = vadd.f32 0.0, %v3133
        %v3135 = vpop.f32.mrb[0].mxu0
        %v3136 = vpop.f32.mrb[0].mxu0
        %v3137 = vadd.f32 0.0, %v3136
        %v3138 = vpop.f32.mrb[0].mxu0
        %3139 = vdwg.mxu0
        %v3140 = vadd.f32 %v3019, %v3110
        %v3141 = vadd.f32 %v3020, %v3113
        %v3142 = vadd.f32 %v3021, %v3118
        %v3143 = vadd.f32 %v3022, %v3121
        %v3144 = vadd.f32 %v3023, %v3126
        %v3145 = vadd.f32 %v3024, %v3129
        %v3146 = vadd.f32 %v3025, %v3134
        %v3147 = vadd.f32 %v3026, %v3137
        %v3148 = vld [vmem:[%s2348] sm:$0xff]
        %v3149 = vld [vmem:[%s2348 + $0x10] sm:$0xff]
        %v3150 = vld [vmem:[%s2348 + $0x20] sm:$0xff]
        %v3151 = vld [vmem:[%s2348 + $0x30] sm:$0xff]
        %v3152 = vld [vmem:[%s2348 + $0x40] sm:$0xff]
        %v3153 = vld [vmem:[%s2348 + $0x50] sm:$0xff]
        %v3154 = vld [vmem:[%s2348 + $0x60] sm:$0xff]
        %v3155 = vld [vmem:[%s2348 + $0x70] sm:$0xff]
        %v3156 = vpack.c.bf16 %v3149, %v3148
        %v3157 = vpack.c.bf16 %v3151, %v3150
        %v3158 = vpack.c.bf16 %v3153, %v3152
        %v3159 = vpack.c.bf16 %v3155, %v3154
        %v3168 = vunpack.c.l.b16 %v2411
        %v3169 = vunpack.c.l.b16 %v2412
        %v3170 = vunpack.c.l.b16 %v2413
        %v3171 = vunpack.c.l.b16 %v2414
        %v3172 = vunpack.c.l.b16 %v2415
        %v3173 = vunpack.c.l.b16 %v2416
        %v3174 = vunpack.c.l.b16 %v2417
        %v3175 = vunpack.c.l.b16 %v2418
        %v3176 = vpack.c.b16 %v3169, %v3168
        %v3177 = vpack.c.b16 %v3171, %v3170
        %v3178 = vpack.c.b16 %v3173, %v3172
        %v3179 = vpack.c.b16 %v3175, %v3174
        %v3185 = vsel %vm2247, %v3156, 0
        %v3188 = vsel %vm2247, %v3157, 0
        %v3191 = vsel %vm2247, %v3158, 0
        %v3194 = vsel %vm2247, %v3159, 0
        %3196 = vmatprep.subr.bf16.mxu0 0
        %3197 = vmatpush1.bf16.msra.mxu0 %v3176
        %3198 = vmatprep.subr.bf16.mxu0 0
        %3199 = vmatpush1.bf16.msra.mxu0 %v3177
        %3200 = vmatprep.subr.bf16.mxu0 0
        %3201 = vmatpush1.bf16.msra.mxu0 %v3178
        %3202 = vmatprep.subr.bf16.mxu0 0
        %3203 = vmatpush1.bf16.msra.mxu0 %v3179
        %3204 = vmatprep.subr.bf16.mxu0 0
        %3205 = vmatpush1.bf16.msra.mxu0 0
        %3206 = vmatprep.subr.bf16.mxu0 0
        %3207 = vmatpush1.bf16.msra.mxu0 0
        %3208 = vmatprep.subr.bf16.mxu0 0
        %3209 = vmatpush1.bf16.msra.mxu0 0
        %3210 = vmatprep.subr.bf16.mxu0 0
        %3211 = vmatpush1.bf16.msra.mxu0 0
        %3212 = vmatprep.subr.bf16.mxu0 0
        %3213 = vmatpush1.bf16.msra.mxu0 0
        %3214 = vmatprep.subr.bf16.mxu0 0
        %3215 = vmatpush1.bf16.msra.mxu0 0
        %3216 = vmatprep.subr.bf16.mxu0 0
        %3217 = vmatpush1.bf16.msra.mxu0 0
        %3218 = vmatprep.subr.bf16.mxu0 0
        %3219 = vmatpush1.bf16.msra.mxu0 0
        %3220 = vmatprep.subr.bf16.mxu0 0
        %3221 = vmatpush1.bf16.msra.mxu0 0
        %3222 = vmatprep.subr.bf16.mxu0 0
        %3223 = vmatpush1.bf16.msra.mxu0 0
        %3224 = vmatprep.subr.bf16.mxu0 0
        %3225 = vmatpush1.bf16.msra.mxu0 0
        %3226 = vmatprep.subr.bf16.mxu0 0
        %3227 = vmatpush1.bf16.msra.mxu0 0
        %3228 = vmatprep.mubr.bf16.mxu0 0
        %3229 = vmatmul.mubr.bf16.gmra.mrb[0].mxu0 %v3185
        %v3230 = vpop.f32.mrb[0].mxu0
        %v3231 = vadd.f32 0.0, %v3230
        %v3232 = vpop.f32.mrb[0].mxu0
        %v3233 = vpop.f32.mrb[0].mxu0
        %v3234 = vadd.f32 0.0, %v3233
        %v3235 = vpop.f32.mrb[0].mxu0
        %3236 = vmatprep.mubr.bf16.mxu0 0
        %3237 = vmatmul.mubr.bf16.gmra.mrb[0].mxu0 %v3188
        %v3238 = vpop.f32.mrb[0].mxu0
        %v3239 = vadd.f32 0.0, %v3238
        %v3240 = vpop.f32.mrb[0].mxu0
        %v3241 = vpop.f32.mrb[0].mxu0
        %v3242 = vadd.f32 0.0, %v3241
        %v3243 = vpop.f32.mrb[0].mxu0
        %3244 = vmatprep.mubr.bf16.mxu0 0
        %3245 = vmatmul.mubr.bf16.gmra.mrb[0].mxu0 %v3191
        %v3246 = vpop.f32.mrb[0].mxu0
        %v3247 = vadd.f32 0.0, %v3246
        %v3248 = vpop.f32.mrb[0].mxu0
        %v3249 = vpop.f32.mrb[0].mxu0
        %v3250 = vadd.f32 0.0, %v3249
        %v3251 = vpop.f32.mrb[0].mxu0
        %3252 = vmatprep.mubr.bf16.mxu0 0
        %3253 = vmatmul.mubr.bf16.gmra.mrb[0].mxu0 %v3194
        %v3254 = vpop.f32.mrb[0].mxu0
        %v3255 = vadd.f32 0.0, %v3254
        %v3256 = vpop.f32.mrb[0].mxu0
        %v3257 = vpop.f32.mrb[0].mxu0
        %v3258 = vadd.f32 0.0, %v3257
        %v3259 = vpop.f32.mrb[0].mxu0
        %3260 = vdwg.mxu0
        %v3261 = vadd.f32 %v3140, %v3231
        %v3262 = vadd.f32 %v3141, %v3234
        %v3263 = vadd.f32 %v3142, %v3239
        %v3264 = vadd.f32 %v3143, %v3242
        %v3265 = vadd.f32 %v3144, %v3247
        %v3266 = vadd.f32 %v3145, %v3250
        %v3267 = vadd.f32 %v3146, %v3255
        %v3268 = vadd.f32 %v3147, %v3258
        %v3269 = vld [vmem:[%s2339] sm:$0xff]
        %v3270 = vld [vmem:[%s2339 + $0x10] sm:$0xff]
        %v3271 = vld [vmem:[%s2339 + $0x20] sm:$0xff]
        %v3272 = vld [vmem:[%s2339 + $0x30] sm:$0xff]
        %v3273 = vld [vmem:[%s2339 + $0x40] sm:$0xff]
        %v3274 = vld [vmem:[%s2339 + $0x50] sm:$0xff]
        %v3275 = vld [vmem:[%s2339 + $0x60] sm:$0xff]
        %v3276 = vld [vmem:[%s2339 + $0x70] sm:$0xff]
        %v3277 = vpack.c.bf16 %v3270, %v3269
        %v3278 = vpack.c.bf16 %v3272, %v3271
        %v3279 = vpack.c.bf16 %v3274, %v3273
        %v3280 = vpack.c.bf16 %v3276, %v3275
        %v3289 = vunpack.c.l.b16 %v2420
        %v3290 = vunpack.c.l.b16 %v2421
        %v3291 = vunpack.c.l.b16 %v2422
        %v3292 = vunpack.c.l.b16 %v2423
        %v3293 = vunpack.c.l.b16 %v2424
        %v3294 = vunpack.c.l.b16 %v2425
        %v3295 = vunpack.c.l.b16 %v2426
        %v3296 = vunpack.c.l.b16 %v2427
        %v3297 = vpack.c.b16 %v3290, %v3289
        %v3298 = vpack.c.b16 %v3292, %v3291
        %v3299 = vpack.c.b16 %v3294, %v3293
        %v3300 = vpack.c.b16 %v3296, %v3295
        %v3306 = vsel %vm2247, %v3277, 0
        %v3309 = vsel %vm2247, %v3278, 0
        %v3312 = vsel %vm2247, %v3279, 0
        %v3315 = vsel %vm2247, %v3280, 0
        %3317 = vmatprep.subr.bf16.mxu0 0
        %3318 = vmatpush1.bf16.msra.mxu0 %v3297
        %3319 = vmatprep.subr.bf16.mxu0 0
        %3320 = vmatpush1.bf16.msra.mxu0 %v3298
        %3321 = vmatprep.subr.bf16.mxu0 0
        %3322 = vmatpush1.bf16.msra.mxu0 %v3299
        %3323 = vmatprep.subr.bf16.mxu0 0
        %3324 = vmatpush1.bf16.msra.mxu0 %v3300
        %3325 = vmatprep.subr.bf16.mxu0 0
        %3326 = vmatpush1.bf16.msra.mxu0 0
        %3327 = vmatprep.subr.bf16.mxu0 0
        %3328 = vmatpush1.bf16.msra.mxu0 0
        %3329 = vmatprep.subr.bf16.mxu0 0
        %3330 = vmatpush1.bf16.msra.mxu0 0
        %3331 = vmatprep.subr.bf16.mxu0 0
        %3332 = vmatpush1.bf16.msra.mxu0 0
        %3333 = vmatprep.subr.bf16.mxu0 0
        %3334 = vmatpush1.bf16.msra.mxu0 0
        %3335 = vmatprep.subr.bf16.mxu0 0
        %3336 = vmatpush1.bf16.msra.mxu0 0
        %3337 = vmatprep.subr.bf16.mxu0 0
        %3338 = vmatpush1.bf16.msra.mxu0 0
        %3339 = vmatprep.subr.bf16.mxu0 0
        %3340 = vmatpush1.bf16.msra.mxu0 0
        %3341 = vmatprep.subr.bf16.mxu0 0
        %3342 = vmatpush1.bf16.msra.mxu0 0
        %3343 = vmatprep.subr.bf16.mxu0 0
        %3344 = vmatpush1.bf16.msra.mxu0 0
        %3345 = vmatprep.subr.bf16.mxu0 0
        %3346 = vmatpush1.bf16.msra.mxu0 0
        %3347 = vmatprep.subr.bf16.mxu0 0
        %3348 = vmatpush1.bf16.msra.mxu0 0
        %3349 = vmatprep.mubr.bf16.mxu0 0
        %3350 = vmatmul.mubr.bf16.gmra.mrb[0].mxu0 %v3306
        %v3351 = vpop.f32.mrb[0].mxu0
        %v3352 = vadd.f32 0.0, %v3351
        %v3353 = vpop.f32.mrb[0].mxu0
        %v3354 = vpop.f32.mrb[0].mxu0
        %v3355 = vadd.f32 0.0, %v3354
        %v3356 = vpop.f32.mrb[0].mxu0
        %3357 = vmatprep.mubr.bf16.mxu0 0
        %3358 = vmatmul.mubr.bf16.gmra.mrb[0].mxu0 %v3309
        %v3359 = vpop.f32.mrb[0].mxu0
        %v3360 = vadd.f32 0.0, %v3359
        %v3361 = vpop.f32.mrb[0].mxu0
        %v3362 = vpop.f32.mrb[0].mxu0
        %v3363 = vadd.f32 0.0, %v3362
        %v3364 = vpop.f32.mrb[0].mxu0
        %3365 = vmatprep.mubr.bf16.mxu0 0
        %3366 = vmatmul.mubr.bf16.gmra.mrb[0].mxu0 %v3312
        %v3367 = vpop.f32.mrb[0].mxu0
        %v3368 = vadd.f32 0.0, %v3367
        %v3369 = vpop.f32.mrb[0].mxu0
        %v3370 = vpop.f32.mrb[0].mxu0
        %v3371 = vadd.f32 0.0, %v3370
        %v3372 = vpop.f32.mrb[0].mxu0
        %3373 = vmatprep.mubr.bf16.mxu0 0
        %3374 = vmatmul.mubr.bf16.gmra.mrb[0].mxu0 %v3315
        %v3375 = vpop.f32.mrb[0].mxu0
        %v3376 = vadd.f32 0.0, %v3375
        %v3377 = vpop.f32.mrb[0].mxu0
        %v3378 = vpop.f32.mrb[0].mxu0
        %v3379 = vadd.f32 0.0, %v3378
        %v3380 = vpop.f32.mrb[0].mxu0
        %3381 = vdwg.mxu0
        %v3382 = vadd.f32 %v3261, %v3352
        %v3383 = vadd.f32 %v3262, %v3355
        %v3384 = vadd.f32 %v3263, %v3360
        %v3385 = vadd.f32 %v3264, %v3363
        %v3386 = vadd.f32 %v3265, %v3368
        %v3387 = vadd.f32 %v3266, %v3371
        %v3388 = vadd.f32 %v3267, %v3376
        %v3389 = vadd.f32 %v3268, %v3379
        %v3390 = vld [vmem:[%s2348 + $0x1] sm:$0xff]
        %v3391 = vld [vmem:[%s2348 + $0x11] sm:$0xff]
        %v3392 = vld [vmem:[%s2348 + $0x21] sm:$0xff]
        %v3393 = vld [vmem:[%s2348 + $0x31] sm:$0xff]
        %v3394 = vld [vmem:[%s2348 + $0x41] sm:$0xff]
        %v3395 = vld [vmem:[%s2348 + $0x51] sm:$0xff]
        %v3396 = vld [vmem:[%s2348 + $0x61] sm:$0xff]
        %v3397 = vld [vmem:[%s2348 + $0x71] sm:$0xff]
        %v3398 = vpack.c.bf16 %v3391, %v3390
        %v3399 = vpack.c.bf16 %v3393, %v3392
        %v3400 = vpack.c.bf16 %v3395, %v3394
        %v3401 = vpack.c.bf16 %v3397, %v3396
        %v3410 = vunpack.c.l.b16 %v2429
        %v3411 = vunpack.c.l.b16 %v2430
        %v3412 = vunpack.c.l.b16 %v2431
        %v3413 = vunpack.c.l.b16 %v2432
        %v3414 = vunpack.c.l.b16 %v2433
        %v3415 = vunpack.c.l.b16 %v2434
        %v3416 = vunpack.c.l.b16 %v2435
        %v3417 = vunpack.c.l.b16 %v2436
        %v3418 = vpack.c.b16 %v3411, %v3410
        %v3419 = vpack.c.b16 %v3413, %v3412
        %v3420 = vpack.c.b16 %v3415, %v3414
        %v3421 = vpack.c.b16 %v3417, %v3416
        %v3427 = vsel %vm2247, %v3398, 0
        %v3430 = vsel %vm2247, %v3399, 0
        %v3433 = vsel %vm2247, %v3400, 0
        %v3436 = vsel %vm2247, %v3401, 0
        %3438 = vmatprep.subr.bf16.mxu0 0
        %3439 = vmatpush1.bf16.msra.mxu0 %v3418
        %3440 = vmatprep.subr.bf16.mxu0 0
        %3441 = vmatpush1.bf16.msra.mxu0 %v3419
        %3442 = vmatprep.subr.bf16.mxu0 0
        %3443 = vmatpush1.bf16.msra.mxu0 %v3420
        %3444 = vmatprep.subr.bf16.mxu0 0
        %3445 = vmatpush1.bf16.msra.mxu0 %v3421
        %3446 = vmatprep.subr.bf16.mxu0 0
        %3447 = vmatpush1.bf16.msra.mxu0 0
        %3448 = vmatprep.subr.bf16.mxu0 0
        %3449 = vmatpush1.bf16.msra.mxu0 0
        %3450 = vmatprep.subr.bf16.mxu0 0
        %3451 = vmatpush1.bf16.msra.mxu0 0
        %3452 = vmatprep.subr.bf16.mxu0 0
        %3453 = vmatpush1.bf16.msra.mxu0 0
        %3454 = vmatprep.subr.bf16.mxu0 0
        %3455 = vmatpush1.bf16.msra.mxu0 0
        %3456 = vmatprep.subr.bf16.mxu0 0
        %3457 = vmatpush1.bf16.msra.mxu0 0
        %3458 = vmatprep.subr.bf16.mxu0 0
        %3459 = vmatpush1.bf16.msra.mxu0 0
        %3460 = vmatprep.subr.bf16.mxu0 0
        %3461 = vmatpush1.bf16.msra.mxu0 0
        %3462 = vmatprep.subr.bf16.mxu0 0
        %3463 = vmatpush1.bf16.msra.mxu0 0
        %3464 = vmatprep.subr.bf16.mxu0 0
        %3465 = vmatpush1.bf16.msra.mxu0 0
        %3466 = vmatprep.subr.bf16.mxu0 0
        %3467 = vmatpush1.bf16.msra.mxu0 0
        %3468 = vmatprep.subr.bf16.mxu0 0
        %3469 = vmatpush1.bf16.msra.mxu0 0
        %3470 = vmatprep.mubr.bf16.mxu0 0
        %3471 = vmatmul.mubr.bf16.gmra.mrb[0].mxu0 %v3427
        %v3472 = vpop.f32.mrb[0].mxu0
        %v3473 = vadd.f32 0.0, %v3472
        %v3474 = vpop.f32.mrb[0].mxu0
        %v3475 = vpop.f32.mrb[0].mxu0
        %v3476 = vadd.f32 0.0, %v3475
        %v3477 = vpop.f32.mrb[0].mxu0
        %3478 = vmatprep.mubr.bf16.mxu0 0
        %3479 = vmatmul.mubr.bf16.gmra.mrb[0].mxu0 %v3430
        %v3480 = vpop.f32.mrb[0].mxu0
        %v3481 = vadd.f32 0.0, %v3480
        %v3482 = vpop.f32.mrb[0].mxu0
        %v3483 = vpop.f32.mrb[0].mxu0
        %v3484 = vadd.f32 0.0, %v3483
        %v3485 = vpop.f32.mrb[0].mxu0
        %3486 = vmatprep.mubr.bf16.mxu0 0
        %3487 = vmatmul.mubr.bf16.gmra.mrb[0].mxu0 %v3433
        %v3488 = vpop.f32.mrb[0].mxu0
        %v3489 = vadd.f32 0.0, %v3488
        %v3490 = vpop.f32.mrb[0].mxu0
        %v3491 = vpop.f32.mrb[0].mxu0
        %v3492 = vadd.f32 0.0, %v3491
        %v3493 = vpop.f32.mrb[0].mxu0
        %3494 = vmatprep.mubr.bf16.mxu0 0
        %3495 = vmatmul.mubr.bf16.gmra.mrb[0].mxu0 %v3436
        %v3496 = vpop.f32.mrb[0].mxu0
        %v3497 = vadd.f32 0.0, %v3496
        %v3498 = vpop.f32.mrb[0].mxu0
        %v3499 = vpop.f32.mrb[0].mxu0
        %v3500 = vadd.f32 0.0, %v3499
        %v3501 = vpop.f32.mrb[0].mxu0
        %3502 = vdwg.mxu0
        %v3503 = vadd.f32 %v3382, %v3473
        %v3504 = vadd.f32 %v3383, %v3476
        %v3505 = vadd.f32 %v3384, %v3481
        %v3506 = vadd.f32 %v3385, %v3484
        %v3507 = vadd.f32 %v3386, %v3489
        %v3508 = vadd.f32 %v3387, %v3492
        %v3509 = vadd.f32 %v3388, %v3497
        %v3510 = vadd.f32 %v3389, %v3500
        %3511 = vmatprep.subr.bf16.mxu0 0
        %3512 = vmatpush1.bf16.msra.mxu0 %v2478
        %3513 = vmatprep.subr.bf16.mxu0 0
        %3514 = vmatpush1.bf16.msra.mxu0 %v2479
        %3515 = vmatprep.subr.bf16.mxu0 0
        %3516 = vmatpush1.bf16.msra.mxu0 %v2480
        %3517 = vmatprep.subr.bf16.mxu0 0
        %3518 = vmatpush1.bf16.msra.mxu0 %v2481
        %3519 = vmatprep.subr.bf16.mxu0 0
        %3520 = vmatpush1.bf16.msra.mxu0 0
        %3521 = vmatprep.subr.bf16.mxu0 0
        %3522 = vmatpush1.bf16.msra.mxu0 0
        %3523 = vmatprep.subr.bf16.mxu0 0
        %3524 = vmatpush1.bf16.msra.mxu0 0
        %3525 = vmatprep.subr.bf16.mxu0 0
        %3526 = vmatpush1.bf16.msra.mxu0 0
        %3527 = vmatprep.subr.bf16.mxu0 0
        %3528 = vmatpush1.bf16.msra.mxu0 0
        %3529 = vmatprep.subr.bf16.mxu0 0
        %3530 = vmatpush1.bf16.msra.mxu0 0
        %3531 = vmatprep.subr.bf16.mxu0 0
        %3532 = vmatpush1.bf16.msra.mxu0 0
        %3533 = vmatprep.subr.bf16.mxu0 0
        %3534 = vmatpush1.bf16.msra.mxu0 0
        %3535 = vmatprep.subr.bf16.mxu0 0
        %3536 = vmatpush1.bf16.msra.mxu0 0
        %3537 = vmatprep.subr.bf16.mxu0 0
        %3538 = vmatpush1.bf16.msra.mxu0 0
        %3539 = vmatprep.subr.bf16.mxu0 0
        %3540 = vmatpush1.bf16.msra.mxu0 0
        %3541 = vmatprep.subr.bf16.mxu0 0
        %3542 = vmatpush1.bf16.msra.mxu0 0
        %3543 = vmatprep.mubr.bf16.mxu0 0
        %3544 = vmatmul.mubr.bf16.gmra.mrb[0].mxu0 %v2701
        %v3545 = vpop.f32.mrb[0].mxu0
        %v3546 = vadd.f32 0.0, %v3545
        %v3547 = vpop.f32.mrb[0].mxu0
        %v3548 = vpop.f32.mrb[0].mxu0
        %v3549 = vadd.f32 0.0, %v3548
        %v3550 = vpop.f32.mrb[0].mxu0
        %3551 = vmatprep.mubr.bf16.mxu0 0
        %3552 = vmatmul.mubr.bf16.gmra.mrb[0].mxu0 %v2704
        %v3553 = vpop.f32.mrb[0].mxu0
        %v3554 = vadd.f32 0.0, %v3553
        %v3555 = vpop.f32.mrb[0].mxu0
        %v3556 = vpop.f32.mrb[0].mxu0
        %v3557 = vadd.f32 0.0, %v3556
        %v3558 = vpop.f32.mrb[0].mxu0
        %3559 = vmatprep.mubr.bf16.mxu0 0
        %3560 = vmatmul.mubr.bf16.gmra.mrb[0].mxu0 %v2707
        %v3561 = vpop.f32.mrb[0].mxu0
        %v3562 = vadd.f32 0.0, %v3561
        %v3563 = vpop.f32.mrb[0].mxu0
        %v3564 = vpop.f32.mrb[0].mxu0
        %v3565 = vadd.f32 0.0, %v3564
        %v3566 = vpop.f32.mrb[0].mxu0
        %3567 = vmatprep.mubr.bf16.mxu0 0
        %3568 = vmatmul.mubr.bf16.gmra.mrb[0].mxu0 %v2710
        %v3569 = vpop.f32.mrb[0].mxu0
        %v3570 = vadd.f32 0.0, %v3569
        %v3571 = vpop.f32.mrb[0].mxu0
        %v3572 = vpop.f32.mrb[0].mxu0
        %v3573 = vadd.f32 0.0, %v3572
        %v3574 = vpop.f32.mrb[0].mxu0
        %3575 = vdwg.mxu0
        %3576 = vmatprep.subr.bf16.mxu0 0
        %3577 = vmatpush1.bf16.msra.mxu0 %v2579
        %3578 = vmatprep.subr.bf16.mxu0 0
        %3579 = vmatpush1.bf16.msra.mxu0 %v2580
        %3580 = vmatprep.subr.bf16.mxu0 0
        %3581 = vmatpush1.bf16.msra.mxu0 %v2581
        %3582 = vmatprep.subr.bf16.mxu0 0
        %3583 = vmatpush1.bf16.msra.mxu0 %v2582
        %3584 = vmatprep.subr.bf16.mxu0 0
        %3585 = vmatpush1.bf16.msra.mxu0 0
        %3586 = vmatprep.subr.bf16.mxu0 0
        %3587 = vmatpush1.bf16.msra.mxu0 0
        %3588 = vmatprep.subr.bf16.mxu0 0
        %3589 = vmatpush1.bf16.msra.mxu0 0
        %3590 = vmatprep.subr.bf16.mxu0 0
        %3591 = vmatpush1.bf16.msra.mxu0 0
        %3592 = vmatprep.subr.bf16.mxu0 0
        %3593 = vmatpush1.bf16.msra.mxu0 0
        %3594 = vmatprep.subr.bf16.mxu0 0
        %3595 = vmatpush1.bf16.msra.mxu0 0
        %3596 = vmatprep.subr.bf16.mxu0 0
        %3597 = vmatpush1.bf16.msra.mxu0 0
        %3598 = vmatprep.subr.bf16.mxu0 0
        %3599 = vmatpush1.bf16.msra.mxu0 0
        %3600 = vmatprep.subr.bf16.mxu0 0
        %3601 = vmatpush1.bf16.msra.mxu0 0
        %3602 = vmatprep.subr.bf16.mxu0 0
        %3603 = vmatpush1.bf16.msra.mxu0 0
        %3604 = vmatprep.subr.bf16.mxu0 0
        %3605 = vmatpush1.bf16.msra.mxu0 0
        %3606 = vmatprep.subr.bf16.mxu0 0
        %3607 = vmatpush1.bf16.msra.mxu0 0
        %3608 = vmatprep.mubr.bf16.mxu0 0
        %3609 = vmatmul.mubr.bf16.gmra.mrb[0].mxu0 %v2487
        %v3610 = vpop.f32.mrb[0].mxu0
        %v3611 = vadd.f32 %v3546, %v3610
        %v3612 = vpop.f32.mrb[0].mxu0
        %v3613 = vpop.f32.mrb[0].mxu0
        %v3614 = vadd.f32 %v3549, %v3613
        %v3615 = vpop.f32.mrb[0].mxu0
        %3616 = vmatprep.mubr.bf16.mxu0 0
        %3617 = vmatmul.mubr.bf16.gmra.mrb[0].mxu0 %v2490
        %v3618 = vpop.f32.mrb[0].mxu0
        %v3619 = vadd.f32 %v3554, %v3618
        %v3620 = vpop.f32.mrb[0].mxu0
        %v3621 = vpop.f32.mrb[0].mxu0
        %v3622 = vadd.f32 %v3557, %v3621
        %v3623 = vpop.f32.mrb[0].mxu0
        %3624 = vmatprep.mubr.bf16.mxu0 0
        %3625 = vmatmul.mubr.bf16.gmra.mrb[0].mxu0 %v2493
        %v3626 = vpop.f32.mrb[0].mxu0
        %v3627 = vadd.f32 %v3562, %v3626
        %v3628 = vpop.f32.mrb[0].mxu0
        %v3629 = vpop.f32.mrb[0].mxu0
        %v3630 = vadd.f32 %v3565, %v3629
        %v3631 = vpop.f32.mrb[0].mxu0
        %3632 = vmatprep.mubr.bf16.mxu0 0
        %3633 = vmatmul.mubr.bf16.gmra.mrb[0].mxu0 %v2496
        %v3634 = vpop.f32.mrb[0].mxu0
        %v3635 = vadd.f32 %v3570, %v3634
        %v3636 = vpop.f32.mrb[0].mxu0
        %v3637 = vpop.f32.mrb[0].mxu0
        %v3638 = vadd.f32 %v3573, %v3637
        %v3639 = vpop.f32.mrb[0].mxu0
        %3640 = vdwg.mxu0
        %v3641 = vld [vmem:[%s2449 + $0x1] sm:$0xff]
        %v3642 = vld [vmem:[%s2449 + $0x11] sm:$0xff]
        %v3643 = vld [vmem:[%s2449 + $0x21] sm:$0xff]
        %v3644 = vld [vmem:[%s2449 + $0x31] sm:$0xff]
        %v3645 = vld [vmem:[%s2449 + $0x41] sm:$0xff]
        %v3646 = vld [vmem:[%s2449 + $0x51] sm:$0xff]
        %v3647 = vld [vmem:[%s2449 + $0x61] sm:$0xff]
        %v3648 = vld [vmem:[%s2449 + $0x71] sm:$0xff]
        %v3649 = vpack.c.bf16 %v3642, %v3641
        %v3650 = vpack.c.bf16 %v3644, %v3643
        %v3651 = vpack.c.bf16 %v3646, %v3645
        %v3652 = vpack.c.bf16 %v3648, %v3647
        %v3654 = vsel %vm2247, %v3649, 0
        %v3657 = vsel %vm2247, %v3650, 0
        %v3660 = vsel %vm2247, %v3651, 0
        %v3663 = vsel %vm2247, %v3652, 0
        %3665 = vmatprep.subr.bf16.mxu0 0
        %3666 = vmatpush1.bf16.msra.mxu0 %v2692
        %3667 = vmatprep.subr.bf16.mxu0 0
        %3668 = vmatpush1.bf16.msra.mxu0 %v2693
        %3669 = vmatprep.subr.bf16.mxu0 0
        %3670 = vmatpush1.bf16.msra.mxu0 %v2694
        %3671 = vmatprep.subr.bf16.mxu0 0
        %3672 = vmatpush1.bf16.msra.mxu0 %v2695
        %3673 = vmatprep.subr.bf16.mxu0 0
        %3674 = vmatpush1.bf16.msra.mxu0 0
        %3675 = vmatprep.subr.bf16.mxu0 0
        %3676 = vmatpush1.bf16.msra.mxu0 0
        %3677 = vmatprep.subr.bf16.mxu0 0
        %3678 = vmatpush1.bf16.msra.mxu0 0
        %3679 = vmatprep.subr.bf16.mxu0 0
        %3680 = vmatpush1.bf16.msra.mxu0 0
        %3681 = vmatprep.subr.bf16.mxu0 0
        %3682 = vmatpush1.bf16.msra.mxu0 0
        %3683 = vmatprep.subr.bf16.mxu0 0
        %3684 = vmatpush1.bf16.msra.mxu0 0
        %3685 = vmatprep.subr.bf16.mxu0 0
        %3686 = vmatpush1.bf16.msra.mxu0 0
        %3687 = vmatprep.subr.bf16.mxu0 0
        %3688 = vmatpush1.bf16.msra.mxu0 0
        %3689 = vmatprep.subr.bf16.mxu0 0
        %3690 = vmatpush1.bf16.msra.mxu0 0
        %3691 = vmatprep.subr.bf16.mxu0 0
        %3692 = vmatpush1.bf16.msra.mxu0 0
        %3693 = vmatprep.subr.bf16.mxu0 0
        %3694 = vmatpush1.bf16.msra.mxu0 0
        %3695 = vmatprep.subr.bf16.mxu0 0
        %3696 = vmatpush1.bf16.msra.mxu0 0
        %3697 = vmatprep.mubr.bf16.mxu0 0
        %3698 = vmatmul.mubr.bf16.gmra.mrb[0].mxu0 %v3654
        %v3699 = vpop.f32.mrb[0].mxu0
        %v3700 = vadd.f32 0.0, %v3699
        %v3701 = vpop.f32.mrb[0].mxu0
        %v3702 = vpop.f32.mrb[0].mxu0
        %v3703 = vadd.f32 0.0, %v3702
        %v3704 = vpop.f32.mrb[0].mxu0
        %3705 = vmatprep.mubr.bf16.mxu0 0
        %3706 = vmatmul.mubr.bf16.gmra.mrb[0].mxu0 %v3657
        %v3707 = vpop.f32.mrb[0].mxu0
        %v3708 = vadd.f32 0.0, %v3707
        %v3709 = vpop.f32.mrb[0].mxu0
        %v3710 = vpop.f32.mrb[0].mxu0
        %v3711 = vadd.f32 0.0, %v3710
        %v3712 = vpop.f32.mrb[0].mxu0
        %3713 = vmatprep.mubr.bf16.mxu0 0
        %3714 = vmatmul.mubr.bf16.gmra.mrb[0].mxu0 %v3660
        %v3715 = vpop.f32.mrb[0].mxu0
        %v3716 = vadd.f32 0.0, %v3715
        %v3717 = vpop.f32.mrb[0].mxu0
        %v3718 = vpop.f32.mrb[0].mxu0
        %v3719 = vadd.f32 0.0, %v3718
        %v3720 = vpop.f32.mrb[0].mxu0
        %3721 = vmatprep.mubr.bf16.mxu0 0
        %3722 = vmatmul.mubr.bf16.gmra.mrb[0].mxu0 %v3663
        %v3723 = vpop.f32.mrb[0].mxu0
        %v3724 = vadd.f32 0.0, %v3723
        %v3725 = vpop.f32.mrb[0].mxu0
        %v3726 = vpop.f32.mrb[0].mxu0
        %v3727 = vadd.f32 0.0, %v3726
        %v3728 = vpop.f32.mrb[0].mxu0
        %3729 = vdwg.mxu0
        %v3730 = vadd.f32 %v3611, %v3700
        %v3731 = vadd.f32 %v3614, %v3703
        %v3732 = vadd.f32 %v3619, %v3708
        %v3733 = vadd.f32 %v3622, %v3711
        %v3734 = vadd.f32 %v3627, %v3716
        %v3735 = vadd.f32 %v3630, %v3719
        %v3736 = vadd.f32 %v3635, %v3724
        %v3737 = vadd.f32 %v3638, %v3727
        %3738 = vmatprep.subr.bf16.mxu0 0
        %3739 = vmatpush1.bf16.msra.mxu0 %v2813
        %3740 = vmatprep.subr.bf16.mxu0 0
        %3741 = vmatpush1.bf16.msra.mxu0 %v2814
        %3742 = vmatprep.subr.bf16.mxu0 0
        %3743 = vmatpush1.bf16.msra.mxu0 %v2815
        %3744 = vmatprep.subr.bf16.mxu0 0
        %3745 = vmatpush1.bf16.msra.mxu0 %v2816
        %3746 = vmatprep.subr.bf16.mxu0 0
        %3747 = vmatpush1.bf16.msra.mxu0 0
        %3748 = vmatprep.subr.bf16.mxu0 0
        %3749 = vmatpush1.bf16.msra.mxu0 0
        %3750 = vmatprep.subr.bf16.mxu0 0
        %3751 = vmatpush1.bf16.msra.mxu0 0
        %3752 = vmatprep.subr.bf16.mxu0 0
        %3753 = vmatpush1.bf16.msra.mxu0 0
        %3754 = vmatprep.subr.bf16.mxu0 0
        %3755 = vmatpush1.bf16.msra.mxu0 0
        %3756 = vmatprep.subr.bf16.mxu0 0
        %3757 = vmatpush1.bf16.msra.mxu0 0
        %3758 = vmatprep.subr.bf16.mxu0 0
        %3759 = vmatpush1.bf16.msra.mxu0 0
        %3760 = vmatprep.subr.bf16.mxu0 0
        %3761 = vmatpush1.bf16.msra.mxu0 0
        %3762 = vmatprep.subr.bf16.mxu0 0
        %3763 = vmatpush1.bf16.msra.mxu0 0
        %3764 = vmatprep.subr.bf16.mxu0 0
        %3765 = vmatpush1.bf16.msra.mxu0 0
        %3766 = vmatprep.subr.bf16.mxu0 0
        %3767 = vmatpush1.bf16.msra.mxu0 0
        %3768 = vmatprep.subr.bf16.mxu0 0
        %3769 = vmatpush1.bf16.msra.mxu0 0
        %3770 = vmatprep.mubr.bf16.mxu0 0
        %3771 = vmatmul.mubr.bf16.gmra.mrb[0].mxu0 %v2943
        %v3772 = vpop.f32.mrb[0].mxu0
        %v3773 = vadd.f32 0.0, %v3772
        %v3774 = vpop.f32.mrb[0].mxu0
        %v3775 = vpop.f32.mrb[0].mxu0
        %v3776 = vadd.f32 0.0, %v3775
        %v3777 = vpop.f32.mrb[0].mxu0
        %3778 = vmatprep.mubr.bf16.mxu0 0
        %3779 = vmatmul.mubr.bf16.gmra.mrb[0].mxu0 %v2946
        %v3780 = vpop.f32.mrb[0].mxu0
        %v3781 = vadd.f32 0.0, %v3780
        %v3782 = vpop.f32.mrb[0].mxu0
        %v3783 = vpop.f32.mrb[0].mxu0
        %v3784 = vadd.f32 0.0, %v3783
        %v3785 = vpop.f32.mrb[0].mxu0
        %3786 = vmatprep.mubr.bf16.mxu0 0
        %3787 = vmatmul.mubr.bf16.gmra.mrb[0].mxu0 %v2949
        %v3788 = vpop.f32.mrb[0].mxu0
        %v3789 = vadd.f32 0.0, %v3788
        %v3790 = vpop.f32.mrb[0].mxu0
        %v3791 = vpop.f32.mrb[0].mxu0
        %v3792 = vadd.f32 0.0, %v3791
        %v3793 = vpop.f32.mrb[0].mxu0
        %3794 = vmatprep.mubr.bf16.mxu0 0
        %3795 = vmatmul.mubr.bf16.gmra.mrb[0].mxu0 %v2952
        %v3796 = vpop.f32.mrb[0].mxu0
        %v3797 = vadd.f32 0.0, %v3796
        %v3798 = vpop.f32.mrb[0].mxu0
        %v3799 = vpop.f32.mrb[0].mxu0
        %v3800 = vadd.f32 0.0, %v3799
        %v3801 = vpop.f32.mrb[0].mxu0
        %3802 = vdwg.mxu0
        %v3803 = vadd.f32 %v3730, %v3773
        %v3804 = vadd.f32 %v3731, %v3776
        %v3805 = vadd.f32 %v3732, %v3781
        %v3806 = vadd.f32 %v3733, %v3784
        %v3807 = vadd.f32 %v3734, %v3789
        %v3808 = vadd.f32 %v3735, %v3792
        %v3809 = vadd.f32 %v3736, %v3797
        %v3810 = vadd.f32 %v3737, %v3800
        %3811 = vmatprep.subr.bf16.mxu0 0
        %3812 = vmatpush1.bf16.msra.mxu0 %v2934
        %3813 = vmatprep.subr.bf16.mxu0 0
        %3814 = vmatpush1.bf16.msra.mxu0 %v2935
        %3815 = vmatprep.subr.bf16.mxu0 0
        %3816 = vmatpush1.bf16.msra.mxu0 %v2936
        %3817 = vmatprep.subr.bf16.mxu0 0
        %3818 = vmatpush1.bf16.msra.mxu0 %v2937
        %3819 = vmatprep.subr.bf16.mxu0 0
        %3820 = vmatpush1.bf16.msra.mxu0 0
        %3821 = vmatprep.subr.bf16.mxu0 0
        %3822 = vmatpush1.bf16.msra.mxu0 0
        %3823 = vmatprep.subr.bf16.mxu0 0
        %3824 = vmatpush1.bf16.msra.mxu0 0
        %3825 = vmatprep.subr.bf16.mxu0 0
        %3826 = vmatpush1.bf16.msra.mxu0 0
        %3827 = vmatprep.subr.bf16.mxu0 0
        %3828 = vmatpush1.bf16.msra.mxu0 0
        %3829 = vmatprep.subr.bf16.mxu0 0
        %3830 = vmatpush1.bf16.msra.mxu0 0
        %3831 = vmatprep.subr.bf16.mxu0 0
        %3832 = vmatpush1.bf16.msra.mxu0 0
        %3833 = vmatprep.subr.bf16.mxu0 0
        %3834 = vmatpush1.bf16.msra.mxu0 0
        %3835 = vmatprep.subr.bf16.mxu0 0
        %3836 = vmatpush1.bf16.msra.mxu0 0
        %3837 = vmatprep.subr.bf16.mxu0 0
        %3838 = vmatpush1.bf16.msra.mxu0 0
        %3839 = vmatprep.subr.bf16.mxu0 0
        %3840 = vmatpush1.bf16.msra.mxu0 0
        %3841 = vmatprep.subr.bf16.mxu0 0
        %3842 = vmatpush1.bf16.msra.mxu0 0
        %3843 = vmatprep.mubr.bf16.mxu0 0
        %3844 = vmatmul.mubr.bf16.gmra.mrb[0].mxu0 %v3064
        %v3845 = vpop.f32.mrb[0].mxu0
        %v3846 = vadd.f32 0.0, %v3845
        %v3847 = vpop.f32.mrb[0].mxu0
        %v3848 = vpop.f32.mrb[0].mxu0
        %v3849 = vadd.f32 0.0, %v3848
        %v3850 = vpop.f32.mrb[0].mxu0
        %3851 = vmatprep.mubr.bf16.mxu0 0
        %3852 = vmatmul.mubr.bf16.gmra.mrb[0].mxu0 %v3067
        %v3853 = vpop.f32.mrb[0].mxu0
        %v3854 = vadd.f32 0.0, %v3853
        %v3855 = vpop.f32.mrb[0].mxu0
        %v3856 = vpop.f32.mrb[0].mxu0
        %v3857 = vadd.f32 0.0, %v3856
        %v3858 = vpop.f32.mrb[0].mxu0
        %3859 = vmatprep.mubr.bf16.mxu0 0
        %3860 = vmatmul.mubr.bf16.gmra.mrb[0].mxu0 %v3070
        %v3861 = vpop.f32.mrb[0].mxu0
        %v3862 = vadd.f32 0.0, %v3861
        %v3863 = vpop.f32.mrb[0].mxu0
        %v3864 = vpop.f32.mrb[0].mxu0
        %v3865 = vadd.f32 0.0, %v3864
        %v3866 = vpop.f32.mrb[0].mxu0
        %3867 = vmatprep.mubr.bf16.mxu0 0
        %3868 = vmatmul.mubr.bf16.gmra.mrb[0].mxu0 %v3073
        %v3869 = vpop.f32.mrb[0].mxu0
        %v3870 = vadd.f32 0.0, %v3869
        %v3871 = vpop.f32.mrb[0].mxu0
        %v3872 = vpop.f32.mrb[0].mxu0
        %v3873 = vadd.f32 0.0, %v3872
        %v3874 = vpop.f32.mrb[0].mxu0
        %3875 = vdwg.mxu0
        %v3876 = vadd.f32 %v3803, %v3846
        %v3877 = vadd.f32 %v3804, %v3849
        %v3878 = vadd.f32 %v3805, %v3854
        %v3879 = vadd.f32 %v3806, %v3857
        %v3880 = vadd.f32 %v3807, %v3862
        %v3881 = vadd.f32 %v3808, %v3865
        %v3882 = vadd.f32 %v3809, %v3870
        %v3883 = vadd.f32 %v3810, %v3873
        %v3884 = vld [vmem:[%s2321 + $0x1] sm:$0xff]
        %v3885 = vld [vmem:[%s2321 + $0x11] sm:$0xff]
        %v3886 = vld [vmem:[%s2321 + $0x21] sm:$0xff]
        %v3887 = vld [vmem:[%s2321 + $0x31] sm:$0xff]
        %v3888 = vld [vmem:[%s2321 + $0x41] sm:$0xff]
        %v3889 = vld [vmem:[%s2321 + $0x51] sm:$0xff]
        %v3890 = vld [vmem:[%s2321 + $0x61] sm:$0xff]
        %v3891 = vld [vmem:[%s2321 + $0x71] sm:$0xff]
        %v3892 = vpack.c.bf16 %v3885, %v3884
        %v3893 = vpack.c.bf16 %v3887, %v3886
        %v3894 = vpack.c.bf16 %v3889, %v3888
        %v3895 = vpack.c.bf16 %v3891, %v3890
        %v3897 = vsel %vm2247, %v3892, 0
        %v3900 = vsel %vm2247, %v3893, 0
        %v3903 = vsel %vm2247, %v3894, 0
        %v3906 = vsel %vm2247, %v3895, 0
        %3908 = vmatprep.subr.bf16.mxu0 0
        %3909 = vmatpush1.bf16.msra.mxu0 %v3055
        %3910 = vmatprep.subr.bf16.mxu0 0
        %3911 = vmatpush1.bf16.msra.mxu0 %v3056
        %3912 = vmatprep.subr.bf16.mxu0 0
        %3913 = vmatpush1.bf16.msra.mxu0 %v3057
        %3914 = vmatprep.subr.bf16.mxu0 0
        %3915 = vmatpush1.bf16.msra.mxu0 %v3058
        %3916 = vmatprep.subr.bf16.mxu0 0
        %3917 = vmatpush1.bf16.msra.mxu0 0
        %3918 = vmatprep.subr.bf16.mxu0 0
        %3919 = vmatpush1.bf16.msra.mxu0 0
        %3920 = vmatprep.subr.bf16.mxu0 0
        %3921 = vmatpush1.bf16.msra.mxu0 0
        %3922 = vmatprep.subr.bf16.mxu0 0
        %3923 = vmatpush1.bf16.msra.mxu0 0
        %3924 = vmatprep.subr.bf16.mxu0 0
        %3925 = vmatpush1.bf16.msra.mxu0 0
        %3926 = vmatprep.subr.bf16.mxu0 0
        %3927 = vmatpush1.bf16.msra.mxu0 0
        %3928 = vmatprep.subr.bf16.mxu0 0
        %3929 = vmatpush1.bf16.msra.mxu0 0
        %3930 = vmatprep.subr.bf16.mxu0 0
        %3931 = vmatpush1.bf16.msra.mxu0 0
        %3932 = vmatprep.subr.bf16.mxu0 0
        %3933 = vmatpush1.bf16.msra.mxu0 0
        %3934 = vmatprep.subr.bf16.mxu0 0
        %3935 = vmatpush1.bf16.msra.mxu0 0
        %3936 = vmatprep.subr.bf16.mxu0 0
        %3937 = vmatpush1.bf16.msra.mxu0 0
        %3938 = vmatprep.subr.bf16.mxu0 0
        %3939 = vmatpush1.bf16.msra.mxu0 0
        %3940 = vmatprep.mubr.bf16.mxu0 0
        %3941 = vmatmul.mubr.bf16.gmra.mrb[0].mxu0 %v3897
        %v3942 = vpop.f32.mrb[0].mxu0
        %v3943 = vadd.f32 0.0, %v3942
        %v3944 = vpop.f32.mrb[0].mxu0
        %v3945 = vpop.f32.mrb[0].mxu0
        %v3946 = vadd.f32 0.0, %v3945
        %v3947 = vpop.f32.mrb[0].mxu0
        %3948 = vmatprep.mubr.bf16.mxu0 0
        %3949 = vmatmul.mubr.bf16.gmra.mrb[0].mxu0 %v3900
        %v3950 = vpop.f32.mrb[0].mxu0
        %v3951 = vadd.f32 0.0, %v3950
        %v3952 = vpop.f32.mrb[0].mxu0
        %v3953 = vpop.f32.mrb[0].mxu0
        %v3954 = vadd.f32 0.0, %v3953
        %v3955 = vpop.f32.mrb[0].mxu0
        %3956 = vmatprep.mubr.bf16.mxu0 0
        %3957 = vmatmul.mubr.bf16.gmra.mrb[0].mxu0 %v3903
        %v3958 = vpop.f32.mrb[0].mxu0
        %v3959 = vadd.f32 0.0, %v3958
        %v3960 = vpop.f32.mrb[0].mxu0
        %v3961 = vpop.f32.mrb[0].mxu0
        %v3962 = vadd.f32 0.0, %v3961
        %v3963 = vpop.f32.mrb[0].mxu0
        %3964 = vmatprep.mubr.bf16.mxu0 0
        %3965 = vmatmul.mubr.bf16.gmra.mrb[0].mxu0 %v3906
        %v3966 = vpop.f32.mrb[0].mxu0
        %v3967 = vadd.f32 0.0, %v3966
        %v3968 = vpop.f32.mrb[0].mxu0
        %v3969 = vpop.f32.mrb[0].mxu0
        %v3970 = vadd.f32 0.0, %v3969
        %v3971 = vpop.f32.mrb[0].mxu0
        %3972 = vdwg.mxu0
        %v3973 = vadd.f32 %v3876, %v3943
        %v3974 = vadd.f32 %v3877, %v3946
        %v3975 = vadd.f32 %v3878, %v3951
        %v3976 = vadd.f32 %v3879, %v3954
        %v3977 = vadd.f32 %v3880, %v3959
        %v3978 = vadd.f32 %v3881, %v3962
        %v3979 = vadd.f32 %v3882, %v3967
        %v3980 = vadd.f32 %v3883, %v3970
        %3981 = vmatprep.subr.bf16.mxu0 0
        %3982 = vmatpush1.bf16.msra.mxu0 %v3176
        %3983 = vmatprep.subr.bf16.mxu0 0
        %3984 = vmatpush1.bf16.msra.mxu0 %v3177
        %3985 = vmatprep.subr.bf16.mxu0 0
        %3986 = vmatpush1.bf16.msra.mxu0 %v3178
        %3987 = vmatprep.subr.bf16.mxu0 0
        %3988 = vmatpush1.bf16.msra.mxu0 %v3179
        %3989 = vmatprep.subr.bf16.mxu0 0
        %3990 = vmatpush1.bf16.msra.mxu0 0
        %3991 = vmatprep.subr.bf16.mxu0 0
        %3992 = vmatpush1.bf16.msra.mxu0 0
        %3993 = vmatprep.subr.bf16.mxu0 0
        %3994 = vmatpush1.bf16.msra.mxu0 0
        %3995 = vmatprep.subr.bf16.mxu0 0
        %3996 = vmatpush1.bf16.msra.mxu0 0
        %3997 = vmatprep.subr.bf16.mxu0 0
        %3998 = vmatpush1.bf16.msra.mxu0 0
        %3999 = vmatprep.subr.bf16.mxu0 0
        %4000 = vmatpush1.bf16.msra.mxu0 0
        %4001 = vmatprep.subr.bf16.mxu0 0
        %4002 = vmatpush1.bf16.msra.mxu0 0
        %4003 = vmatprep.subr.bf16.mxu0 0
        %4004 = vmatpush1.bf16.msra.mxu0 0
        %4005 = vmatprep.subr.bf16.mxu0 0
        %4006 = vmatpush1.bf16.msra.mxu0 0
        %4007 = vmatprep.subr.bf16.mxu0 0
        %4008 = vmatpush1.bf16.msra.mxu0 0
        %4009 = vmatprep.subr.bf16.mxu0 0
        %4010 = vmatpush1.bf16.msra.mxu0 0
        %4011 = vmatprep.subr.bf16.mxu0 0
        %4012 = vmatpush1.bf16.msra.mxu0 0
        %4013 = vmatprep.mubr.bf16.mxu0 0
        %4014 = vmatmul.mubr.bf16.gmra.mrb[0].mxu0 %v3306
        %v4015 = vpop.f32.mrb[0].mxu0
        %v4016 = vadd.f32 0.0, %v4015
        %v4017 = vpop.f32.mrb[0].mxu0
        %v4018 = vpop.f32.mrb[0].mxu0
        %v4019 = vadd.f32 0.0, %v4018
        %v4020 = vpop.f32.mrb[0].mxu0
        %4021 = vmatprep.mubr.bf16.mxu0 0
        %4022 = vmatmul.mubr.bf16.gmra.mrb[0].mxu0 %v3309
        %v4023 = vpop.f32.mrb[0].mxu0
        %v4024 = vadd.f32 0.0, %v4023
        %v4025 = vpop.f32.mrb[0].mxu0
        %v4026 = vpop.f32.mrb[0].mxu0
        %v4027 = vadd.f32 0.0, %v4026
        %v4028 = vpop.f32.mrb[0].mxu0
        %4029 = vmatprep.mubr.bf16.mxu0 0
        %4030 = vmatmul.mubr.bf16.gmra.mrb[0].mxu0 %v3312
        %v4031 = vpop.f32.mrb[0].mxu0
        %v4032 = vadd.f32 0.0, %v4031
        %v4033 = vpop.f32.mrb[0].mxu0
        %v4034 = vpop.f32.mrb[0].mxu0
        %v4035 = vadd.f32 0.0, %v4034
        %v4036 = vpop.f32.mrb[0].mxu0
        %4037 = vmatprep.mubr.bf16.mxu0 0
        %4038 = vmatmul.mubr.bf16.gmra.mrb[0].mxu0 %v3315
        %v4039 = vpop.f32.mrb[0].mxu0
        %v4040 = vadd.f32 0.0, %v4039
        %v4041 = vpop.f32.mrb[0].mxu0
        %v4042 = vpop.f32.mrb[0].mxu0
        %v4043 = vadd.f32 0.0, %v4042
        %v4044 = vpop.f32.mrb[0].mxu0
        %4045 = vdwg.mxu0
        %v4046 = vadd.f32 %v3973, %v4016
        %v4047 = vadd.f32 %v3974, %v4019
        %v4048 = vadd.f32 %v3975, %v4024
        %v4049 = vadd.f32 %v3976, %v4027
        %v4050 = vadd.f32 %v3977, %v4032
        %v4051 = vadd.f32 %v3978, %v4035
        %v4052 = vadd.f32 %v3979, %v4040
        %v4053 = vadd.f32 %v3980, %v4043
        %4054 = vmatprep.subr.bf16.mxu0 0
        %4055 = vmatpush1.bf16.msra.mxu0 %v3297
        %4056 = vmatprep.subr.bf16.mxu0 0
        %4057 = vmatpush1.bf16.msra.mxu0 %v3298
        %4058 = vmatprep.subr.bf16.mxu0 0
        %4059 = vmatpush1.bf16.msra.mxu0 %v3299
        %4060 = vmatprep.subr.bf16.mxu0 0
        %4061 = vmatpush1.bf16.msra.mxu0 %v3300
        %4062 = vmatprep.subr.bf16.mxu0 0
        %4063 = vmatpush1.bf16.msra.mxu0 0
        %4064 = vmatprep.subr.bf16.mxu0 0
        %4065 = vmatpush1.bf16.msra.mxu0 0
        %4066 = vmatprep.subr.bf16.mxu0 0
        %4067 = vmatpush1.bf16.msra.mxu0 0
        %4068 = vmatprep.subr.bf16.mxu0 0
        %4069 = vmatpush1.bf16.msra.mxu0 0
        %4070 = vmatprep.subr.bf16.mxu0 0
        %4071 = vmatpush1.bf16.msra.mxu0 0
        %4072 = vmatprep.subr.bf16.mxu0 0
        %4073 = vmatpush1.bf16.msra.mxu0 0
        %4074 = vmatprep.subr.bf16.mxu0 0
        %4075 = vmatpush1.bf16.msra.mxu0 0
        %4076 = vmatprep.subr.bf16.mxu0 0
        %4077 = vmatpush1.bf16.msra.mxu0 0
        %4078 = vmatprep.subr.bf16.mxu0 0
        %4079 = vmatpush1.bf16.msra.mxu0 0
        %4080 = vmatprep.subr.bf16.mxu0 0
        %4081 = vmatpush1.bf16.msra.mxu0 0
        %4082 = vmatprep.subr.bf16.mxu0 0
        %4083 = vmatpush1.bf16.msra.mxu0 0
        %4084 = vmatprep.subr.bf16.mxu0 0
        %4085 = vmatpush1.bf16.msra.mxu0 0
        %4086 = vmatprep.mubr.bf16.mxu0 0
        %4087 = vmatmul.mubr.bf16.gmra.mrb[0].mxu0 %v3427
        %v4088 = vpop.f32.mrb[0].mxu0
        %v4089 = vadd.f32 0.0, %v4088
        %v4090 = vpop.f32.mrb[0].mxu0
        %v4091 = vpop.f32.mrb[0].mxu0
        %v4092 = vadd.f32 0.0, %v4091
        %v4093 = vpop.f32.mrb[0].mxu0
        %4094 = vmatprep.mubr.bf16.mxu0 0
        %4095 = vmatmul.mubr.bf16.gmra.mrb[0].mxu0 %v3430
        %v4096 = vpop.f32.mrb[0].mxu0
        %v4097 = vadd.f32 0.0, %v4096
        %v4098 = vpop.f32.mrb[0].mxu0
        %v4099 = vpop.f32.mrb[0].mxu0
        %v4100 = vadd.f32 0.0, %v4099
        %v4101 = vpop.f32.mrb[0].mxu0
        %4102 = vmatprep.mubr.bf16.mxu0 0
        %4103 = vmatmul.mubr.bf16.gmra.mrb[0].mxu0 %v3433
        %v4104 = vpop.f32.mrb[0].mxu0
        %v4105 = vadd.f32 0.0, %v4104
        %v4106 = vpop.f32.mrb[0].mxu0
        %v4107 = vpop.f32.mrb[0].mxu0
        %v4108 = vadd.f32 0.0, %v4107
        %v4109 = vpop.f32.mrb[0].mxu0
        %4110 = vmatprep.mubr.bf16.mxu0 0
        %4111 = vmatmul.mubr.bf16.gmra.mrb[0].mxu0 %v3436
        %v4112 = vpop.f32.mrb[0].mxu0
        %v4113 = vadd.f32 0.0, %v4112
        %v4114 = vpop.f32.mrb[0].mxu0
        %v4115 = vpop.f32.mrb[0].mxu0
        %v4116 = vadd.f32 0.0, %v4115
        %v4117 = vpop.f32.mrb[0].mxu0
        %4118 = vdwg.mxu0
        %v4119 = vadd.f32 %v4046, %v4089
        %v4120 = vadd.f32 %v4047, %v4092
        %v4121 = vadd.f32 %v4048, %v4097
        %v4122 = vadd.f32 %v4049, %v4100
        %v4123 = vadd.f32 %v4050, %v4105
        %v4124 = vadd.f32 %v4051, %v4108
        %v4125 = vadd.f32 %v4052, %v4113
        %v4126 = vadd.f32 %v4053, %v4116
        %v4127 = vld [vmem:[%s2339 + $0x1] sm:$0xff]
        %v4128 = vld [vmem:[%s2339 + $0x11] sm:$0xff]
        %v4129 = vld [vmem:[%s2339 + $0x21] sm:$0xff]
        %v4130 = vld [vmem:[%s2339 + $0x31] sm:$0xff]
        %v4131 = vld [vmem:[%s2339 + $0x41] sm:$0xff]
        %v4132 = vld [vmem:[%s2339 + $0x51] sm:$0xff]
        %v4133 = vld [vmem:[%s2339 + $0x61] sm:$0xff]
        %v4134 = vld [vmem:[%s2339 + $0x71] sm:$0xff]
        %v4135 = vpack.c.bf16 %v4128, %v4127
        %v4136 = vpack.c.bf16 %v4130, %v4129
        %v4137 = vpack.c.bf16 %v4132, %v4131
        %v4138 = vpack.c.bf16 %v4134, %v4133
        %v4140 = vsel %vm2247, %v4135, 0
        %v4143 = vsel %vm2247, %v4136, 0
        %v4146 = vsel %vm2247, %v4137, 0
        %v4149 = vsel %vm2247, %v4138, 0
        %4151 = vmatprep.subr.bf16.mxu0 0
        %4152 = vmatpush1.bf16.msra.mxu0 %v3418
        %4153 = vmatprep.subr.bf16.mxu0 0
        %4154 = vmatpush1.bf16.msra.mxu0 %v3419
        %4155 = vmatprep.subr.bf16.mxu0 0
        %4156 = vmatpush1.bf16.msra.mxu0 %v3420
        %4157 = vmatprep.subr.bf16.mxu0 0
        %4158 = vmatpush1.bf16.msra.mxu0 %v3421
        %4159 = vmatprep.subr.bf16.mxu0 0
        %4160 = vmatpush1.bf16.msra.mxu0 0
        %4161 = vmatprep.subr.bf16.mxu0 0
        %4162 = vmatpush1.bf16.msra.mxu0 0
        %4163 = vmatprep.subr.bf16.mxu0 0
        %4164 = vmatpush1.bf16.msra.mxu0 0
        %4165 = vmatprep.subr.bf16.mxu0 0
        %4166 = vmatpush1.bf16.msra.mxu0 0
        %4167 = vmatprep.subr.bf16.mxu0 0
        %4168 = vmatpush1.bf16.msra.mxu0 0
        %4169 = vmatprep.subr.bf16.mxu0 0
        %4170 = vmatpush1.bf16.msra.mxu0 0
        %4171 = vmatprep.subr.bf16.mxu0 0
        %4172 = vmatpush1.bf16.msra.mxu0 0
        %4173 = vmatprep.subr.bf16.mxu0 0
        %4174 = vmatpush1.bf16.msra.mxu0 0
        %4175 = vmatprep.subr.bf16.mxu0 0
        %4176 = vmatpush1.bf16.msra.mxu0 0
        %4177 = vmatprep.subr.bf16.mxu0 0
        %4178 = vmatpush1.bf16.msra.mxu0 0
        %4179 = vmatprep.subr.bf16.mxu0 0
        %4180 = vmatpush1.bf16.msra.mxu0 0
        %4181 = vmatprep.subr.bf16.mxu0 0
        %4182 = vmatpush1.bf16.msra.mxu0 0
        %4183 = vmatprep.mubr.bf16.mxu0 0
        %4184 = vmatmul.mubr.bf16.gmra.mrb[0].mxu0 %v4140
        %v4185 = vpop.f32.mrb[0].mxu0
        %v4186 = vadd.f32 0.0, %v4185
        %v4187 = vpop.f32.mrb[0].mxu0
        %v4188 = vpop.f32.mrb[0].mxu0
        %v4189 = vadd.f32 0.0, %v4188
        %v4190 = vpop.f32.mrb[0].mxu0
        %4191 = vmatprep.mubr.bf16.mxu0 0
        %4192 = vmatmul.mubr.bf16.gmra.mrb[0].mxu0 %v4143
        %v4193 = vpop.f32.mrb[0].mxu0
        %v4194 = vadd.f32 0.0, %v4193
        %v4195 = vpop.f32.mrb[0].mxu0
        %v4196 = vpop.f32.mrb[0].mxu0
        %v4197 = vadd.f32 0.0, %v4196
        %v4198 = vpop.f32.mrb[0].mxu0
        %4199 = vmatprep.mubr.bf16.mxu0 0
        %4200 = vmatmul.mubr.bf16.gmra.mrb[0].mxu0 %v4146
        %v4201 = vpop.f32.mrb[0].mxu0
        %v4202 = vadd.f32 0.0, %v4201
        %v4203 = vpop.f32.mrb[0].mxu0
        %v4204 = vpop.f32.mrb[0].mxu0
        %v4205 = vadd.f32 0.0, %v4204
        %v4206 = vpop.f32.mrb[0].mxu0
        %4207 = vmatprep.mubr.bf16.mxu0 0
        %4208 = vmatmul.mubr.bf16.gmra.mrb[0].mxu0 %v4149
        %v4209 = vpop.f32.mrb[0].mxu0
        %v4210 = vadd.f32 0.0, %v4209
        %v4211 = vpop.f32.mrb[0].mxu0
        %v4212 = vpop.f32.mrb[0].mxu0
        %v4213 = vadd.f32 0.0, %v4212
        %v4214 = vpop.f32.mrb[0].mxu0
        %4215 = vdwg.mxu0
        %v4216 = vadd.f32 %v4119, %v4186
        %v4217 = vadd.f32 %v4120, %v4189
        %v4218 = vadd.f32 %v4121, %v4194
        %v4219 = vadd.f32 %v4122, %v4197
        %v4220 = vadd.f32 %v4123, %v4202
        %v4221 = vadd.f32 %v4124, %v4205
        %v4222 = vadd.f32 %v4125, %v4210
        %v4223 = vadd.f32 %v4126, %v4213
        %v4224 = vmax.f32 %v3503, %v4216
        %v4225 = vmax.f32 %v3504, %v4217
        %v4226 = vmax.f32 %v3505, %v4218
        %v4227 = vmax.f32 %v3506, %v4219
        %v4228 = vmax.f32 %v3507, %v4220
        %v4229 = vmax.f32 %v3508, %v4221
        %v4230 = vmax.f32 %v3509, %v4222
        %v4231 = vmax.f32 %v3510, %v4223
        %4232 = vmatprep.subr.bf16.mxu0 0
        %4233 = vmatpush1.bf16.msra.mxu0 %v2478
        %4234 = vmatprep.subr.bf16.mxu0 0
        %4235 = vmatpush1.bf16.msra.mxu0 %v2479
        %4236 = vmatprep.subr.bf16.mxu0 0
        %4237 = vmatpush1.bf16.msra.mxu0 %v2480
        %4238 = vmatprep.subr.bf16.mxu0 0
        %4239 = vmatpush1.bf16.msra.mxu0 %v2481
        %4240 = vmatprep.subr.bf16.mxu0 0
        %4241 = vmatpush1.bf16.msra.mxu0 0
        %4242 = vmatprep.subr.bf16.mxu0 0
        %4243 = vmatpush1.bf16.msra.mxu0 0
        %4244 = vmatprep.subr.bf16.mxu0 0
        %4245 = vmatpush1.bf16.msra.mxu0 0
        %4246 = vmatprep.subr.bf16.mxu0 0
        %4247 = vmatpush1.bf16.msra.mxu0 0
        %4248 = vmatprep.subr.bf16.mxu0 0
        %4249 = vmatpush1.bf16.msra.mxu0 0
        %4250 = vmatprep.subr.bf16.mxu0 0
        %4251 = vmatpush1.bf16.msra.mxu0 0
        %4252 = vmatprep.subr.bf16.mxu0 0
        %4253 = vmatpush1.bf16.msra.mxu0 0
        %4254 = vmatprep.subr.bf16.mxu0 0
        %4255 = vmatpush1.bf16.msra.mxu0 0
        %4256 = vmatprep.subr.bf16.mxu0 0
        %4257 = vmatpush1.bf16.msra.mxu0 0
        %4258 = vmatprep.subr.bf16.mxu0 0
        %4259 = vmatpush1.bf16.msra.mxu0 0
        %4260 = vmatprep.subr.bf16.mxu0 0
        %4261 = vmatpush1.bf16.msra.mxu0 0
        %4262 = vmatprep.subr.bf16.mxu0 0
        %4263 = vmatpush1.bf16.msra.mxu0 0
        %4264 = vmatprep.mubr.bf16.mxu0 0
        %4265 = vmatmul.mubr.bf16.gmra.mrb[0].mxu0 %v2943
        %v4266 = vpop.f32.mrb[0].mxu0
        %v4267 = vadd.f32 0.0, %v4266
        %v4268 = vpop.f32.mrb[0].mxu0
        %v4269 = vpop.f32.mrb[0].mxu0
        %v4270 = vadd.f32 0.0, %v4269
        %v4271 = vpop.f32.mrb[0].mxu0
        %4272 = vmatprep.mubr.bf16.mxu0 0
        %4273 = vmatmul.mubr.bf16.gmra.mrb[0].mxu0 %v2946
        %v4274 = vpop.f32.mrb[0].mxu0
        %v4275 = vadd.f32 0.0, %v4274
        %v4276 = vpop.f32.mrb[0].mxu0
        %v4277 = vpop.f32.mrb[0].mxu0
        %v4278 = vadd.f32 0.0, %v4277
        %v4279 = vpop.f32.mrb[0].mxu0
        %4280 = vmatprep.mubr.bf16.mxu0 0
        %4281 = vmatmul.mubr.bf16.gmra.mrb[0].mxu0 %v2949
        %v4282 = vpop.f32.mrb[0].mxu0
        %v4283 = vadd.f32 0.0, %v4282
        %v4284 = vpop.f32.mrb[0].mxu0
        %v4285 = vpop.f32.mrb[0].mxu0
        %v4286 = vadd.f32 0.0, %v4285
        %v4287 = vpop.f32.mrb[0].mxu0
        %4288 = vmatprep.mubr.bf16.mxu0 0
        %4289 = vmatmul.mubr.bf16.gmra.mrb[0].mxu0 %v2952
        %v4290 = vpop.f32.mrb[0].mxu0
        %v4291 = vadd.f32 0.0, %v4290
        %v4292 = vpop.f32.mrb[0].mxu0
        %v4293 = vpop.f32.mrb[0].mxu0
        %v4294 = vadd.f32 0.0, %v4293
        %v4295 = vpop.f32.mrb[0].mxu0
        %4296 = vdwg.mxu0
        %4297 = vmatprep.subr.bf16.mxu0 0
        %4298 = vmatpush1.bf16.msra.mxu0 %v2579
        %4299 = vmatprep.subr.bf16.mxu0 0
        %4300 = vmatpush1.bf16.msra.mxu0 %v2580
        %4301 = vmatprep.subr.bf16.mxu0 0
        %4302 = vmatpush1.bf16.msra.mxu0 %v2581
        %4303 = vmatprep.subr.bf16.mxu0 0
        %4304 = vmatpush1.bf16.msra.mxu0 %v2582
        %4305 = vmatprep.subr.bf16.mxu0 0
        %4306 = vmatpush1.bf16.msra.mxu0 0
        %4307 = vmatprep.subr.bf16.mxu0 0
        %4308 = vmatpush1.bf16.msra.mxu0 0
        %4309 = vmatprep.subr.bf16.mxu0 0
        %4310 = vmatpush1.bf16.msra.mxu0 0
        %4311 = vmatprep.subr.bf16.mxu0 0
        %4312 = vmatpush1.bf16.msra.mxu0 0
        %4313 = vmatprep.subr.bf16.mxu0 0
        %4314 = vmatpush1.bf16.msra.mxu0 0
        %4315 = vmatprep.subr.bf16.mxu0 0
        %4316 = vmatpush1.bf16.msra.mxu0 0
        %4317 = vmatprep.subr.bf16.mxu0 0
        %4318 = vmatpush1.bf16.msra.mxu0 0
        %4319 = vmatprep.subr.bf16.mxu0 0
        %4320 = vmatpush1.bf16.msra.mxu0 0
        %4321 = vmatprep.subr.bf16.mxu0 0
        %4322 = vmatpush1.bf16.msra.mxu0 0
        %4323 = vmatprep.subr.bf16.mxu0 0
        %4324 = vmatpush1.bf16.msra.mxu0 0
        %4325 = vmatprep.subr.bf16.mxu0 0
        %4326 = vmatpush1.bf16.msra.mxu0 0
        %4327 = vmatprep.subr.bf16.mxu0 0
        %4328 = vmatpush1.bf16.msra.mxu0 0
        %4329 = vmatprep.mubr.bf16.mxu0 0
        %4330 = vmatmul.mubr.bf16.gmra.mrb[0].mxu0 %v2822
        %v4331 = vpop.f32.mrb[0].mxu0
        %v4332 = vadd.f32 %v4267, %v4331
        %v4333 = vpop.f32.mrb[0].mxu0
        %v4334 = vpop.f32.mrb[0].mxu0
        %v4335 = vadd.f32 %v4270, %v4334
        %v4336 = vpop.f32.mrb[0].mxu0
        %4337 = vmatprep.mubr.bf16.mxu0 0
        %4338 = vmatmul.mubr.bf16.gmra.mrb[0].mxu0 %v2825
        %v4339 = vpop.f32.mrb[0].mxu0
        %v4340 = vadd.f32 %v4275, %v4339
        %v4341 = vpop.f32.mrb[0].mxu0
        %v4342 = vpop.f32.mrb[0].mxu0
        %v4343 = vadd.f32 %v4278, %v4342
        %v4344 = vpop.f32.mrb[0].mxu0
        %4345 = vmatprep.mubr.bf16.mxu0 0
        %4346 = vmatmul.mubr.bf16.gmra.mrb[0].mxu0 %v2828
        %v4347 = vpop.f32.mrb[0].mxu0
        %v4348 = vadd.f32 %v4283, %v4347
        %v4349 = vpop.f32.mrb[0].mxu0
        %v4350 = vpop.f32.mrb[0].mxu0
        %v4351 = vadd.f32 %v4286, %v4350
        %v4352 = vpop.f32.mrb[0].mxu0
        %4353 = vmatprep.mubr.bf16.mxu0 0
        %4354 = vmatmul.mubr.bf16.gmra.mrb[0].mxu0 %v2831
        %v4355 = vpop.f32.mrb[0].mxu0
        %v4356 = vadd.f32 %v4291, %v4355
        %v4357 = vpop.f32.mrb[0].mxu0
        %v4358 = vpop.f32.mrb[0].mxu0
        %v4359 = vadd.f32 %v4294, %v4358
        %v4360 = vpop.f32.mrb[0].mxu0
        %4361 = vdwg.mxu0
        %4362 = vmatprep.subr.bf16.mxu0 0
        %4363 = vmatpush1.bf16.msra.mxu0 %v2692
        %4364 = vmatprep.subr.bf16.mxu0 0
        %4365 = vmatpush1.bf16.msra.mxu0 %v2693
        %4366 = vmatprep.subr.bf16.mxu0 0
        %4367 = vmatpush1.bf16.msra.mxu0 %v2694
        %4368 = vmatprep.subr.bf16.mxu0 0
        %4369 = vmatpush1.bf16.msra.mxu0 %v2695
        %4370 = vmatprep.subr.bf16.mxu0 0
        %4371 = vmatpush1.bf16.msra.mxu0 0
        %4372 = vmatprep.subr.bf16.mxu0 0
        %4373 = vmatpush1.bf16.msra.mxu0 0
        %4374 = vmatprep.subr.bf16.mxu0 0
        %4375 = vmatpush1.bf16.msra.mxu0 0
        %4376 = vmatprep.subr.bf16.mxu0 0
        %4377 = vmatpush1.bf16.msra.mxu0 0
        %4378 = vmatprep.subr.bf16.mxu0 0
        %4379 = vmatpush1.bf16.msra.mxu0 0
        %4380 = vmatprep.subr.bf16.mxu0 0
        %4381 = vmatpush1.bf16.msra.mxu0 0
        %4382 = vmatprep.subr.bf16.mxu0 0
        %4383 = vmatpush1.bf16.msra.mxu0 0
        %4384 = vmatprep.subr.bf16.mxu0 0
        %4385 = vmatpush1.bf16.msra.mxu0 0
        %4386 = vmatprep.subr.bf16.mxu0 0
        %4387 = vmatpush1.bf16.msra.mxu0 0
        %4388 = vmatprep.subr.bf16.mxu0 0
        %4389 = vmatpush1.bf16.msra.mxu0 0
        %4390 = vmatprep.subr.bf16.mxu0 0
        %4391 = vmatpush1.bf16.msra.mxu0 0
        %4392 = vmatprep.subr.bf16.mxu0 0
        %4393 = vmatpush1.bf16.msra.mxu0 0
        %4394 = vmatprep.mubr.bf16.mxu0 0
        %4395 = vmatmul.mubr.bf16.gmra.mrb[0].mxu0 %v3064
        %v4396 = vpop.f32.mrb[0].mxu0
        %v4397 = vadd.f32 0.0, %v4396
        %v4398 = vpop.f32.mrb[0].mxu0
        %v4399 = vpop.f32.mrb[0].mxu0
        %v4400 = vadd.f32 0.0, %v4399
        %v4401 = vpop.f32.mrb[0].mxu0
        %4402 = vmatprep.mubr.bf16.mxu0 0
        %4403 = vmatmul.mubr.bf16.gmra.mrb[0].mxu0 %v3067
        %v4404 = vpop.f32.mrb[0].mxu0
        %v4405 = vadd.f32 0.0, %v4404
        %v4406 = vpop.f32.mrb[0].mxu0
        %v4407 = vpop.f32.mrb[0].mxu0
        %v4408 = vadd.f32 0.0, %v4407
        %v4409 = vpop.f32.mrb[0].mxu0
        %4410 = vmatprep.mubr.bf16.mxu0 0
        %4411 = vmatmul.mubr.bf16.gmra.mrb[0].mxu0 %v3070
        %v4412 = vpop.f32.mrb[0].mxu0
        %v4413 = vadd.f32 0.0, %v4412
        %v4414 = vpop.f32.mrb[0].mxu0
        %v4415 = vpop.f32.mrb[0].mxu0
        %v4416 = vadd.f32 0.0, %v4415
        %v4417 = vpop.f32.mrb[0].mxu0
        %4418 = vmatprep.mubr.bf16.mxu0 0
        %4419 = vmatmul.mubr.bf16.gmra.mrb[0].mxu0 %v3073
        %v4420 = vpop.f32.mrb[0].mxu0
        %v4421 = vadd.f32 0.0, %v4420
        %v4422 = vpop.f32.mrb[0].mxu0
        %v4423 = vpop.f32.mrb[0].mxu0
        %v4424 = vadd.f32 0.0, %v4423
        %v4425 = vpop.f32.mrb[0].mxu0
        %4426 = vdwg.mxu0
        %v4427 = vadd.f32 %v4332, %v4397
        %v4428 = vadd.f32 %v4335, %v4400
        %v4429 = vadd.f32 %v4340, %v4405
        %v4430 = vadd.f32 %v4343, %v4408
        %v4431 = vadd.f32 %v4348, %v4413
        %v4432 = vadd.f32 %v4351, %v4416
        %v4433 = vadd.f32 %v4356, %v4421
        %v4434 = vadd.f32 %v4359, %v4424
        %4435 = vmatprep.subr.bf16.mxu0 0
        %4436 = vmatpush1.bf16.msra.mxu0 %v2813
        %4437 = vmatprep.subr.bf16.mxu0 0
        %4438 = vmatpush1.bf16.msra.mxu0 %v2814
        %4439 = vmatprep.subr.bf16.mxu0 0
        %4440 = vmatpush1.bf16.msra.mxu0 %v2815
        %4441 = vmatprep.subr.bf16.mxu0 0
        %4442 = vmatpush1.bf16.msra.mxu0 %v2816
        %4443 = vmatprep.subr.bf16.mxu0 0
        %4444 = vmatpush1.bf16.msra.mxu0 0
        %4445 = vmatprep.subr.bf16.mxu0 0
        %4446 = vmatpush1.bf16.msra.mxu0 0
        %4447 = vmatprep.subr.bf16.mxu0 0
        %4448 = vmatpush1.bf16.msra.mxu0 0
        %4449 = vmatprep.subr.bf16.mxu0 0
        %4450 = vmatpush1.bf16.msra.mxu0 0
        %4451 = vmatprep.subr.bf16.mxu0 0
        %4452 = vmatpush1.bf16.msra.mxu0 0
        %4453 = vmatprep.subr.bf16.mxu0 0
        %4454 = vmatpush1.bf16.msra.mxu0 0
        %4455 = vmatprep.subr.bf16.mxu0 0
        %4456 = vmatpush1.bf16.msra.mxu0 0
        %4457 = vmatprep.subr.bf16.mxu0 0
        %4458 = vmatpush1.bf16.msra.mxu0 0
        %4459 = vmatprep.subr.bf16.mxu0 0
        %4460 = vmatpush1.bf16.msra.mxu0 0
        %4461 = vmatprep.subr.bf16.mxu0 0
        %4462 = vmatpush1.bf16.msra.mxu0 0
        %4463 = vmatprep.subr.bf16.mxu0 0
        %4464 = vmatpush1.bf16.msra.mxu0 0
        %4465 = vmatprep.subr.bf16.mxu0 0
        %4466 = vmatpush1.bf16.msra.mxu0 0
        %4467 = vmatprep.mubr.bf16.mxu0 0
        %4468 = vmatmul.mubr.bf16.gmra.mrb[0].mxu0 %v3185
        %v4469 = vpop.f32.mrb[0].mxu0
        %v4470 = vadd.f32 0.0, %v4469
        %v4471 = vpop.f32.mrb[0].mxu0
        %v4472 = vpop.f32.mrb[0].mxu0
        %v4473 = vadd.f32 0.0, %v4472
        %v4474 = vpop.f32.mrb[0].mxu0
        %4475 = vmatprep.mubr.bf16.mxu0 0
        %4476 = vmatmul.mubr.bf16.gmra.mrb[0].mxu0 %v3188
        %v4477 = vpop.f32.mrb[0].mxu0
        %v4478 = vadd.f32 0.0, %v4477
        %v4479 = vpop.f32.mrb[0].mxu0
        %v4480 = vpop.f32.mrb[0].mxu0
        %v4481 = vadd.f32 0.0, %v4480
        %v4482 = vpop.f32.mrb[0].mxu0
        %4483 = vmatprep.mubr.bf16.mxu0 0
        %4484 = vmatmul.mubr.bf16.gmra.mrb[0].mxu0 %v3191
        %v4485 = vpop.f32.mrb[0].mxu0
        %v4486 = vadd.f32 0.0, %v4485
        %v4487 = vpop.f32.mrb[0].mxu0
        %v4488 = vpop.f32.mrb[0].mxu0
        %v4489 = vadd.f32 0.0, %v4488
        %v4490 = vpop.f32.mrb[0].mxu0
        %4491 = vmatprep.mubr.bf16.mxu0 0
        %4492 = vmatmul.mubr.bf16.gmra.mrb[0].mxu0 %v3194
        %v4493 = vpop.f32.mrb[0].mxu0
        %v4494 = vadd.f32 0.0, %v4493
        %v4495 = vpop.f32.mrb[0].mxu0
        %v4496 = vpop.f32.mrb[0].mxu0
        %v4497 = vadd.f32 0.0, %v4496
        %v4498 = vpop.f32.mrb[0].mxu0
        %4499 = vdwg.mxu0
        %v4500 = vadd.f32 %v4427, %v4470
        %v4501 = vadd.f32 %v4428, %v4473
        %v4502 = vadd.f32 %v4429, %v4478
        %v4503 = vadd.f32 %v4430, %v4481
        %v4504 = vadd.f32 %v4431, %v4486
        %v4505 = vadd.f32 %v4432, %v4489
        %v4506 = vadd.f32 %v4433, %v4494
        %v4507 = vadd.f32 %v4434, %v4497
        %4508 = vmatprep.subr.bf16.mxu0 0
        %4509 = vmatpush1.bf16.msra.mxu0 %v2934
        %4510 = vmatprep.subr.bf16.mxu0 0
        %4511 = vmatpush1.bf16.msra.mxu0 %v2935
        %4512 = vmatprep.subr.bf16.mxu0 0
        %4513 = vmatpush1.bf16.msra.mxu0 %v2936
        %4514 = vmatprep.subr.bf16.mxu0 0
        %4515 = vmatpush1.bf16.msra.mxu0 %v2937
        %4516 = vmatprep.subr.bf16.mxu0 0
        %4517 = vmatpush1.bf16.msra.mxu0 0
        %4518 = vmatprep.subr.bf16.mxu0 0
        %4519 = vmatpush1.bf16.msra.mxu0 0
        %4520 = vmatprep.subr.bf16.mxu0 0
        %4521 = vmatpush1.bf16.msra.mxu0 0
        %4522 = vmatprep.subr.bf16.mxu0 0
        %4523 = vmatpush1.bf16.msra.mxu0 0
        %4524 = vmatprep.subr.bf16.mxu0 0
        %4525 = vmatpush1.bf16.msra.mxu0 0
        %4526 = vmatprep.subr.bf16.mxu0 0
        %4527 = vmatpush1.bf16.msra.mxu0 0
        %4528 = vmatprep.subr.bf16.mxu0 0
        %4529 = vmatpush1.bf16.msra.mxu0 0
        %4530 = vmatprep.subr.bf16.mxu0 0
        %4531 = vmatpush1.bf16.msra.mxu0 0
        %4532 = vmatprep.subr.bf16.mxu0 0
        %4533 = vmatpush1.bf16.msra.mxu0 0
        %4534 = vmatprep.subr.bf16.mxu0 0
        %4535 = vmatpush1.bf16.msra.mxu0 0
        %4536 = vmatprep.subr.bf16.mxu0 0
        %4537 = vmatpush1.bf16.msra.mxu0 0
        %4538 = vmatprep.subr.bf16.mxu0 0
        %4539 = vmatpush1.bf16.msra.mxu0 0
        %4540 = vmatprep.mubr.bf16.mxu0 0
        %4541 = vmatmul.mubr.bf16.gmra.mrb[0].mxu0 %v3306
        %v4542 = vpop.f32.mrb[0].mxu0
        %v4543 = vadd.f32 0.0, %v4542
        %v4544 = vpop.f32.mrb[0].mxu0
        %v4545 = vpop.f32.mrb[0].mxu0
        %v4546 = vadd.f32 0.0, %v4545
        %v4547 = vpop.f32.mrb[0].mxu0
        %4548 = vmatprep.mubr.bf16.mxu0 0
        %4549 = vmatmul.mubr.bf16.gmra.mrb[0].mxu0 %v3309
        %v4550 = vpop.f32.mrb[0].mxu0
        %v4551 = vadd.f32 0.0, %v4550
        %v4552 = vpop.f32.mrb[0].mxu0
        %v4553 = vpop.f32.mrb[0].mxu0
        %v4554 = vadd.f32 0.0, %v4553
        %v4555 = vpop.f32.mrb[0].mxu0
        %4556 = vmatprep.mubr.bf16.mxu0 0
        %4557 = vmatmul.mubr.bf16.gmra.mrb[0].mxu0 %v3312
        %v4558 = vpop.f32.mrb[0].mxu0
        %v4559 = vadd.f32 0.0, %v4558
        %v4560 = vpop.f32.mrb[0].mxu0
        %v4561 = vpop.f32.mrb[0].mxu0
        %v4562 = vadd.f32 0.0, %v4561
        %v4563 = vpop.f32.mrb[0].mxu0
        %4564 = vmatprep.mubr.bf16.mxu0 0
        %4565 = vmatmul.mubr.bf16.gmra.mrb[0].mxu0 %v3315
        %v4566 = vpop.f32.mrb[0].mxu0
        %v4567 = vadd.f32 0.0, %v4566
        %v4568 = vpop.f32.mrb[0].mxu0
        %v4569 = vpop.f32.mrb[0].mxu0
        %v4570 = vadd.f32 0.0, %v4569
        %v4571 = vpop.f32.mrb[0].mxu0
        %4572 = vdwg.mxu0
        %v4573 = vadd.f32 %v4500, %v4543
        %v4574 = vadd.f32 %v4501, %v4546
        %v4575 = vadd.f32 %v4502, %v4551
        %v4576 = vadd.f32 %v4503, %v4554
        %v4577 = vadd.f32 %v4504, %v4559
        %v4578 = vadd.f32 %v4505, %v4562
        %v4579 = vadd.f32 %v4506, %v4567
        %v4580 = vadd.f32 %v4507, %v4570
        %4581 = vmatprep.subr.bf16.mxu0 0
        %4582 = vmatpush1.bf16.msra.mxu0 %v3055
        %4583 = vmatprep.subr.bf16.mxu0 0
        %4584 = vmatpush1.bf16.msra.mxu0 %v3056
        %4585 = vmatprep.subr.bf16.mxu0 0
        %4586 = vmatpush1.bf16.msra.mxu0 %v3057
        %4587 = vmatprep.subr.bf16.mxu0 0
        %4588 = vmatpush1.bf16.msra.mxu0 %v3058
        %4589 = vmatprep.subr.bf16.mxu0 0
        %4590 = vmatpush1.bf16.msra.mxu0 0
        %4591 = vmatprep.subr.bf16.mxu0 0
        %4592 = vmatpush1.bf16.msra.mxu0 0
        %4593 = vmatprep.subr.bf16.mxu0 0
        %4594 = vmatpush1.bf16.msra.mxu0 0
        %4595 = vmatprep.subr.bf16.mxu0 0
        %4596 = vmatpush1.bf16.msra.mxu0 0
        %4597 = vmatprep.subr.bf16.mxu0 0
        %4598 = vmatpush1.bf16.msra.mxu0 0
        %4599 = vmatprep.subr.bf16.mxu0 0
        %4600 = vmatpush1.bf16.msra.mxu0 0
        %4601 = vmatprep.subr.bf16.mxu0 0
        %4602 = vmatpush1.bf16.msra.mxu0 0
        %4603 = vmatprep.subr.bf16.mxu0 0
        %4604 = vmatpush1.bf16.msra.mxu0 0
        %4605 = vmatprep.subr.bf16.mxu0 0
        %4606 = vmatpush1.bf16.msra.mxu0 0
        %4607 = vmatprep.subr.bf16.mxu0 0
        %4608 = vmatpush1.bf16.msra.mxu0 0
        %4609 = vmatprep.subr.bf16.mxu0 0
        %4610 = vmatpush1.bf16.msra.mxu0 0
        %4611 = vmatprep.subr.bf16.mxu0 0
        %4612 = vmatpush1.bf16.msra.mxu0 0
        %4613 = vmatprep.mubr.bf16.mxu0 0
        %4614 = vmatmul.mubr.bf16.gmra.mrb[0].mxu0 %v3427
        %v4615 = vpop.f32.mrb[0].mxu0
        %v4616 = vadd.f32 0.0, %v4615
        %v4617 = vpop.f32.mrb[0].mxu0
        %v4618 = vpop.f32.mrb[0].mxu0
        %v4619 = vadd.f32 0.0, %v4618
        %v4620 = vpop.f32.mrb[0].mxu0
        %4621 = vmatprep.mubr.bf16.mxu0 0
        %4622 = vmatmul.mubr.bf16.gmra.mrb[0].mxu0 %v3430
        %v4623 = vpop.f32.mrb[0].mxu0
        %v4624 = vadd.f32 0.0, %v4623
        %v4625 = vpop.f32.mrb[0].mxu0
        %v4626 = vpop.f32.mrb[0].mxu0
        %v4627 = vadd.f32 0.0, %v4626
        %v4628 = vpop.f32.mrb[0].mxu0
        %4629 = vmatprep.mubr.bf16.mxu0 0
        %4630 = vmatmul.mubr.bf16.gmra.mrb[0].mxu0 %v3433
        %v4631 = vpop.f32.mrb[0].mxu0
        %v4632 = vadd.f32 0.0, %v4631
        %v4633 = vpop.f32.mrb[0].mxu0
        %v4634 = vpop.f32.mrb[0].mxu0
        %v4635 = vadd.f32 0.0, %v4634
        %v4636 = vpop.f32.mrb[0].mxu0
        %4637 = vmatprep.mubr.bf16.mxu0 0
        %4638 = vmatmul.mubr.bf16.gmra.mrb[0].mxu0 %v3436
        %v4639 = vpop.f32.mrb[0].mxu0
        %v4640 = vadd.f32 0.0, %v4639
        %v4641 = vpop.f32.mrb[0].mxu0
        %v4642 = vpop.f32.mrb[0].mxu0
        %v4643 = vadd.f32 0.0, %v4642
        %v4644 = vpop.f32.mrb[0].mxu0
        %4645 = vdwg.mxu0
        %v4646 = vadd.f32 %v4573, %v4616
        %v4647 = vadd.f32 %v4574, %v4619
        %v4648 = vadd.f32 %v4575, %v4624
        %v4649 = vadd.f32 %v4576, %v4627
        %v4650 = vadd.f32 %v4577, %v4632
        %v4651 = vadd.f32 %v4578, %v4635
        %v4652 = vadd.f32 %v4579, %v4640
        %v4653 = vadd.f32 %v4580, %v4643
        %s4654 = scalar_lea.vmem [#allocation2], 304
        %v4655 = vld [vmem:[%s4654] sm:$0xff]
        %v4656 = vld [vmem:[%s4654 + $0x10] sm:$0xff]
        %v4657 = vld [vmem:[%s4654 + $0x20] sm:$0xff]
        %v4658 = vld [vmem:[%s4654 + $0x30] sm:$0xff]
        %v4659 = vld [vmem:[%s4654 + $0x40] sm:$0xff]
        %v4660 = vld [vmem:[%s4654 + $0x50] sm:$0xff]
        %v4661 = vld [vmem:[%s4654 + $0x60] sm:$0xff]
        %v4662 = vld [vmem:[%s4654 + $0x70] sm:$0xff]
        %v4663 = vpack.c.bf16 %v4656, %v4655
        %v4664 = vpack.c.bf16 %v4658, %v4657
        %v4665 = vpack.c.bf16 %v4660, %v4659
        %v4666 = vpack.c.bf16 %v4662, %v4661
        %v4668 = vsel %vm2247, %v4663, 0
        %v4671 = vsel %vm2247, %v4664, 0
        %v4674 = vsel %vm2247, %v4665, 0
        %v4677 = vsel %vm2247, %v4666, 0
        %4679 = vmatprep.subr.bf16.mxu0 0
        %4680 = vmatpush1.bf16.msra.mxu0 %v3176
        %4681 = vmatprep.subr.bf16.mxu0 0
        %4682 = vmatpush1.bf16.msra.mxu0 %v3177
        %4683 = vmatprep.subr.bf16.mxu0 0
        %4684 = vmatpush1.bf16.msra.mxu0 %v3178
        %4685 = vmatprep.subr.bf16.mxu0 0
        %4686 = vmatpush1.bf16.msra.mxu0 %v3179
        %4687 = vmatprep.subr.bf16.mxu0 0
        %4688 = vmatpush1.bf16.msra.mxu0 0
        %4689 = vmatprep.subr.bf16.mxu0 0
        %4690 = vmatpush1.bf16.msra.mxu0 0
        %4691 = vmatprep.subr.bf16.mxu0 0
        %4692 = vmatpush1.bf16.msra.mxu0 0
        %4693 = vmatprep.subr.bf16.mxu0 0
        %4694 = vmatpush1.bf16.msra.mxu0 0
        %4695 = vmatprep.subr.bf16.mxu0 0
        %4696 = vmatpush1.bf16.msra.mxu0 0
        %4697 = vmatprep.subr.bf16.mxu0 0
        %4698 = vmatpush1.bf16.msra.mxu0 0
        %4699 = vmatprep.subr.bf16.mxu0 0
        %4700 = vmatpush1.bf16.msra.mxu0 0
        %4701 = vmatprep.subr.bf16.mxu0 0
        %4702 = vmatpush1.bf16.msra.mxu0 0
        %4703 = vmatprep.subr.bf16.mxu0 0
        %4704 = vmatpush1.bf16.msra.mxu0 0
        %4705 = vmatprep.subr.bf16.mxu0 0
        %4706 = vmatpush1.bf16.msra.mxu0 0
        %4707 = vmatprep.subr.bf16.mxu0 0
        %4708 = vmatpush1.bf16.msra.mxu0 0
        %4709 = vmatprep.subr.bf16.mxu0 0
        %4710 = vmatpush1.bf16.msra.mxu0 0
        %4711 = vmatprep.mubr.bf16.mxu0 0
        %4712 = vmatmul.mubr.bf16.gmra.mrb[0].mxu0 %v4668
        %v4713 = vpop.f32.mrb[0].mxu0
        %v4714 = vadd.f32 0.0, %v4713
        %v4715 = vpop.f32.mrb[0].mxu0
        %v4716 = vpop.f32.mrb[0].mxu0
        %v4717 = vadd.f32 0.0, %v4716
        %v4718 = vpop.f32.mrb[0].mxu0
        %4719 = vmatprep.mubr.bf16.mxu0 0
        %4720 = vmatmul.mubr.bf16.gmra.mrb[0].mxu0 %v4671
        %v4721 = vpop.f32.mrb[0].mxu0
        %v4722 = vadd.f32 0.0, %v4721
        %v4723 = vpop.f32.mrb[0].mxu0
        %v4724 = vpop.f32.mrb[0].mxu0
        %v4725 = vadd.f32 0.0, %v4724
        %v4726 = vpop.f32.mrb[0].mxu0
        %4727 = vmatprep.mubr.bf16.mxu0 0
        %4728 = vmatmul.mubr.bf16.gmra.mrb[0].mxu0 %v4674
        %v4729 = vpop.f32.mrb[0].mxu0
        %v4730 = vadd.f32 0.0, %v4729
        %v4731 = vpop.f32.mrb[0].mxu0
        %v4732 = vpop.f32.mrb[0].mxu0
        %v4733 = vadd.f32 0.0, %v4732
        %v4734 = vpop.f32.mrb[0].mxu0
        %4735 = vmatprep.mubr.bf16.mxu0 0
        %4736 = vmatmul.mubr.bf16.gmra.mrb[0].mxu0 %v4677
        %v4737 = vpop.f32.mrb[0].mxu0
        %v4738 = vadd.f32 0.0, %v4737
        %v4739 = vpop.f32.mrb[0].mxu0
        %v4740 = vpop.f32.mrb[0].mxu0
        %v4741 = vadd.f32 0.0, %v4740
        %v4742 = vpop.f32.mrb[0].mxu0
        %4743 = vdwg.mxu0
        %v4744 = vadd.f32 %v4646, %v4714
        %v4745 = vadd.f32 %v4647, %v4717
        %v4746 = vadd.f32 %v4648, %v4722
        %v4747 = vadd.f32 %v4649, %v4725
        %v4748 = vadd.f32 %v4650, %v4730
        %v4749 = vadd.f32 %v4651, %v4733
        %v4750 = vadd.f32 %v4652, %v4738
        %v4751 = vadd.f32 %v4653, %v4741
        %s4752 = scalar_lea.vmem [#allocation2], 448
        %v4753 = vld [vmem:[%s4752] sm:$0xff]
        %v4754 = vld [vmem:[%s4752 + $0x10] sm:$0xff]
        %v4755 = vld [vmem:[%s4752 + $0x20] sm:$0xff]
        %v4756 = vld [vmem:[%s4752 + $0x30] sm:$0xff]
        %v4757 = vld [vmem:[%s4752 + $0x40] sm:$0xff]
        %v4758 = vld [vmem:[%s4752 + $0x50] sm:$0xff]
        %v4759 = vld [vmem:[%s4752 + $0x60] sm:$0xff]
        %v4760 = vld [vmem:[%s4752 + $0x70] sm:$0xff]
        %v4761 = vpack.c.bf16 %v4754, %v4753
        %v4762 = vpack.c.bf16 %v4756, %v4755
        %v4763 = vpack.c.bf16 %v4758, %v4757
        %v4764 = vpack.c.bf16 %v4760, %v4759
        %v4766 = vsel %vm2247, %v4761, 0
        %v4769 = vsel %vm2247, %v4762, 0
        %v4772 = vsel %vm2247, %v4763, 0
        %v4775 = vsel %vm2247, %v4764, 0
        %4777 = vmatprep.subr.bf16.mxu0 0
        %4778 = vmatpush1.bf16.msra.mxu0 %v3297
        %4779 = vmatprep.subr.bf16.mxu0 0
        %4780 = vmatpush1.bf16.msra.mxu0 %v3298
        %4781 = vmatprep.subr.bf16.mxu0 0
        %4782 = vmatpush1.bf16.msra.mxu0 %v3299
        %4783 = vmatprep.subr.bf16.mxu0 0
        %4784 = vmatpush1.bf16.msra.mxu0 %v3300
        %4785 = vmatprep.subr.bf16.mxu0 0
        %4786 = vmatpush1.bf16.msra.mxu0 0
        %4787 = vmatprep.subr.bf16.mxu0 0
        %4788 = vmatpush1.bf16.msra.mxu0 0
        %4789 = vmatprep.subr.bf16.mxu0 0
        %4790 = vmatpush1.bf16.msra.mxu0 0
        %4791 = vmatprep.subr.bf16.mxu0 0
        %4792 = vmatpush1.bf16.msra.mxu0 0
        %4793 = vmatprep.subr.bf16.mxu0 0
        %4794 = vmatpush1.bf16.msra.mxu0 0
        %4795 = vmatprep.subr.bf16.mxu0 0
        %4796 = vmatpush1.bf16.msra.mxu0 0
        %4797 = vmatprep.subr.bf16.mxu0 0
        %4798 = vmatpush1.bf16.msra.mxu0 0
        %4799 = vmatprep.subr.bf16.mxu0 0
        %4800 = vmatpush1.bf16.msra.mxu0 0
        %4801 = vmatprep.subr.bf16.mxu0 0
        %4802 = vmatpush1.bf16.msra.mxu0 0
        %4803 = vmatprep.subr.bf16.mxu0 0
        %4804 = vmatpush1.bf16.msra.mxu0 0
        %4805 = vmatprep.subr.bf16.mxu0 0
        %4806 = vmatpush1.bf16.msra.mxu0 0
        %4807 = vmatprep.subr.bf16.mxu0 0
        %4808 = vmatpush1.bf16.msra.mxu0 0
        %4809 = vmatprep.mubr.bf16.mxu0 0
        %4810 = vmatmul.mubr.bf16.gmra.mrb[0].mxu0 %v4766
        %v4811 = vpop.f32.mrb[0].mxu0
        %v4812 = vadd.f32 0.0, %v4811
        %v4813 = vpop.f32.mrb[0].mxu0
        %v4814 = vpop.f32.mrb[0].mxu0
        %v4815 = vadd.f32 0.0, %v4814
        %v4816 = vpop.f32.mrb[0].mxu0
        %4817 = vmatprep.mubr.bf16.mxu0 0
        %4818 = vmatmul.mubr.bf16.gmra.mrb[0].mxu0 %v4769
        %v4819 = vpop.f32.mrb[0].mxu0
        %v4820 = vadd.f32 0.0, %v4819
        %v4821 = vpop.f32.mrb[0].mxu0
        %v4822 = vpop.f32.mrb[0].mxu0
        %v4823 = vadd.f32 0.0, %v4822
        %v4824 = vpop.f32.mrb[0].mxu0
        %4825 = vmatprep.mubr.bf16.mxu0 0
        %4826 = vmatmul.mubr.bf16.gmra.mrb[0].mxu0 %v4772
        %v4827 = vpop.f32.mrb[0].mxu0
        %v4828 = vadd.f32 0.0, %v4827
        %v4829 = vpop.f32.mrb[0].mxu0
        %v4830 = vpop.f32.mrb[0].mxu0
        %v4831 = vadd.f32 0.0, %v4830
        %v4832 = vpop.f32.mrb[0].mxu0
        %4833 = vmatprep.mubr.bf16.mxu0 0
        %4834 = vmatmul.mubr.bf16.gmra.mrb[0].mxu0 %v4775
        %v4835 = vpop.f32.mrb[0].mxu0
        %v4836 = vadd.f32 0.0, %v4835
        %v4837 = vpop.f32.mrb[0].mxu0
        %v4838 = vpop.f32.mrb[0].mxu0
        %v4839 = vadd.f32 0.0, %v4838
        %v4840 = vpop.f32.mrb[0].mxu0
        %4841 = vdwg.mxu0
        %v4842 = vadd.f32 %v4744, %v4812
        %v4843 = vadd.f32 %v4745, %v4815
        %v4844 = vadd.f32 %v4746, %v4820
        %v4845 = vadd.f32 %v4747, %v4823
        %v4846 = vadd.f32 %v4748, %v4828
        %v4847 = vadd.f32 %v4749, %v4831
        %v4848 = vadd.f32 %v4750, %v4836
        %v4849 = vadd.f32 %v4751, %v4839
        %v4850 = vld [vmem:[%s4654 + $0x1] sm:$0xff]
        %v4851 = vld [vmem:[%s4654 + $0x11] sm:$0xff]
        %v4852 = vld [vmem:[%s4654 + $0x21] sm:$0xff]
        %v4853 = vld [vmem:[%s4654 + $0x31] sm:$0xff]
        %v4854 = vld [vmem:[%s4654 + $0x41] sm:$0xff]
        %v4855 = vld [vmem:[%s4654 + $0x51] sm:$0xff]
        %v4856 = vld [vmem:[%s4654 + $0x61] sm:$0xff]
        %v4857 = vld [vmem:[%s4654 + $0x71] sm:$0xff]
        %v4858 = vpack.c.bf16 %v4851, %v4850
        %v4859 = vpack.c.bf16 %v4853, %v4852
        %v4860 = vpack.c.bf16 %v4855, %v4854
        %v4861 = vpack.c.bf16 %v4857, %v4856
        %v4863 = vsel %vm2247, %v4858, 0
        %v4866 = vsel %vm2247, %v4859, 0
        %v4869 = vsel %vm2247, %v4860, 0
        %v4872 = vsel %vm2247, %v4861, 0
        %4874 = vmatprep.subr.bf16.mxu0 0
        %4875 = vmatpush1.bf16.msra.mxu0 %v3418
        %4876 = vmatprep.subr.bf16.mxu0 0
        %4877 = vmatpush1.bf16.msra.mxu0 %v3419
        %4878 = vmatprep.subr.bf16.mxu0 0
        %4879 = vmatpush1.bf16.msra.mxu0 %v3420
        %4880 = vmatprep.subr.bf16.mxu0 0
        %4881 = vmatpush1.bf16.msra.mxu0 %v3421
        %4882 = vmatprep.subr.bf16.mxu0 0
        %4883 = vmatpush1.bf16.msra.mxu0 0
        %4884 = vmatprep.subr.bf16.mxu0 0
        %4885 = vmatpush1.bf16.msra.mxu0 0
        %4886 = vmatprep.subr.bf16.mxu0 0
        %4887 = vmatpush1.bf16.msra.mxu0 0
        %4888 = vmatprep.subr.bf16.mxu0 0
        %4889 = vmatpush1.bf16.msra.mxu0 0
        %4890 = vmatprep.subr.bf16.mxu0 0
        %4891 = vmatpush1.bf16.msra.mxu0 0
        %4892 = vmatprep.subr.bf16.mxu0 0
        %4893 = vmatpush1.bf16.msra.mxu0 0
        %4894 = vmatprep.subr.bf16.mxu0 0
        %4895 = vmatpush1.bf16.msra.mxu0 0
        %4896 = vmatprep.subr.bf16.mxu0 0
        %4897 = vmatpush1.bf16.msra.mxu0 0
        %4898 = vmatprep.subr.bf16.mxu0 0
        %4899 = vmatpush1.bf16.msra.mxu0 0
        %4900 = vmatprep.subr.bf16.mxu0 0
        %4901 = vmatpush1.bf16.msra.mxu0 0
        %4902 = vmatprep.subr.bf16.mxu0 0
        %4903 = vmatpush1.bf16.msra.mxu0 0
        %4904 = vmatprep.subr.bf16.mxu0 0
        %4905 = vmatpush1.bf16.msra.mxu0 0
        %4906 = vmatprep.mubr.bf16.mxu0 0
        %4907 = vmatmul.mubr.bf16.gmra.mrb[0].mxu0 %v4863
        %v4908 = vpop.f32.mrb[0].mxu0
        %v4909 = vadd.f32 0.0, %v4908
        %v4910 = vpop.f32.mrb[0].mxu0
        %v4911 = vpop.f32.mrb[0].mxu0
        %v4912 = vadd.f32 0.0, %v4911
        %v4913 = vpop.f32.mrb[0].mxu0
        %4914 = vmatprep.mubr.bf16.mxu0 0
        %4915 = vmatmul.mubr.bf16.gmra.mrb[0].mxu0 %v4866
        %v4916 = vpop.f32.mrb[0].mxu0
        %v4917 = vadd.f32 0.0, %v4916
        %v4918 = vpop.f32.mrb[0].mxu0
        %v4919 = vpop.f32.mrb[0].mxu0
        %v4920 = vadd.f32 0.0, %v4919
        %v4921 = vpop.f32.mrb[0].mxu0
        %4922 = vmatprep.mubr.bf16.mxu0 0
        %4923 = vmatmul.mubr.bf16.gmra.mrb[0].mxu0 %v4869
        %v4924 = vpop.f32.mrb[0].mxu0
        %v4925 = vadd.f32 0.0, %v4924
        %v4926 = vpop.f32.mrb[0].mxu0
        %v4927 = vpop.f32.mrb[0].mxu0
        %v4928 = vadd.f32 0.0, %v4927
        %v4929 = vpop.f32.mrb[0].mxu0
        %4930 = vmatprep.mubr.bf16.mxu0 0
        %4931 = vmatmul.mubr.bf16.gmra.mrb[0].mxu0 %v4872
        %v4932 = vpop.f32.mrb[0].mxu0
        %v4933 = vadd.f32 0.0, %v4932
        %v4934 = vpop.f32.mrb[0].mxu0
        %v4935 = vpop.f32.mrb[0].mxu0
        %v4936 = vadd.f32 0.0, %v4935
        %v4937 = vpop.f32.mrb[0].mxu0
        %4938 = vdwg.mxu0
        %v4939 = vadd.f32 %v4842, %v4909
        %v4940 = vadd.f32 %v4843, %v4912
        %v4941 = vadd.f32 %v4844, %v4917
        %v4942 = vadd.f32 %v4845, %v4920
        %v4943 = vadd.f32 %v4846, %v4925
        %v4944 = vadd.f32 %v4847, %v4928
        %v4945 = vadd.f32 %v4848, %v4933
        %v4946 = vadd.f32 %v4849, %v4936
        %v4947 = vmax.f32 %v4224, %v4939
        %v4948 = vmax.f32 %v4225, %v4940
        %v4949 = vmax.f32 %v4226, %v4941
        %v4950 = vmax.f32 %v4227, %v4942
        %v4951 = vmax.f32 %v4228, %v4943
        %v4952 = vmax.f32 %v4229, %v4944
        %v4953 = vmax.f32 %v4230, %v4945
        %v4954 = vmax.f32 %v4231, %v4946
        %4955 = vmatprep.subr.bf16.mxu0 0
        %4956 = vmatpush1.bf16.msra.mxu0 %v2478
        %4957 = vmatprep.subr.bf16.mxu0 0
        %4958 = vmatpush1.bf16.msra.mxu0 %v2479
        %4959 = vmatprep.subr.bf16.mxu0 0
        %4960 = vmatpush1.bf16.msra.mxu0 %v2480
        %4961 = vmatprep.subr.bf16.mxu0 0
        %4962 = vmatpush1.bf16.msra.mxu0 %v2481
        %4963 = vmatprep.subr.bf16.mxu0 0
        %4964 = vmatpush1.bf16.msra.mxu0 0
        %4965 = vmatprep.subr.bf16.mxu0 0
        %4966 = vmatpush1.bf16.msra.mxu0 0
        %4967 = vmatprep.subr.bf16.mxu0 0
        %4968 = vmatpush1.bf16.msra.mxu0 0
        %4969 = vmatprep.subr.bf16.mxu0 0
        %4970 = vmatpush1.bf16.msra.mxu0 0
        %4971 = vmatprep.subr.bf16.mxu0 0
        %4972 = vmatpush1.bf16.msra.mxu0 0
        %4973 = vmatprep.subr.bf16.mxu0 0
        %4974 = vmatpush1.bf16.msra.mxu0 0
        %4975 = vmatprep.subr.bf16.mxu0 0
        %4976 = vmatpush1.bf16.msra.mxu0 0
        %4977 = vmatprep.subr.bf16.mxu0 0
        %4978 = vmatpush1.bf16.msra.mxu0 0
        %4979 = vmatprep.subr.bf16.mxu0 0
        %4980 = vmatpush1.bf16.msra.mxu0 0
        %4981 = vmatprep.subr.bf16.mxu0 0
        %4982 = vmatpush1.bf16.msra.mxu0 0
        %4983 = vmatprep.subr.bf16.mxu0 0
        %4984 = vmatpush1.bf16.msra.mxu0 0
        %4985 = vmatprep.subr.bf16.mxu0 0
        %4986 = vmatpush1.bf16.msra.mxu0 0
        %4987 = vmatprep.mubr.bf16.mxu0 0
        %4988 = vmatmul.mubr.bf16.gmra.mrb[0].mxu0 %v3064
        %v4989 = vpop.f32.mrb[0].mxu0
        %v4990 = vadd.f32 0.0, %v4989
        %v4991 = vpop.f32.mrb[0].mxu0
        %v4992 = vpop.f32.mrb[0].mxu0
        %v4993 = vadd.f32 0.0, %v4992
        %v4994 = vpop.f32.mrb[0].mxu0
        %4995 = vmatprep.mubr.bf16.mxu0 0
        %4996 = vmatmul.mubr.bf16.gmra.mrb[0].mxu0 %v3067
        %v4997 = vpop.f32.mrb[0].mxu0
        %v4998 = vadd.f32 0.0, %v4997
        %v4999 = vpop.f32.mrb[0].mxu0
        %v5000 = vpop.f32.mrb[0].mxu0
        %v5001 = vadd.f32 0.0, %v5000
        %v5002 = vpop.f32.mrb[0].mxu0
        %5003 = vmatprep.mubr.bf16.mxu0 0
        %5004 = vmatmul.mubr.bf16.gmra.mrb[0].mxu0 %v3070
        %v5005 = vpop.f32.mrb[0].mxu0
        %v5006 = vadd.f32 0.0, %v5005
        %v5007 = vpop.f32.mrb[0].mxu0
        %v5008 = vpop.f32.mrb[0].mxu0
        %v5009 = vadd.f32 0.0, %v5008
        %v5010 = vpop.f32.mrb[0].mxu0
        %5011 = vmatprep.mubr.bf16.mxu0 0
        %5012 = vmatmul.mubr.bf16.gmra.mrb[0].mxu0 %v3073
        %v5013 = vpop.f32.mrb[0].mxu0
        %v5014 = vadd.f32 0.0, %v5013
        %v5015 = vpop.f32.mrb[0].mxu0
        %v5016 = vpop.f32.mrb[0].mxu0
        %v5017 = vadd.f32 0.0, %v5016
        %v5018 = vpop.f32.mrb[0].mxu0
        %5019 = vdwg.mxu0
        %5020 = vmatprep.subr.bf16.mxu0 0
        %5021 = vmatpush1.bf16.msra.mxu0 %v2579
        %5022 = vmatprep.subr.bf16.mxu0 0
        %5023 = vmatpush1.bf16.msra.mxu0 %v2580
        %5024 = vmatprep.subr.bf16.mxu0 0
        %5025 = vmatpush1.bf16.msra.mxu0 %v2581
        %5026 = vmatprep.subr.bf16.mxu0 0
        %5027 = vmatpush1.bf16.msra.mxu0 %v2582
        %5028 = vmatprep.subr.bf16.mxu0 0
        %5029 = vmatpush1.bf16.msra.mxu0 0
        %5030 = vmatprep.subr.bf16.mxu0 0
        %5031 = vmatpush1.bf16.msra.mxu0 0
        %5032 = vmatprep.subr.bf16.mxu0 0
        %5033 = vmatpush1.bf16.msra.mxu0 0
        %5034 = vmatprep.subr.bf16.mxu0 0
        %5035 = vmatpush1.bf16.msra.mxu0 0
        %5036 = vmatprep.subr.bf16.mxu0 0
        %5037 = vmatpush1.bf16.msra.mxu0 0
        %5038 = vmatprep.subr.bf16.mxu0 0
        %5039 = vmatpush1.bf16.msra.mxu0 0
        %5040 = vmatprep.subr.bf16.mxu0 0
        %5041 = vmatpush1.bf16.msra.mxu0 0
        %5042 = vmatprep.subr.bf16.mxu0 0
        %5043 = vmatpush1.bf16.msra.mxu0 0
        %5044 = vmatprep.subr.bf16.mxu0 0
        %5045 = vmatpush1.bf16.msra.mxu0 0
        %5046 = vmatprep.subr.bf16.mxu0 0
        %5047 = vmatpush1.bf16.msra.mxu0 0
        %5048 = vmatprep.subr.bf16.mxu0 0
        %5049 = vmatpush1.bf16.msra.mxu0 0
        %5050 = vmatprep.subr.bf16.mxu0 0
        %5051 = vmatpush1.bf16.msra.mxu0 0
        %5052 = vmatprep.mubr.bf16.mxu0 0
        %5053 = vmatmul.mubr.bf16.gmra.mrb[0].mxu0 %v2943
        %v5054 = vpop.f32.mrb[0].mxu0
        %v5055 = vadd.f32 %v4990, %v5054
        %v5056 = vpop.f32.mrb[0].mxu0
        %v5057 = vpop.f32.mrb[0].mxu0
        %v5058 = vadd.f32 %v4993, %v5057
        %v5059 = vpop.f32.mrb[0].mxu0
        %5060 = vmatprep.mubr.bf16.mxu0 0
        %5061 = vmatmul.mubr.bf16.gmra.mrb[0].mxu0 %v2946
        %v5062 = vpop.f32.mrb[0].mxu0
        %v5063 = vadd.f32 %v4998, %v5062
        %v5064 = vpop.f32.mrb[0].mxu0
        %v5065 = vpop.f32.mrb[0].mxu0
        %v5066 = vadd.f32 %v5001, %v5065
        %v5067 = vpop.f32.mrb[0].mxu0
        %5068 = vmatprep.mubr.bf16.mxu0 0
        %5069 = vmatmul.mubr.bf16.gmra.mrb[0].mxu0 %v2949
        %v5070 = vpop.f32.mrb[0].mxu0
        %v5071 = vadd.f32 %v5006, %v5070
        %v5072 = vpop.f32.mrb[0].mxu0
        %v5073 = vpop.f32.mrb[0].mxu0
        %v5074 = vadd.f32 %v5009, %v5073
        %v5075 = vpop.f32.mrb[0].mxu0
        %5076 = vmatprep.mubr.bf16.mxu0 0
        %5077 = vmatmul.mubr.bf16.gmra.mrb[0].mxu0 %v2952
        %v5078 = vpop.f32.mrb[0].mxu0
        %v5079 = vadd.f32 %v5014, %v5078
        %v5080 = vpop.f32.mrb[0].mxu0
        %v5081 = vpop.f32.mrb[0].mxu0
        %v5082 = vadd.f32 %v5017, %v5081
        %v5083 = vpop.f32.mrb[0].mxu0
        %5084 = vdwg.mxu0
        %5085 = vmatprep.subr.bf16.mxu0 0
        %5086 = vmatpush1.bf16.msra.mxu0 %v2692
        %5087 = vmatprep.subr.bf16.mxu0 0
        %5088 = vmatpush1.bf16.msra.mxu0 %v2693
        %5089 = vmatprep.subr.bf16.mxu0 0
        %5090 = vmatpush1.bf16.msra.mxu0 %v2694
        %5091 = vmatprep.subr.bf16.mxu0 0
        %5092 = vmatpush1.bf16.msra.mxu0 %v2695
        %5093 = vmatprep.subr.bf16.mxu0 0
        %5094 = vmatpush1.bf16.msra.mxu0 0
        %5095 = vmatprep.subr.bf16.mxu0 0
        %5096 = vmatpush1.bf16.msra.mxu0 0
        %5097 = vmatprep.subr.bf16.mxu0 0
        %5098 = vmatpush1.bf16.msra.mxu0 0
        %5099 = vmatprep.subr.bf16.mxu0 0
        %5100 = vmatpush1.bf16.msra.mxu0 0
        %5101 = vmatprep.subr.bf16.mxu0 0
        %5102 = vmatpush1.bf16.msra.mxu0 0
        %5103 = vmatprep.subr.bf16.mxu0 0
        %5104 = vmatpush1.bf16.msra.mxu0 0
        %5105 = vmatprep.subr.bf16.mxu0 0
        %5106 = vmatpush1.bf16.msra.mxu0 0
        %5107 = vmatprep.subr.bf16.mxu0 0
        %5108 = vmatpush1.bf16.msra.mxu0 0
        %5109 = vmatprep.subr.bf16.mxu0 0
        %5110 = vmatpush1.bf16.msra.mxu0 0
        %5111 = vmatprep.subr.bf16.mxu0 0
        %5112 = vmatpush1.bf16.msra.mxu0 0
        %5113 = vmatprep.subr.bf16.mxu0 0
        %5114 = vmatpush1.bf16.msra.mxu0 0
        %5115 = vmatprep.subr.bf16.mxu0 0
        %5116 = vmatpush1.bf16.msra.mxu0 0
        %5117 = vmatprep.mubr.bf16.mxu0 0
        %5118 = vmatmul.mubr.bf16.gmra.mrb[0].mxu0 %v3897
        %v5119 = vpop.f32.mrb[0].mxu0
        %v5120 = vadd.f32 0.0, %v5119
        %v5121 = vpop.f32.mrb[0].mxu0
        %v5122 = vpop.f32.mrb[0].mxu0
        %v5123 = vadd.f32 0.0, %v5122
        %v5124 = vpop.f32.mrb[0].mxu0
        %5125 = vmatprep.mubr.bf16.mxu0 0
        %5126 = vmatmul.mubr.bf16.gmra.mrb[0].mxu0 %v3900
        %v5127 = vpop.f32.mrb[0].mxu0
        %v5128 = vadd.f32 0.0, %v5127
        %v5129 = vpop.f32.mrb[0].mxu0
        %v5130 = vpop.f32.mrb[0].mxu0
        %v5131 = vadd.f32 0.0, %v5130
        %v5132 = vpop.f32.mrb[0].mxu0
        %5133 = vmatprep.mubr.bf16.mxu0 0
        %5134 = vmatmul.mubr.bf16.gmra.mrb[0].mxu0 %v3903
        %v5135 = vpop.f32.mrb[0].mxu0
        %v5136 = vadd.f32 0.0, %v5135
        %v5137 = vpop.f32.mrb[0].mxu0
        %v5138 = vpop.f32.mrb[0].mxu0
        %v5139 = vadd.f32 0.0, %v5138
        %v5140 = vpop.f32.mrb[0].mxu0
        %5141 = vmatprep.mubr.bf16.mxu0 0
        %5142 = vmatmul.mubr.bf16.gmra.mrb[0].mxu0 %v3906
        %v5143 = vpop.f32.mrb[0].mxu0
        %v5144 = vadd.f32 0.0, %v5143
        %v5145 = vpop.f32.mrb[0].mxu0
        %v5146 = vpop.f32.mrb[0].mxu0
        %v5147 = vadd.f32 0.0, %v5146
        %v5148 = vpop.f32.mrb[0].mxu0
        %5149 = vdwg.mxu0
        %v5150 = vadd.f32 %v5055, %v5120
        %v5151 = vadd.f32 %v5058, %v5123
        %v5152 = vadd.f32 %v5063, %v5128
        %v5153 = vadd.f32 %v5066, %v5131
        %v5154 = vadd.f32 %v5071, %v5136
        %v5155 = vadd.f32 %v5074, %v5139
        %v5156 = vadd.f32 %v5079, %v5144
        %v5157 = vadd.f32 %v5082, %v5147
        %5158 = vmatprep.subr.bf16.mxu0 0
        %5159 = vmatpush1.bf16.msra.mxu0 %v2813
        %5160 = vmatprep.subr.bf16.mxu0 0
        %5161 = vmatpush1.bf16.msra.mxu0 %v2814
        %5162 = vmatprep.subr.bf16.mxu0 0
        %5163 = vmatpush1.bf16.msra.mxu0 %v2815
        %5164 = vmatprep.subr.bf16.mxu0 0
        %5165 = vmatpush1.bf16.msra.mxu0 %v2816
        %5166 = vmatprep.subr.bf16.mxu0 0
        %5167 = vmatpush1.bf16.msra.mxu0 0
        %5168 = vmatprep.subr.bf16.mxu0 0
        %5169 = vmatpush1.bf16.msra.mxu0 0
        %5170 = vmatprep.subr.bf16.mxu0 0
        %5171 = vmatpush1.bf16.msra.mxu0 0
        %5172 = vmatprep.subr.bf16.mxu0 0
        %5173 = vmatpush1.bf16.msra.mxu0 0
        %5174 = vmatprep.subr.bf16.mxu0 0
        %5175 = vmatpush1.bf16.msra.mxu0 0
        %5176 = vmatprep.subr.bf16.mxu0 0
        %5177 = vmatpush1.bf16.msra.mxu0 0
        %5178 = vmatprep.subr.bf16.mxu0 0
        %5179 = vmatpush1.bf16.msra.mxu0 0
        %5180 = vmatprep.subr.bf16.mxu0 0
        %5181 = vmatpush1.bf16.msra.mxu0 0
        %5182 = vmatprep.subr.bf16.mxu0 0
        %5183 = vmatpush1.bf16.msra.mxu0 0
        %5184 = vmatprep.subr.bf16.mxu0 0
        %5185 = vmatpush1.bf16.msra.mxu0 0
        %5186 = vmatprep.subr.bf16.mxu0 0
        %5187 = vmatpush1.bf16.msra.mxu0 0
        %5188 = vmatprep.subr.bf16.mxu0 0
        %5189 = vmatpush1.bf16.msra.mxu0 0
        %5190 = vmatprep.mubr.bf16.mxu0 0
        %5191 = vmatmul.mubr.bf16.gmra.mrb[0].mxu0 %v3306
        %v5192 = vpop.f32.mrb[0].mxu0
        %v5193 = vadd.f32 0.0, %v5192
        %v5194 = vpop.f32.mrb[0].mxu0
        %v5195 = vpop.f32.mrb[0].mxu0
        %v5196 = vadd.f32 0.0, %v5195
        %v5197 = vpop.f32.mrb[0].mxu0
        %5198 = vmatprep.mubr.bf16.mxu0 0
        %5199 = vmatmul.mubr.bf16.gmra.mrb[0].mxu0 %v3309
        %v5200 = vpop.f32.mrb[0].mxu0
        %v5201 = vadd.f32 0.0, %v5200
        %v5202 = vpop.f32.mrb[0].mxu0
        %v5203 = vpop.f32.mrb[0].mxu0
        %v5204 = vadd.f32 0.0, %v5203
        %v5205 = vpop.f32.mrb[0].mxu0
        %5206 = vmatprep.mubr.bf16.mxu0 0
        %5207 = vmatmul.mubr.bf16.gmra.mrb[0].mxu0 %v3312
        %v5208 = vpop.f32.mrb[0].mxu0
        %v5209 = vadd.f32 0.0, %v5208
        %v5210 = vpop.f32.mrb[0].mxu0
        %v5211 = vpop.f32.mrb[0].mxu0
        %v5212 = vadd.f32 0.0, %v5211
        %v5213 = vpop.f32.mrb[0].mxu0
        %5214 = vmatprep.mubr.bf16.mxu0 0
        %5215 = vmatmul.mubr.bf16.gmra.mrb[0].mxu0 %v3315
        %v5216 = vpop.f32.mrb[0].mxu0
        %v5217 = vadd.f32 0.0, %v5216
        %v5218 = vpop.f32.mrb[0].mxu0
        %v5219 = vpop.f32.mrb[0].mxu0
        %v5220 = vadd.f32 0.0, %v5219
        %v5221 = vpop.f32.mrb[0].mxu0
        %5222 = vdwg.mxu0
        %v5223 = vadd.f32 %v5150, %v5193
        %v5224 = vadd.f32 %v5151, %v5196
        %v5225 = vadd.f32 %v5152, %v5201
        %v5226 = vadd.f32 %v5153, %v5204
        %v5227 = vadd.f32 %v5154, %v5209
        %v5228 = vadd.f32 %v5155, %v5212
        %v5229 = vadd.f32 %v5156, %v5217
        %v5230 = vadd.f32 %v5157, %v5220
        %5231 = vmatprep.subr.bf16.mxu0 0
        %5232 = vmatpush1.bf16.msra.mxu0 %v2934
        %5233 = vmatprep.subr.bf16.mxu0 0
        %5234 = vmatpush1.bf16.msra.mxu0 %v2935
        %5235 = vmatprep.subr.bf16.mxu0 0
        %5236 = vmatpush1.bf16.msra.mxu0 %v2936
        %5237 = vmatprep.subr.bf16.mxu0 0
        %5238 = vmatpush1.bf16.msra.mxu0 %v2937
        %5239 = vmatprep.subr.bf16.mxu0 0
        %5240 = vmatpush1.bf16.msra.mxu0 0
        %5241 = vmatprep.subr.bf16.mxu0 0
        %5242 = vmatpush1.bf16.msra.mxu0 0
        %5243 = vmatprep.subr.bf16.mxu0 0
        %5244 = vmatpush1.bf16.msra.mxu0 0
        %5245 = vmatprep.subr.bf16.mxu0 0
        %5246 = vmatpush1.bf16.msra.mxu0 0
        %5247 = vmatprep.subr.bf16.mxu0 0
        %5248 = vmatpush1.bf16.msra.mxu0 0
        %5249 = vmatprep.subr.bf16.mxu0 0
        %5250 = vmatpush1.bf16.msra.mxu0 0
        %5251 = vmatprep.subr.bf16.mxu0 0
        %5252 = vmatpush1.bf16.msra.mxu0 0
        %5253 = vmatprep.subr.bf16.mxu0 0
        %5254 = vmatpush1.bf16.msra.mxu0 0
        %5255 = vmatprep.subr.bf16.mxu0 0
        %5256 = vmatpush1.bf16.msra.mxu0 0
        %5257 = vmatprep.subr.bf16.mxu0 0
        %5258 = vmatpush1.bf16.msra.mxu0 0
        %5259 = vmatprep.subr.bf16.mxu0 0
        %5260 = vmatpush1.bf16.msra.mxu0 0
        %5261 = vmatprep.subr.bf16.mxu0 0
        %5262 = vmatpush1.bf16.msra.mxu0 0
        %5263 = vmatprep.mubr.bf16.mxu0 0
        %5264 = vmatmul.mubr.bf16.gmra.mrb[0].mxu0 %v3427
        %v5265 = vpop.f32.mrb[0].mxu0
        %v5266 = vadd.f32 0.0, %v5265
        %v5267 = vpop.f32.mrb[0].mxu0
        %v5268 = vpop.f32.mrb[0].mxu0
        %v5269 = vadd.f32 0.0, %v5268
        %v5270 = vpop.f32.mrb[0].mxu0
        %5271 = vmatprep.mubr.bf16.mxu0 0
        %5272 = vmatmul.mubr.bf16.gmra.mrb[0].mxu0 %v3430
        %v5273 = vpop.f32.mrb[0].mxu0
        %v5274 = vadd.f32 0.0, %v5273
        %v5275 = vpop.f32.mrb[0].mxu0
        %v5276 = vpop.f32.mrb[0].mxu0
        %v5277 = vadd.f32 0.0, %v5276
        %v5278 = vpop.f32.mrb[0].mxu0
        %5279 = vmatprep.mubr.bf16.mxu0 0
        %5280 = vmatmul.mubr.bf16.gmra.mrb[0].mxu0 %v3433
        %v5281 = vpop.f32.mrb[0].mxu0
        %v5282 = vadd.f32 0.0, %v5281
        %v5283 = vpop.f32.mrb[0].mxu0
        %v5284 = vpop.f32.mrb[0].mxu0
        %v5285 = vadd.f32 0.0, %v5284
        %v5286 = vpop.f32.mrb[0].mxu0
        %5287 = vmatprep.mubr.bf16.mxu0 0
        %5288 = vmatmul.mubr.bf16.gmra.mrb[0].mxu0 %v3436
        %v5289 = vpop.f32.mrb[0].mxu0
        %v5290 = vadd.f32 0.0, %v5289
        %v5291 = vpop.f32.mrb[0].mxu0
        %v5292 = vpop.f32.mrb[0].mxu0
        %v5293 = vadd.f32 0.0, %v5292
        %v5294 = vpop.f32.mrb[0].mxu0
        %5295 = vdwg.mxu0
        %v5296 = vadd.f32 %v5223, %v5266
        %v5297 = vadd.f32 %v5224, %v5269
        %v5298 = vadd.f32 %v5225, %v5274
        %v5299 = vadd.f32 %v5226, %v5277
        %v5300 = vadd.f32 %v5227, %v5282
        %v5301 = vadd.f32 %v5228, %v5285
        %v5302 = vadd.f32 %v5229, %v5290
        %v5303 = vadd.f32 %v5230, %v5293
        %5304 = vmatprep.subr.bf16.mxu0 0
        %5305 = vmatpush1.bf16.msra.mxu0 %v3055
        %5306 = vmatprep.subr.bf16.mxu0 0
        %5307 = vmatpush1.bf16.msra.mxu0 %v3056
        %5308 = vmatprep.subr.bf16.mxu0 0
        %5309 = vmatpush1.bf16.msra.mxu0 %v3057
        %5310 = vmatprep.subr.bf16.mxu0 0
        %5311 = vmatpush1.bf16.msra.mxu0 %v3058
        %5312 = vmatprep.subr.bf16.mxu0 0
        %5313 = vmatpush1.bf16.msra.mxu0 0
        %5314 = vmatprep.subr.bf16.mxu0 0
        %5315 = vmatpush1.bf16.msra.mxu0 0
        %5316 = vmatprep.subr.bf16.mxu0 0
        %5317 = vmatpush1.bf16.msra.mxu0 0
        %5318 = vmatprep.subr.bf16.mxu0 0
        %5319 = vmatpush1.bf16.msra.mxu0 0
        %5320 = vmatprep.subr.bf16.mxu0 0
        %5321 = vmatpush1.bf16.msra.mxu0 0
        %5322 = vmatprep.subr.bf16.mxu0 0
        %5323 = vmatpush1.bf16.msra.mxu0 0
        %5324 = vmatprep.subr.bf16.mxu0 0
        %5325 = vmatpush1.bf16.msra.mxu0 0
        %5326 = vmatprep.subr.bf16.mxu0 0
        %5327 = vmatpush1.bf16.msra.mxu0 0
        %5328 = vmatprep.subr.bf16.mxu0 0
        %5329 = vmatpush1.bf16.msra.mxu0 0
        %5330 = vmatprep.subr.bf16.mxu0 0
        %5331 = vmatpush1.bf16.msra.mxu0 0
        %5332 = vmatprep.subr.bf16.mxu0 0
        %5333 = vmatpush1.bf16.msra.mxu0 0
        %5334 = vmatprep.subr.bf16.mxu0 0
        %5335 = vmatpush1.bf16.msra.mxu0 0
        %5336 = vmatprep.mubr.bf16.mxu0 0
        %5337 = vmatmul.mubr.bf16.gmra.mrb[0].mxu0 %v4140
        %v5338 = vpop.f32.mrb[0].mxu0
        %v5339 = vadd.f32 0.0, %v5338
        %v5340 = vpop.f32.mrb[0].mxu0
        %v5341 = vpop.f32.mrb[0].mxu0
        %v5342 = vadd.f32 0.0, %v5341
        %v5343 = vpop.f32.mrb[0].mxu0
        %5344 = vmatprep.mubr.bf16.mxu0 0
        %5345 = vmatmul.mubr.bf16.gmra.mrb[0].mxu0 %v4143
        %v5346 = vpop.f32.mrb[0].mxu0
        %v5347 = vadd.f32 0.0, %v5346
        %v5348 = vpop.f32.mrb[0].mxu0
        %v5349 = vpop.f32.mrb[0].mxu0
        %v5350 = vadd.f32 0.0, %v5349
        %v5351 = vpop.f32.mrb[0].mxu0
        %5352 = vmatprep.mubr.bf16.mxu0 0
        %5353 = vmatmul.mubr.bf16.gmra.mrb[0].mxu0 %v4146
        %v5354 = vpop.f32.mrb[0].mxu0
        %v5355 = vadd.f32 0.0, %v5354
        %v5356 = vpop.f32.mrb[0].mxu0
        %v5357 = vpop.f32.mrb[0].mxu0
        %v5358 = vadd.f32 0.0, %v5357
        %v5359 = vpop.f32.mrb[0].mxu0
        %5360 = vmatprep.mubr.bf16.mxu0 0
        %5361 = vmatmul.mubr.bf16.gmra.mrb[0].mxu0 %v4149
        %v5362 = vpop.f32.mrb[0].mxu0
        %v5363 = vadd.f32 0.0, %v5362
        %v5364 = vpop.f32.mrb[0].mxu0
        %v5365 = vpop.f32.mrb[0].mxu0
        %v5366 = vadd.f32 0.0, %v5365
        %v5367 = vpop.f32.mrb[0].mxu0
        %5368 = vdwg.mxu0
        %v5369 = vadd.f32 %v5296, %v5339
        %v5370 = vadd.f32 %v5297, %v5342
        %v5371 = vadd.f32 %v5298, %v5347
        %v5372 = vadd.f32 %v5299, %v5350
        %v5373 = vadd.f32 %v5300, %v5355
        %v5374 = vadd.f32 %v5301, %v5358
        %v5375 = vadd.f32 %v5302, %v5363
        %v5376 = vadd.f32 %v5303, %v5366
        %5377 = vmatprep.subr.bf16.mxu0 0
        %5378 = vmatpush1.bf16.msra.mxu0 %v3176
        %5379 = vmatprep.subr.bf16.mxu0 0
        %5380 = vmatpush1.bf16.msra.mxu0 %v3177
        %5381 = vmatprep.subr.bf16.mxu0 0
        %5382 = vmatpush1.bf16.msra.mxu0 %v3178
        %5383 = vmatprep.subr.bf16.mxu0 0
        %5384 = vmatpush1.bf16.msra.mxu0 %v3179
        %5385 = vmatprep.subr.bf16.mxu0 0
        %5386 = vmatpush1.bf16.msra.mxu0 0
        %5387 = vmatprep.subr.bf16.mxu0 0
        %5388 = vmatpush1.bf16.msra.mxu0 0
        %5389 = vmatprep.subr.bf16.mxu0 0
        %5390 = vmatpush1.bf16.msra.mxu0 0
        %5391 = vmatprep.subr.bf16.mxu0 0
        %5392 = vmatpush1.bf16.msra.mxu0 0
        %5393 = vmatprep.subr.bf16.mxu0 0
        %5394 = vmatpush1.bf16.msra.mxu0 0
        %5395 = vmatprep.subr.bf16.mxu0 0
        %5396 = vmatpush1.bf16.msra.mxu0 0
        %5397 = vmatprep.subr.bf16.mxu0 0
        %5398 = vmatpush1.bf16.msra.mxu0 0
        %5399 = vmatprep.subr.bf16.mxu0 0
        %5400 = vmatpush1.bf16.msra.mxu0 0
        %5401 = vmatprep.subr.bf16.mxu0 0
        %5402 = vmatpush1.bf16.msra.mxu0 0
        %5403 = vmatprep.subr.bf16.mxu0 0
        %5404 = vmatpush1.bf16.msra.mxu0 0
        %5405 = vmatprep.subr.bf16.mxu0 0
        %5406 = vmatpush1.bf16.msra.mxu0 0
        %5407 = vmatprep.subr.bf16.mxu0 0
        %5408 = vmatpush1.bf16.msra.mxu0 0
        %5409 = vmatprep.mubr.bf16.mxu0 0
        %5410 = vmatmul.mubr.bf16.gmra.mrb[0].mxu0 %v4766
        %v5411 = vpop.f32.mrb[0].mxu0
        %v5412 = vadd.f32 0.0, %v5411
        %v5413 = vpop.f32.mrb[0].mxu0
        %v5414 = vpop.f32.mrb[0].mxu0
        %v5415 = vadd.f32 0.0, %v5414
        %v5416 = vpop.f32.mrb[0].mxu0
        %5417 = vmatprep.mubr.bf16.mxu0 0
        %5418 = vmatmul.mubr.bf16.gmra.mrb[0].mxu0 %v4769
        %v5419 = vpop.f32.mrb[0].mxu0
        %v5420 = vadd.f32 0.0, %v5419
        %v5421 = vpop.f32.mrb[0].mxu0
        %v5422 = vpop.f32.mrb[0].mxu0
        %v5423 = vadd.f32 0.0, %v5422
        %v5424 = vpop.f32.mrb[0].mxu0
        %5425 = vmatprep.mubr.bf16.mxu0 0
        %5426 = vmatmul.mubr.bf16.gmra.mrb[0].mxu0 %v4772
        %v5427 = vpop.f32.mrb[0].mxu0
        %v5428 = vadd.f32 0.0, %v5427
        %v5429 = vpop.f32.mrb[0].mxu0
        %v5430 = vpop.f32.mrb[0].mxu0
        %v5431 = vadd.f32 0.0, %v5430
        %v5432 = vpop.f32.mrb[0].mxu0
        %5433 = vmatprep.mubr.bf16.mxu0 0
        %5434 = vmatmul.mubr.bf16.gmra.mrb[0].mxu0 %v4775
        %v5435 = vpop.f32.mrb[0].mxu0
        %v5436 = vadd.f32 0.0, %v5435
        %v5437 = vpop.f32.mrb[0].mxu0
        %v5438 = vpop.f32.mrb[0].mxu0
        %v5439 = vadd.f32 0.0, %v5438
        %v5440 = vpop.f32.mrb[0].mxu0
        %5441 = vdwg.mxu0
        %v5442 = vadd.f32 %v5369, %v5412
        %v5443 = vadd.f32 %v5370, %v5415
        %v5444 = vadd.f32 %v5371, %v5420
        %v5445 = vadd.f32 %v5372, %v5423
        %v5446 = vadd.f32 %v5373, %v5428
        %v5447 = vadd.f32 %v5374, %v5431
        %v5448 = vadd.f32 %v5375, %v5436
        %v5449 = vadd.f32 %v5376, %v5439
        %5450 = vmatprep.subr.bf16.mxu0 0
        %5451 = vmatpush1.bf16.msra.mxu0 %v3297
        %5452 = vmatprep.subr.bf16.mxu0 0
        %5453 = vmatpush1.bf16.msra.mxu0 %v3298
        %5454 = vmatprep.subr.bf16.mxu0 0
        %5455 = vmatpush1.bf16.msra.mxu0 %v3299
        %5456 = vmatprep.subr.bf16.mxu0 0
        %5457 = vmatpush1.bf16.msra.mxu0 %v3300
        %5458 = vmatprep.subr.bf16.mxu0 0
        %5459 = vmatpush1.bf16.msra.mxu0 0
        %5460 = vmatprep.subr.bf16.mxu0 0
        %5461 = vmatpush1.bf16.msra.mxu0 0
        %5462 = vmatprep.subr.bf16.mxu0 0
        %5463 = vmatpush1.bf16.msra.mxu0 0
        %5464 = vmatprep.subr.bf16.mxu0 0
        %5465 = vmatpush1.bf16.msra.mxu0 0
        %5466 = vmatprep.subr.bf16.mxu0 0
        %5467 = vmatpush1.bf16.msra.mxu0 0
        %5468 = vmatprep.subr.bf16.mxu0 0
        %5469 = vmatpush1.bf16.msra.mxu0 0
        %5470 = vmatprep.subr.bf16.mxu0 0
        %5471 = vmatpush1.bf16.msra.mxu0 0
        %5472 = vmatprep.subr.bf16.mxu0 0
        %5473 = vmatpush1.bf16.msra.mxu0 0
        %5474 = vmatprep.subr.bf16.mxu0 0
        %5475 = vmatpush1.bf16.msra.mxu0 0
        %5476 = vmatprep.subr.bf16.mxu0 0
        %5477 = vmatpush1.bf16.msra.mxu0 0
        %5478 = vmatprep.subr.bf16.mxu0 0
        %5479 = vmatpush1.bf16.msra.mxu0 0
        %5480 = vmatprep.subr.bf16.mxu0 0
        %5481 = vmatpush1.bf16.msra.mxu0 0
        %5482 = vmatprep.mubr.bf16.mxu0 0
        %5483 = vmatmul.mubr.bf16.gmra.mrb[0].mxu0 %v4863
        %v5484 = vpop.f32.mrb[0].mxu0
        %v5485 = vadd.f32 0.0, %v5484
        %v5486 = vpop.f32.mrb[0].mxu0
        %v5487 = vpop.f32.mrb[0].mxu0
        %v5488 = vadd.f32 0.0, %v5487
        %v5489 = vpop.f32.mrb[0].mxu0
        %5490 = vmatprep.mubr.bf16.mxu0 0
        %5491 = vmatmul.mubr.bf16.gmra.mrb[0].mxu0 %v4866
        %v5492 = vpop.f32.mrb[0].mxu0
        %v5493 = vadd.f32 0.0, %v5492
        %v5494 = vpop.f32.mrb[0].mxu0
        %v5495 = vpop.f32.mrb[0].mxu0
        %v5496 = vadd.f32 0.0, %v5495
        %v5497 = vpop.f32.mrb[0].mxu0
        %5498 = vmatprep.mubr.bf16.mxu0 0
        %5499 = vmatmul.mubr.bf16.gmra.mrb[0].mxu0 %v4869
        %v5500 = vpop.f32.mrb[0].mxu0
        %v5501 = vadd.f32 0.0, %v5500
        %v5502 = vpop.f32.mrb[0].mxu0
        %v5503 = vpop.f32.mrb[0].mxu0
        %v5504 = vadd.f32 0.0, %v5503
        %v5505 = vpop.f32.mrb[0].mxu0
        %5506 = vmatprep.mubr.bf16.mxu0 0
        %5507 = vmatmul.mubr.bf16.gmra.mrb[0].mxu0 %v4872
        %v5508 = vpop.f32.mrb[0].mxu0
        %v5509 = vadd.f32 0.0, %v5508
        %v5510 = vpop.f32.mrb[0].mxu0
        %v5511 = vpop.f32.mrb[0].mxu0
        %v5512 = vadd.f32 0.0, %v5511
        %v5513 = vpop.f32.mrb[0].mxu0
        %5514 = vdwg.mxu0
        %v5515 = vadd.f32 %v5442, %v5485
        %v5516 = vadd.f32 %v5443, %v5488
        %v5517 = vadd.f32 %v5444, %v5493
        %v5518 = vadd.f32 %v5445, %v5496
        %v5519 = vadd.f32 %v5446, %v5501
        %v5520 = vadd.f32 %v5447, %v5504
        %v5521 = vadd.f32 %v5448, %v5509
        %v5522 = vadd.f32 %v5449, %v5512
        %v5523 = vld [vmem:[%s4752 + $0x1] sm:$0xff]
        %v5524 = vld [vmem:[%s4752 + $0x11] sm:$0xff]
        %v5525 = vld [vmem:[%s4752 + $0x21] sm:$0xff]
        %v5526 = vld [vmem:[%s4752 + $0x31] sm:$0xff]
        %v5527 = vld [vmem:[%s4752 + $0x41] sm:$0xff]
        %v5528 = vld [vmem:[%s4752 + $0x51] sm:$0xff]
        %v5529 = vld [vmem:[%s4752 + $0x61] sm:$0xff]
        %v5530 = vld [vmem:[%s4752 + $0x71] sm:$0xff]
        %v5531 = vpack.c.bf16 %v5524, %v5523
        %v5532 = vpack.c.bf16 %v5526, %v5525
        %v5533 = vpack.c.bf16 %v5528, %v5527
        %v5534 = vpack.c.bf16 %v5530, %v5529
        %v5536 = vsel %vm2247, %v5531, 0
        %v5539 = vsel %vm2247, %v5532, 0
        %v5542 = vsel %vm2247, %v5533, 0
        %v5545 = vsel %vm2247, %v5534, 0
        %5547 = vmatprep.subr.bf16.mxu0 0
        %5548 = vmatpush1.bf16.msra.mxu0 %v3418
        %5549 = vmatprep.subr.bf16.mxu0 0
        %5550 = vmatpush1.bf16.msra.mxu0 %v3419
        %5551 = vmatprep.subr.bf16.mxu0 0
        %5552 = vmatpush1.bf16.msra.mxu0 %v3420
        %5553 = vmatprep.subr.bf16.mxu0 0
        %5554 = vmatpush1.bf16.msra.mxu0 %v3421
        %5555 = vmatprep.subr.bf16.mxu0 0
        %5556 = vmatpush1.bf16.msra.mxu0 0
        %5557 = vmatprep.subr.bf16.mxu0 0
        %5558 = vmatpush1.bf16.msra.mxu0 0
        %5559 = vmatprep.subr.bf16.mxu0 0
        %5560 = vmatpush1.bf16.msra.mxu0 0
        %5561 = vmatprep.subr.bf16.mxu0 0
        %5562 = vmatpush1.bf16.msra.mxu0 0
        %5563 = vmatprep.subr.bf16.mxu0 0
        %5564 = vmatpush1.bf16.msra.mxu0 0
        %5565 = vmatprep.subr.bf16.mxu0 0
        %5566 = vmatpush1.bf16.msra.mxu0 0
        %5567 = vmatprep.subr.bf16.mxu0 0
        %5568 = vmatpush1.bf16.msra.mxu0 0
        %5569 = vmatprep.subr.bf16.mxu0 0
        %5570 = vmatpush1.bf16.msra.mxu0 0
        %5571 = vmatprep.subr.bf16.mxu0 0
        %5572 = vmatpush1.bf16.msra.mxu0 0
        %5573 = vmatprep.subr.bf16.mxu0 0
        %5574 = vmatpush1.bf16.msra.mxu0 0
        %5575 = vmatprep.subr.bf16.mxu0 0
        %5576 = vmatpush1.bf16.msra.mxu0 0
        %5577 = vmatprep.subr.bf16.mxu0 0
        %5578 = vmatpush1.bf16.msra.mxu0 0
        %5579 = vmatprep.mubr.bf16.mxu0 0
        %5580 = vmatmul.mubr.bf16.gmra.mrb[0].mxu0 %v5536
        %v5581 = vpop.f32.mrb[0].mxu0
        %v5582 = vadd.f32 0.0, %v5581
        %v5583 = vpop.f32.mrb[0].mxu0
        %v5584 = vpop.f32.mrb[0].mxu0
        %v5585 = vadd.f32 0.0, %v5584
        %v5586 = vpop.f32.mrb[0].mxu0
        %5587 = vmatprep.mubr.bf16.mxu0 0
        %5588 = vmatmul.mubr.bf16.gmra.mrb[0].mxu0 %v5539
        %v5589 = vpop.f32.mrb[0].mxu0
        %v5590 = vadd.f32 0.0, %v5589
        %v5591 = vpop.f32.mrb[0].mxu0
        %v5592 = vpop.f32.mrb[0].mxu0
        %v5593 = vadd.f32 0.0, %v5592
        %v5594 = vpop.f32.mrb[0].mxu0
        %5595 = vmatprep.mubr.bf16.mxu0 0
        %5596 = vmatmul.mubr.bf16.gmra.mrb[0].mxu0 %v5542
        %v5597 = vpop.f32.mrb[0].mxu0
        %v5598 = vadd.f32 0.0, %v5597
        %v5599 = vpop.f32.mrb[0].mxu0
        %v5600 = vpop.f32.mrb[0].mxu0
        %v5601 = vadd.f32 0.0, %v5600
        %v5602 = vpop.f32.mrb[0].mxu0
        %5603 = vmatprep.mubr.bf16.mxu0 0
        %5604 = vmatmul.mubr.bf16.gmra.mrb[0].mxu0 %v5545
        %v5605 = vpop.f32.mrb[0].mxu0
        %v5606 = vadd.f32 0.0, %v5605
        %v5607 = vpop.f32.mrb[0].mxu0
        %v5608 = vpop.f32.mrb[0].mxu0
        %v5609 = vadd.f32 0.0, %v5608
        %v5610 = vpop.f32.mrb[0].mxu0
        %5611 = vdwg.mxu0
        %v5612 = vadd.f32 %v5515, %v5582
        %v5613 = vadd.f32 %v5516, %v5585
        %v5614 = vadd.f32 %v5517, %v5590
        %v5615 = vadd.f32 %v5518, %v5593
        %v5616 = vadd.f32 %v5519, %v5598
        %v5617 = vadd.f32 %v5520, %v5601
        %v5618 = vadd.f32 %v5521, %v5606
        %v5619 = vadd.f32 %v5522, %v5609
        %v5620 = vmax.f32 %v4947, %v5612
        %v5621 = vmax.f32 %v4948, %v5613
        %v5622 = vmax.f32 %v4949, %v5614
        %v5623 = vmax.f32 %v4950, %v5615
        %v5624 = vmax.f32 %v4951, %v5616
        %v5625 = vmax.f32 %v4952, %v5617
        %v5626 = vmax.f32 %v4953, %v5618
        %v5627 = vmax.f32 %v4954, %v5619
        %v5628 = vld [vmem:[%s4] sm:$0x1]
        %v5630 = vlaneseq
        %v5631 = vshrl.u32 %v5630, 7
        %v5632 = vsub.s32 0, %v5631
        %v5633 = vrot.slane %v5628, %v5632
        %v5635 = vadd.f32 %v5620, %v5633
        %v5636 = vadd.f32 %v5621, %v5633
        %v5637 = vadd.f32 %v5622, %v5633
        %v5638 = vadd.f32 %v5623, %v5633
        %v5639 = vadd.f32 %v5624, %v5633
        %v5640 = vadd.f32 %v5625, %v5633
        %v5641 = vadd.f32 %v5626, %v5633
        %v5642 = vadd.f32 %v5627, %v5633
        %v5643 = vmax.f32 %v5635, 0.0
        %v5644 = vmax.f32 %v5636, 0.0
        %v5645 = vmax.f32 %v5637, 0.0
        %v5646 = vmax.f32 %v5638, 0.0
        %v5647 = vmax.f32 %v5639, 0.0
        %v5648 = vmax.f32 %v5640, 0.0
        %v5649 = vmax.f32 %v5641, 0.0
        %v5650 = vmax.f32 %v5642, 0.0
        %v5651 = vpack.c.bf16 %v5644, %v5643
        %v5652 = vpack.c.bf16 %v5646, %v5645
        %v5653 = vpack.c.bf16 %v5648, %v5647
        %v5654 = vpack.c.bf16 %v5650, %v5649
        %v5659 = vunpack.c.l.b16 %v5651
        %v5660 = vunpack.c.h.b16 %v5651
        %v5661 = vunpack.c.l.b16 %v5652
        %v5662 = vunpack.c.h.b16 %v5652
        %v5663 = vunpack.c.l.b16 %v5653
        %v5664 = vunpack.c.h.b16 %v5653
        %v5665 = vunpack.c.l.b16 %v5654
        %v5666 = vunpack.c.h.b16 %v5654
        %v5667 = vpack.c.b16 %v5659, %v5659
        %v5668 = vpack.c.b16 %v5660, %v5660
        %v5669 = vpack.c.b16 %v5661, %v5661
        %v5670 = vpack.c.b16 %v5662, %v5662
        %v5671 = vpack.c.b16 %v5663, %v5663
        %v5672 = vpack.c.b16 %v5664, %v5664
        %v5673 = vpack.c.b16 %v5665, %v5665
        %v5674 = vpack.c.b16 %v5666, %v5666
        %5683 = vst [vmem:[%s774] sm:$0xf] %v5667
        %5684 = vst [vmem:[%s774 + $0x4] sm:$0xf] %v5668
        %5685 = vst [vmem:[%s774 + $0x8] sm:$0xf] %v5669
        %5686 = vst [vmem:[%s774 + $0xc] sm:$0xf] %v5670
        %5687 = vst [vmem:[%s774 + $0x10] sm:$0xf] %v5671
        %5688 = vst [vmem:[%s774 + $0x14] sm:$0xf] %v5672
        %5689 = vst [vmem:[%s774 + $0x18] sm:$0xf] %v5673
        %5690 = vst [vmem:[%s774 + $0x1c] sm:$0xf] %v5674
        %p5691 = scmp.lt.s32.totalorder %s16, 1
        %s5692 = scalar_select %p5691, %s16, 1
        %s5693 = smul.addr %s5692, 8
        %s5694 = smul.addr %s5693, 4
        %s5695 = scalar_lea.vmem %s5, %s5694
        // Predicated region
        $region82: #{cifar10_forward.2} parent=76 // pred_check
          %p5696 = pneg %p144
        $region83: #{cifar10_forward.2} parent=76 // pred_check_branch
          %5698 = sbr.rel (%p5696) target = $region85
        $region84: #{cifar10_forward.2} parent=76 // pred_region
          _
        $region85: #{cifar10_forward.2} parent=76 // pred_fallthru
          _
      $region77: #{cifar10_forward.2} parent=5 // pred_fallthru
        _
      %p5699 = scmp.le.s32.totalorder 2, %s11
      // Predicated region
      $region86: #{cifar10_forward.2} parent=5 // pred_check
        %p5700 = pneg %p5699
      $region87: #{cifar10_forward.2} parent=5 // pred_check_branch
        %5702 = sbr.rel (%p5700) target = $region89
      $region88: #{cifar10_forward.2} parent=5 // pred_region
        %s5703 = ssub.s32 %s11, 2
        // Predicated region
        $region90: #{cifar10_forward.2} parent=88 // pred_check
          %p5704 = pneg %p150
        $region91: #{cifar10_forward.2} parent=88 // pred_check_branch
          %5706 = sbr.rel (%p5704) target = $region93
        $region92: #{cifar10_forward.2} parent=88 // pred_region
          %p5707 = scmp.lt.s32.totalorder %s17, 1
          %s5708 = scalar_select %p5707, %s17, 1
          %s5709 = smul.addr %s5708, 8
          %s5710 = smul.addr %s5709, 4
          %s5711 = scalar_lea.vmem %s5, %s5710
        $region93: #{cifar10_forward.2} parent=88 // pred_fallthru
          _
      $region89: #{cifar10_forward.2} parent=5 // pred_fallthru
        _
    $region6: #{cifar10_forward.2} parent=1 // loop_footer
      %s15 = sadd.s32 1, %s11
    $region7: #{cifar10_forward.2} parent=1 // loop_footer_branch
      %10 = sbr.rel target = $region3
    $region8: #{cifar10_forward.2} parent=1 // loop_exit
      _

// kernel: cifar10_forward.3
$region0: #{cifar10_forward.3}
  #allocation0 [shape = 'u32[]', space=smem, size = 0x4, offset = 0x4, fixed_abs, tag = 'smem constant byte address 0x4 - core index']
  #allocation1 [shape = 'u32[144,128]{1,0:T(1,128)}', space=vmem, size = 0x12000, scoped, tag = 'internal scratch']
  %s0 = inlined_call_operand.vmem [shape: bf16[2,8192], index: 0, kind: input, shape index: {}]
  %s1 = inlined_call_operand.vmem [shape: bf16[8192,128], index: 1, kind: input, shape index: {}]
  %s2 = inlined_call_operand.vmem [shape: f32[1,128], index: 2, kind: input, shape index: {}]
  %s3 = inlined_call_operand.hbm [shape: f32[2,128], index: 3, kind: output, shape index: {}]
  %s4 = sld [smem:[#allocation0]]
  $region22: #{cifar10_forward.3} parent=0
    _
  %s6 = ssub.s32 1, %s4
  %s7 = scalar_select 0, %s6, %s4
  $region1: #{cifar10_forward.3} parent=0
    #allocation2 [shape = 'u8[1024]{0}', space=vmem, size = 0x400, scoped, tag = 'output window, operand 0, single buffered']
    #allocation3 [shape = 's32[1]{0}', space=sflag, size = 0x4, scoped, tag = 'scoped memory for cifar10_forward.3']
    %8 = vsyncpa [#allocation3], 0
    // Predicated region
    $region2: #{cifar10_forward.3} parent=1 // pred_check
      _
    $region3: #{cifar10_forward.3} parent=1 // pred_check_branch
      %10 = sbr.rel (0) target = $region5
    $region4: #{cifar10_forward.3} parent=1 // pred_region
      _
    $region5: #{cifar10_forward.3} parent=1 // pred_fallthru
      _
    // Predicated region
    $region6: #{cifar10_forward.3} parent=1 // pred_check
      _
    $region7: #{cifar10_forward.3} parent=1 // pred_check_branch
      %12 = sbr.rel (0) target = $region9
    $region8: #{cifar10_forward.3} parent=1 // pred_region
      _
    $region9: #{cifar10_forward.3} parent=1 // pred_fallthru
      _
    // Predicated region
    $region10: #{cifar10_forward.3} parent=1 // pred_check
      _
    $region11: #{cifar10_forward.3} parent=1 // pred_check_branch
      %14 = sbr.rel (0) target = $region13
    $region12: #{cifar10_forward.3} parent=1 // pred_region
      _
    $region13: #{cifar10_forward.3} parent=1 // pred_fallthru
      _
    %v16 = vld [vmem:[%s0] sm:$0xff]
    %v17 = vld [vmem:[%s0 + $0x8] sm:$0xff]
    %v18 = vld [vmem:[%s0 + $0x10] sm:$0xff]
    %v19 = vld [vmem:[%s0 + $0x18] sm:$0xff]
    %v20 = vld [vmem:[%s0 + $0x20] sm:$0xff]
    %v21 = vld [vmem:[%s0 + $0x28] sm:$0xff]
    %v22 = vld [vmem:[%s0 + $0x30] sm:$0xff]
    %v23 = vld [vmem:[%s0 + $0x38] sm:$0xff]
    %v24 = vld [vmem:[%s1] sm:$0xf]
    %v25 = vld [vmem:[%s1 + $0x4] sm:$0xf]
    %v26 = vld [vmem:[%s1 + $0x8] sm:$0xf]
    %v27 = vld [vmem:[%s1 + $0xc] sm:$0xf]
    %v28 = vld [vmem:[%s1 + $0x10] sm:$0xf]
    %v29 = vld [vmem:[%s1 + $0x14] sm:$0xf]
    %v30 = vld [vmem:[%s1 + $0x18] sm:$0xf]
    %v31 = vld [vmem:[%s1 + $0x1c] sm:$0xf]
    %v32 = vld [vmem:[%s1 + $0x20] sm:$0xf]
    %v33 = vld [vmem:[%s1 + $0x24] sm:$0xf]
    %v34 = vld [vmem:[%s1 + $0x28] sm:$0xf]
    %v35 = vld [vmem:[%s1 + $0x2c] sm:$0xf]
    %v36 = vld [vmem:[%s1 + $0x30] sm:$0xf]
    %v37 = vld [vmem:[%s1 + $0x34] sm:$0xf]
    %v38 = vld [vmem:[%s1 + $0x38] sm:$0xf]
    %v39 = vld [vmem:[%s1 + $0x3c] sm:$0xf]
    %v40 = vld [vmem:[%s1 + $0x40] sm:$0xf]
    %v41 = vld [vmem:[%s1 + $0x44] sm:$0xf]
    %v42 = vld [vmem:[%s1 + $0x48] sm:$0xf]
    %v43 = vld [vmem:[%s1 + $0x4c] sm:$0xf]
    %v44 = vld [vmem:[%s1 + $0x50] sm:$0xf]
    %v45 = vld [vmem:[%s1 + $0x54] sm:$0xf]
    %v46 = vld [vmem:[%s1 + $0x58] sm:$0xf]
    %v47 = vld [vmem:[%s1 + $0x5c] sm:$0xf]
    %v48 = vld [vmem:[%s1 + $0x60] sm:$0xf]
    %v49 = vld [vmem:[%s1 + $0x64] sm:$0xf]
    %v50 = vld [vmem:[%s1 + $0x68] sm:$0xf]
    %v51 = vld [vmem:[%s1 + $0x6c] sm:$0xf]
    %v52 = vld [vmem:[%s1 + $0x70] sm:$0xf]
    %v53 = vld [vmem:[%s1 + $0x74] sm:$0xf]
    %v54 = vld [vmem:[%s1 + $0x78] sm:$0xf]
    %v55 = vld [vmem:[%s1 + $0x7c] sm:$0xf]
    %v56 = vld [vmem:[%s1 + $0x80] sm:$0xf]
    %v57 = vld [vmem:[%s1 + $0x84] sm:$0xf]
    %v58 = vld [vmem:[%s1 + $0x88] sm:$0xf]
    %v59 = vld [vmem:[%s1 + $0x8c] sm:$0xf]
    %v60 = vld [vmem:[%s1 + $0x90] sm:$0xf]
    %v61 = vld [vmem:[%s1 + $0x94] sm:$0xf]
    %v62 = vld [vmem:[%s1 + $0x98] sm:$0xf]
    %v63 = vld [vmem:[%s1 + $0x9c] sm:$0xf]
    %v64 = vld [vmem:[%s1 + $0xa0] sm:$0xf]
    %v65 = vld [vmem:[%s1 + $0xa4] sm:$0xf]
    %v66 = vld [vmem:[%s1 + $0xa8] sm:$0xf]
    %v67 = vld [vmem:[%s1 + $0xac] sm:$0xf]
    %v68 = vld [vmem:[%s1 + $0xb0] sm:$0xf]
    %v69 = vld [vmem:[%s1 + $0xb4] sm:$0xf]
    %v70 = vld [vmem:[%s1 + $0xb8] sm:$0xf]
    %v71 = vld [vmem:[%s1 + $0xbc] sm:$0xf]
    %v72 = vld [vmem:[%s1 + $0xc0] sm:$0xf]
    %v73 = vld [vmem:[%s1 + $0xc4] sm:$0xf]
    %v74 = vld [vmem:[%s1 + $0xc8] sm:$0xf]
    %v75 = vld [vmem:[%s1 + $0xcc] sm:$0xf]
    %v76 = vld [vmem:[%s1 + $0xd0] sm:$0xf]
    %v77 = vld [vmem:[%s1 + $0xd4] sm:$0xf]
    %v78 = vld [vmem:[%s1 + $0xd8] sm:$0xf]
    %v79 = vld [vmem:[%s1 + $0xdc] sm:$0xf]
    %v80 = vld [vmem:[%s1 + $0xe0] sm:$0xf]
    %v81 = vld [vmem:[%s1 + $0xe4] sm:$0xf]
    %v82 = vld [vmem:[%s1 + $0xe8] sm:$0xf]
    %v83 = vld [vmem:[%s1 + $0xec] sm:$0xf]
    %v84 = vld [vmem:[%s1 + $0xf0] sm:$0xf]
    %v85 = vld [vmem:[%s1 + $0xf4] sm:$0xf]
    %v86 = vld [vmem:[%s1 + $0xf8] sm:$0xf]
    %v87 = vld [vmem:[%s1 + $0xfc] sm:$0xf]
    %v88 = vld [vmem:[%s1 + $0x100] sm:$0xf]
    %v89 = vld [vmem:[%s1 + $0x104] sm:$0xf]
    %v90 = vld [vmem:[%s1 + $0x108] sm:$0xf]
    %v91 = vld [vmem:[%s1 + $0x10c] sm:$0xf]
    %v92 = vld [vmem:[%s1 + $0x110] sm:$0xf]
    %v93 = vld [vmem:[%s1 + $0x114] sm:$0xf]
    %v94 = vld [vmem:[%s1 + $0x118] sm:$0xf]
    %v95 = vld [vmem:[%s1 + $0x11c] sm:$0xf]
    %v96 = vld [vmem:[%s1 + $0x120] sm:$0xf]
    %v97 = vld [vmem:[%s1 + $0x124] sm:$0xf]
    %v98 = vld [vmem:[%s1 + $0x128] sm:$0xf]
    %v99 = vld [vmem:[%s1 + $0x12c] sm:$0xf]
    %v100 = vld [vmem:[%s1 + $0x130] sm:$0xf]
    %v101 = vld [vmem:[%s1 + $0x134] sm:$0xf]
    %v102 = vld [vmem:[%s1 + $0x138] sm:$0xf]
    %v103 = vld [vmem:[%s1 + $0x13c] sm:$0xf]
    %v104 = vld [vmem:[%s1 + $0x140] sm:$0xf]
    %v105 = vld [vmem:[%s1 + $0x144] sm:$0xf]
    %v106 = vld [vmem:[%s1 + $0x148] sm:$0xf]
    %v107 = vld [vmem:[%s1 + $0x14c] sm:$0xf]
    %v108 = vld [vmem:[%s1 + $0x150] sm:$0xf]
    %v109 = vld [vmem:[%s1 + $0x154] sm:$0xf]
    %v110 = vld [vmem:[%s1 + $0x158] sm:$0xf]
    %v111 = vld [vmem:[%s1 + $0x15c] sm:$0xf]
    %v112 = vld [vmem:[%s1 + $0x160] sm:$0xf]
    %v113 = vld [vmem:[%s1 + $0x164] sm:$0xf]
    %v114 = vld [vmem:[%s1 + $0x168] sm:$0xf]
    %v115 = vld [vmem:[%s1 + $0x16c] sm:$0xf]
    %v116 = vld [vmem:[%s1 + $0x170] sm:$0xf]
    %v117 = vld [vmem:[%s1 + $0x174] sm:$0xf]
    %v118 = vld [vmem:[%s1 + $0x178] sm:$0xf]
    %v119 = vld [vmem:[%s1 + $0x17c] sm:$0xf]
    %v120 = vld [vmem:[%s1 + $0x180] sm:$0xf]
    %v121 = vld [vmem:[%s1 + $0x184] sm:$0xf]
    %v122 = vld [vmem:[%s1 + $0x188] sm:$0xf]
    %v123 = vld [vmem:[%s1 + $0x18c] sm:$0xf]
    %v124 = vld [vmem:[%s1 + $0x190] sm:$0xf]
    %v125 = vld [vmem:[%s1 + $0x194] sm:$0xf]
    %v126 = vld [vmem:[%s1 + $0x198] sm:$0xf]
    %v127 = vld [vmem:[%s1 + $0x19c] sm:$0xf]
    %v128 = vld [vmem:[%s1 + $0x1a0] sm:$0xf]
    %v129 = vld [vmem:[%s1 + $0x1a4] sm:$0xf]
    %v130 = vld [vmem:[%s1 + $0x1a8] sm:$0xf]
    %v131 = vld [vmem:[%s1 + $0x1ac] sm:$0xf]
    %v132 = vld [vmem:[%s1 + $0x1b0] sm:$0xf]
    %v133 = vld [vmem:[%s1 + $0x1b4] sm:$0xf]
    %v134 = vld [vmem:[%s1 + $0x1b8] sm:$0xf]
    %v135 = vld [vmem:[%s1 + $0x1bc] sm:$0xf]
    %v136 = vld [vmem:[%s1 + $0x1c0] sm:$0xf]
    %v137 = vld [vmem:[%s1 + $0x1c4] sm:$0xf]
    %v138 = vld [vmem:[%s1 + $0x1c8] sm:$0xf]
    %v139 = vld [vmem:[%s1 + $0x1cc] sm:$0xf]
    %v140 = vld [vmem:[%s1 + $0x1d0] sm:$0xf]
    %v141 = vld [vmem:[%s1 + $0x1d4] sm:$0xf]
    %v142 = vld [vmem:[%s1 + $0x1d8] sm:$0xf]
    %v143 = vld [vmem:[%s1 + $0x1dc] sm:$0xf]
    %v144 = vld [vmem:[%s1 + $0x1e0] sm:$0xf]
    %v145 = vld [vmem:[%s1 + $0x1e4] sm:$0xf]
    %v146 = vld [vmem:[%s1 + $0x1e8] sm:$0xf]
    %v147 = vld [vmem:[%s1 + $0x1ec] sm:$0xf]
    %v148 = vld [vmem:[%s1 + $0x1f0] sm:$0xf]
    %v149 = vld [vmem:[%s1 + $0x1f4] sm:$0xf]
    %v150 = vld [vmem:[%s1 + $0x1f8] sm:$0xf]
    %v151 = vld [vmem:[%s1 + $0x1fc] sm:$0xf]
    %v152 = vld [vmem:[%s1 + $0x200] sm:$0xf]
    %v153 = vld [vmem:[%s1 + $0x204] sm:$0xf]
    %v154 = vld [vmem:[%s1 + $0x208] sm:$0xf]
    %v155 = vld [vmem:[%s1 + $0x20c] sm:$0xf]
    %v156 = vld [vmem:[%s1 + $0x210] sm:$0xf]
    %v157 = vld [vmem:[%s1 + $0x214] sm:$0xf]
    %v158 = vld [vmem:[%s1 + $0x218] sm:$0xf]
    %v159 = vld [vmem:[%s1 + $0x21c] sm:$0xf]
    %v160 = vld [vmem:[%s1 + $0x220] sm:$0xf]
    %v161 = vld [vmem:[%s1 + $0x224] sm:$0xf]
    %v162 = vld [vmem:[%s1 + $0x228] sm:$0xf]
    %v163 = vld [vmem:[%s1 + $0x22c] sm:$0xf]
    %v164 = vld [vmem:[%s1 + $0x230] sm:$0xf]
    %v165 = vld [vmem:[%s1 + $0x234] sm:$0xf]
    %v166 = vld [vmem:[%s1 + $0x238] sm:$0xf]
    %v167 = vld [vmem:[%s1 + $0x23c] sm:$0xf]
    %v168 = vld [vmem:[%s1 + $0x240] sm:$0xf]
    %v169 = vld [vmem:[%s1 + $0x244] sm:$0xf]
    %v170 = vld [vmem:[%s1 + $0x248] sm:$0xf]
    %v171 = vld [vmem:[%s1 + $0x24c] sm:$0xf]
    %v172 = vld [vmem:[%s1 + $0x250] sm:$0xf]
    %v173 = vld [vmem:[%s1 + $0x254] sm:$0xf]
    %v174 = vld [vmem:[%s1 + $0x258] sm:$0xf]
    %v175 = vld [vmem:[%s1 + $0x25c] sm:$0xf]
    %v176 = vld [vmem:[%s1 + $0x260] sm:$0xf]
    %v177 = vld [vmem:[%s1 + $0x264] sm:$0xf]
    %v178 = vld [vmem:[%s1 + $0x268] sm:$0xf]
    %v179 = vld [vmem:[%s1 + $0x26c] sm:$0xf]
    %v180 = vld [vmem:[%s1 + $0x270] sm:$0xf]
    %v181 = vld [vmem:[%s1 + $0x274] sm:$0xf]
    %v182 = vld [vmem:[%s1 + $0x278] sm:$0xf]
    %v183 = vld [vmem:[%s1 + $0x27c] sm:$0xf]
    %v184 = vld [vmem:[%s1 + $0x280] sm:$0xf]
    %v185 = vld [vmem:[%s1 + $0x284] sm:$0xf]
    %v186 = vld [vmem:[%s1 + $0x288] sm:$0xf]
    %v187 = vld [vmem:[%s1 + $0x28c] sm:$0xf]
    %v188 = vld [vmem:[%s1 + $0x290] sm:$0xf]
    %v189 = vld [vmem:[%s1 + $0x294] sm:$0xf]
    %v190 = vld [vmem:[%s1 + $0x298] sm:$0xf]
    %v191 = vld [vmem:[%s1 + $0x29c] sm:$0xf]
    %v192 = vld [vmem:[%s1 + $0x2a0] sm:$0xf]
    %v193 = vld [vmem:[%s1 + $0x2a4] sm:$0xf]
    %v194 = vld [vmem:[%s1 + $0x2a8] sm:$0xf]
    %v195 = vld [vmem:[%s1 + $0x2ac] sm:$0xf]
    %v196 = vld [vmem:[%s1 + $0x2b0] sm:$0xf]
    %v197 = vld [vmem:[%s1 + $0x2b4] sm:$0xf]
    %v198 = vld [vmem:[%s1 + $0x2b8] sm:$0xf]
    %v199 = vld [vmem:[%s1 + $0x2bc] sm:$0xf]
    %v200 = vld [vmem:[%s1 + $0x2c0] sm:$0xf]
    %v201 = vld [vmem:[%s1 + $0x2c4] sm:$0xf]
    %v202 = vld [vmem:[%s1 + $0x2c8] sm:$0xf]
    %v203 = vld [vmem:[%s1 + $0x2cc] sm:$0xf]
    %v204 = vld [vmem:[%s1 + $0x2d0] sm:$0xf]
    %v205 = vld [vmem:[%s1 + $0x2d4] sm:$0xf]
    %v206 = vld [vmem:[%s1 + $0x2d8] sm:$0xf]
    %v207 = vld [vmem:[%s1 + $0x2dc] sm:$0xf]
    %v208 = vld [vmem:[%s1 + $0x2e0] sm:$0xf]
    %v209 = vld [vmem:[%s1 + $0x2e4] sm:$0xf]
    %v210 = vld [vmem:[%s1 + $0x2e8] sm:$0xf]
    %v211 = vld [vmem:[%s1 + $0x2ec] sm:$0xf]
    %v212 = vld [vmem:[%s1 + $0x2f0] sm:$0xf]
    %v213 = vld [vmem:[%s1 + $0x2f4] sm:$0xf]
    %v214 = vld [vmem:[%s1 + $0x2f8] sm:$0xf]
    %v215 = vld [vmem:[%s1 + $0x2fc] sm:$0xf]
    %v216 = vld [vmem:[%s1 + $0x300] sm:$0xf]
    %v217 = vld [vmem:[%s1 + $0x304] sm:$0xf]
    %v218 = vld [vmem:[%s1 + $0x308] sm:$0xf]
    %v219 = vld [vmem:[%s1 + $0x30c] sm:$0xf]
    %v220 = vld [vmem:[%s1 + $0x310] sm:$0xf]
    %v221 = vld [vmem:[%s1 + $0x314] sm:$0xf]
    %v222 = vld [vmem:[%s1 + $0x318] sm:$0xf]
    %v223 = vld [vmem:[%s1 + $0x31c] sm:$0xf]
    %v224 = vld [vmem:[%s1 + $0x320] sm:$0xf]
    %v225 = vld [vmem:[%s1 + $0x324] sm:$0xf]
    %v226 = vld [vmem:[%s1 + $0x328] sm:$0xf]
    %v227 = vld [vmem:[%s1 + $0x32c] sm:$0xf]
    %v228 = vld [vmem:[%s1 + $0x330] sm:$0xf]
    %v229 = vld [vmem:[%s1 + $0x334] sm:$0xf]
    %v230 = vld [vmem:[%s1 + $0x338] sm:$0xf]
    %v231 = vld [vmem:[%s1 + $0x33c] sm:$0xf]
    %v232 = vld [vmem:[%s1 + $0x340] sm:$0xf]
    %v233 = vld [vmem:[%s1 + $0x344] sm:$0xf]
    %v234 = vld [vmem:[%s1 + $0x348] sm:$0xf]
    %v235 = vld [vmem:[%s1 + $0x34c] sm:$0xf]
    %v236 = vld [vmem:[%s1 + $0x350] sm:$0xf]
    %v237 = vld [vmem:[%s1 + $0x354] sm:$0xf]
    %v238 = vld [vmem:[%s1 + $0x358] sm:$0xf]
    %v239 = vld [vmem:[%s1 + $0x35c] sm:$0xf]
    %v240 = vld [vmem:[%s1 + $0x360] sm:$0xf]
    %v241 = vld [vmem:[%s1 + $0x364] sm:$0xf]
    %v242 = vld [vmem:[%s1 + $0x368] sm:$0xf]
    %v243 = vld [vmem:[%s1 + $0x36c] sm:$0xf]
    %v244 = vld [vmem:[%s1 + $0x370] sm:$0xf]
    %v245 = vld [vmem:[%s1 + $0x374] sm:$0xf]
    %v246 = vld [vmem:[%s1 + $0x378] sm:$0xf]
    %v247 = vld [vmem:[%s1 + $0x37c] sm:$0xf]
    %v248 = vld [vmem:[%s1 + $0x380] sm:$0xf]
    %v249 = vld [vmem:[%s1 + $0x384] sm:$0xf]
    %v250 = vld [vmem:[%s1 + $0x388] sm:$0xf]
    %v251 = vld [vmem:[%s1 + $0x38c] sm:$0xf]
    %v252 = vld [vmem:[%s1 + $0x390] sm:$0xf]
    %v253 = vld [vmem:[%s1 + $0x394] sm:$0xf]
    %v254 = vld [vmem:[%s1 + $0x398] sm:$0xf]
    %v255 = vld [vmem:[%s1 + $0x39c] sm:$0xf]
    %v256 = vld [vmem:[%s1 + $0x3a0] sm:$0xf]
    %v257 = vld [vmem:[%s1 + $0x3a4] sm:$0xf]
    %v258 = vld [vmem:[%s1 + $0x3a8] sm:$0xf]
    %v259 = vld [vmem:[%s1 + $0x3ac] sm:$0xf]
    %v260 = vld [vmem:[%s1 + $0x3b0] sm:$0xf]
    %v261 = vld [vmem:[%s1 + $0x3b4] sm:$0xf]
    %v262 = vld [vmem:[%s1 + $0x3b8] sm:$0xf]
    %v263 = vld [vmem:[%s1 + $0x3bc] sm:$0xf]
    %v264 = vld [vmem:[%s1 + $0x3c0] sm:$0xf]
    %v265 = vld [vmem:[%s1 + $0x3c4] sm:$0xf]
    %v266 = vld [vmem:[%s1 + $0x3c8] sm:$0xf]
    %v267 = vld [vmem:[%s1 + $0x3cc] sm:$0xf]
    %v268 = vld [vmem:[%s1 + $0x3d0] sm:$0xf]
    %v269 = vld [vmem:[%s1 + $0x3d4] sm:$0xf]
    %v270 = vld [vmem:[%s1 + $0x3d8] sm:$0xf]
    %v271 = vld [vmem:[%s1 + $0x3dc] sm:$0xf]
    %v272 = vld [vmem:[%s1 + $0x3e0] sm:$0xf]
    %v273 = vld [vmem:[%s1 + $0x3e4] sm:$0xf]
    %v274 = vld [vmem:[%s1 + $0x3e8] sm:$0xf]
    %v275 = vld [vmem:[%s1 + $0x3ec] sm:$0xf]
    %v276 = vld [vmem:[%s1 + $0x3f0] sm:$0xf]
    %v277 = vld [vmem:[%s1 + $0x3f4] sm:$0xf]
    %v278 = vld [vmem:[%s1 + $0x3f8] sm:$0xf]
    %v279 = vld [vmem:[%s1 + $0x3fc] sm:$0xf]
    %v280 = vld [vmem:[%s1 + $0x400] sm:$0xf]
    %v281 = vld [vmem:[%s1 + $0x404] sm:$0xf]
    %v282 = vld [vmem:[%s1 + $0x408] sm:$0xf]
    %v283 = vld [vmem:[%s1 + $0x40c] sm:$0xf]
    %v284 = vld [vmem:[%s1 + $0x410] sm:$0xf]
    %v285 = vld [vmem:[%s1 + $0x414] sm:$0xf]
    %v286 = vld [vmem:[%s1 + $0x418] sm:$0xf]
    %v287 = vld [vmem:[%s1 + $0x41c] sm:$0xf]
    %v288 = vld [vmem:[%s1 + $0x420] sm:$0xf]
    %v289 = vld [vmem:[%s1 + $0x424] sm:$0xf]
    %v290 = vld [vmem:[%s1 + $0x428] sm:$0xf]
    %v291 = vld [vmem:[%s1 + $0x42c] sm:$0xf]
    %v292 = vld [vmem:[%s1 + $0x430] sm:$0xf]
    %v293 = vld [vmem:[%s1 + $0x434] sm:$0xf]
    %v294 = vld [vmem:[%s1 + $0x438] sm:$0xf]
    %v295 = vld [vmem:[%s1 + $0x43c] sm:$0xf]
    %v296 = vld [vmem:[%s1 + $0x440] sm:$0xf]
    %v297 = vld [vmem:[%s1 + $0x444] sm:$0xf]
    %v298 = vld [vmem:[%s1 + $0x448] sm:$0xf]
    %v299 = vld [vmem:[%s1 + $0x44c] sm:$0xf]
    %v300 = vld [vmem:[%s1 + $0x450] sm:$0xf]
    %v301 = vld [vmem:[%s1 + $0x454] sm:$0xf]
    %v302 = vld [vmem:[%s1 + $0x458] sm:$0xf]
    %v303 = vld [vmem:[%s1 + $0x45c] sm:$0xf]
    %v304 = vld [vmem:[%s1 + $0x460] sm:$0xf]
    %v305 = vld [vmem:[%s1 + $0x464] sm:$0xf]
    %v306 = vld [vmem:[%s1 + $0x468] sm:$0xf]
    %v307 = vld [vmem:[%s1 + $0x46c] sm:$0xf]
    %v308 = vld [vmem:[%s1 + $0x470] sm:$0xf]
    %v309 = vld [vmem:[%s1 + $0x474] sm:$0xf]
    %v310 = vld [vmem:[%s1 + $0x478] sm:$0xf]
    %v311 = vld [vmem:[%s1 + $0x47c] sm:$0xf]
    %v312 = vld [vmem:[%s1 + $0x480] sm:$0xf]
    %v313 = vld [vmem:[%s1 + $0x484] sm:$0xf]
    %v314 = vld [vmem:[%s1 + $0x488] sm:$0xf]
    %v315 = vld [vmem:[%s1 + $0x48c] sm:$0xf]
    %v316 = vld [vmem:[%s1 + $0x490] sm:$0xf]
    %v317 = vld [vmem:[%s1 + $0x494] sm:$0xf]
    %v318 = vld [vmem:[%s1 + $0x498] sm:$0xf]
    %v319 = vld [vmem:[%s1 + $0x49c] sm:$0xf]
    %v320 = vld [vmem:[%s1 + $0x4a0] sm:$0xf]
    %v321 = vld [vmem:[%s1 + $0x4a4] sm:$0xf]
    %v322 = vld [vmem:[%s1 + $0x4a8] sm:$0xf]
    %v323 = vld [vmem:[%s1 + $0x4ac] sm:$0xf]
    %v324 = vld [vmem:[%s1 + $0x4b0] sm:$0xf]
    %v325 = vld [vmem:[%s1 + $0x4b4] sm:$0xf]
    %v326 = vld [vmem:[%s1 + $0x4b8] sm:$0xf]
    %v327 = vld [vmem:[%s1 + $0x4bc] sm:$0xf]
    %v328 = vld [vmem:[%s1 + $0x4c0] sm:$0xf]
    %v329 = vld [vmem:[%s1 + $0x4c4] sm:$0xf]
    %v330 = vld [vmem:[%s1 + $0x4c8] sm:$0xf]
    %v331 = vld [vmem:[%s1 + $0x4cc] sm:$0xf]
    %v332 = vld [vmem:[%s1 + $0x4d0] sm:$0xf]
    %v333 = vld [vmem:[%s1 + $0x4d4] sm:$0xf]
    %v334 = vld [vmem:[%s1 + $0x4d8] sm:$0xf]
    %v335 = vld [vmem:[%s1 + $0x4dc] sm:$0xf]
    %v336 = vld [vmem:[%s1 + $0x4e0] sm:$0xf]
    %v337 = vld [vmem:[%s1 + $0x4e4] sm:$0xf]
    %v338 = vld [vmem:[%s1 + $0x4e8] sm:$0xf]
    %v339 = vld [vmem:[%s1 + $0x4ec] sm:$0xf]
    %v340 = vld [vmem:[%s1 + $0x4f0] sm:$0xf]
    %v341 = vld [vmem:[%s1 + $0x4f4] sm:$0xf]
    %v342 = vld [vmem:[%s1 + $0x4f8] sm:$0xf]
    %v343 = vld [vmem:[%s1 + $0x4fc] sm:$0xf]
    %v344 = vld [vmem:[%s1 + $0x500] sm:$0xf]
    %v345 = vld [vmem:[%s1 + $0x504] sm:$0xf]
    %v346 = vld [vmem:[%s1 + $0x508] sm:$0xf]
    %v347 = vld [vmem:[%s1 + $0x50c] sm:$0xf]
    %v348 = vld [vmem:[%s1 + $0x510] sm:$0xf]
    %v349 = vld [vmem:[%s1 + $0x514] sm:$0xf]
    %v350 = vld [vmem:[%s1 + $0x518] sm:$0xf]
    %v351 = vld [vmem:[%s1 + $0x51c] sm:$0xf]
    %v352 = vld [vmem:[%s1 + $0x520] sm:$0xf]
    %v353 = vld [vmem:[%s1 + $0x524] sm:$0xf]
    %v354 = vld [vmem:[%s1 + $0x528] sm:$0xf]
    %v355 = vld [vmem:[%s1 + $0x52c] sm:$0xf]
    %v356 = vld [vmem:[%s1 + $0x530] sm:$0xf]
    %v357 = vld [vmem:[%s1 + $0x534] sm:$0xf]
    %v358 = vld [vmem:[%s1 + $0x538] sm:$0xf]
    %v359 = vld [vmem:[%s1 + $0x53c] sm:$0xf]
    %v360 = vld [vmem:[%s1 + $0x540] sm:$0xf]
    %v361 = vld [vmem:[%s1 + $0x544] sm:$0xf]
    %v362 = vld [vmem:[%s1 + $0x548] sm:$0xf]
    %v363 = vld [vmem:[%s1 + $0x54c] sm:$0xf]
    %v364 = vld [vmem:[%s1 + $0x550] sm:$0xf]
    %v365 = vld [vmem:[%s1 + $0x554] sm:$0xf]
    %v366 = vld [vmem:[%s1 + $0x558] sm:$0xf]
    %v367 = vld [vmem:[%s1 + $0x55c] sm:$0xf]
    %v368 = vld [vmem:[%s1 + $0x560] sm:$0xf]
    %v369 = vld [vmem:[%s1 + $0x564] sm:$0xf]
    %v370 = vld [vmem:[%s1 + $0x568] sm:$0xf]
    %v371 = vld [vmem:[%s1 + $0x56c] sm:$0xf]
    %v372 = vld [vmem:[%s1 + $0x570] sm:$0xf]
    %v373 = vld [vmem:[%s1 + $0x574] sm:$0xf]
    %v374 = vld [vmem:[%s1 + $0x578] sm:$0xf]
    %v375 = vld [vmem:[%s1 + $0x57c] sm:$0xf]
    %v376 = vld [vmem:[%s1 + $0x580] sm:$0xf]
    %v377 = vld [vmem:[%s1 + $0x584] sm:$0xf]
    %v378 = vld [vmem:[%s1 + $0x588] sm:$0xf]
    %v379 = vld [vmem:[%s1 + $0x58c] sm:$0xf]
    %v380 = vld [vmem:[%s1 + $0x590] sm:$0xf]
    %v381 = vld [vmem:[%s1 + $0x594] sm:$0xf]
    %v382 = vld [vmem:[%s1 + $0x598] sm:$0xf]
    %v383 = vld [vmem:[%s1 + $0x59c] sm:$0xf]
    %v384 = vld [vmem:[%s1 + $0x5a0] sm:$0xf]
    %v385 = vld [vmem:[%s1 + $0x5a4] sm:$0xf]
    %v386 = vld [vmem:[%s1 + $0x5a8] sm:$0xf]
    %v387 = vld [vmem:[%s1 + $0x5ac] sm:$0xf]
    %v388 = vld [vmem:[%s1 + $0x5b0] sm:$0xf]
    %v389 = vld [vmem:[%s1 + $0x5b4] sm:$0xf]
    %v390 = vld [vmem:[%s1 + $0x5b8] sm:$0xf]
    %v391 = vld [vmem:[%s1 + $0x5bc] sm:$0xf]
    %v392 = vld [vmem:[%s1 + $0x5c0] sm:$0xf]
    %v393 = vld [vmem:[%s1 + $0x5c4] sm:$0xf]
    %v394 = vld [vmem:[%s1 + $0x5c8] sm:$0xf]
    %v395 = vld [vmem:[%s1 + $0x5cc] sm:$0xf]
    %v396 = vld [vmem:[%s1 + $0x5d0] sm:$0xf]
    %v397 = vld [vmem:[%s1 + $0x5d4] sm:$0xf]
    %v398 = vld [vmem:[%s1 + $0x5d8] sm:$0xf]
    %v399 = vld [vmem:[%s1 + $0x5dc] sm:$0xf]
    %v400 = vld [vmem:[%s1 + $0x5e0] sm:$0xf]
    %v401 = vld [vmem:[%s1 + $0x5e4] sm:$0xf]
    %v402 = vld [vmem:[%s1 + $0x5e8] sm:$0xf]
    %v403 = vld [vmem:[%s1 + $0x5ec] sm:$0xf]
    %v404 = vld [vmem:[%s1 + $0x5f0] sm:$0xf]
    %v405 = vld [vmem:[%s1 + $0x5f4] sm:$0xf]
    %v406 = vld [vmem:[%s1 + $0x5f8] sm:$0xf]
    %v407 = vld [vmem:[%s1 + $0x5fc] sm:$0xf]
    %v408 = vld [vmem:[%s1 + $0x600] sm:$0xf]
    %v409 = vld [vmem:[%s1 + $0x604] sm:$0xf]
    %v410 = vld [vmem:[%s1 + $0x608] sm:$0xf]
    %v411 = vld [vmem:[%s1 + $0x60c] sm:$0xf]
    %v412 = vld [vmem:[%s1 + $0x610] sm:$0xf]
    %v413 = vld [vmem:[%s1 + $0x614] sm:$0xf]
    %v414 = vld [vmem:[%s1 + $0x618] sm:$0xf]
    %v415 = vld [vmem:[%s1 + $0x61c] sm:$0xf]
    %v416 = vld [vmem:[%s1 + $0x620] sm:$0xf]
    %v417 = vld [vmem:[%s1 + $0x624] sm:$0xf]
    %v418 = vld [vmem:[%s1 + $0x628] sm:$0xf]
    %v419 = vld [vmem:[%s1 + $0x62c] sm:$0xf]
    %v420 = vld [vmem:[%s1 + $0x630] sm:$0xf]
    %v421 = vld [vmem:[%s1 + $0x634] sm:$0xf]
    %v422 = vld [vmem:[%s1 + $0x638] sm:$0xf]
    %v423 = vld [vmem:[%s1 + $0x63c] sm:$0xf]
    %v424 = vld [vmem:[%s1 + $0x640] sm:$0xf]
    %v425 = vld [vmem:[%s1 + $0x644] sm:$0xf]
    %v426 = vld [vmem:[%s1 + $0x648] sm:$0xf]
    %v427 = vld [vmem:[%s1 + $0x64c] sm:$0xf]
    %v428 = vld [vmem:[%s1 + $0x650] sm:$0xf]
    %v429 = vld [vmem:[%s1 + $0x654] sm:$0xf]
    %v430 = vld [vmem:[%s1 + $0x658] sm:$0xf]
    %v431 = vld [vmem:[%s1 + $0x65c] sm:$0xf]
    %v432 = vld [vmem:[%s1 + $0x660] sm:$0xf]
    %v433 = vld [vmem:[%s1 + $0x664] sm:$0xf]
    %v434 = vld [vmem:[%s1 + $0x668] sm:$0xf]
    %v435 = vld [vmem:[%s1 + $0x66c] sm:$0xf]
    %v436 = vld [vmem:[%s1 + $0x670] sm:$0xf]
    %v437 = vld [vmem:[%s1 + $0x674] sm:$0xf]
    %v438 = vld [vmem:[%s1 + $0x678] sm:$0xf]
    %v439 = vld [vmem:[%s1 + $0x67c] sm:$0xf]
    %v440 = vld [vmem:[%s1 + $0x680] sm:$0xf]
    %v441 = vld [vmem:[%s1 + $0x684] sm:$0xf]
    %v442 = vld [vmem:[%s1 + $0x688] sm:$0xf]
    %v443 = vld [vmem:[%s1 + $0x68c] sm:$0xf]
    %v444 = vld [vmem:[%s1 + $0x690] sm:$0xf]
    %v445 = vld [vmem:[%s1 + $0x694] sm:$0xf]
    %v446 = vld [vmem:[%s1 + $0x698] sm:$0xf]
    %v447 = vld [vmem:[%s1 + $0x69c] sm:$0xf]
    %v448 = vld [vmem:[%s1 + $0x6a0] sm:$0xf]
    %v449 = vld [vmem:[%s1 + $0x6a4] sm:$0xf]
    %v450 = vld [vmem:[%s1 + $0x6a8] sm:$0xf]
    %v451 = vld [vmem:[%s1 + $0x6ac] sm:$0xf]
    %v452 = vld [vmem:[%s1 + $0x6b0] sm:$0xf]
    %v453 = vld [vmem:[%s1 + $0x6b4] sm:$0xf]
    %v454 = vld [vmem:[%s1 + $0x6b8] sm:$0xf]
    %v455 = vld [vmem:[%s1 + $0x6bc] sm:$0xf]
    %v456 = vld [vmem:[%s1 + $0x6c0] sm:$0xf]
    %v457 = vld [vmem:[%s1 + $0x6c4] sm:$0xf]
    %v458 = vld [vmem:[%s1 + $0x6c8] sm:$0xf]
    %v459 = vld [vmem:[%s1 + $0x6cc] sm:$0xf]
    %v460 = vld [vmem:[%s1 + $0x6d0] sm:$0xf]
    %v461 = vld [vmem:[%s1 + $0x6d4] sm:$0xf]
    %v462 = vld [vmem:[%s1 + $0x6d8] sm:$0xf]
    %v463 = vld [vmem:[%s1 + $0x6dc] sm:$0xf]
    %v464 = vld [vmem:[%s1 + $0x6e0] sm:$0xf]
    %v465 = vld [vmem:[%s1 + $0x6e4] sm:$0xf]
    %v466 = vld [vmem:[%s1 + $0x6e8] sm:$0xf]
    %v467 = vld [vmem:[%s1 + $0x6ec] sm:$0xf]
    %v468 = vld [vmem:[%s1 + $0x6f0] sm:$0xf]
    %v469 = vld [vmem:[%s1 + $0x6f4] sm:$0xf]
    %v470 = vld [vmem:[%s1 + $0x6f8] sm:$0xf]
    %v471 = vld [vmem:[%s1 + $0x6fc] sm:$0xf]
    %v472 = vld [vmem:[%s1 + $0x700] sm:$0xf]
    %v473 = vld [vmem:[%s1 + $0x704] sm:$0xf]
    %v474 = vld [vmem:[%s1 + $0x708] sm:$0xf]
    %v475 = vld [vmem:[%s1 + $0x70c] sm:$0xf]
    %v476 = vld [vmem:[%s1 + $0x710] sm:$0xf]
    %v477 = vld [vmem:[%s1 + $0x714] sm:$0xf]
    %v478 = vld [vmem:[%s1 + $0x718] sm:$0xf]
    %v479 = vld [vmem:[%s1 + $0x71c] sm:$0xf]
    %v480 = vld [vmem:[%s1 + $0x720] sm:$0xf]
    %v481 = vld [vmem:[%s1 + $0x724] sm:$0xf]
    %v482 = vld [vmem:[%s1 + $0x728] sm:$0xf]
    %v483 = vld [vmem:[%s1 + $0x72c] sm:$0xf]
    %v484 = vld [vmem:[%s1 + $0x730] sm:$0xf]
    %v485 = vld [vmem:[%s1 + $0x734] sm:$0xf]
    %v486 = vld [vmem:[%s1 + $0x738] sm:$0xf]
    %v487 = vld [vmem:[%s1 + $0x73c] sm:$0xf]
    %v488 = vld [vmem:[%s1 + $0x740] sm:$0xf]
    %v489 = vld [vmem:[%s1 + $0x744] sm:$0xf]
    %v490 = vld [vmem:[%s1 + $0x748] sm:$0xf]
    %v491 = vld [vmem:[%s1 + $0x74c] sm:$0xf]
    %v492 = vld [vmem:[%s1 + $0x750] sm:$0xf]
    %v493 = vld [vmem:[%s1 + $0x754] sm:$0xf]
    %v494 = vld [vmem:[%s1 + $0x758] sm:$0xf]
    %v495 = vld [vmem:[%s1 + $0x75c] sm:$0xf]
    %v496 = vld [vmem:[%s1 + $0x760] sm:$0xf]
    %v497 = vld [vmem:[%s1 + $0x764] sm:$0xf]
    %v498 = vld [vmem:[%s1 + $0x768] sm:$0xf]
    %v499 = vld [vmem:[%s1 + $0x76c] sm:$0xf]
    %v500 = vld [vmem:[%s1 + $0x770] sm:$0xf]
    %v501 = vld [vmem:[%s1 + $0x774] sm:$0xf]
    %v502 = vld [vmem:[%s1 + $0x778] sm:$0xf]
    %v503 = vld [vmem:[%s1 + $0x77c] sm:$0xf]
    %v504 = vld [vmem:[%s1 + $0x780] sm:$0xf]
    %v505 = vld [vmem:[%s1 + $0x784] sm:$0xf]
    %v506 = vld [vmem:[%s1 + $0x788] sm:$0xf]
    %v507 = vld [vmem:[%s1 + $0x78c] sm:$0xf]
    %v508 = vld [vmem:[%s1 + $0x790] sm:$0xf]
    %v509 = vld [vmem:[%s1 + $0x794] sm:$0xf]
    %v510 = vld [vmem:[%s1 + $0x798] sm:$0xf]
    %v511 = vld [vmem:[%s1 + $0x79c] sm:$0xf]
    %v512 = vld [vmem:[%s1 + $0x7a0] sm:$0xf]
    %v513 = vld [vmem:[%s1 + $0x7a4] sm:$0xf]
    %v514 = vld [vmem:[%s1 + $0x7a8] sm:$0xf]
    %v515 = vld [vmem:[%s1 + $0x7ac] sm:$0xf]
    %v516 = vld [vmem:[%s1 + $0x7b0] sm:$0xf]
    %v517 = vld [vmem:[%s1 + $0x7b4] sm:$0xf]
    %v518 = vld [vmem:[%s1 + $0x7b8] sm:$0xf]
    %v519 = vld [vmem:[%s1 + $0x7bc] sm:$0xf]
    %v520 = vld [vmem:[%s1 + $0x7c0] sm:$0xf]
    %v521 = vld [vmem:[%s1 + $0x7c4] sm:$0xf]
    %v522 = vld [vmem:[%s1 + $0x7c8] sm:$0xf]
    %v523 = vld [vmem:[%s1 + $0x7cc] sm:$0xf]
    %v524 = vld [vmem:[%s1 + $0x7d0] sm:$0xf]
    %v525 = vld [vmem:[%s1 + $0x7d4] sm:$0xf]
    %v526 = vld [vmem:[%s1 + $0x7d8] sm:$0xf]
    %v527 = vld [vmem:[%s1 + $0x7dc] sm:$0xf]
    %v528 = vld [vmem:[%s1 + $0x7e0] sm:$0xf]
    %v529 = vld [vmem:[%s1 + $0x7e4] sm:$0xf]
    %v530 = vld [vmem:[%s1 + $0x7e8] sm:$0xf]
    %v531 = vld [vmem:[%s1 + $0x7ec] sm:$0xf]
    %v532 = vld [vmem:[%s1 + $0x7f0] sm:$0xf]
    %v533 = vld [vmem:[%s1 + $0x7f4] sm:$0xf]
    %v534 = vld [vmem:[%s1 + $0x7f8] sm:$0xf]
    %v535 = vld [vmem:[%s1 + $0x7fc] sm:$0xf]
    %v536 = vld [vmem:[%s1 + $0x800] sm:$0xf]
    %v537 = vld [vmem:[%s1 + $0x804] sm:$0xf]
    %v538 = vld [vmem:[%s1 + $0x808] sm:$0xf]
    %v539 = vld [vmem:[%s1 + $0x80c] sm:$0xf]
    %v540 = vld [vmem:[%s1 + $0x810] sm:$0xf]
    %v541 = vld [vmem:[%s1 + $0x814] sm:$0xf]
    %v542 = vld [vmem:[%s1 + $0x818] sm:$0xf]
    %v543 = vld [vmem:[%s1 + $0x81c] sm:$0xf]
    %v544 = vld [vmem:[%s1 + $0x820] sm:$0xf]
    %v545 = vld [vmem:[%s1 + $0x824] sm:$0xf]
    %v546 = vld [vmem:[%s1 + $0x828] sm:$0xf]
    %v547 = vld [vmem:[%s1 + $0x82c] sm:$0xf]
    %v548 = vld [vmem:[%s1 + $0x830] sm:$0xf]
    %v549 = vld [vmem:[%s1 + $0x834] sm:$0xf]
    %v550 = vld [vmem:[%s1 + $0x838] sm:$0xf]
    %v551 = vld [vmem:[%s1 + $0x83c] sm:$0xf]
    %v552 = vld [vmem:[%s1 + $0x840] sm:$0xf]
    %v553 = vld [vmem:[%s1 + $0x844] sm:$0xf]
    %v554 = vld [vmem:[%s1 + $0x848] sm:$0xf]
    %v555 = vld [vmem:[%s1 + $0x84c] sm:$0xf]
    %v556 = vld [vmem:[%s1 + $0x850] sm:$0xf]
    %v557 = vld [vmem:[%s1 + $0x854] sm:$0xf]
    %v558 = vld [vmem:[%s1 + $0x858] sm:$0xf]
    %v559 = vld [vmem:[%s1 + $0x85c] sm:$0xf]
    %v560 = vld [vmem:[%s1 + $0x860] sm:$0xf]
    %v561 = vld [vmem:[%s1 + $0x864] sm:$0xf]
    %v562 = vld [vmem:[%s1 + $0x868] sm:$0xf]
    %v563 = vld [vmem:[%s1 + $0x86c] sm:$0xf]
    %v564 = vld [vmem:[%s1 + $0x870] sm:$0xf]
    %v565 = vld [vmem:[%s1 + $0x874] sm:$0xf]
    %v566 = vld [vmem:[%s1 + $0x878] sm:$0xf]
    %v567 = vld [vmem:[%s1 + $0x87c] sm:$0xf]
    %v568 = vld [vmem:[%s1 + $0x880] sm:$0xf]
    %v569 = vld [vmem:[%s1 + $0x884] sm:$0xf]
    %v570 = vld [vmem:[%s1 + $0x888] sm:$0xf]
    %v571 = vld [vmem:[%s1 + $0x88c] sm:$0xf]
    %v572 = vld [vmem:[%s1 + $0x890] sm:$0xf]
    %v573 = vld [vmem:[%s1 + $0x894] sm:$0xf]
    %v574 = vld [vmem:[%s1 + $0x898] sm:$0xf]
    %v575 = vld [vmem:[%s1 + $0x89c] sm:$0xf]
    %v576 = vld [vmem:[%s1 + $0x8a0] sm:$0xf]
    %v577 = vld [vmem:[%s1 + $0x8a4] sm:$0xf]
    %v578 = vld [vmem:[%s1 + $0x8a8] sm:$0xf]
    %v579 = vld [vmem:[%s1 + $0x8ac] sm:$0xf]
    %v580 = vld [vmem:[%s1 + $0x8b0] sm:$0xf]
    %v581 = vld [vmem:[%s1 + $0x8b4] sm:$0xf]
    %v582 = vld [vmem:[%s1 + $0x8b8] sm:$0xf]
    %v583 = vld [vmem:[%s1 + $0x8bc] sm:$0xf]
    %v584 = vld [vmem:[%s1 + $0x8c0] sm:$0xf]
    %v585 = vld [vmem:[%s1 + $0x8c4] sm:$0xf]
    %v586 = vld [vmem:[%s1 + $0x8c8] sm:$0xf]
    %v587 = vld [vmem:[%s1 + $0x8cc] sm:$0xf]
    %v588 = vld [vmem:[%s1 + $0x8d0] sm:$0xf]
    %v589 = vld [vmem:[%s1 + $0x8d4] sm:$0xf]
    %v590 = vld [vmem:[%s1 + $0x8d8] sm:$0xf]
    %v591 = vld [vmem:[%s1 + $0x8dc] sm:$0xf]
    %v592 = vld [vmem:[%s1 + $0x8e0] sm:$0xf]
    %v593 = vld [vmem:[%s1 + $0x8e4] sm:$0xf]
    %v594 = vld [vmem:[%s1 + $0x8e8] sm:$0xf]
    %v595 = vld [vmem:[%s1 + $0x8ec] sm:$0xf]
    %v596 = vld [vmem:[%s1 + $0x8f0] sm:$0xf]
    %v597 = vld [vmem:[%s1 + $0x8f4] sm:$0xf]
    %v598 = vld [vmem:[%s1 + $0x8f8] sm:$0xf]
    %v599 = vld [vmem:[%s1 + $0x8fc] sm:$0xf]
    %v600 = vld [vmem:[%s1 + $0x900] sm:$0xf]
    %v601 = vld [vmem:[%s1 + $0x904] sm:$0xf]
    %v602 = vld [vmem:[%s1 + $0x908] sm:$0xf]
    %v603 = vld [vmem:[%s1 + $0x90c] sm:$0xf]
    %v604 = vld [vmem:[%s1 + $0x910] sm:$0xf]
    %v605 = vld [vmem:[%s1 + $0x914] sm:$0xf]
    %v606 = vld [vmem:[%s1 + $0x918] sm:$0xf]
    %v607 = vld [vmem:[%s1 + $0x91c] sm:$0xf]
    %v608 = vld [vmem:[%s1 + $0x920] sm:$0xf]
    %v609 = vld [vmem:[%s1 + $0x924] sm:$0xf]
    %v610 = vld [vmem:[%s1 + $0x928] sm:$0xf]
    %v611 = vld [vmem:[%s1 + $0x92c] sm:$0xf]
    %v612 = vld [vmem:[%s1 + $0x930] sm:$0xf]
    %v613 = vld [vmem:[%s1 + $0x934] sm:$0xf]
    %v614 = vld [vmem:[%s1 + $0x938] sm:$0xf]
    %v615 = vld [vmem:[%s1 + $0x93c] sm:$0xf]
    %v616 = vld [vmem:[%s1 + $0x940] sm:$0xf]
    %v617 = vld [vmem:[%s1 + $0x944] sm:$0xf]
    %v618 = vld [vmem:[%s1 + $0x948] sm:$0xf]
    %v619 = vld [vmem:[%s1 + $0x94c] sm:$0xf]
    %v620 = vld [vmem:[%s1 + $0x950] sm:$0xf]
    %v621 = vld [vmem:[%s1 + $0x954] sm:$0xf]
    %v622 = vld [vmem:[%s1 + $0x958] sm:$0xf]
    %v623 = vld [vmem:[%s1 + $0x95c] sm:$0xf]
    %v624 = vld [vmem:[%s1 + $0x960] sm:$0xf]
    %v625 = vld [vmem:[%s1 + $0x964] sm:$0xf]
    %v626 = vld [vmem:[%s1 + $0x968] sm:$0xf]
    %v627 = vld [vmem:[%s1 + $0x96c] sm:$0xf]
    %v628 = vld [vmem:[%s1 + $0x970] sm:$0xf]
    %v629 = vld [vmem:[%s1 + $0x974] sm:$0xf]
    %v630 = vld [vmem:[%s1 + $0x978] sm:$0xf]
    %v631 = vld [vmem:[%s1 + $0x97c] sm:$0xf]
    %v632 = vld [vmem:[%s1 + $0x980] sm:$0xf]
    %v633 = vld [vmem:[%s1 + $0x984] sm:$0xf]
    %v634 = vld [vmem:[%s1 + $0x988] sm:$0xf]
    %v635 = vld [vmem:[%s1 + $0x98c] sm:$0xf]
    %v636 = vld [vmem:[%s1 + $0x990] sm:$0xf]
    %v637 = vld [vmem:[%s1 + $0x994] sm:$0xf]
    %v638 = vld [vmem:[%s1 + $0x998] sm:$0xf]
    %v639 = vld [vmem:[%s1 + $0x99c] sm:$0xf]
    %v640 = vld [vmem:[%s1 + $0x9a0] sm:$0xf]
    %v641 = vld [vmem:[%s1 + $0x9a4] sm:$0xf]
    %v642 = vld [vmem:[%s1 + $0x9a8] sm:$0xf]
    %v643 = vld [vmem:[%s1 + $0x9ac] sm:$0xf]
    %v644 = vld [vmem:[%s1 + $0x9b0] sm:$0xf]
    %v645 = vld [vmem:[%s1 + $0x9b4] sm:$0xf]
    %v646 = vld [vmem:[%s1 + $0x9b8] sm:$0xf]
    %v647 = vld [vmem:[%s1 + $0x9bc] sm:$0xf]
    %v648 = vld [vmem:[%s1 + $0x9c0] sm:$0xf]
    %v649 = vld [vmem:[%s1 + $0x9c4] sm:$0xf]
    %v650 = vld [vmem:[%s1 + $0x9c8] sm:$0xf]
    %v651 = vld [vmem:[%s1 + $0x9cc] sm:$0xf]
    %v652 = vld [vmem:[%s1 + $0x9d0] sm:$0xf]
    %v653 = vld [vmem:[%s1 + $0x9d4] sm:$0xf]
    %v654 = vld [vmem:[%s1 + $0x9d8] sm:$0xf]
    %v655 = vld [vmem:[%s1 + $0x9dc] sm:$0xf]
    %v656 = vld [vmem:[%s1 + $0x9e0] sm:$0xf]
    %v657 = vld [vmem:[%s1 + $0x9e4] sm:$0xf]
    %v658 = vld [vmem:[%s1 + $0x9e8] sm:$0xf]
    %v659 = vld [vmem:[%s1 + $0x9ec] sm:$0xf]
    %v660 = vld [vmem:[%s1 + $0x9f0] sm:$0xf]
    %v661 = vld [vmem:[%s1 + $0x9f4] sm:$0xf]
    %v662 = vld [vmem:[%s1 + $0x9f8] sm:$0xf]
    %v663 = vld [vmem:[%s1 + $0x9fc] sm:$0xf]
    %v664 = vld [vmem:[%s1 + $0xa00] sm:$0xf]
    %v665 = vld [vmem:[%s1 + $0xa04] sm:$0xf]
    %v666 = vld [vmem:[%s1 + $0xa08] sm:$0xf]
    %v667 = vld [vmem:[%s1 + $0xa0c] sm:$0xf]
    %v668 = vld [vmem:[%s1 + $0xa10] sm:$0xf]
    %v669 = vld [vmem:[%s1 + $0xa14] sm:$0xf]
    %v670 = vld [vmem:[%s1 + $0xa18] sm:$0xf]
    %v671 = vld [vmem:[%s1 + $0xa1c] sm:$0xf]
    %v672 = vld [vmem:[%s1 + $0xa20] sm:$0xf]
    %v673 = vld [vmem:[%s1 + $0xa24] sm:$0xf]
    %v674 = vld [vmem:[%s1 + $0xa28] sm:$0xf]
    %v675 = vld [vmem:[%s1 + $0xa2c] sm:$0xf]
    %v676 = vld [vmem:[%s1 + $0xa30] sm:$0xf]
    %v677 = vld [vmem:[%s1 + $0xa34] sm:$0xf]
    %v678 = vld [vmem:[%s1 + $0xa38] sm:$0xf]
    %v679 = vld [vmem:[%s1 + $0xa3c] sm:$0xf]
    %v680 = vld [vmem:[%s1 + $0xa40] sm:$0xf]
    %v681 = vld [vmem:[%s1 + $0xa44] sm:$0xf]
    %v682 = vld [vmem:[%s1 + $0xa48] sm:$0xf]
    %v683 = vld [vmem:[%s1 + $0xa4c] sm:$0xf]
    %v684 = vld [vmem:[%s1 + $0xa50] sm:$0xf]
    %v685 = vld [vmem:[%s1 + $0xa54] sm:$0xf]
    %v686 = vld [vmem:[%s1 + $0xa58] sm:$0xf]
    %v687 = vld [vmem:[%s1 + $0xa5c] sm:$0xf]
    %v688 = vld [vmem:[%s1 + $0xa60] sm:$0xf]
    %v689 = vld [vmem:[%s1 + $0xa64] sm:$0xf]
    %v690 = vld [vmem:[%s1 + $0xa68] sm:$0xf]
    %v691 = vld [vmem:[%s1 + $0xa6c] sm:$0xf]
    %v692 = vld [vmem:[%s1 + $0xa70] sm:$0xf]
    %v693 = vld [vmem:[%s1 + $0xa74] sm:$0xf]
    %v694 = vld [vmem:[%s1 + $0xa78] sm:$0xf]
    %v695 = vld [vmem:[%s1 + $0xa7c] sm:$0xf]
    %v696 = vld [vmem:[%s1 + $0xa80] sm:$0xf]
    %v697 = vld [vmem:[%s1 + $0xa84] sm:$0xf]
    %v698 = vld [vmem:[%s1 + $0xa88] sm:$0xf]
    %v699 = vld [vmem:[%s1 + $0xa8c] sm:$0xf]
    %v700 = vld [vmem:[%s1 + $0xa90] sm:$0xf]
    %v701 = vld [vmem:[%s1 + $0xa94] sm:$0xf]
    %v702 = vld [vmem:[%s1 + $0xa98] sm:$0xf]
    %v703 = vld [vmem:[%s1 + $0xa9c] sm:$0xf]
    %v704 = vld [vmem:[%s1 + $0xaa0] sm:$0xf]
    %v705 = vld [vmem:[%s1 + $0xaa4] sm:$0xf]
    %v706 = vld [vmem:[%s1 + $0xaa8] sm:$0xf]
    %v707 = vld [vmem:[%s1 + $0xaac] sm:$0xf]
    %v708 = vld [vmem:[%s1 + $0xab0] sm:$0xf]
    %v709 = vld [vmem:[%s1 + $0xab4] sm:$0xf]
    %v710 = vld [vmem:[%s1 + $0xab8] sm:$0xf]
    %v711 = vld [vmem:[%s1 + $0xabc] sm:$0xf]
    %v712 = vld [vmem:[%s1 + $0xac0] sm:$0xf]
    %v713 = vld [vmem:[%s1 + $0xac4] sm:$0xf]
    %v714 = vld [vmem:[%s1 + $0xac8] sm:$0xf]
    %v715 = vld [vmem:[%s1 + $0xacc] sm:$0xf]
    %v716 = vld [vmem:[%s1 + $0xad0] sm:$0xf]
    %v717 = vld [vmem:[%s1 + $0xad4] sm:$0xf]
    %v718 = vld [vmem:[%s1 + $0xad8] sm:$0xf]
    %v719 = vld [vmem:[%s1 + $0xadc] sm:$0xf]
    %v720 = vld [vmem:[%s1 + $0xae0] sm:$0xf]
    %v721 = vld [vmem:[%s1 + $0xae4] sm:$0xf]
    %v722 = vld [vmem:[%s1 + $0xae8] sm:$0xf]
    %v723 = vld [vmem:[%s1 + $0xaec] sm:$0xf]
    %v724 = vld [vmem:[%s1 + $0xaf0] sm:$0xf]
    %v725 = vld [vmem:[%s1 + $0xaf4] sm:$0xf]
    %v726 = vld [vmem:[%s1 + $0xaf8] sm:$0xf]
    %v727 = vld [vmem:[%s1 + $0xafc] sm:$0xf]
    %v728 = vld [vmem:[%s1 + $0xb00] sm:$0xf]
    %v729 = vld [vmem:[%s1 + $0xb04] sm:$0xf]
    %v730 = vld [vmem:[%s1 + $0xb08] sm:$0xf]
    %v731 = vld [vmem:[%s1 + $0xb0c] sm:$0xf]
    %v732 = vld [vmem:[%s1 + $0xb10] sm:$0xf]
    %v733 = vld [vmem:[%s1 + $0xb14] sm:$0xf]
    %v734 = vld [vmem:[%s1 + $0xb18] sm:$0xf]
    %v735 = vld [vmem:[%s1 + $0xb1c] sm:$0xf]
    %v736 = vld [vmem:[%s1 + $0xb20] sm:$0xf]
    %v737 = vld [vmem:[%s1 + $0xb24] sm:$0xf]
    %v738 = vld [vmem:[%s1 + $0xb28] sm:$0xf]
    %v739 = vld [vmem:[%s1 + $0xb2c] sm:$0xf]
    %v740 = vld [vmem:[%s1 + $0xb30] sm:$0xf]
    %v741 = vld [vmem:[%s1 + $0xb34] sm:$0xf]
    %v742 = vld [vmem:[%s1 + $0xb38] sm:$0xf]
    %v743 = vld [vmem:[%s1 + $0xb3c] sm:$0xf]
    %v744 = vld [vmem:[%s1 + $0xb40] sm:$0xf]
    %v745 = vld [vmem:[%s1 + $0xb44] sm:$0xf]
    %v746 = vld [vmem:[%s1 + $0xb48] sm:$0xf]
    %v747 = vld [vmem:[%s1 + $0xb4c] sm:$0xf]
    %v748 = vld [vmem:[%s1 + $0xb50] sm:$0xf]
    %v749 = vld [vmem:[%s1 + $0xb54] sm:$0xf]
    %v750 = vld [vmem:[%s1 + $0xb58] sm:$0xf]
    %v751 = vld [vmem:[%s1 + $0xb5c] sm:$0xf]
    %v752 = vld [vmem:[%s1 + $0xb60] sm:$0xf]
    %v753 = vld [vmem:[%s1 + $0xb64] sm:$0xf]
    %v754 = vld [vmem:[%s1 + $0xb68] sm:$0xf]
    %v755 = vld [vmem:[%s1 + $0xb6c] sm:$0xf]
    %v756 = vld [vmem:[%s1 + $0xb70] sm:$0xf]
    %v757 = vld [vmem:[%s1 + $0xb74] sm:$0xf]
    %v758 = vld [vmem:[%s1 + $0xb78] sm:$0xf]
    %v759 = vld [vmem:[%s1 + $0xb7c] sm:$0xf]
    %v760 = vld [vmem:[%s1 + $0xb80] sm:$0xf]
    %v761 = vld [vmem:[%s1 + $0xb84] sm:$0xf]
    %v762 = vld [vmem:[%s1 + $0xb88] sm:$0xf]
    %v763 = vld [vmem:[%s1 + $0xb8c] sm:$0xf]
    %v764 = vld [vmem:[%s1 + $0xb90] sm:$0xf]
    %v765 = vld [vmem:[%s1 + $0xb94] sm:$0xf]
    %v766 = vld [vmem:[%s1 + $0xb98] sm:$0xf]
    %v767 = vld [vmem:[%s1 + $0xb9c] sm:$0xf]
    %v768 = vld [vmem:[%s1 + $0xba0] sm:$0xf]
    %v769 = vld [vmem:[%s1 + $0xba4] sm:$0xf]
    %v770 = vld [vmem:[%s1 + $0xba8] sm:$0xf]
    %v771 = vld [vmem:[%s1 + $0xbac] sm:$0xf]
    %v772 = vld [vmem:[%s1 + $0xbb0] sm:$0xf]
    %v773 = vld [vmem:[%s1 + $0xbb4] sm:$0xf]
    %v774 = vld [vmem:[%s1 + $0xbb8] sm:$0xf]
    %v775 = vld [vmem:[%s1 + $0xbbc] sm:$0xf]
    %v776 = vld [vmem:[%s1 + $0xbc0] sm:$0xf]
    %v777 = vld [vmem:[%s1 + $0xbc4] sm:$0xf]
    %v778 = vld [vmem:[%s1 + $0xbc8] sm:$0xf]
    %v779 = vld [vmem:[%s1 + $0xbcc] sm:$0xf]
    %v780 = vld [vmem:[%s1 + $0xbd0] sm:$0xf]
    %v781 = vld [vmem:[%s1 + $0xbd4] sm:$0xf]
    %v782 = vld [vmem:[%s1 + $0xbd8] sm:$0xf]
    %v783 = vld [vmem:[%s1 + $0xbdc] sm:$0xf]
    %v784 = vld [vmem:[%s1 + $0xbe0] sm:$0xf]
    %v785 = vld [vmem:[%s1 + $0xbe4] sm:$0xf]
    %v786 = vld [vmem:[%s1 + $0xbe8] sm:$0xf]
    %v787 = vld [vmem:[%s1 + $0xbec] sm:$0xf]
    %v788 = vld [vmem:[%s1 + $0xbf0] sm:$0xf]
    %v789 = vld [vmem:[%s1 + $0xbf4] sm:$0xf]
    %v790 = vld [vmem:[%s1 + $0xbf8] sm:$0xf]
    %v791 = vld [vmem:[%s1 + $0xbfc] sm:$0xf]
    %v792 = vld [vmem:[%s1 + $0xc00] sm:$0xf]
    %v793 = vld [vmem:[%s1 + $0xc04] sm:$0xf]
    %v794 = vld [vmem:[%s1 + $0xc08] sm:$0xf]
    %v795 = vld [vmem:[%s1 + $0xc0c] sm:$0xf]
    %v796 = vld [vmem:[%s1 + $0xc10] sm:$0xf]
    %v797 = vld [vmem:[%s1 + $0xc14] sm:$0xf]
    %v798 = vld [vmem:[%s1 + $0xc18] sm:$0xf]
    %v799 = vld [vmem:[%s1 + $0xc1c] sm:$0xf]
    %v800 = vld [vmem:[%s1 + $0xc20] sm:$0xf]
    %v801 = vld [vmem:[%s1 + $0xc24] sm:$0xf]
    %v802 = vld [vmem:[%s1 + $0xc28] sm:$0xf]
    %v803 = vld [vmem:[%s1 + $0xc2c] sm:$0xf]
    %v804 = vld [vmem:[%s1 + $0xc30] sm:$0xf]
    %v805 = vld [vmem:[%s1 + $0xc34] sm:$0xf]
    %v806 = vld [vmem:[%s1 + $0xc38] sm:$0xf]
    %v807 = vld [vmem:[%s1 + $0xc3c] sm:$0xf]
    %v808 = vld [vmem:[%s1 + $0xc40] sm:$0xf]
    %v809 = vld [vmem:[%s1 + $0xc44] sm:$0xf]
    %v810 = vld [vmem:[%s1 + $0xc48] sm:$0xf]
    %v811 = vld [vmem:[%s1 + $0xc4c] sm:$0xf]
    %v812 = vld [vmem:[%s1 + $0xc50] sm:$0xf]
    %v813 = vld [vmem:[%s1 + $0xc54] sm:$0xf]
    %v814 = vld [vmem:[%s1 + $0xc58] sm:$0xf]
    %v815 = vld [vmem:[%s1 + $0xc5c] sm:$0xf]
    %v816 = vld [vmem:[%s1 + $0xc60] sm:$0xf]
    %v817 = vld [vmem:[%s1 + $0xc64] sm:$0xf]
    %v818 = vld [vmem:[%s1 + $0xc68] sm:$0xf]
    %v819 = vld [vmem:[%s1 + $0xc6c] sm:$0xf]
    %v820 = vld [vmem:[%s1 + $0xc70] sm:$0xf]
    %v821 = vld [vmem:[%s1 + $0xc74] sm:$0xf]
    %v822 = vld [vmem:[%s1 + $0xc78] sm:$0xf]
    %v823 = vld [vmem:[%s1 + $0xc7c] sm:$0xf]
    %v824 = vld [vmem:[%s1 + $0xc80] sm:$0xf]
    %v825 = vld [vmem:[%s1 + $0xc84] sm:$0xf]
    %v826 = vld [vmem:[%s1 + $0xc88] sm:$0xf]
    %v827 = vld [vmem:[%s1 + $0xc8c] sm:$0xf]
    %v828 = vld [vmem:[%s1 + $0xc90] sm:$0xf]
    %v829 = vld [vmem:[%s1 + $0xc94] sm:$0xf]
    %v830 = vld [vmem:[%s1 + $0xc98] sm:$0xf]
    %v831 = vld [vmem:[%s1 + $0xc9c] sm:$0xf]
    %v832 = vld [vmem:[%s1 + $0xca0] sm:$0xf]
    %v833 = vld [vmem:[%s1 + $0xca4] sm:$0xf]
    %v834 = vld [vmem:[%s1 + $0xca8] sm:$0xf]
    %v835 = vld [vmem:[%s1 + $0xcac] sm:$0xf]
    %v836 = vld [vmem:[%s1 + $0xcb0] sm:$0xf]
    %v837 = vld [vmem:[%s1 + $0xcb4] sm:$0xf]
    %v838 = vld [vmem:[%s1 + $0xcb8] sm:$0xf]
    %v839 = vld [vmem:[%s1 + $0xcbc] sm:$0xf]
    %v840 = vld [vmem:[%s1 + $0xcc0] sm:$0xf]
    %v841 = vld [vmem:[%s1 + $0xcc4] sm:$0xf]
    %v842 = vld [vmem:[%s1 + $0xcc8] sm:$0xf]
    %v843 = vld [vmem:[%s1 + $0xccc] sm:$0xf]
    %v844 = vld [vmem:[%s1 + $0xcd0] sm:$0xf]
    %v845 = vld [vmem:[%s1 + $0xcd4] sm:$0xf]
    %v846 = vld [vmem:[%s1 + $0xcd8] sm:$0xf]
    %v847 = vld [vmem:[%s1 + $0xcdc] sm:$0xf]
    %v848 = vld [vmem:[%s1 + $0xce0] sm:$0xf]
    %v849 = vld [vmem:[%s1 + $0xce4] sm:$0xf]
    %v850 = vld [vmem:[%s1 + $0xce8] sm:$0xf]
    %v851 = vld [vmem:[%s1 + $0xcec] sm:$0xf]
    %v852 = vld [vmem:[%s1 + $0xcf0] sm:$0xf]
    %v853 = vld [vmem:[%s1 + $0xcf4] sm:$0xf]
    %v854 = vld [vmem:[%s1 + $0xcf8] sm:$0xf]
    %v855 = vld [vmem:[%s1 + $0xcfc] sm:$0xf]
    %v856 = vld [vmem:[%s1 + $0xd00] sm:$0xf]
    %v857 = vld [vmem:[%s1 + $0xd04] sm:$0xf]
    %v858 = vld [vmem:[%s1 + $0xd08] sm:$0xf]
    %v859 = vld [vmem:[%s1 + $0xd0c] sm:$0xf]
    %v860 = vld [vmem:[%s1 + $0xd10] sm:$0xf]
    %v861 = vld [vmem:[%s1 + $0xd14] sm:$0xf]
    %v862 = vld [vmem:[%s1 + $0xd18] sm:$0xf]
    %v863 = vld [vmem:[%s1 + $0xd1c] sm:$0xf]
    %v864 = vld [vmem:[%s1 + $0xd20] sm:$0xf]
    %v865 = vld [vmem:[%s1 + $0xd24] sm:$0xf]
    %v866 = vld [vmem:[%s1 + $0xd28] sm:$0xf]
    %v867 = vld [vmem:[%s1 + $0xd2c] sm:$0xf]
    %v868 = vld [vmem:[%s1 + $0xd30] sm:$0xf]
    %v869 = vld [vmem:[%s1 + $0xd34] sm:$0xf]
    %v870 = vld [vmem:[%s1 + $0xd38] sm:$0xf]
    %v871 = vld [vmem:[%s1 + $0xd3c] sm:$0xf]
    %v872 = vld [vmem:[%s1 + $0xd40] sm:$0xf]
    %v873 = vld [vmem:[%s1 + $0xd44] sm:$0xf]
    %v874 = vld [vmem:[%s1 + $0xd48] sm:$0xf]
    %v875 = vld [vmem:[%s1 + $0xd4c] sm:$0xf]
    %v876 = vld [vmem:[%s1 + $0xd50] sm:$0xf]
    %v877 = vld [vmem:[%s1 + $0xd54] sm:$0xf]
    %v878 = vld [vmem:[%s1 + $0xd58] sm:$0xf]
    %v879 = vld [vmem:[%s1 + $0xd5c] sm:$0xf]
    %v880 = vld [vmem:[%s1 + $0xd60] sm:$0xf]
    %v881 = vld [vmem:[%s1 + $0xd64] sm:$0xf]
    %v882 = vld [vmem:[%s1 + $0xd68] sm:$0xf]
    %v883 = vld [vmem:[%s1 + $0xd6c] sm:$0xf]
    %v884 = vld [vmem:[%s1 + $0xd70] sm:$0xf]
    %v885 = vld [vmem:[%s1 + $0xd74] sm:$0xf]
    %v886 = vld [vmem:[%s1 + $0xd78] sm:$0xf]
    %v887 = vld [vmem:[%s1 + $0xd7c] sm:$0xf]
    %v888 = vld [vmem:[%s1 + $0xd80] sm:$0xf]
    %v889 = vld [vmem:[%s1 + $0xd84] sm:$0xf]
    %v890 = vld [vmem:[%s1 + $0xd88] sm:$0xf]
    %v891 = vld [vmem:[%s1 + $0xd8c] sm:$0xf]
    %v892 = vld [vmem:[%s1 + $0xd90] sm:$0xf]
    %v893 = vld [vmem:[%s1 + $0xd94] sm:$0xf]
    %v894 = vld [vmem:[%s1 + $0xd98] sm:$0xf]
    %v895 = vld [vmem:[%s1 + $0xd9c] sm:$0xf]
    %v896 = vld [vmem:[%s1 + $0xda0] sm:$0xf]
    %v897 = vld [vmem:[%s1 + $0xda4] sm:$0xf]
    %v898 = vld [vmem:[%s1 + $0xda8] sm:$0xf]
    %v899 = vld [vmem:[%s1 + $0xdac] sm:$0xf]
    %v900 = vld [vmem:[%s1 + $0xdb0] sm:$0xf]
    %v901 = vld [vmem:[%s1 + $0xdb4] sm:$0xf]
    %v902 = vld [vmem:[%s1 + $0xdb8] sm:$0xf]
    %v903 = vld [vmem:[%s1 + $0xdbc] sm:$0xf]
    %v904 = vld [vmem:[%s1 + $0xdc0] sm:$0xf]
    %v905 = vld [vmem:[%s1 + $0xdc4] sm:$0xf]
    %v906 = vld [vmem:[%s1 + $0xdc8] sm:$0xf]
    %v907 = vld [vmem:[%s1 + $0xdcc] sm:$0xf]
    %v908 = vld [vmem:[%s1 + $0xdd0] sm:$0xf]
    %v909 = vld [vmem:[%s1 + $0xdd4] sm:$0xf]
    %v910 = vld [vmem:[%s1 + $0xdd8] sm:$0xf]
    %v911 = vld [vmem:[%s1 + $0xddc] sm:$0xf]
    %v912 = vld [vmem:[%s1 + $0xde0] sm:$0xf]
    %v913 = vld [vmem:[%s1 + $0xde4] sm:$0xf]
    %v914 = vld [vmem:[%s1 + $0xde8] sm:$0xf]
    %v915 = vld [vmem:[%s1 + $0xdec] sm:$0xf]
    %v916 = vld [vmem:[%s1 + $0xdf0] sm:$0xf]
    %v917 = vld [vmem:[%s1 + $0xdf4] sm:$0xf]
    %v918 = vld [vmem:[%s1 + $0xdf8] sm:$0xf]
    %v919 = vld [vmem:[%s1 + $0xdfc] sm:$0xf]
    %v920 = vld [vmem:[%s1 + $0xe00] sm:$0xf]
    %v921 = vld [vmem:[%s1 + $0xe04] sm:$0xf]
    %v922 = vld [vmem:[%s1 + $0xe08] sm:$0xf]
    %v923 = vld [vmem:[%s1 + $0xe0c] sm:$0xf]
    %v924 = vld [vmem:[%s1 + $0xe10] sm:$0xf]
    %v925 = vld [vmem:[%s1 + $0xe14] sm:$0xf]
    %v926 = vld [vmem:[%s1 + $0xe18] sm:$0xf]
    %v927 = vld [vmem:[%s1 + $0xe1c] sm:$0xf]
    %v928 = vld [vmem:[%s1 + $0xe20] sm:$0xf]
    %v929 = vld [vmem:[%s1 + $0xe24] sm:$0xf]
    %v930 = vld [vmem:[%s1 + $0xe28] sm:$0xf]
    %v931 = vld [vmem:[%s1 + $0xe2c] sm:$0xf]
    %v932 = vld [vmem:[%s1 + $0xe30] sm:$0xf]
    %v933 = vld [vmem:[%s1 + $0xe34] sm:$0xf]
    %v934 = vld [vmem:[%s1 + $0xe38] sm:$0xf]
    %v935 = vld [vmem:[%s1 + $0xe3c] sm:$0xf]
    %v936 = vld [vmem:[%s1 + $0xe40] sm:$0xf]
    %v937 = vld [vmem:[%s1 + $0xe44] sm:$0xf]
    %v938 = vld [vmem:[%s1 + $0xe48] sm:$0xf]
    %v939 = vld [vmem:[%s1 + $0xe4c] sm:$0xf]
    %v940 = vld [vmem:[%s1 + $0xe50] sm:$0xf]
    %v941 = vld [vmem:[%s1 + $0xe54] sm:$0xf]
    %v942 = vld [vmem:[%s1 + $0xe58] sm:$0xf]
    %v943 = vld [vmem:[%s1 + $0xe5c] sm:$0xf]
    %v944 = vld [vmem:[%s1 + $0xe60] sm:$0xf]
    %v945 = vld [vmem:[%s1 + $0xe64] sm:$0xf]
    %v946 = vld [vmem:[%s1 + $0xe68] sm:$0xf]
    %v947 = vld [vmem:[%s1 + $0xe6c] sm:$0xf]
    %v948 = vld [vmem:[%s1 + $0xe70] sm:$0xf]
    %v949 = vld [vmem:[%s1 + $0xe74] sm:$0xf]
    %v950 = vld [vmem:[%s1 + $0xe78] sm:$0xf]
    %v951 = vld [vmem:[%s1 + $0xe7c] sm:$0xf]
    %v952 = vld [vmem:[%s1 + $0xe80] sm:$0xf]
    %v953 = vld [vmem:[%s1 + $0xe84] sm:$0xf]
    %v954 = vld [vmem:[%s1 + $0xe88] sm:$0xf]
    %v955 = vld [vmem:[%s1 + $0xe8c] sm:$0xf]
    %v956 = vld [vmem:[%s1 + $0xe90] sm:$0xf]
    %v957 = vld [vmem:[%s1 + $0xe94] sm:$0xf]
    %v958 = vld [vmem:[%s1 + $0xe98] sm:$0xf]
    %v959 = vld [vmem:[%s1 + $0xe9c] sm:$0xf]
    %v960 = vld [vmem:[%s1 + $0xea0] sm:$0xf]
    %v961 = vld [vmem:[%s1 + $0xea4] sm:$0xf]
    %v962 = vld [vmem:[%s1 + $0xea8] sm:$0xf]
    %v963 = vld [vmem:[%s1 + $0xeac] sm:$0xf]
    %v964 = vld [vmem:[%s1 + $0xeb0] sm:$0xf]
    %v965 = vld [vmem:[%s1 + $0xeb4] sm:$0xf]
    %v966 = vld [vmem:[%s1 + $0xeb8] sm:$0xf]
    %v967 = vld [vmem:[%s1 + $0xebc] sm:$0xf]
    %v968 = vld [vmem:[%s1 + $0xec0] sm:$0xf]
    %v969 = vld [vmem:[%s1 + $0xec4] sm:$0xf]
    %v970 = vld [vmem:[%s1 + $0xec8] sm:$0xf]
    %v971 = vld [vmem:[%s1 + $0xecc] sm:$0xf]
    %v972 = vld [vmem:[%s1 + $0xed0] sm:$0xf]
    %v973 = vld [vmem:[%s1 + $0xed4] sm:$0xf]
    %v974 = vld [vmem:[%s1 + $0xed8] sm:$0xf]
    %v975 = vld [vmem:[%s1 + $0xedc] sm:$0xf]
    %v976 = vld [vmem:[%s1 + $0xee0] sm:$0xf]
    %v977 = vld [vmem:[%s1 + $0xee4] sm:$0xf]
    %v978 = vld [vmem:[%s1 + $0xee8] sm:$0xf]
    %v979 = vld [vmem:[%s1 + $0xeec] sm:$0xf]
    %v980 = vld [vmem:[%s1 + $0xef0] sm:$0xf]
    %v981 = vld [vmem:[%s1 + $0xef4] sm:$0xf]
    %v982 = vld [vmem:[%s1 + $0xef8] sm:$0xf]
    %v983 = vld [vmem:[%s1 + $0xefc] sm:$0xf]
    %v984 = vld [vmem:[%s1 + $0xf00] sm:$0xf]
    %v985 = vld [vmem:[%s1 + $0xf04] sm:$0xf]
    %v986 = vld [vmem:[%s1 + $0xf08] sm:$0xf]
    %v987 = vld [vmem:[%s1 + $0xf0c] sm:$0xf]
    %v988 = vld [vmem:[%s1 + $0xf10] sm:$0xf]
    %v989 = vld [vmem:[%s1 + $0xf14] sm:$0xf]
    %v990 = vld [vmem:[%s1 + $0xf18] sm:$0xf]
    %v991 = vld [vmem:[%s1 + $0xf1c] sm:$0xf]
    %v992 = vld [vmem:[%s1 + $0xf20] sm:$0xf]
    %v993 = vld [vmem:[%s1 + $0xf24] sm:$0xf]
    %v994 = vld [vmem:[%s1 + $0xf28] sm:$0xf]
    %v995 = vld [vmem:[%s1 + $0xf2c] sm:$0xf]
    %v996 = vld [vmem:[%s1 + $0xf30] sm:$0xf]
    %v997 = vld [vmem:[%s1 + $0xf34] sm:$0xf]
    %v998 = vld [vmem:[%s1 + $0xf38] sm:$0xf]
    %v999 = vld [vmem:[%s1 + $0xf3c] sm:$0xf]
    %v1000 = vld [vmem:[%s1 + $0xf40] sm:$0xf]
    %v1001 = vld [vmem:[%s1 + $0xf44] sm:$0xf]
    %v1002 = vld [vmem:[%s1 + $0xf48] sm:$0xf]
    %v1003 = vld [vmem:[%s1 + $0xf4c] sm:$0xf]
    %v1004 = vld [vmem:[%s1 + $0xf50] sm:$0xf]
    %v1005 = vld [vmem:[%s1 + $0xf54] sm:$0xf]
    %v1006 = vld [vmem:[%s1 + $0xf58] sm:$0xf]
    %v1007 = vld [vmem:[%s1 + $0xf5c] sm:$0xf]
    %v1008 = vld [vmem:[%s1 + $0xf60] sm:$0xf]
    %v1009 = vld [vmem:[%s1 + $0xf64] sm:$0xf]
    %v1010 = vld [vmem:[%s1 + $0xf68] sm:$0xf]
    %v1011 = vld [vmem:[%s1 + $0xf6c] sm:$0xf]
    %v1012 = vld [vmem:[%s1 + $0xf70] sm:$0xf]
    %v1013 = vld [vmem:[%s1 + $0xf74] sm:$0xf]
    %v1014 = vld [vmem:[%s1 + $0xf78] sm:$0xf]
    %v1015 = vld [vmem:[%s1 + $0xf7c] sm:$0xf]
    %v1016 = vld [vmem:[%s1 + $0xf80] sm:$0xf]
    %v1017 = vld [vmem:[%s1 + $0xf84] sm:$0xf]
    %v1018 = vld [vmem:[%s1 + $0xf88] sm:$0xf]
    %v1019 = vld [vmem:[%s1 + $0xf8c] sm:$0xf]
    %v1020 = vld [vmem:[%s1 + $0xf90] sm:$0xf]
    %v1021 = vld [vmem:[%s1 + $0xf94] sm:$0xf]
    %v1022 = vld [vmem:[%s1 + $0xf98] sm:$0xf]
    %v1023 = vld [vmem:[%s1 + $0xf9c] sm:$0xf]
    %v1024 = vld [vmem:[%s1 + $0xfa0] sm:$0xf]
    %v1025 = vld [vmem:[%s1 + $0xfa4] sm:$0xf]
    %v1026 = vld [vmem:[%s1 + $0xfa8] sm:$0xf]
    %v1027 = vld [vmem:[%s1 + $0xfac] sm:$0xf]
    %v1028 = vld [vmem:[%s1 + $0xfb0] sm:$0xf]
    %v1029 = vld [vmem:[%s1 + $0xfb4] sm:$0xf]
    %v1030 = vld [vmem:[%s1 + $0xfb8] sm:$0xf]
    %v1031 = vld [vmem:[%s1 + $0xfbc] sm:$0xf]
    %v1032 = vld [vmem:[%s1 + $0xfc0] sm:$0xf]
    %v1033 = vld [vmem:[%s1 + $0xfc4] sm:$0xf]
    %v1034 = vld [vmem:[%s1 + $0xfc8] sm:$0xf]
    %v1035 = vld [vmem:[%s1 + $0xfcc] sm:$0xf]
    %v1036 = vld [vmem:[%s1 + $0xfd0] sm:$0xf]
    %v1037 = vld [vmem:[%s1 + $0xfd4] sm:$0xf]
    %v1038 = vld [vmem:[%s1 + $0xfd8] sm:$0xf]
    %v1039 = vld [vmem:[%s1 + $0xfdc] sm:$0xf]
    %v1040 = vld [vmem:[%s1 + $0xfe0] sm:$0xf]
    %v1041 = vld [vmem:[%s1 + $0xfe4] sm:$0xf]
    %v1042 = vld [vmem:[%s1 + $0xfe8] sm:$0xf]
    %v1043 = vld [vmem:[%s1 + $0xfec] sm:$0xf]
    %v1044 = vld [vmem:[%s1 + $0xff0] sm:$0xf]
    %v1045 = vld [vmem:[%s1 + $0xff4] sm:$0xf]
    %v1046 = vld [vmem:[%s1 + $0xff8] sm:$0xf]
    %v1047 = vld [vmem:[%s1 + $0xffc] sm:$0xf]
    %v1048 = vld [vmem:[%s2] sm:$0x1]
    %v1050 = vlaneseq
    %v1051 = vshrl.u32 %v1050, 7
    %v1052 = vsub.s32 0, %v1051
    %v1053 = vrot.slane %v1048, %v1052
    %v1063 = vcombine.high %v16, %v16
    %v1065 = vunpack.c.l.s4 1966171168
    %v1066 = vunpack.c.0.s8 %v1065
    %v1067 = vlaneseq
    %v1068 = vshrl.u32 %v1067, 7
    %v1069 = vsub.s32 %v1066, %v1068
    %v1070 = vrot.slane %v16, %v1069
    %v1072 = vunpack.c.l.s4 1966171168
    %v1073 = vunpack.c.0.s8 %v1072
    %v1074 = vlaneseq
    %v1075 = vshrl.u32 %v1074, 7
    %v1076 = vsub.s32 %v1073, %v1075
    %v1077 = vrot.slane %v1063, %v1076
    %v1078 = vcombine.high %v1070, %v1070
    %v1079 = vcombine.high %v1077, %v1077
    %v1081 = vunpack.c.l.s4 1966171168
    %v1082 = vunpack.c.0.s8 %v1081
    %v1083 = vlaneseq
    %v1084 = vshrl.u32 %v1083, 7
    %v1085 = vsub.s32 %v1082, %v1084
    %v1086 = vrot.slane %v1070, %v1085
    %v1088 = vunpack.c.l.s4 1966171168
    %v1089 = vunpack.c.0.s8 %v1088
    %v1090 = vlaneseq
    %v1091 = vshrl.u32 %v1090, 7
    %v1092 = vsub.s32 %v1089, %v1091
    %v1093 = vrot.slane %v1077, %v1092
    %v1095 = vunpack.c.l.s4 1966171168
    %v1096 = vunpack.c.0.s8 %v1095
    %v1097 = vlaneseq
    %v1098 = vshrl.u32 %v1097, 7
    %v1099 = vsub.s32 %v1096, %v1098
    %v1100 = vrot.slane %v1078, %v1099
    %v1102 = vunpack.c.l.s4 1966171168
    %v1103 = vunpack.c.0.s8 %v1102
    %v1104 = vlaneseq
    %v1105 = vshrl.u32 %v1104, 7
    %v1106 = vsub.s32 %v1103, %v1105
    %v1107 = vrot.slane %v1079, %v1106
    %v1108 = vcombine.high %v1086, %v1086
    %v1109 = vcombine.high %v1093, %v1093
    %v1110 = vcombine.high %v1100, %v1100
    %v1111 = vcombine.high %v1107, %v1107
    %v1112 = vcombine.high %v17, %v17
    %v1114 = vunpack.c.l.s4 1966171168
    %v1115 = vunpack.c.0.s8 %v1114
    %v1116 = vlaneseq
    %v1117 = vshrl.u32 %v1116, 7
    %v1118 = vsub.s32 %v1115, %v1117
    %v1119 = vrot.slane %v17, %v1118
    %v1121 = vunpack.c.l.s4 1966171168
    %v1122 = vunpack.c.0.s8 %v1121
    %v1123 = vlaneseq
    %v1124 = vshrl.u32 %v1123, 7
    %v1125 = vsub.s32 %v1122, %v1124
    %v1126 = vrot.slane %v1112, %v1125
    %v1127 = vcombine.high %v1119, %v1119
    %v1128 = vcombine.high %v1126, %v1126
    %v1130 = vunpack.c.l.s4 1966171168
    %v1131 = vunpack.c.0.s8 %v1130
    %v1132 = vlaneseq
    %v1133 = vshrl.u32 %v1132, 7
    %v1134 = vsub.s32 %v1131, %v1133
    %v1135 = vrot.slane %v1119, %v1134
    %v1137 = vunpack.c.l.s4 1966171168
    %v1138 = vunpack.c.0.s8 %v1137
    %v1139 = vlaneseq
    %v1140 = vshrl.u32 %v1139, 7
    %v1141 = vsub.s32 %v1138, %v1140
    %v1142 = vrot.slane %v1126, %v1141
    %v1144 = vunpack.c.l.s4 1966171168
    %v1145 = vunpack.c.0.s8 %v1144
    %v1146 = vlaneseq
    %v1147 = vshrl.u32 %v1146, 7
    %v1148 = vsub.s32 %v1145, %v1147
    %v1149 = vrot.slane %v1127, %v1148
    %v1151 = vunpack.c.l.s4 1966171168
    %v1152 = vunpack.c.0.s8 %v1151
    %v1153 = vlaneseq
    %v1154 = vshrl.u32 %v1153, 7
    %v1155 = vsub.s32 %v1152, %v1154
    %v1156 = vrot.slane %v1128, %v1155
    %v1157 = vcombine.high %v1135, %v1135
    %v1158 = vcombine.high %v1142, %v1142
    %v1159 = vcombine.high %v1149, %v1149
    %v1160 = vcombine.high %v1156, %v1156
    %v1161 = vcombine.high %v18, %v18
    %v1163 = vunpack.c.l.s4 1966171168
    %v1164 = vunpack.c.0.s8 %v1163
    %v1165 = vlaneseq
    %v1166 = vshrl.u32 %v1165, 7
    %v1167 = vsub.s32 %v1164, %v1166
    %v1168 = vrot.slane %v18, %v1167
    %v1170 = vunpack.c.l.s4 1966171168
    %v1171 = vunpack.c.0.s8 %v1170
    %v1172 = vlaneseq
    %v1173 = vshrl.u32 %v1172, 7
    %v1174 = vsub.s32 %v1171, %v1173
    %v1175 = vrot.slane %v1161, %v1174
    %v1176 = vcombine.high %v1168, %v1168
    %v1177 = vcombine.high %v1175, %v1175
    %v1179 = vunpack.c.l.s4 1966171168
    %v1180 = vunpack.c.0.s8 %v1179
    %v1181 = vlaneseq
    %v1182 = vshrl.u32 %v1181, 7
    %v1183 = vsub.s32 %v1180, %v1182
    %v1184 = vrot.slane %v1168, %v1183
    %v1186 = vunpack.c.l.s4 1966171168
    %v1187 = vunpack.c.0.s8 %v1186
    %v1188 = vlaneseq
    %v1189 = vshrl.u32 %v1188, 7
    %v1190 = vsub.s32 %v1187, %v1189
    %v1191 = vrot.slane %v1175, %v1190
    %v1193 = vunpack.c.l.s4 1966171168
    %v1194 = vunpack.c.0.s8 %v1193
    %v1195 = vlaneseq
    %v1196 = vshrl.u32 %v1195, 7
    %v1197 = vsub.s32 %v1194, %v1196
    %v1198 = vrot.slane %v1176, %v1197
    %v1200 = vunpack.c.l.s4 1966171168
    %v1201 = vunpack.c.0.s8 %v1200
    %v1202 = vlaneseq
    %v1203 = vshrl.u32 %v1202, 7
    %v1204 = vsub.s32 %v1201, %v1203
    %v1205 = vrot.slane %v1177, %v1204
    %v1206 = vcombine.high %v1184, %v1184
    %v1207 = vcombine.high %v1191, %v1191
    %v1208 = vcombine.high %v1198, %v1198
    %v1209 = vcombine.high %v1205, %v1205
    %v1210 = vcombine.high %v19, %v19
    %v1212 = vunpack.c.l.s4 1966171168
    %v1213 = vunpack.c.0.s8 %v1212
    %v1214 = vlaneseq
    %v1215 = vshrl.u32 %v1214, 7
    %v1216 = vsub.s32 %v1213, %v1215
    %v1217 = vrot.slane %v19, %v1216
    %v1219 = vunpack.c.l.s4 1966171168
    %v1220 = vunpack.c.0.s8 %v1219
    %v1221 = vlaneseq
    %v1222 = vshrl.u32 %v1221, 7
    %v1223 = vsub.s32 %v1220, %v1222
    %v1224 = vrot.slane %v1210, %v1223
    %v1225 = vcombine.high %v1217, %v1217
    %v1226 = vcombine.high %v1224, %v1224
    %v1228 = vunpack.c.l.s4 1966171168
    %v1229 = vunpack.c.0.s8 %v1228
    %v1230 = vlaneseq
    %v1231 = vshrl.u32 %v1230, 7
    %v1232 = vsub.s32 %v1229, %v1231
    %v1233 = vrot.slane %v1217, %v1232
    %v1235 = vunpack.c.l.s4 1966171168
    %v1236 = vunpack.c.0.s8 %v1235
    %v1237 = vlaneseq
    %v1238 = vshrl.u32 %v1237, 7
    %v1239 = vsub.s32 %v1236, %v1238
    %v1240 = vrot.slane %v1224, %v1239
    %v1242 = vunpack.c.l.s4 1966171168
    %v1243 = vunpack.c.0.s8 %v1242
    %v1244 = vlaneseq
    %v1245 = vshrl.u32 %v1244, 7
    %v1246 = vsub.s32 %v1243, %v1245
    %v1247 = vrot.slane %v1225, %v1246
    %v1249 = vunpack.c.l.s4 1966171168
    %v1250 = vunpack.c.0.s8 %v1249
    %v1251 = vlaneseq
    %v1252 = vshrl.u32 %v1251, 7
    %v1253 = vsub.s32 %v1250, %v1252
    %v1254 = vrot.slane %v1226, %v1253
    %v1255 = vcombine.high %v1233, %v1233
    %v1256 = vcombine.high %v1240, %v1240
    %v1257 = vcombine.high %v1247, %v1247
    %v1258 = vcombine.high %v1254, %v1254
    %v1259 = vcombine.high %v20, %v20
    %v1261 = vunpack.c.l.s4 1966171168
    %v1262 = vunpack.c.0.s8 %v1261
    %v1263 = vlaneseq
    %v1264 = vshrl.u32 %v1263, 7
    %v1265 = vsub.s32 %v1262, %v1264
    %v1266 = vrot.slane %v20, %v1265
    %v1268 = vunpack.c.l.s4 1966171168
    %v1269 = vunpack.c.0.s8 %v1268
    %v1270 = vlaneseq
    %v1271 = vshrl.u32 %v1270, 7
    %v1272 = vsub.s32 %v1269, %v1271
    %v1273 = vrot.slane %v1259, %v1272
    %v1274 = vcombine.high %v1266, %v1266
    %v1275 = vcombine.high %v1273, %v1273
    %v1277 = vunpack.c.l.s4 1966171168
    %v1278 = vunpack.c.0.s8 %v1277
    %v1279 = vlaneseq
    %v1280 = vshrl.u32 %v1279, 7
    %v1281 = vsub.s32 %v1278, %v1280
    %v1282 = vrot.slane %v1266, %v1281
    %v1284 = vunpack.c.l.s4 1966171168
    %v1285 = vunpack.c.0.s8 %v1284
    %v1286 = vlaneseq
    %v1287 = vshrl.u32 %v1286, 7
    %v1288 = vsub.s32 %v1285, %v1287
    %v1289 = vrot.slane %v1273, %v1288
    %v1291 = vunpack.c.l.s4 1966171168
    %v1292 = vunpack.c.0.s8 %v1291
    %v1293 = vlaneseq
    %v1294 = vshrl.u32 %v1293, 7
    %v1295 = vsub.s32 %v1292, %v1294
    %v1296 = vrot.slane %v1274, %v1295
    %v1298 = vunpack.c.l.s4 1966171168
    %v1299 = vunpack.c.0.s8 %v1298
    %v1300 = vlaneseq
    %v1301 = vshrl.u32 %v1300, 7
    %v1302 = vsub.s32 %v1299, %v1301
    %v1303 = vrot.slane %v1275, %v1302
    %v1304 = vcombine.high %v1282, %v1282
    %v1305 = vcombine.high %v1289, %v1289
    %v1306 = vcombine.high %v1296, %v1296
    %v1307 = vcombine.high %v1303, %v1303
    %v1308 = vcombine.high %v21, %v21
    %v1310 = vunpack.c.l.s4 1966171168
    %v1311 = vunpack.c.0.s8 %v1310
    %v1312 = vlaneseq
    %v1313 = vshrl.u32 %v1312, 7
    %v1314 = vsub.s32 %v1311, %v1313
    %v1315 = vrot.slane %v21, %v1314
    %v1317 = vunpack.c.l.s4 1966171168
    %v1318 = vunpack.c.0.s8 %v1317
    %v1319 = vlaneseq
    %v1320 = vshrl.u32 %v1319, 7
    %v1321 = vsub.s32 %v1318, %v1320
    %v1322 = vrot.slane %v1308, %v1321
    %v1323 = vcombine.high %v1315, %v1315
    %v1324 = vcombine.high %v1322, %v1322
    %v1326 = vunpack.c.l.s4 1966171168
    %v1327 = vunpack.c.0.s8 %v1326
    %v1328 = vlaneseq
    %v1329 = vshrl.u32 %v1328, 7
    %v1330 = vsub.s32 %v1327, %v1329
    %v1331 = vrot.slane %v1315, %v1330
    %v1333 = vunpack.c.l.s4 1966171168
    %v1334 = vunpack.c.0.s8 %v1333
    %v1335 = vlaneseq
    %v1336 = vshrl.u32 %v1335, 7
    %v1337 = vsub.s32 %v1334, %v1336
    %v1338 = vrot.slane %v1322, %v1337
    %v1340 = vunpack.c.l.s4 1966171168
    %v1341 = vunpack.c.0.s8 %v1340
    %v1342 = vlaneseq
    %v1343 = vshrl.u32 %v1342, 7
    %v1344 = vsub.s32 %v1341, %v1343
    %v1345 = vrot.slane %v1323, %v1344
    %v1347 = vunpack.c.l.s4 1966171168
    %v1348 = vunpack.c.0.s8 %v1347
    %v1349 = vlaneseq
    %v1350 = vshrl.u32 %v1349, 7
    %v1351 = vsub.s32 %v1348, %v1350
    %v1352 = vrot.slane %v1324, %v1351
    %v1353 = vcombine.high %v1331, %v1331
    %v1354 = vcombine.high %v1338, %v1338
    %v1355 = vcombine.high %v1345, %v1345
    %v1356 = vcombine.high %v1352, %v1352
    %v1357 = vcombine.high %v22, %v22
    %v1359 = vunpack.c.l.s4 1966171168
    %v1360 = vunpack.c.0.s8 %v1359
    %v1361 = vlaneseq
    %v1362 = vshrl.u32 %v1361, 7
    %v1363 = vsub.s32 %v1360, %v1362
    %v1364 = vrot.slane %v22, %v1363
    %v1366 = vunpack.c.l.s4 1966171168
    %v1367 = vunpack.c.0.s8 %v1366
    %v1368 = vlaneseq
    %v1369 = vshrl.u32 %v1368, 7
    %v1370 = vsub.s32 %v1367, %v1369
    %v1371 = vrot.slane %v1357, %v1370
    %v1372 = vcombine.high %v1364, %v1364
    %v1373 = vcombine.high %v1371, %v1371
    %v1375 = vunpack.c.l.s4 1966171168
    %v1376 = vunpack.c.0.s8 %v1375
    %v1377 = vlaneseq
    %v1378 = vshrl.u32 %v1377, 7
    %v1379 = vsub.s32 %v1376, %v1378
    %v1380 = vrot.slane %v1364, %v1379
    %v1382 = vunpack.c.l.s4 1966171168
    %v1383 = vunpack.c.0.s8 %v1382
    %v1384 = vlaneseq
    %v1385 = vshrl.u32 %v1384, 7
    %v1386 = vsub.s32 %v1383, %v1385
    %v1387 = vrot.slane %v1371, %v1386
    %v1389 = vunpack.c.l.s4 1966171168
    %v1390 = vunpack.c.0.s8 %v1389
    %v1391 = vlaneseq
    %v1392 = vshrl.u32 %v1391, 7
    %v1393 = vsub.s32 %v1390, %v1392
    %v1394 = vrot.slane %v1372, %v1393
    %v1396 = vunpack.c.l.s4 1966171168
    %v1397 = vunpack.c.0.s8 %v1396
    %v1398 = vlaneseq
    %v1399 = vshrl.u32 %v1398, 7
    %v1400 = vsub.s32 %v1397, %v1399
    %v1401 = vrot.slane %v1373, %v1400
    %v1402 = vcombine.high %v1380, %v1380
    %v1403 = vcombine.high %v1387, %v1387
    %v1404 = vcombine.high %v1394, %v1394
    %v1405 = vcombine.high %v1401, %v1401
    %v1406 = vcombine.high %v23, %v23
    %v1408 = vunpack.c.l.s4 1966171168
    %v1409 = vunpack.c.0.s8 %v1408
    %v1410 = vlaneseq
    %v1411 = vshrl.u32 %v1410, 7
    %v1412 = vsub.s32 %v1409, %v1411
    %v1413 = vrot.slane %v23, %v1412
    %v1415 = vunpack.c.l.s4 1966171168
    %v1416 = vunpack.c.0.s8 %v1415
    %v1417 = vlaneseq
    %v1418 = vshrl.u32 %v1417, 7
    %v1419 = vsub.s32 %v1416, %v1418
    %v1420 = vrot.slane %v1406, %v1419
    %v1421 = vcombine.high %v1413, %v1413
    %v1422 = vcombine.high %v1420, %v1420
    %v1424 = vunpack.c.l.s4 1966171168
    %v1425 = vunpack.c.0.s8 %v1424
    %v1426 = vlaneseq
    %v1427 = vshrl.u32 %v1426, 7
    %v1428 = vsub.s32 %v1425, %v1427
    %v1429 = vrot.slane %v1413, %v1428
    %v1431 = vunpack.c.l.s4 1966171168
    %v1432 = vunpack.c.0.s8 %v1431
    %v1433 = vlaneseq
    %v1434 = vshrl.u32 %v1433, 7
    %v1435 = vsub.s32 %v1432, %v1434
    %v1436 = vrot.slane %v1420, %v1435
    %v1438 = vunpack.c.l.s4 1966171168
    %v1439 = vunpack.c.0.s8 %v1438
    %v1440 = vlaneseq
    %v1441 = vshrl.u32 %v1440, 7
    %v1442 = vsub.s32 %v1439, %v1441
    %v1443 = vrot.slane %v1421, %v1442
    %v1445 = vunpack.c.l.s4 1966171168
    %v1446 = vunpack.c.0.s8 %v1445
    %v1447 = vlaneseq
    %v1448 = vshrl.u32 %v1447, 7
    %v1449 = vsub.s32 %v1446, %v1448
    %v1450 = vrot.slane %v1422, %v1449
    %v1451 = vcombine.high %v1429, %v1429
    %v1452 = vcombine.high %v1436, %v1436
    %v1453 = vcombine.high %v1443, %v1443
    %v1454 = vcombine.high %v1450, %v1450
    %v2543 = vunpack.c.l.b16 %v24
    %v2544 = vunpack.c.l.b16 %v25
    %v2545 = vunpack.c.l.b16 %v26
    %v2546 = vunpack.c.l.b16 %v27
    %v2547 = vunpack.c.l.b16 %v28
    %v2548 = vunpack.c.l.b16 %v29
    %v2549 = vunpack.c.l.b16 %v30
    %v2550 = vunpack.c.l.b16 %v31
    %v2551 = vunpack.c.l.b16 %v32
    %v2552 = vunpack.c.l.b16 %v33
    %v2553 = vunpack.c.l.b16 %v34
    %v2554 = vunpack.c.l.b16 %v35
    %v2555 = vunpack.c.l.b16 %v36
    %v2556 = vunpack.c.l.b16 %v37
    %v2557 = vunpack.c.l.b16 %v38
    %v2558 = vunpack.c.l.b16 %v39
    %v2559 = vunpack.c.l.b16 %v40
    %v2560 = vunpack.c.l.b16 %v41
    %v2561 = vunpack.c.l.b16 %v42
    %v2562 = vunpack.c.l.b16 %v43
    %v2563 = vunpack.c.l.b16 %v44
    %v2564 = vunpack.c.l.b16 %v45
    %v2565 = vunpack.c.l.b16 %v46
    %v2566 = vunpack.c.l.b16 %v47
    %v2567 = vunpack.c.l.b16 %v48
    %v2568 = vunpack.c.l.b16 %v49
    %v2569 = vunpack.c.l.b16 %v50
    %v2570 = vunpack.c.l.b16 %v51
    %v2571 = vunpack.c.l.b16 %v52
    %v2572 = vunpack.c.l.b16 %v53
    %v2573 = vunpack.c.l.b16 %v54
    %v2574 = vunpack.c.l.b16 %v55
    %v2575 = vunpack.c.l.b16 %v56
    %v2576 = vunpack.c.l.b16 %v57
    %v2577 = vunpack.c.l.b16 %v58
    %v2578 = vunpack.c.l.b16 %v59
    %v2579 = vunpack.c.l.b16 %v60
    %v2580 = vunpack.c.l.b16 %v61
    %v2581 = vunpack.c.l.b16 %v62
    %v2582 = vunpack.c.l.b16 %v63
    %v2583 = vunpack.c.l.b16 %v64
    %v2584 = vunpack.c.l.b16 %v65
    %v2585 = vunpack.c.l.b16 %v66
    %v2586 = vunpack.c.l.b16 %v67
    %v2587 = vunpack.c.l.b16 %v68
    %v2588 = vunpack.c.l.b16 %v69
    %v2589 = vunpack.c.l.b16 %v70
    %v2590 = vunpack.c.l.b16 %v71
    %v2591 = vunpack.c.l.b16 %v72
    %v2592 = vunpack.c.l.b16 %v73
    %v2593 = vunpack.c.l.b16 %v74
    %v2594 = vunpack.c.l.b16 %v75
    %v2595 = vunpack.c.l.b16 %v76
    %v2596 = vunpack.c.l.b16 %v77
    %v2597 = vunpack.c.l.b16 %v78
    %v2598 = vunpack.c.l.b16 %v79
    %v2599 = vunpack.c.l.b16 %v80
    %v2600 = vunpack.c.l.b16 %v81
    %v2601 = vunpack.c.l.b16 %v82
    %v2602 = vunpack.c.l.b16 %v83
    %v2603 = vunpack.c.l.b16 %v84
    %v2604 = vunpack.c.l.b16 %v85
    %v2605 = vunpack.c.l.b16 %v86
    %v2606 = vunpack.c.l.b16 %v87
    %v2607 = vunpack.c.l.b16 %v88
    %v2608 = vunpack.c.l.b16 %v89
    %v2609 = vunpack.c.l.b16 %v90
    %v2610 = vunpack.c.l.b16 %v91
    %v2611 = vunpack.c.l.b16 %v92
    %v2612 = vunpack.c.l.b16 %v93
    %v2613 = vunpack.c.l.b16 %v94
    %v2614 = vunpack.c.l.b16 %v95
    %v2615 = vunpack.c.l.b16 %v96
    %v2616 = vunpack.c.l.b16 %v97
    %v2617 = vunpack.c.l.b16 %v98
    %v2618 = vunpack.c.l.b16 %v99
    %v2619 = vunpack.c.l.b16 %v100
    %v2620 = vunpack.c.l.b16 %v101
    %v2621 = vunpack.c.l.b16 %v102
    %v2622 = vunpack.c.l.b16 %v103
    %v2623 = vunpack.c.l.b16 %v104
    %v2624 = vunpack.c.l.b16 %v105
    %v2625 = vunpack.c.l.b16 %v106
    %v2626 = vunpack.c.l.b16 %v107
    %v2627 = vunpack.c.l.b16 %v108
    %v2628 = vunpack.c.l.b16 %v109
    %v2629 = vunpack.c.l.b16 %v110
    %v2630 = vunpack.c.l.b16 %v111
    %v2631 = vunpack.c.l.b16 %v112
    %v2632 = vunpack.c.l.b16 %v113
    %v2633 = vunpack.c.l.b16 %v114
    %v2634 = vunpack.c.l.b16 %v115
    %v2635 = vunpack.c.l.b16 %v116
    %v2636 = vunpack.c.l.b16 %v117
    %v2637 = vunpack.c.l.b16 %v118
    %v2638 = vunpack.c.l.b16 %v119
    %v2639 = vunpack.c.l.b16 %v120
    %v2640 = vunpack.c.l.b16 %v121
    %v2641 = vunpack.c.l.b16 %v122
    %v2642 = vunpack.c.l.b16 %v123
    %v2643 = vunpack.c.l.b16 %v124
    %v2644 = vunpack.c.l.b16 %v125
    %v2645 = vunpack.c.l.b16 %v126
    %v2646 = vunpack.c.l.b16 %v127
    %v2647 = vunpack.c.l.b16 %v128
    %v2648 = vunpack.c.l.b16 %v129
    %v2649 = vunpack.c.l.b16 %v130
    %v2650 = vunpack.c.l.b16 %v131
    %v2651 = vunpack.c.l.b16 %v132
    %v2652 = vunpack.c.l.b16 %v133
    %v2653 = vunpack.c.l.b16 %v134
    %v2654 = vunpack.c.l.b16 %v135
    %v2655 = vunpack.c.l.b16 %v136
    %v2656 = vunpack.c.l.b16 %v137
    %v2657 = vunpack.c.l.b16 %v138
    %v2658 = vunpack.c.l.b16 %v139
    %v2659 = vunpack.c.l.b16 %v140
    %v2660 = vunpack.c.l.b16 %v141
    %v2661 = vunpack.c.l.b16 %v142
    %v2662 = vunpack.c.l.b16 %v143
    %v2663 = vunpack.c.l.b16 %v144
    %v2664 = vunpack.c.l.b16 %v145
    %v2665 = vunpack.c.l.b16 %v146
    %v2666 = vunpack.c.l.b16 %v147
    %v2667 = vunpack.c.l.b16 %v148
    %v2668 = vunpack.c.l.b16 %v149
    %v2669 = vunpack.c.l.b16 %v150
    %v2670 = vunpack.c.l.b16 %v151
    %v2671 = vunpack.c.l.b16 %v152
    %v2672 = vunpack.c.l.b16 %v153
    %v2673 = vunpack.c.l.b16 %v154
    %v2674 = vunpack.c.l.b16 %v155
    %v2675 = vunpack.c.l.b16 %v156
    %v2676 = vunpack.c.l.b16 %v157
    %v2677 = vunpack.c.l.b16 %v158
    %v2678 = vunpack.c.l.b16 %v159
    %v2679 = vunpack.c.l.b16 %v160
    %v2680 = vunpack.c.l.b16 %v161
    %v2681 = vunpack.c.l.b16 %v162
    %v2682 = vunpack.c.l.b16 %v163
    %v2683 = vunpack.c.l.b16 %v164
    %v2684 = vunpack.c.l.b16 %v165
    %v2685 = vunpack.c.l.b16 %v166
    %v2686 = vunpack.c.l.b16 %v167
    %v2687 = vunpack.c.l.b16 %v168
    %v2688 = vunpack.c.l.b16 %v169
    %v2689 = vunpack.c.l.b16 %v170
    %v2690 = vunpack.c.l.b16 %v171
    %v2691 = vunpack.c.l.b16 %v172
    %v2692 = vunpack.c.l.b16 %v173
    %v2693 = vunpack.c.l.b16 %v174
    %v2694 = vunpack.c.l.b16 %v175
    %v2695 = vunpack.c.l.b16 %v176
    %v2696 = vunpack.c.l.b16 %v177
    %v2697 = vunpack.c.l.b16 %v178
    %v2698 = vunpack.c.l.b16 %v179
    %v2699 = vunpack.c.l.b16 %v180
    %v2700 = vunpack.c.l.b16 %v181
    %v2701 = vunpack.c.l.b16 %v182
    %v2702 = vunpack.c.l.b16 %v183
    %v2703 = vunpack.c.l.b16 %v184
    %v2704 = vunpack.c.l.b16 %v185
    %v2705 = vunpack.c.l.b16 %v186
    %v2706 = vunpack.c.l.b16 %v187
    %v2707 = vunpack.c.l.b16 %v188
    %v2708 = vunpack.c.l.b16 %v189
    %v2709 = vunpack.c.l.b16 %v190
    %v2710 = vunpack.c.l.b16 %v191
    %v2711 = vunpack.c.l.b16 %v192
    %v2712 = vunpack.c.l.b16 %v193
    %v2713 = vunpack.c.l.b16 %v194
    %v2714 = vunpack.c.l.b16 %v195
    %v2715 = vunpack.c.l.b16 %v196
    %v2716 = vunpack.c.l.b16 %v197
    %v2717 = vunpack.c.l.b16 %v198
    %v2718 = vunpack.c.l.b16 %v199
    %v2719 = vunpack.c.l.b16 %v200
    %v2720 = vunpack.c.l.b16 %v201
    %v2721 = vunpack.c.l.b16 %v202
    %v2722 = vunpack.c.l.b16 %v203
    %v2723 = vunpack.c.l.b16 %v204
    %v2724 = vunpack.c.l.b16 %v205
    %v2725 = vunpack.c.l.b16 %v206
    %v2726 = vunpack.c.l.b16 %v207
    %v2727 = vunpack.c.l.b16 %v208
    %v2728 = vunpack.c.l.b16 %v209
    %v2729 = vunpack.c.l.b16 %v210
    %v2730 = vunpack.c.l.b16 %v211
    %v2731 = vunpack.c.l.b16 %v212
    %v2732 = vunpack.c.l.b16 %v213
    %v2733 = vunpack.c.l.b16 %v214
    %v2734 = vunpack.c.l.b16 %v215
    %v2735 = vunpack.c.l.b16 %v216
    %v2736 = vunpack.c.l.b16 %v217
    %v2737 = vunpack.c.l.b16 %v218
    %v2738 = vunpack.c.l.b16 %v219
    %v2739 = vunpack.c.l.b16 %v220
    %v2740 = vunpack.c.l.b16 %v221
    %v2741 = vunpack.c.l.b16 %v222
    %v2742 = vunpack.c.l.b16 %v223
    %v2743 = vunpack.c.l.b16 %v224
    %v2744 = vunpack.c.l.b16 %v225
    %v2745 = vunpack.c.l.b16 %v226
    %v2746 = vunpack.c.l.b16 %v227
    %v2747 = vunpack.c.l.b16 %v228
    %v2748 = vunpack.c.l.b16 %v229
    %v2749 = vunpack.c.l.b16 %v230
    %v2750 = vunpack.c.l.b16 %v231
    %v2751 = vunpack.c.l.b16 %v232
    %v2752 = vunpack.c.l.b16 %v233
    %v2753 = vunpack.c.l.b16 %v234
    %v2754 = vunpack.c.l.b16 %v235
    %v2755 = vunpack.c.l.b16 %v236
    %v2756 = vunpack.c.l.b16 %v237
    %v2757 = vunpack.c.l.b16 %v238
    %v2758 = vunpack.c.l.b16 %v239
    %v2759 = vunpack.c.l.b16 %v240
    %v2760 = vunpack.c.l.b16 %v241
    %v2761 = vunpack.c.l.b16 %v242
    %v2762 = vunpack.c.l.b16 %v243
    %v2763 = vunpack.c.l.b16 %v244
    %v2764 = vunpack.c.l.b16 %v245
    %v2765 = vunpack.c.l.b16 %v246
    %v2766 = vunpack.c.l.b16 %v247
    %v2767 = vunpack.c.l.b16 %v248
    %v2768 = vunpack.c.l.b16 %v249
    %v2769 = vunpack.c.l.b16 %v250
    %v2770 = vunpack.c.l.b16 %v251
    %v2771 = vunpack.c.l.b16 %v252
    %v2772 = vunpack.c.l.b16 %v253
    %v2773 = vunpack.c.l.b16 %v254
    %v2774 = vunpack.c.l.b16 %v255
    %v2775 = vunpack.c.l.b16 %v256
    %v2776 = vunpack.c.l.b16 %v257
    %v2777 = vunpack.c.l.b16 %v258
    %v2778 = vunpack.c.l.b16 %v259
    %v2779 = vunpack.c.l.b16 %v260
    %v2780 = vunpack.c.l.b16 %v261
    %v2781 = vunpack.c.l.b16 %v262
    %v2782 = vunpack.c.l.b16 %v263
    %v2783 = vunpack.c.l.b16 %v264
    %v2784 = vunpack.c.l.b16 %v265
    %v2785 = vunpack.c.l.b16 %v266
    %v2786 = vunpack.c.l.b16 %v267
    %v2787 = vunpack.c.l.b16 %v268
    %v2788 = vunpack.c.l.b16 %v269
    %v2789 = vunpack.c.l.b16 %v270
    %v2790 = vunpack.c.l.b16 %v271
    %v2791 = vunpack.c.l.b16 %v272
    %v2792 = vunpack.c.l.b16 %v273
    %v2793 = vunpack.c.l.b16 %v274
    %v2794 = vunpack.c.l.b16 %v275
    %v2795 = vunpack.c.l.b16 %v276
    %v2796 = vunpack.c.l.b16 %v277
    %v2797 = vunpack.c.l.b16 %v278
    %v2798 = vunpack.c.l.b16 %v279
    %v2799 = vunpack.c.l.b16 %v280
    %v2800 = vunpack.c.l.b16 %v281
    %v2801 = vunpack.c.l.b16 %v282
    %v2802 = vunpack.c.l.b16 %v283
    %v2803 = vunpack.c.l.b16 %v284
    %v2804 = vunpack.c.l.b16 %v285
    %v2805 = vunpack.c.l.b16 %v286
    %v2806 = vunpack.c.l.b16 %v287
    %v2807 = vunpack.c.l.b16 %v288
    %v2808 = vunpack.c.l.b16 %v289
    %v2809 = vunpack.c.l.b16 %v290
    %v2810 = vunpack.c.l.b16 %v291
    %v2811 = vunpack.c.l.b16 %v292
    %v2812 = vunpack.c.l.b16 %v293
    %v2813 = vunpack.c.l.b16 %v294
    %v2814 = vunpack.c.l.b16 %v295
    %v2815 = vunpack.c.l.b16 %v296
    %v2816 = vunpack.c.l.b16 %v297
    %v2817 = vunpack.c.l.b16 %v298
    %v2818 = vunpack.c.l.b16 %v299
    %v2819 = vunpack.c.l.b16 %v300
    %v2820 = vunpack.c.l.b16 %v301
    %v2821 = vunpack.c.l.b16 %v302
    %v2822 = vunpack.c.l.b16 %v303
    %v2823 = vunpack.c.l.b16 %v304
    %v2824 = vunpack.c.l.b16 %v305
    %v2825 = vunpack.c.l.b16 %v306
    %v2826 = vunpack.c.l.b16 %v307
    %v2827 = vunpack.c.l.b16 %v308
    %v2828 = vunpack.c.l.b16 %v309
    %v2829 = vunpack.c.l.b16 %v310
    %v2830 = vunpack.c.l.b16 %v311
    %v2831 = vunpack.c.l.b16 %v312
    %v2832 = vunpack.c.l.b16 %v313
    %v2833 = vunpack.c.l.b16 %v314
    %v2834 = vunpack.c.l.b16 %v315
    %v2835 = vunpack.c.l.b16 %v316
    %v2836 = vunpack.c.l.b16 %v317
    %v2837 = vunpack.c.l.b16 %v318
    %v2838 = vunpack.c.l.b16 %v319
    %v2839 = vunpack.c.l.b16 %v320
    %v2840 = vunpack.c.l.b16 %v321
    %v2841 = vunpack.c.l.b16 %v322
    %v2842 = vunpack.c.l.b16 %v323
    %v2843 = vunpack.c.l.b16 %v324
    %v2844 = vunpack.c.l.b16 %v325
    %v2845 = vunpack.c.l.b16 %v326
    %v2846 = vunpack.c.l.b16 %v327
    %v2847 = vunpack.c.l.b16 %v328
    %v2848 = vunpack.c.l.b16 %v329
    %v2849 = vunpack.c.l.b16 %v330
    %v2850 = vunpack.c.l.b16 %v331
    %v2851 = vunpack.c.l.b16 %v332
    %v2852 = vunpack.c.l.b16 %v333
    %v2853 = vunpack.c.l.b16 %v334
    %v2854 = vunpack.c.l.b16 %v335
    %v2855 = vunpack.c.l.b16 %v336
    %v2856 = vunpack.c.l.b16 %v337
    %v2857 = vunpack.c.l.b16 %v338
    %v2858 = vunpack.c.l.b16 %v339
    %v2859 = vunpack.c.l.b16 %v340
    %v2860 = vunpack.c.l.b16 %v341
    %v2861 = vunpack.c.l.b16 %v342
    %v2862 = vunpack.c.l.b16 %v343
    %v2863 = vunpack.c.l.b16 %v344
    %v2864 = vunpack.c.l.b16 %v345
    %v2865 = vunpack.c.l.b16 %v346
    %v2866 = vunpack.c.l.b16 %v347
    %v2867 = vunpack.c.l.b16 %v348
    %v2868 = vunpack.c.l.b16 %v349
    %v2869 = vunpack.c.l.b16 %v350
    %v2870 = vunpack.c.l.b16 %v351
    %v2871 = vunpack.c.l.b16 %v352
    %v2872 = vunpack.c.l.b16 %v353
    %v2873 = vunpack.c.l.b16 %v354
    %v2874 = vunpack.c.l.b16 %v355
    %v2875 = vunpack.c.l.b16 %v356
    %v2876 = vunpack.c.l.b16 %v357
    %v2877 = vunpack.c.l.b16 %v358
    %v2878 = vunpack.c.l.b16 %v359
    %v2879 = vunpack.c.l.b16 %v360
    %v2880 = vunpack.c.l.b16 %v361
    %v2881 = vunpack.c.l.b16 %v362
    %v2882 = vunpack.c.l.b16 %v363
    %v2883 = vunpack.c.l.b16 %v364
    %v2884 = vunpack.c.l.b16 %v365
    %v2885 = vunpack.c.l.b16 %v366
    %v2886 = vunpack.c.l.b16 %v367
    %v2887 = vunpack.c.l.b16 %v368
    %v2888 = vunpack.c.l.b16 %v369
    %v2889 = vunpack.c.l.b16 %v370
    %v2890 = vunpack.c.l.b16 %v371
    %v2891 = vunpack.c.l.b16 %v372
    %v2892 = vunpack.c.l.b16 %v373
    %v2893 = vunpack.c.l.b16 %v374
    %v2894 = vunpack.c.l.b16 %v375
    %v2895 = vunpack.c.l.b16 %v376
    %v2896 = vunpack.c.l.b16 %v377
    %v2897 = vunpack.c.l.b16 %v378
    %v2898 = vunpack.c.l.b16 %v379
    %v2899 = vunpack.c.l.b16 %v380
    %v2900 = vunpack.c.l.b16 %v381
    %v2901 = vunpack.c.l.b16 %v382
    %v2902 = vunpack.c.l.b16 %v383
    %v2903 = vunpack.c.l.b16 %v384
    %v2904 = vunpack.c.l.b16 %v385
    %v2905 = vunpack.c.l.b16 %v386
    %v2906 = vunpack.c.l.b16 %v387
    %v2907 = vunpack.c.l.b16 %v388
    %v2908 = vunpack.c.l.b16 %v389
    %v2909 = vunpack.c.l.b16 %v390
    %v2910 = vunpack.c.l.b16 %v391
    %v2911 = vunpack.c.l.b16 %v392
    %v2912 = vunpack.c.l.b16 %v393
    %v2913 = vunpack.c.l.b16 %v394
    %v2914 = vunpack.c.l.b16 %v395
    %v2915 = vunpack.c.l.b16 %v396
    %v2916 = vunpack.c.l.b16 %v397
    %v2917 = vunpack.c.l.b16 %v398
    %v2918 = vunpack.c.l.b16 %v399
    %v2919 = vunpack.c.l.b16 %v400
    %v2920 = vunpack.c.l.b16 %v401
    %v2921 = vunpack.c.l.b16 %v402
    %v2922 = vunpack.c.l.b16 %v403
    %v2923 = vunpack.c.l.b16 %v404
    %v2924 = vunpack.c.l.b16 %v405
    %v2925 = vunpack.c.l.b16 %v406
    %v2926 = vunpack.c.l.b16 %v407
    %v2927 = vunpack.c.l.b16 %v408
    %v2928 = vunpack.c.l.b16 %v409
    %v2929 = vunpack.c.l.b16 %v410
    %v2930 = vunpack.c.l.b16 %v411
    %v2931 = vunpack.c.l.b16 %v412
    %v2932 = vunpack.c.l.b16 %v413
    %v2933 = vunpack.c.l.b16 %v414
    %v2934 = vunpack.c.l.b16 %v415
    %v2935 = vunpack.c.l.b16 %v416
    %v2936 = vunpack.c.l.b16 %v417
    %v2937 = vunpack.c.l.b16 %v418
    %v2938 = vunpack.c.l.b16 %v419
    %v2939 = vunpack.c.l.b16 %v420
    %v2940 = vunpack.c.l.b16 %v421
    %v2941 = vunpack.c.l.b16 %v422
    %v2942 = vunpack.c.l.b16 %v423
    %v2943 = vunpack.c.l.b16 %v424
    %v2944 = vunpack.c.l.b16 %v425
    %v2945 = vunpack.c.l.b16 %v426
    %v2946 = vunpack.c.l.b16 %v427
    %v2947 = vunpack.c.l.b16 %v428
    %v2948 = vunpack.c.l.b16 %v429
    %v2949 = vunpack.c.l.b16 %v430
    %v2950 = vunpack.c.l.b16 %v431
    %v2951 = vunpack.c.l.b16 %v432
    %v2952 = vunpack.c.l.b16 %v433
    %v2953 = vunpack.c.l.b16 %v434
    %v2954 = vunpack.c.l.b16 %v435
    %v2955 = vunpack.c.l.b16 %v436
    %v2956 = vunpack.c.l.b16 %v437
    %v2957 = vunpack.c.l.b16 %v438
    %v2958 = vunpack.c.l.b16 %v439
    %v2959 = vunpack.c.l.b16 %v440
    %v2960 = vunpack.c.l.b16 %v441
    %v2961 = vunpack.c.l.b16 %v442
    %v2962 = vunpack.c.l.b16 %v443
    %v2963 = vunpack.c.l.b16 %v444
    %v2964 = vunpack.c.l.b16 %v445
    %v2965 = vunpack.c.l.b16 %v446
    %v2966 = vunpack.c.l.b16 %v447
    %v2967 = vunpack.c.l.b16 %v448
    %v2968 = vunpack.c.l.b16 %v449
    %v2969 = vunpack.c.l.b16 %v450
    %v2970 = vunpack.c.l.b16 %v451
    %v2971 = vunpack.c.l.b16 %v452
    %v2972 = vunpack.c.l.b16 %v453
    %v2973 = vunpack.c.l.b16 %v454
    %v2974 = vunpack.c.l.b16 %v455
    %v2975 = vunpack.c.l.b16 %v456
    %v2976 = vunpack.c.l.b16 %v457
    %v2977 = vunpack.c.l.b16 %v458
    %v2978 = vunpack.c.l.b16 %v459
    %v2979 = vunpack.c.l.b16 %v460
    %v2980 = vunpack.c.l.b16 %v461
    %v2981 = vunpack.c.l.b16 %v462
    %v2982 = vunpack.c.l.b16 %v463
    %v2983 = vunpack.c.l.b16 %v464
    %v2984 = vunpack.c.l.b16 %v465
    %v2985 = vunpack.c.l.b16 %v466
    %v2986 = vunpack.c.l.b16 %v467
    %v2987 = vunpack.c.l.b16 %v468
    %v2988 = vunpack.c.l.b16 %v469
    %v2989 = vunpack.c.l.b16 %v470
    %v2990 = vunpack.c.l.b16 %v471
    %v2991 = vunpack.c.l.b16 %v472
    %v2992 = vunpack.c.l.b16 %v473
    %v2993 = vunpack.c.l.b16 %v474
    %v2994 = vunpack.c.l.b16 %v475
    %v2995 = vunpack.c.l.b16 %v476
    %v2996 = vunpack.c.l.b16 %v477
    %v2997 = vunpack.c.l.b16 %v478
    %v2998 = vunpack.c.l.b16 %v479
    %v2999 = vunpack.c.l.b16 %v480
    %v3000 = vunpack.c.l.b16 %v481
    %v3001 = vunpack.c.l.b16 %v482
    %v3002 = vunpack.c.l.b16 %v483
    %v3003 = vunpack.c.l.b16 %v484
    %v3004 = vunpack.c.l.b16 %v485
    %v3005 = vunpack.c.l.b16 %v486
    %v3006 = vunpack.c.l.b16 %v487
    %v3007 = vunpack.c.l.b16 %v488
    %v3008 = vunpack.c.l.b16 %v489
    %v3009 = vunpack.c.l.b16 %v490
    %v3010 = vunpack.c.l.b16 %v491
    %v3011 = vunpack.c.l.b16 %v492
    %v3012 = vunpack.c.l.b16 %v493
    %v3013 = vunpack.c.l.b16 %v494
    %v3014 = vunpack.c.l.b16 %v495
    %v3015 = vunpack.c.l.b16 %v496
    %v3016 = vunpack.c.l.b16 %v497
    %v3017 = vunpack.c.l.b16 %v498
    %v3018 = vunpack.c.l.b16 %v499
    %v3019 = vunpack.c.l.b16 %v500
    %v3020 = vunpack.c.l.b16 %v501
    %v3021 = vunpack.c.l.b16 %v502
    %v3022 = vunpack.c.l.b16 %v503
    %v3023 = vunpack.c.l.b16 %v504
    %v3024 = vunpack.c.l.b16 %v505
    %v3025 = vunpack.c.l.b16 %v506
    %v3026 = vunpack.c.l.b16 %v507
    %v3027 = vunpack.c.l.b16 %v508
    %v3028 = vunpack.c.l.b16 %v509
    %v3029 = vunpack.c.l.b16 %v510
    %v3030 = vunpack.c.l.b16 %v511
    %v3031 = vunpack.c.l.b16 %v512
    %v3032 = vunpack.c.l.b16 %v513
    %v3033 = vunpack.c.l.b16 %v514
    %v3034 = vunpack.c.l.b16 %v515
    %v3035 = vunpack.c.l.b16 %v516
    %v3036 = vunpack.c.l.b16 %v517
    %v3037 = vunpack.c.l.b16 %v518
    %v3038 = vunpack.c.l.b16 %v519
    %v3039 = vunpack.c.l.b16 %v520
    %v3040 = vunpack.c.l.b16 %v521
    %v3041 = vunpack.c.l.b16 %v522
    %v3042 = vunpack.c.l.b16 %v523
    %v3043 = vunpack.c.l.b16 %v524
    %v3044 = vunpack.c.l.b16 %v525
    %v3045 = vunpack.c.l.b16 %v526
    %v3046 = vunpack.c.l.b16 %v527
    %v3047 = vunpack.c.l.b16 %v528
    %v3048 = vunpack.c.l.b16 %v529
    %v3049 = vunpack.c.l.b16 %v530
    %v3050 = vunpack.c.l.b16 %v531
    %v3051 = vunpack.c.l.b16 %v532
    %v3052 = vunpack.c.l.b16 %v533
    %v3053 = vunpack.c.l.b16 %v534
    %v3054 = vunpack.c.l.b16 %v535
    %v3055 = vunpack.c.l.b16 %v536
    %v3056 = vunpack.c.l.b16 %v537
    %v3057 = vunpack.c.l.b16 %v538
    %v3058 = vunpack.c.l.b16 %v539
    %v3059 = vunpack.c.l.b16 %v540
    %v3060 = vunpack.c.l.b16 %v541
    %v3061 = vunpack.c.l.b16 %v542
    %v3062 = vunpack.c.l.b16 %v543
    %v3063 = vunpack.c.l.b16 %v544
    %v3064 = vunpack.c.l.b16 %v545
    %v3065 = vunpack.c.l.b16 %v546
    %v3066 = vunpack.c.l.b16 %v547
    %v3067 = vunpack.c.l.b16 %v548
    %v3068 = vunpack.c.l.b16 %v549
    %v3069 = vunpack.c.l.b16 %v550
    %v3070 = vunpack.c.l.b16 %v551
    %v3071 = vunpack.c.l.b16 %v552
    %v3072 = vunpack.c.l.b16 %v553
    %v3073 = vunpack.c.l.b16 %v554
    %v3074 = vunpack.c.l.b16 %v555
    %v3075 = vunpack.c.l.b16 %v556
    %v3076 = vunpack.c.l.b16 %v557
    %v3077 = vunpack.c.l.b16 %v558
    %v3078 = vunpack.c.l.b16 %v559
    %v3079 = vunpack.c.l.b16 %v560
    %v3080 = vunpack.c.l.b16 %v561
    %v3081 = vunpack.c.l.b16 %v562
    %v3082 = vunpack.c.l.b16 %v563
    %v3083 = vunpack.c.l.b16 %v564
    %v3084 = vunpack.c.l.b16 %v565
    %v3085 = vunpack.c.l.b16 %v566
    %v3086 = vunpack.c.l.b16 %v567
    %v3087 = vunpack.c.l.b16 %v568
    %v3088 = vunpack.c.l.b16 %v569
    %v3089 = vunpack.c.l.b16 %v570
    %v3090 = vunpack.c.l.b16 %v571
    %v3091 = vunpack.c.l.b16 %v572
    %v3092 = vunpack.c.l.b16 %v573
    %v3093 = vunpack.c.l.b16 %v574
    %v3094 = vunpack.c.l.b16 %v575
    %v3095 = vunpack.c.l.b16 %v576
    %v3096 = vunpack.c.l.b16 %v577
    %v3097 = vunpack.c.l.b16 %v578
    %v3098 = vunpack.c.l.b16 %v579
    %v3099 = vunpack.c.l.b16 %v580
    %v3100 = vunpack.c.l.b16 %v581
    %v3101 = vunpack.c.l.b16 %v582
    %v3102 = vunpack.c.l.b16 %v583
    %v3103 = vunpack.c.l.b16 %v584
    %v3104 = vunpack.c.l.b16 %v585
    %v3105 = vunpack.c.l.b16 %v586
    %v3106 = vunpack.c.l.b16 %v587
    %v3107 = vunpack.c.l.b16 %v588
    %v3108 = vunpack.c.l.b16 %v589
    %v3109 = vunpack.c.l.b16 %v590
    %v3110 = vunpack.c.l.b16 %v591
    %v3111 = vunpack.c.l.b16 %v592
    %v3112 = vunpack.c.l.b16 %v593
    %v3113 = vunpack.c.l.b16 %v594
    %v3114 = vunpack.c.l.b16 %v595
    %v3115 = vunpack.c.l.b16 %v596
    %v3116 = vunpack.c.l.b16 %v597
    %v3117 = vunpack.c.l.b16 %v598
    %v3118 = vunpack.c.l.b16 %v599
    %v3119 = vunpack.c.l.b16 %v600
    %v3120 = vunpack.c.l.b16 %v601
    %v3121 = vunpack.c.l.b16 %v602
    %v3122 = vunpack.c.l.b16 %v603
    %v3123 = vunpack.c.l.b16 %v604
    %v3124 = vunpack.c.l.b16 %v605
    %v3125 = vunpack.c.l.b16 %v606
    %v3126 = vunpack.c.l.b16 %v607
    %v3127 = vunpack.c.l.b16 %v608
    %v3128 = vunpack.c.l.b16 %v609
    %v3129 = vunpack.c.l.b16 %v610
    %v3130 = vunpack.c.l.b16 %v611
    %v3131 = vunpack.c.l.b16 %v612
    %v3132 = vunpack.c.l.b16 %v613
    %v3133 = vunpack.c.l.b16 %v614
    %v3134 = vunpack.c.l.b16 %v615
    %v3135 = vunpack.c.l.b16 %v616
    %v3136 = vunpack.c.l.b16 %v617
    %v3137 = vunpack.c.l.b16 %v618
    %v3138 = vunpack.c.l.b16 %v619
    %v3139 = vunpack.c.l.b16 %v620
    %v3140 = vunpack.c.l.b16 %v621
    %v3141 = vunpack.c.l.b16 %v622
    %v3142 = vunpack.c.l.b16 %v623
    %v3143 = vunpack.c.l.b16 %v624
    %v3144 = vunpack.c.l.b16 %v625
    %v3145 = vunpack.c.l.b16 %v626
    %v3146 = vunpack.c.l.b16 %v627
    %v3147 = vunpack.c.l.b16 %v628
    %v3148 = vunpack.c.l.b16 %v629
    %v3149 = vunpack.c.l.b16 %v630
    %v3150 = vunpack.c.l.b16 %v631
    %v3151 = vunpack.c.l.b16 %v632
    %v3152 = vunpack.c.l.b16 %v633
    %v3153 = vunpack.c.l.b16 %v634
    %v3154 = vunpack.c.l.b16 %v635
    %v3155 = vunpack.c.l.b16 %v636
    %v3156 = vunpack.c.l.b16 %v637
    %v3157 = vunpack.c.l.b16 %v638
    %v3158 = vunpack.c.l.b16 %v639
    %v3159 = vunpack.c.l.b16 %v640
    %v3160 = vunpack.c.l.b16 %v641
    %v3161 = vunpack.c.l.b16 %v642
    %v3162 = vunpack.c.l.b16 %v643
    %v3163 = vunpack.c.l.b16 %v644
    %v3164 = vunpack.c.l.b16 %v645
    %v3165 = vunpack.c.l.b16 %v646
    %v3166 = vunpack.c.l.b16 %v647
    %v3167 = vunpack.c.l.b16 %v648
    %v3168 = vunpack.c.l.b16 %v649
    %v3169 = vunpack.c.l.b16 %v650
    %v3170 = vunpack.c.l.b16 %v651
    %v3171 = vunpack.c.l.b16 %v652
    %v3172 = vunpack.c.l.b16 %v653
    %v3173 = vunpack.c.l.b16 %v654
    %v3174 = vunpack.c.l.b16 %v655
    %v3175 = vunpack.c.l.b16 %v656
    %v3176 = vunpack.c.l.b16 %v657
    %v3177 = vunpack.c.l.b16 %v658
    %v3178 = vunpack.c.l.b16 %v659
    %v3179 = vunpack.c.l.b16 %v660
    %v3180 = vunpack.c.l.b16 %v661
    %v3181 = vunpack.c.l.b16 %v662
    %v3182 = vunpack.c.l.b16 %v663
    %v3183 = vunpack.c.l.b16 %v664
    %v3184 = vunpack.c.l.b16 %v665
    %v3185 = vunpack.c.l.b16 %v666
    %v3186 = vunpack.c.l.b16 %v667
    %v3187 = vunpack.c.l.b16 %v668
    %v3188 = vunpack.c.l.b16 %v669
    %v3189 = vunpack.c.l.b16 %v670
    %v3190 = vunpack.c.l.b16 %v671
    %v3191 = vunpack.c.l.b16 %v672
    %v3192 = vunpack.c.l.b16 %v673
    %v3193 = vunpack.c.l.b16 %v674
    %v3194 = vunpack.c.l.b16 %v675
    %v3195 = vunpack.c.l.b16 %v676
    %v3196 = vunpack.c.l.b16 %v677
    %v3197 = vunpack.c.l.b16 %v678
    %v3198 = vunpack.c.l.b16 %v679
    %v3199 = vunpack.c.l.b16 %v680
    %v3200 = vunpack.c.l.b16 %v681
    %v3201 = vunpack.c.l.b16 %v682
    %v3202 = vunpack.c.l.b16 %v683
    %v3203 = vunpack.c.l.b16 %v684
    %v3204 = vunpack.c.l.b16 %v685
    %v3205 = vunpack.c.l.b16 %v686
    %v3206 = vunpack.c.l.b16 %v687
    %v3207 = vunpack.c.l.b16 %v688
    %v3208 = vunpack.c.l.b16 %v689
    %v3209 = vunpack.c.l.b16 %v690
    %v3210 = vunpack.c.l.b16 %v691
    %v3211 = vunpack.c.l.b16 %v692
    %v3212 = vunpack.c.l.b16 %v693
    %v3213 = vunpack.c.l.b16 %v694
    %v3214 = vunpack.c.l.b16 %v695
    %v3215 = vunpack.c.l.b16 %v696
    %v3216 = vunpack.c.l.b16 %v697
    %v3217 = vunpack.c.l.b16 %v698
    %v3218 = vunpack.c.l.b16 %v699
    %v3219 = vunpack.c.l.b16 %v700
    %v3220 = vunpack.c.l.b16 %v701
    %v3221 = vunpack.c.l.b16 %v702
    %v3222 = vunpack.c.l.b16 %v703
    %v3223 = vunpack.c.l.b16 %v704
    %v3224 = vunpack.c.l.b16 %v705
    %v3225 = vunpack.c.l.b16 %v706
    %v3226 = vunpack.c.l.b16 %v707
    %v3227 = vunpack.c.l.b16 %v708
    %v3228 = vunpack.c.l.b16 %v709
    %v3229 = vunpack.c.l.b16 %v710
    %v3230 = vunpack.c.l.b16 %v711
    %v3231 = vunpack.c.l.b16 %v712
    %v3232 = vunpack.c.l.b16 %v713
    %v3233 = vunpack.c.l.b16 %v714
    %v3234 = vunpack.c.l.b16 %v715
    %v3235 = vunpack.c.l.b16 %v716
    %v3236 = vunpack.c.l.b16 %v717
    %v3237 = vunpack.c.l.b16 %v718
    %v3238 = vunpack.c.l.b16 %v719
    %v3239 = vunpack.c.l.b16 %v720
    %v3240 = vunpack.c.l.b16 %v721
    %v3241 = vunpack.c.l.b16 %v722
    %v3242 = vunpack.c.l.b16 %v723
    %v3243 = vunpack.c.l.b16 %v724
    %v3244 = vunpack.c.l.b16 %v725
    %v3245 = vunpack.c.l.b16 %v726
    %v3246 = vunpack.c.l.b16 %v727
    %v3247 = vunpack.c.l.b16 %v728
    %v3248 = vunpack.c.l.b16 %v729
    %v3249 = vunpack.c.l.b16 %v730
    %v3250 = vunpack.c.l.b16 %v731
    %v3251 = vunpack.c.l.b16 %v732
    %v3252 = vunpack.c.l.b16 %v733
    %v3253 = vunpack.c.l.b16 %v734
    %v3254 = vunpack.c.l.b16 %v735
    %v3255 = vunpack.c.l.b16 %v736
    %v3256 = vunpack.c.l.b16 %v737
    %v3257 = vunpack.c.l.b16 %v738
    %v3258 = vunpack.c.l.b16 %v739
    %v3259 = vunpack.c.l.b16 %v740
    %v3260 = vunpack.c.l.b16 %v741
    %v3261 = vunpack.c.l.b16 %v742
    %v3262 = vunpack.c.l.b16 %v743
    %v3263 = vunpack.c.l.b16 %v744
    %v3264 = vunpack.c.l.b16 %v745
    %v3265 = vunpack.c.l.b16 %v746
    %v3266 = vunpack.c.l.b16 %v747
    %v3267 = vunpack.c.l.b16 %v748
    %v3268 = vunpack.c.l.b16 %v749
    %v3269 = vunpack.c.l.b16 %v750
    %v3270 = vunpack.c.l.b16 %v751
    %v3271 = vunpack.c.l.b16 %v752
    %v3272 = vunpack.c.l.b16 %v753
    %v3273 = vunpack.c.l.b16 %v754
    %v3274 = vunpack.c.l.b16 %v755
    %v3275 = vunpack.c.l.b16 %v756
    %v3276 = vunpack.c.l.b16 %v757
    %v3277 = vunpack.c.l.b16 %v758
    %v3278 = vunpack.c.l.b16 %v759
    %v3279 = vunpack.c.l.b16 %v760
    %v3280 = vunpack.c.l.b16 %v761
    %v3281 = vunpack.c.l.b16 %v762
    %v3282 = vunpack.c.l.b16 %v763
    %v3283 = vunpack.c.l.b16 %v764
    %v3284 = vunpack.c.l.b16 %v765
    %v3285 = vunpack.c.l.b16 %v766
    %v3286 = vunpack.c.l.b16 %v767
    %v3287 = vunpack.c.l.b16 %v768
    %v3288 = vunpack.c.l.b16 %v769
    %v3289 = vunpack.c.l.b16 %v770
    %v3290 = vunpack.c.l.b16 %v771
    %v3291 = vunpack.c.l.b16 %v772
    %v3292 = vunpack.c.l.b16 %v773
    %v3293 = vunpack.c.l.b16 %v774
    %v3294 = vunpack.c.l.b16 %v775
    %v3295 = vunpack.c.l.b16 %v776
    %v3296 = vunpack.c.l.b16 %v777
    %v3297 = vunpack.c.l.b16 %v778
    %v3298 = vunpack.c.l.b16 %v779
    %v3299 = vunpack.c.l.b16 %v780
    %v3300 = vunpack.c.l.b16 %v781
    %v3301 = vunpack.c.l.b16 %v782
    %v3302 = vunpack.c.l.b16 %v783
    %v3303 = vunpack.c.l.b16 %v784
    %v3304 = vunpack.c.l.b16 %v785
    %v3305 = vunpack.c.l.b16 %v786
    %v3306 = vunpack.c.l.b16 %v787
    %v3307 = vunpack.c.l.b16 %v788
    %v3308 = vunpack.c.l.b16 %v789
    %v3309 = vunpack.c.l.b16 %v790
    %v3310 = vunpack.c.l.b16 %v791
    %v3311 = vunpack.c.l.b16 %v792
    %v3312 = vunpack.c.l.b16 %v793
    %v3313 = vunpack.c.l.b16 %v794
    %v3314 = vunpack.c.l.b16 %v795
    %v3315 = vunpack.c.l.b16 %v796
    %v3316 = vunpack.c.l.b16 %v797
    %v3317 = vunpack.c.l.b16 %v798
    %v3318 = vunpack.c.l.b16 %v799
    %v3319 = vunpack.c.l.b16 %v800
    %v3320 = vunpack.c.l.b16 %v801
    %v3321 = vunpack.c.l.b16 %v802
    %v3322 = vunpack.c.l.b16 %v803
    %v3323 = vunpack.c.l.b16 %v804
    %v3324 = vunpack.c.l.b16 %v805
    %v3325 = vunpack.c.l.b16 %v806
    %v3326 = vunpack.c.l.b16 %v807
    %v3327 = vunpack.c.l.b16 %v808
    %v3328 = vunpack.c.l.b16 %v809
    %v3329 = vunpack.c.l.b16 %v810
    %v3330 = vunpack.c.l.b16 %v811
    %v3331 = vunpack.c.l.b16 %v812
    %v3332 = vunpack.c.l.b16 %v813
    %v3333 = vunpack.c.l.b16 %v814
    %v3334 = vunpack.c.l.b16 %v815
    %v3335 = vunpack.c.l.b16 %v816
    %v3336 = vunpack.c.l.b16 %v817
    %v3337 = vunpack.c.l.b16 %v818
    %v3338 = vunpack.c.l.b16 %v819
    %v3339 = vunpack.c.l.b16 %v820
    %v3340 = vunpack.c.l.b16 %v821
    %v3341 = vunpack.c.l.b16 %v822
    %v3342 = vunpack.c.l.b16 %v823
    %v3343 = vunpack.c.l.b16 %v824
    %v3344 = vunpack.c.l.b16 %v825
    %v3345 = vunpack.c.l.b16 %v826
    %v3346 = vunpack.c.l.b16 %v827
    %v3347 = vunpack.c.l.b16 %v828
    %v3348 = vunpack.c.l.b16 %v829
    %v3349 = vunpack.c.l.b16 %v830
    %v3350 = vunpack.c.l.b16 %v831
    %v3351 = vunpack.c.l.b16 %v832
    %v3352 = vunpack.c.l.b16 %v833
    %v3353 = vunpack.c.l.b16 %v834
    %v3354 = vunpack.c.l.b16 %v835
    %v3355 = vunpack.c.l.b16 %v836
    %v3356 = vunpack.c.l.b16 %v837
    %v3357 = vunpack.c.l.b16 %v838
    %v3358 = vunpack.c.l.b16 %v839
    %v3359 = vunpack.c.l.b16 %v840
    %v3360 = vunpack.c.l.b16 %v841
    %v3361 = vunpack.c.l.b16 %v842
    %v3362 = vunpack.c.l.b16 %v843
    %v3363 = vunpack.c.l.b16 %v844
    %v3364 = vunpack.c.l.b16 %v845
    %v3365 = vunpack.c.l.b16 %v846
    %v3366 = vunpack.c.l.b16 %v847
    %v3367 = vunpack.c.l.b16 %v848
    %v3368 = vunpack.c.l.b16 %v849
    %v3369 = vunpack.c.l.b16 %v850
    %v3370 = vunpack.c.l.b16 %v851
    %v3371 = vunpack.c.l.b16 %v852
    %v3372 = vunpack.c.l.b16 %v853
    %v3373 = vunpack.c.l.b16 %v854
    %v3374 = vunpack.c.l.b16 %v855
    %v3375 = vunpack.c.l.b16 %v856
    %v3376 = vunpack.c.l.b16 %v857
    %v3377 = vunpack.c.l.b16 %v858
    %v3378 = vunpack.c.l.b16 %v859
    %v3379 = vunpack.c.l.b16 %v860
    %v3380 = vunpack.c.l.b16 %v861
    %v3381 = vunpack.c.l.b16 %v862
    %v3382 = vunpack.c.l.b16 %v863
    %v3383 = vunpack.c.l.b16 %v864
    %v3384 = vunpack.c.l.b16 %v865
    %v3385 = vunpack.c.l.b16 %v866
    %v3386 = vunpack.c.l.b16 %v867
    %v3387 = vunpack.c.l.b16 %v868
    %v3388 = vunpack.c.l.b16 %v869
    %v3389 = vunpack.c.l.b16 %v870
    %v3390 = vunpack.c.l.b16 %v871
    %v3391 = vunpack.c.l.b16 %v872
    %v3392 = vunpack.c.l.b16 %v873
    %v3393 = vunpack.c.l.b16 %v874
    %v3394 = vunpack.c.l.b16 %v875
    %v3395 = vunpack.c.l.b16 %v876
    %v3396 = vunpack.c.l.b16 %v877
    %v3397 = vunpack.c.l.b16 %v878
    %v3398 = vunpack.c.l.b16 %v879
    %v3399 = vunpack.c.l.b16 %v880
    %v3400 = vunpack.c.l.b16 %v881
    %v3401 = vunpack.c.l.b16 %v882
    %v3402 = vunpack.c.l.b16 %v883
    %v3403 = vunpack.c.l.b16 %v884
    %v3404 = vunpack.c.l.b16 %v885
    %v3405 = vunpack.c.l.b16 %v886
    %v3406 = vunpack.c.l.b16 %v887
    %v3407 = vunpack.c.l.b16 %v888
    %v3408 = vunpack.c.l.b16 %v889
    %v3409 = vunpack.c.l.b16 %v890
    %v3410 = vunpack.c.l.b16 %v891
    %v3411 = vunpack.c.l.b16 %v892
    %v3412 = vunpack.c.l.b16 %v893
    %v3413 = vunpack.c.l.b16 %v894
    %v3414 = vunpack.c.l.b16 %v895
    %v3415 = vunpack.c.l.b16 %v896
    %v3416 = vunpack.c.l.b16 %v897
    %v3417 = vunpack.c.l.b16 %v898
    %v3418 = vunpack.c.l.b16 %v899
    %v3419 = vunpack.c.l.b16 %v900
    %v3420 = vunpack.c.l.b16 %v901
    %v3421 = vunpack.c.l.b16 %v902
    %v3422 = vunpack.c.l.b16 %v903
    %v3423 = vunpack.c.l.b16 %v904
    %v3424 = vunpack.c.l.b16 %v905
    %v3425 = vunpack.c.l.b16 %v906
    %v3426 = vunpack.c.l.b16 %v907
    %v3427 = vunpack.c.l.b16 %v908
    %v3428 = vunpack.c.l.b16 %v909
    %v3429 = vunpack.c.l.b16 %v910
    %v3430 = vunpack.c.l.b16 %v911
    %v3431 = vunpack.c.l.b16 %v912
    %v3432 = vunpack.c.l.b16 %v913
    %v3433 = vunpack.c.l.b16 %v914
    %v3434 = vunpack.c.l.b16 %v915
    %v3435 = vunpack.c.l.b16 %v916
    %v3436 = vunpack.c.l.b16 %v917
    %v3437 = vunpack.c.l.b16 %v918
    %v3438 = vunpack.c.l.b16 %v919
    %v3439 = vunpack.c.l.b16 %v920
    %v3440 = vunpack.c.l.b16 %v921
    %v3441 = vunpack.c.l.b16 %v922
    %v3442 = vunpack.c.l.b16 %v923
    %v3443 = vunpack.c.l.b16 %v924
    %v3444 = vunpack.c.l.b16 %v925
    %v3445 = vunpack.c.l.b16 %v926
    %v3446 = vunpack.c.l.b16 %v927
    %v3447 = vunpack.c.l.b16 %v928
    %v3448 = vunpack.c.l.b16 %v929
    %v3449 = vunpack.c.l.b16 %v930
    %v3450 = vunpack.c.l.b16 %v931
    %v3451 = vunpack.c.l.b16 %v932
    %v3452 = vunpack.c.l.b16 %v933
    %v3453 = vunpack.c.l.b16 %v934
    %v3454 = vunpack.c.l.b16 %v935
    %v3455 = vunpack.c.l.b16 %v936
    %v3456 = vunpack.c.l.b16 %v937
    %v3457 = vunpack.c.l.b16 %v938
    %v3458 = vunpack.c.l.b16 %v939
    %v3459 = vunpack.c.l.b16 %v940
    %v3460 = vunpack.c.l.b16 %v941
    %v3461 = vunpack.c.l.b16 %v942
    %v3462 = vunpack.c.l.b16 %v943
    %v3463 = vunpack.c.l.b16 %v944
    %v3464 = vunpack.c.l.b16 %v945
    %v3465 = vunpack.c.l.b16 %v946
    %v3466 = vunpack.c.l.b16 %v947
    %v3467 = vunpack.c.l.b16 %v948
    %v3468 = vunpack.c.l.b16 %v949
    %v3469 = vunpack.c.l.b16 %v950
    %v3470 = vunpack.c.l.b16 %v951
    %v3471 = vunpack.c.l.b16 %v952
    %v3472 = vunpack.c.l.b16 %v953
    %v3473 = vunpack.c.l.b16 %v954
    %v3474 = vunpack.c.l.b16 %v955
    %v3475 = vunpack.c.l.b16 %v956
    %v3476 = vunpack.c.l.b16 %v957
    %v3477 = vunpack.c.l.b16 %v958
    %v3478 = vunpack.c.l.b16 %v959
    %v3479 = vunpack.c.l.b16 %v960
    %v3480 = vunpack.c.l.b16 %v961
    %v3481 = vunpack.c.l.b16 %v962
    %v3482 = vunpack.c.l.b16 %v963
    %v3483 = vunpack.c.l.b16 %v964
    %v3484 = vunpack.c.l.b16 %v965
    %v3485 = vunpack.c.l.b16 %v966
    %v3486 = vunpack.c.l.b16 %v967
    %v3487 = vunpack.c.l.b16 %v968
    %v3488 = vunpack.c.l.b16 %v969
    %v3489 = vunpack.c.l.b16 %v970
    %v3490 = vunpack.c.l.b16 %v971
    %v3491 = vunpack.c.l.b16 %v972
    %v3492 = vunpack.c.l.b16 %v973
    %v3493 = vunpack.c.l.b16 %v974
    %v3494 = vunpack.c.l.b16 %v975
    %v3495 = vunpack.c.l.b16 %v976
    %v3496 = vunpack.c.l.b16 %v977
    %v3497 = vunpack.c.l.b16 %v978
    %v3498 = vunpack.c.l.b16 %v979
    %v3499 = vunpack.c.l.b16 %v980
    %v3500 = vunpack.c.l.b16 %v981
    %v3501 = vunpack.c.l.b16 %v982
    %v3502 = vunpack.c.l.b16 %v983
    %v3503 = vunpack.c.l.b16 %v984
    %v3504 = vunpack.c.l.b16 %v985
    %v3505 = vunpack.c.l.b16 %v986
    %v3506 = vunpack.c.l.b16 %v987
    %v3507 = vunpack.c.l.b16 %v988
    %v3508 = vunpack.c.l.b16 %v989
    %v3509 = vunpack.c.l.b16 %v990
    %v3510 = vunpack.c.l.b16 %v991
    %v3511 = vunpack.c.l.b16 %v992
    %v3512 = vunpack.c.l.b16 %v993
    %v3513 = vunpack.c.l.b16 %v994
    %v3514 = vunpack.c.l.b16 %v995
    %v3515 = vunpack.c.l.b16 %v996
    %v3516 = vunpack.c.l.b16 %v997
    %v3517 = vunpack.c.l.b16 %v998
    %v3518 = vunpack.c.l.b16 %v999
    %v3519 = vunpack.c.l.b16 %v1000
    %v3520 = vunpack.c.l.b16 %v1001
    %v3521 = vunpack.c.l.b16 %v1002
    %v3522 = vunpack.c.l.b16 %v1003
    %v3523 = vunpack.c.l.b16 %v1004
    %v3524 = vunpack.c.l.b16 %v1005
    %v3525 = vunpack.c.l.b16 %v1006
    %v3526 = vunpack.c.l.b16 %v1007
    %v3527 = vunpack.c.l.b16 %v1008
    %v3528 = vunpack.c.l.b16 %v1009
    %v3529 = vunpack.c.l.b16 %v1010
    %v3530 = vunpack.c.l.b16 %v1011
    %v3531 = vunpack.c.l.b16 %v1012
    %v3532 = vunpack.c.l.b16 %v1013
    %v3533 = vunpack.c.l.b16 %v1014
    %v3534 = vunpack.c.l.b16 %v1015
    %v3535 = vunpack.c.l.b16 %v1016
    %v3536 = vunpack.c.l.b16 %v1017
    %v3537 = vunpack.c.l.b16 %v1018
    %v3538 = vunpack.c.l.b16 %v1019
    %v3539 = vunpack.c.l.b16 %v1020
    %v3540 = vunpack.c.l.b16 %v1021
    %v3541 = vunpack.c.l.b16 %v1022
    %v3542 = vunpack.c.l.b16 %v1023
    %v3543 = vunpack.c.l.b16 %v1024
    %v3544 = vunpack.c.l.b16 %v1025
    %v3545 = vunpack.c.l.b16 %v1026
    %v3546 = vunpack.c.l.b16 %v1027
    %v3547 = vunpack.c.l.b16 %v1028
    %v3548 = vunpack.c.l.b16 %v1029
    %v3549 = vunpack.c.l.b16 %v1030
    %v3550 = vunpack.c.l.b16 %v1031
    %v3551 = vunpack.c.l.b16 %v1032
    %v3552 = vunpack.c.l.b16 %v1033
    %v3553 = vunpack.c.l.b16 %v1034
    %v3554 = vunpack.c.l.b16 %v1035
    %v3555 = vunpack.c.l.b16 %v1036
    %v3556 = vunpack.c.l.b16 %v1037
    %v3557 = vunpack.c.l.b16 %v1038
    %v3558 = vunpack.c.l.b16 %v1039
    %v3559 = vunpack.c.l.b16 %v1040
    %v3560 = vunpack.c.l.b16 %v1041
    %v3561 = vunpack.c.l.b16 %v1042
    %v3562 = vunpack.c.l.b16 %v1043
    %v3563 = vunpack.c.l.b16 %v1044
    %v3564 = vunpack.c.l.b16 %v1045
    %v3565 = vunpack.c.l.b16 %v1046
    %v3566 = vunpack.c.l.b16 %v1047
    %v3567 = vpack.c.b16 %v2544, %v2543
    %v3568 = vpack.c.b16 %v2546, %v2545
    %v3569 = vpack.c.b16 %v2548, %v2547
    %v3570 = vpack.c.b16 %v2550, %v2549
    %v3571 = vpack.c.b16 %v2552, %v2551
    %v3572 = vpack.c.b16 %v2554, %v2553
    %v3573 = vpack.c.b16 %v2556, %v2555
    %v3574 = vpack.c.b16 %v2558, %v2557
    %v3575 = vpack.c.b16 %v2560, %v2559
    %v3576 = vpack.c.b16 %v2562, %v2561
    %v3577 = vpack.c.b16 %v2564, %v2563
    %v3578 = vpack.c.b16 %v2566, %v2565
    %v3579 = vpack.c.b16 %v2568, %v2567
    %v3580 = vpack.c.b16 %v2570, %v2569
    %v3581 = vpack.c.b16 %v2572, %v2571
    %v3582 = vpack.c.b16 %v2574, %v2573
    %v3583 = vpack.c.b16 %v2576, %v2575
    %v3584 = vpack.c.b16 %v2578, %v2577
    %v3585 = vpack.c.b16 %v2580, %v2579
    %v3586 = vpack.c.b16 %v2582, %v2581
    %v3587 = vpack.c.b16 %v2584, %v2583
    %v3588 = vpack.c.b16 %v2586, %v2585
    %v3589 = vpack.c.b16 %v2588, %v2587
    %v3590 = vpack.c.b16 %v2590, %v2589
    %v3591 = vpack.c.b16 %v2592, %v2591
    %v3592 = vpack.c.b16 %v2594, %v2593
    %v3593 = vpack.c.b16 %v2596, %v2595
    %v3594 = vpack.c.b16 %v2598, %v2597
    %v3595 = vpack.c.b16 %v2600, %v2599
    %v3596 = vpack.c.b16 %v2602, %v2601
    %v3597 = vpack.c.b16 %v2604, %v2603
    %v3598 = vpack.c.b16 %v2606, %v2605
    %v3599 = vpack.c.b16 %v2608, %v2607
    %v3600 = vpack.c.b16 %v2610, %v2609
    %v3601 = vpack.c.b16 %v2612, %v2611
    %v3602 = vpack.c.b16 %v2614, %v2613
    %v3603 = vpack.c.b16 %v2616, %v2615
    %v3604 = vpack.c.b16 %v2618, %v2617
    %v3605 = vpack.c.b16 %v2620, %v2619
    %v3606 = vpack.c.b16 %v2622, %v2621
    %v3607 = vpack.c.b16 %v2624, %v2623
    %v3608 = vpack.c.b16 %v2626, %v2625
    %v3609 = vpack.c.b16 %v2628, %v2627
    %v3610 = vpack.c.b16 %v2630, %v2629
    %v3611 = vpack.c.b16 %v2632, %v2631
    %v3612 = vpack.c.b16 %v2634, %v2633
    %v3613 = vpack.c.b16 %v2636, %v2635
    %v3614 = vpack.c.b16 %v2638, %v2637
    %v3615 = vpack.c.b16 %v2640, %v2639
    %v3616 = vpack.c.b16 %v2642, %v2641
    %v3617 = vpack.c.b16 %v2644, %v2643
    %v3618 = vpack.c.b16 %v2646, %v2645
    %v3619 = vpack.c.b16 %v2648, %v2647
    %v3620 = vpack.c.b16 %v2650, %v2649
    %v3621 = vpack.c.b16 %v2652, %v2651
    %v3622 = vpack.c.b16 %v2654, %v2653
    %v3623 = vpack.c.b16 %v2656, %v2655
    %v3624 = vpack.c.b16 %v2658, %v2657
    %v3625 = vpack.c.b16 %v2660, %v2659
    %v3626 = vpack.c.b16 %v2662, %v2661
    %v3627 = vpack.c.b16 %v2664, %v2663
    %v3628 = vpack.c.b16 %v2666, %v2665
    %v3629 = vpack.c.b16 %v2668, %v2667
    %v3630 = vpack.c.b16 %v2670, %v2669
    %v3631 = vpack.c.b16 %v2672, %v2671
    %v3632 = vpack.c.b16 %v2674, %v2673
    %v3633 = vpack.c.b16 %v2676, %v2675
    %v3634 = vpack.c.b16 %v2678, %v2677
    %v3635 = vpack.c.b16 %v2680, %v2679
    %v3636 = vpack.c.b16 %v2682, %v2681
    %v3637 = vpack.c.b16 %v2684, %v2683
    %v3638 = vpack.c.b16 %v2686, %v2685
    %v3639 = vpack.c.b16 %v2688, %v2687
    %v3640 = vpack.c.b16 %v2690, %v2689
    %v3641 = vpack.c.b16 %v2692, %v2691
    %v3642 = vpack.c.b16 %v2694, %v2693
    %v3643 = vpack.c.b16 %v2696, %v2695
    %v3644 = vpack.c.b16 %v2698, %v2697
    %v3645 = vpack.c.b16 %v2700, %v2699
    %v3646 = vpack.c.b16 %v2702, %v2701
    %v3647 = vpack.c.b16 %v2704, %v2703
    %v3648 = vpack.c.b16 %v2706, %v2705
    %v3649 = vpack.c.b16 %v2708, %v2707
    %v3650 = vpack.c.b16 %v2710, %v2709
    %v3651 = vpack.c.b16 %v2712, %v2711
    %v3652 = vpack.c.b16 %v2714, %v2713
    %v3653 = vpack.c.b16 %v2716, %v2715
    %v3654 = vpack.c.b16 %v2718, %v2717
    %v3655 = vpack.c.b16 %v2720, %v2719
    %v3656 = vpack.c.b16 %v2722, %v2721
    %v3657 = vpack.c.b16 %v2724, %v2723
    %v3658 = vpack.c.b16 %v2726, %v2725
    %v3659 = vpack.c.b16 %v2728, %v2727
    %v3660 = vpack.c.b16 %v2730, %v2729
    %v3661 = vpack.c.b16 %v2732, %v2731
    %v3662 = vpack.c.b16 %v2734, %v2733
    %v3663 = vpack.c.b16 %v2736, %v2735
    %v3664 = vpack.c.b16 %v2738, %v2737
    %v3665 = vpack.c.b16 %v2740, %v2739
    %v3666 = vpack.c.b16 %v2742, %v2741
    %v3667 = vpack.c.b16 %v2744, %v2743
    %v3668 = vpack.c.b16 %v2746, %v2745
    %v3669 = vpack.c.b16 %v2748, %v2747
    %v3670 = vpack.c.b16 %v2750, %v2749
    %v3671 = vpack.c.b16 %v2752, %v2751
    %v3672 = vpack.c.b16 %v2754, %v2753
    %v3673 = vpack.c.b16 %v2756, %v2755
    %v3674 = vpack.c.b16 %v2758, %v2757
    %v3675 = vpack.c.b16 %v2760, %v2759
    %v3676 = vpack.c.b16 %v2762, %v2761
    %v3677 = vpack.c.b16 %v2764, %v2763
    %v3678 = vpack.c.b16 %v2766, %v2765
    %v3679 = vpack.c.b16 %v2768, %v2767
    %v3680 = vpack.c.b16 %v2770, %v2769
    %v3681 = vpack.c.b16 %v2772, %v2771
    %v3682 = vpack.c.b16 %v2774, %v2773
    %v3683 = vpack.c.b16 %v2776, %v2775
    %v3684 = vpack.c.b16 %v2778, %v2777
    %v3685 = vpack.c.b16 %v2780, %v2779
    %v3686 = vpack.c.b16 %v2782, %v2781
    %v3687 = vpack.c.b16 %v2784, %v2783
    %v3688 = vpack.c.b16 %v2786, %v2785
    %v3689 = vpack.c.b16 %v2788, %v2787
    %v3690 = vpack.c.b16 %v2790, %v2789
    %v3691 = vpack.c.b16 %v2792, %v2791
    %v3692 = vpack.c.b16 %v2794, %v2793
    %v3693 = vpack.c.b16 %v2796, %v2795
    %v3694 = vpack.c.b16 %v2798, %v2797
    %v3695 = vpack.c.b16 %v2800, %v2799
    %v3696 = vpack.c.b16 %v2802, %v2801
    %v3697 = vpack.c.b16 %v2804, %v2803
    %v3698 = vpack.c.b16 %v2806, %v2805
    %v3699 = vpack.c.b16 %v2808, %v2807
    %v3700 = vpack.c.b16 %v2810, %v2809
    %v3701 = vpack.c.b16 %v2812, %v2811
    %v3702 = vpack.c.b16 %v2814, %v2813
    %v3703 = vpack.c.b16 %v2816, %v2815
    %v3704 = vpack.c.b16 %v2818, %v2817
    %v3705 = vpack.c.b16 %v2820, %v2819
    %v3706 = vpack.c.b16 %v2822, %v2821
    %v3707 = vpack.c.b16 %v2824, %v2823
    %v3708 = vpack.c.b16 %v2826, %v2825
    %v3709 = vpack.c.b16 %v2828, %v2827
    %v3710 = vpack.c.b16 %v2830, %v2829
    %v3711 = vpack.c.b16 %v2832, %v2831
    %v3712 = vpack.c.b16 %v2834, %v2833
    %v3713 = vpack.c.b16 %v2836, %v2835
    %v3714 = vpack.c.b16 %v2838, %v2837
    %v3715 = vpack.c.b16 %v2840, %v2839
    %v3716 = vpack.c.b16 %v2842, %v2841
    %v3717 = vpack.c.b16 %v2844, %v2843
    %v3718 = vpack.c.b16 %v2846, %v2845
    %v3719 = vpack.c.b16 %v2848, %v2847
    %v3720 = vpack.c.b16 %v2850, %v2849
    %v3721 = vpack.c.b16 %v2852, %v2851
    %v3722 = vpack.c.b16 %v2854, %v2853
    %v3723 = vpack.c.b16 %v2856, %v2855
    %v3724 = vpack.c.b16 %v2858, %v2857
    %v3725 = vpack.c.b16 %v2860, %v2859
    %v3726 = vpack.c.b16 %v2862, %v2861
    %v3727 = vpack.c.b16 %v2864, %v2863
    %v3728 = vpack.c.b16 %v2866, %v2865
    %v3729 = vpack.c.b16 %v2868, %v2867
    %v3730 = vpack.c.b16 %v2870, %v2869
    %v3731 = vpack.c.b16 %v2872, %v2871
    %v3732 = vpack.c.b16 %v2874, %v2873
    %v3733 = vpack.c.b16 %v2876, %v2875
    %v3734 = vpack.c.b16 %v2878, %v2877
    %v3735 = vpack.c.b16 %v2880, %v2879
    %v3736 = vpack.c.b16 %v2882, %v2881
    %v3737 = vpack.c.b16 %v2884, %v2883
    %v3738 = vpack.c.b16 %v2886, %v2885
    %v3739 = vpack.c.b16 %v2888, %v2887
    %v3740 = vpack.c.b16 %v2890, %v2889
    %v3741 = vpack.c.b16 %v2892, %v2891
    %v3742 = vpack.c.b16 %v2894, %v2893
    %v3743 = vpack.c.b16 %v2896, %v2895
    %v3744 = vpack.c.b16 %v2898, %v2897
    %v3745 = vpack.c.b16 %v2900, %v2899
    %v3746 = vpack.c.b16 %v2902, %v2901
    %v3747 = vpack.c.b16 %v2904, %v2903
    %v3748 = vpack.c.b16 %v2906, %v2905
    %v3749 = vpack.c.b16 %v2908, %v2907
    %v3750 = vpack.c.b16 %v2910, %v2909
    %v3751 = vpack.c.b16 %v2912, %v2911
    %v3752 = vpack.c.b16 %v2914, %v2913
    %v3753 = vpack.c.b16 %v2916, %v2915
    %v3754 = vpack.c.b16 %v2918, %v2917
    %v3755 = vpack.c.b16 %v2920, %v2919
    %v3756 = vpack.c.b16 %v2922, %v2921
    %v3757 = vpack.c.b16 %v2924, %v2923
    %v3758 = vpack.c.b16 %v2926, %v2925
    %v3759 = vpack.c.b16 %v2928, %v2927
    %v3760 = vpack.c.b16 %v2930, %v2929
    %v3761 = vpack.c.b16 %v2932, %v2931
    %v3762 = vpack.c.b16 %v2934, %v2933
    %v3763 = vpack.c.b16 %v2936, %v2935
    %v3764 = vpack.c.b16 %v2938, %v2937
    %v3765 = vpack.c.b16 %v2940, %v2939
    %v3766 = vpack.c.b16 %v2942, %v2941
    %v3767 = vpack.c.b16 %v2944, %v2943
    %v3768 = vpack.c.b16 %v2946, %v2945
    %v3769 = vpack.c.b16 %v2948, %v2947
    %v3770 = vpack.c.b16 %v2950, %v2949
    %v3771 = vpack.c.b16 %v2952, %v2951
    %v3772 = vpack.c.b16 %v2954, %v2953
    %v3773 = vpack.c.b16 %v2956, %v2955
    %v3774 = vpack.c.b16 %v2958, %v2957
    %v3775 = vpack.c.b16 %v2960, %v2959
    %v3776 = vpack.c.b16 %v2962, %v2961
    %v3777 = vpack.c.b16 %v2964, %v2963
    %v3778 = vpack.c.b16 %v2966, %v2965
    %v3779 = vpack.c.b16 %v2968, %v2967
    %v3780 = vpack.c.b16 %v2970, %v2969
    %v3781 = vpack.c.b16 %v2972, %v2971
    %v3782 = vpack.c.b16 %v2974, %v2973
    %v3783 = vpack.c.b16 %v2976, %v2975
    %v3784 = vpack.c.b16 %v2978, %v2977
    %v3785 = vpack.c.b16 %v2980, %v2979
    %v3786 = vpack.c.b16 %v2982, %v2981
    %v3787 = vpack.c.b16 %v2984, %v2983
    %v3788 = vpack.c.b16 %v2986, %v2985
    %v3789 = vpack.c.b16 %v2988, %v2987
    %v3790 = vpack.c.b16 %v2990, %v2989
    %v3791 = vpack.c.b16 %v2992, %v2991
    %v3792 = vpack.c.b16 %v2994, %v2993
    %v3793 = vpack.c.b16 %v2996, %v2995
    %v3794 = vpack.c.b16 %v2998, %v2997
    %v3795 = vpack.c.b16 %v3000, %v2999
    %v3796 = vpack.c.b16 %v3002, %v3001
    %v3797 = vpack.c.b16 %v3004, %v3003
    %v3798 = vpack.c.b16 %v3006, %v3005
    %v3799 = vpack.c.b16 %v3008, %v3007
    %v3800 = vpack.c.b16 %v3010, %v3009
    %v3801 = vpack.c.b16 %v3012, %v3011
    %v3802 = vpack.c.b16 %v3014, %v3013
    %v3803 = vpack.c.b16 %v3016, %v3015
    %v3804 = vpack.c.b16 %v3018, %v3017
    %v3805 = vpack.c.b16 %v3020, %v3019
    %v3806 = vpack.c.b16 %v3022, %v3021
    %v3807 = vpack.c.b16 %v3024, %v3023
    %v3808 = vpack.c.b16 %v3026, %v3025
    %v3809 = vpack.c.b16 %v3028, %v3027
    %v3810 = vpack.c.b16 %v3030, %v3029
    %v3811 = vpack.c.b16 %v3032, %v3031
    %v3812 = vpack.c.b16 %v3034, %v3033
    %v3813 = vpack.c.b16 %v3036, %v3035
    %v3814 = vpack.c.b16 %v3038, %v3037
    %v3815 = vpack.c.b16 %v3040, %v3039
    %v3816 = vpack.c.b16 %v3042, %v3041
    %v3817 = vpack.c.b16 %v3044, %v3043
    %v3818 = vpack.c.b16 %v3046, %v3045
    %v3819 = vpack.c.b16 %v3048, %v3047
    %v3820 = vpack.c.b16 %v3050, %v3049
    %v3821 = vpack.c.b16 %v3052, %v3051
    %v3822 = vpack.c.b16 %v3054, %v3053
    %v3823 = vpack.c.b16 %v3056, %v3055
    %v3824 = vpack.c.b16 %v3058, %v3057
    %v3825 = vpack.c.b16 %v3060, %v3059
    %v3826 = vpack.c.b16 %v3062, %v3061
    %v3827 = vpack.c.b16 %v3064, %v3063
    %v3828 = vpack.c.b16 %v3066, %v3065
    %v3829 = vpack.c.b16 %v3068, %v3067
    %v3830 = vpack.c.b16 %v3070, %v3069
    %v3831 = vpack.c.b16 %v3072, %v3071
    %v3832 = vpack.c.b16 %v3074, %v3073
    %v3833 = vpack.c.b16 %v3076, %v3075
    %v3834 = vpack.c.b16 %v3078, %v3077
    %v3835 = vpack.c.b16 %v3080, %v3079
    %v3836 = vpack.c.b16 %v3082, %v3081
    %v3837 = vpack.c.b16 %v3084, %v3083
    %v3838 = vpack.c.b16 %v3086, %v3085
    %v3839 = vpack.c.b16 %v3088, %v3087
    %v3840 = vpack.c.b16 %v3090, %v3089
    %v3841 = vpack.c.b16 %v3092, %v3091
    %v3842 = vpack.c.b16 %v3094, %v3093
    %v3843 = vpack.c.b16 %v3096, %v3095
    %v3844 = vpack.c.b16 %v3098, %v3097
    %v3845 = vpack.c.b16 %v3100, %v3099
    %v3846 = vpack.c.b16 %v3102, %v3101
    %v3847 = vpack.c.b16 %v3104, %v3103
    %v3848 = vpack.c.b16 %v3106, %v3105
    %v3849 = vpack.c.b16 %v3108, %v3107
    %v3850 = vpack.c.b16 %v3110, %v3109
    %v3851 = vpack.c.b16 %v3112, %v3111
    %v3852 = vpack.c.b16 %v3114, %v3113
    %v3853 = vpack.c.b16 %v3116, %v3115
    %v3854 = vpack.c.b16 %v3118, %v3117
    %v3855 = vpack.c.b16 %v3120, %v3119
    %v3856 = vpack.c.b16 %v3122, %v3121
    %v3857 = vpack.c.b16 %v3124, %v3123
    %v3858 = vpack.c.b16 %v3126, %v3125
    %v3859 = vpack.c.b16 %v3128, %v3127
    %v3860 = vpack.c.b16 %v3130, %v3129
    %v3861 = vpack.c.b16 %v3132, %v3131
    %v3862 = vpack.c.b16 %v3134, %v3133
    %v3863 = vpack.c.b16 %v3136, %v3135
    %v3864 = vpack.c.b16 %v3138, %v3137
    %v3865 = vpack.c.b16 %v3140, %v3139
    %v3866 = vpack.c.b16 %v3142, %v3141
    %v3867 = vpack.c.b16 %v3144, %v3143
    %v3868 = vpack.c.b16 %v3146, %v3145
    %v3869 = vpack.c.b16 %v3148, %v3147
    %v3870 = vpack.c.b16 %v3150, %v3149
    %v3871 = vpack.c.b16 %v3152, %v3151
    %v3872 = vpack.c.b16 %v3154, %v3153
    %v3873 = vpack.c.b16 %v3156, %v3155
    %v3874 = vpack.c.b16 %v3158, %v3157
    %v3875 = vpack.c.b16 %v3160, %v3159
    %v3876 = vpack.c.b16 %v3162, %v3161
    %v3877 = vpack.c.b16 %v3164, %v3163
    %v3878 = vpack.c.b16 %v3166, %v3165
    %v3879 = vpack.c.b16 %v3168, %v3167
    %v3880 = vpack.c.b16 %v3170, %v3169
    %v3881 = vpack.c.b16 %v3172, %v3171
    %v3882 = vpack.c.b16 %v3174, %v3173
    %v3883 = vpack.c.b16 %v3176, %v3175
    %v3884 = vpack.c.b16 %v3178, %v3177
    %v3885 = vpack.c.b16 %v3180, %v3179
    %v3886 = vpack.c.b16 %v3182, %v3181
    %v3887 = vpack.c.b16 %v3184, %v3183
    %v3888 = vpack.c.b16 %v3186, %v3185
    %v3889 = vpack.c.b16 %v3188, %v3187
    %v3890 = vpack.c.b16 %v3190, %v3189
    %v3891 = vpack.c.b16 %v3192, %v3191
    %v3892 = vpack.c.b16 %v3194, %v3193
    %v3893 = vpack.c.b16 %v3196, %v3195
    %v3894 = vpack.c.b16 %v3198, %v3197
    %v3895 = vpack.c.b16 %v3200, %v3199
    %v3896 = vpack.c.b16 %v3202, %v3201
    %v3897 = vpack.c.b16 %v3204, %v3203
    %v3898 = vpack.c.b16 %v3206, %v3205
    %v3899 = vpack.c.b16 %v3208, %v3207
    %v3900 = vpack.c.b16 %v3210, %v3209
    %v3901 = vpack.c.b16 %v3212, %v3211
    %v3902 = vpack.c.b16 %v3214, %v3213
    %v3903 = vpack.c.b16 %v3216, %v3215
    %v3904 = vpack.c.b16 %v3218, %v3217
    %v3905 = vpack.c.b16 %v3220, %v3219
    %v3906 = vpack.c.b16 %v3222, %v3221
    %v3907 = vpack.c.b16 %v3224, %v3223
    %v3908 = vpack.c.b16 %v3226, %v3225
    %v3909 = vpack.c.b16 %v3228, %v3227
    %v3910 = vpack.c.b16 %v3230, %v3229
    %v3911 = vpack.c.b16 %v3232, %v3231
    %v3912 = vpack.c.b16 %v3234, %v3233
    %v3913 = vpack.c.b16 %v3236, %v3235
    %v3914 = vpack.c.b16 %v3238, %v3237
    %v3915 = vpack.c.b16 %v3240, %v3239
    %v3916 = vpack.c.b16 %v3242, %v3241
    %v3917 = vpack.c.b16 %v3244, %v3243
    %v3918 = vpack.c.b16 %v3246, %v3245
    %v3919 = vpack.c.b16 %v3248, %v3247
    %v3920 = vpack.c.b16 %v3250, %v3249
    %v3921 = vpack.c.b16 %v3252, %v3251
    %v3922 = vpack.c.b16 %v3254, %v3253
    %v3923 = vpack.c.b16 %v3256, %v3255
    %v3924 = vpack.c.b16 %v3258, %v3257
    %v3925 = vpack.c.b16 %v3260, %v3259
    %v3926 = vpack.c.b16 %v3262, %v3261
    %v3927 = vpack.c.b16 %v3264, %v3263
    %v3928 = vpack.c.b16 %v3266, %v3265
    %v3929 = vpack.c.b16 %v3268, %v3267
    %v3930 = vpack.c.b16 %v3270, %v3269
    %v3931 = vpack.c.b16 %v3272, %v3271
    %v3932 = vpack.c.b16 %v3274, %v3273
    %v3933 = vpack.c.b16 %v3276, %v3275
    %v3934 = vpack.c.b16 %v3278, %v3277
    %v3935 = vpack.c.b16 %v3280, %v3279
    %v3936 = vpack.c.b16 %v3282, %v3281
    %v3937 = vpack.c.b16 %v3284, %v3283
    %v3938 = vpack.c.b16 %v3286, %v3285
    %v3939 = vpack.c.b16 %v3288, %v3287
    %v3940 = vpack.c.b16 %v3290, %v3289
    %v3941 = vpack.c.b16 %v3292, %v3291
    %v3942 = vpack.c.b16 %v3294, %v3293
    %v3943 = vpack.c.b16 %v3296, %v3295
    %v3944 = vpack.c.b16 %v3298, %v3297
    %v3945 = vpack.c.b16 %v3300, %v3299
    %v3946 = vpack.c.b16 %v3302, %v3301
    %v3947 = vpack.c.b16 %v3304, %v3303
    %v3948 = vpack.c.b16 %v3306, %v3305
    %v3949 = vpack.c.b16 %v3308, %v3307
    %v3950 = vpack.c.b16 %v3310, %v3309
    %v3951 = vpack.c.b16 %v3312, %v3311
    %v3952 = vpack.c.b16 %v3314, %v3313
    %v3953 = vpack.c.b16 %v3316, %v3315
    %v3954 = vpack.c.b16 %v3318, %v3317
    %v3955 = vpack.c.b16 %v3320, %v3319
    %v3956 = vpack.c.b16 %v3322, %v3321
    %v3957 = vpack.c.b16 %v3324, %v3323
    %v3958 = vpack.c.b16 %v3326, %v3325
    %v3959 = vpack.c.b16 %v3328, %v3327
    %v3960 = vpack.c.b16 %v3330, %v3329
    %v3961 = vpack.c.b16 %v3332, %v3331
    %v3962 = vpack.c.b16 %v3334, %v3333
    %v3963 = vpack.c.b16 %v3336, %v3335
    %v3964 = vpack.c.b16 %v3338, %v3337
    %v3965 = vpack.c.b16 %v3340, %v3339
    %v3966 = vpack.c.b16 %v3342, %v3341
    %v3967 = vpack.c.b16 %v3344, %v3343
    %v3968 = vpack.c.b16 %v3346, %v3345
    %v3969 = vpack.c.b16 %v3348, %v3347
    %v3970 = vpack.c.b16 %v3350, %v3349
    %v3971 = vpack.c.b16 %v3352, %v3351
    %v3972 = vpack.c.b16 %v3354, %v3353
    %v3973 = vpack.c.b16 %v3356, %v3355
    %v3974 = vpack.c.b16 %v3358, %v3357
    %v3975 = vpack.c.b16 %v3360, %v3359
    %v3976 = vpack.c.b16 %v3362, %v3361
    %v3977 = vpack.c.b16 %v3364, %v3363
    %v3978 = vpack.c.b16 %v3366, %v3365
    %v3979 = vpack.c.b16 %v3368, %v3367
    %v3980 = vpack.c.b16 %v3370, %v3369
    %v3981 = vpack.c.b16 %v3372, %v3371
    %v3982 = vpack.c.b16 %v3374, %v3373
    %v3983 = vpack.c.b16 %v3376, %v3375
    %v3984 = vpack.c.b16 %v3378, %v3377
    %v3985 = vpack.c.b16 %v3380, %v3379
    %v3986 = vpack.c.b16 %v3382, %v3381
    %v3987 = vpack.c.b16 %v3384, %v3383
    %v3988 = vpack.c.b16 %v3386, %v3385
    %v3989 = vpack.c.b16 %v3388, %v3387
    %v3990 = vpack.c.b16 %v3390, %v3389
    %v3991 = vpack.c.b16 %v3392, %v3391
    %v3992 = vpack.c.b16 %v3394, %v3393
    %v3993 = vpack.c.b16 %v3396, %v3395
    %v3994 = vpack.c.b16 %v3398, %v3397
    %v3995 = vpack.c.b16 %v3400, %v3399
    %v3996 = vpack.c.b16 %v3402, %v3401
    %v3997 = vpack.c.b16 %v3404, %v3403
    %v3998 = vpack.c.b16 %v3406, %v3405
    %v3999 = vpack.c.b16 %v3408, %v3407
    %v4000 = vpack.c.b16 %v3410, %v3409
    %v4001 = vpack.c.b16 %v3412, %v3411
    %v4002 = vpack.c.b16 %v3414, %v3413
    %v4003 = vpack.c.b16 %v3416, %v3415
    %v4004 = vpack.c.b16 %v3418, %v3417
    %v4005 = vpack.c.b16 %v3420, %v3419
    %v4006 = vpack.c.b16 %v3422, %v3421
    %v4007 = vpack.c.b16 %v3424, %v3423
    %v4008 = vpack.c.b16 %v3426, %v3425
    %v4009 = vpack.c.b16 %v3428, %v3427
    %v4010 = vpack.c.b16 %v3430, %v3429
    %v4011 = vpack.c.b16 %v3432, %v3431
    %v4012 = vpack.c.b16 %v3434, %v3433
    %v4013 = vpack.c.b16 %v3436, %v3435
    %v4014 = vpack.c.b16 %v3438, %v3437
    %v4015 = vpack.c.b16 %v3440, %v3439
    %v4016 = vpack.c.b16 %v3442, %v3441
    %v4017 = vpack.c.b16 %v3444, %v3443
    %v4018 = vpack.c.b16 %v3446, %v3445
    %v4019 = vpack.c.b16 %v3448, %v3447
    %v4020 = vpack.c.b16 %v3450, %v3449
    %v4021 = vpack.c.b16 %v3452, %v3451
    %v4022 = vpack.c.b16 %v3454, %v3453
    %v4023 = vpack.c.b16 %v3456, %v3455
    %v4024 = vpack.c.b16 %v3458, %v3457
    %v4025 = vpack.c.b16 %v3460, %v3459
    %v4026 = vpack.c.b16 %v3462, %v3461
    %v4027 = vpack.c.b16 %v3464, %v3463
    %v4028 = vpack.c.b16 %v3466, %v3465
    %v4029 = vpack.c.b16 %v3468, %v3467
    %v4030 = vpack.c.b16 %v3470, %v3469
    %v4031 = vpack.c.b16 %v3472, %v3471
    %v4032 = vpack.c.b16 %v3474, %v3473
    %v4033 = vpack.c.b16 %v3476, %v3475
    %v4034 = vpack.c.b16 %v3478, %v3477
    %v4035 = vpack.c.b16 %v3480, %v3479
    %v4036 = vpack.c.b16 %v3482, %v3481
    %v4037 = vpack.c.b16 %v3484, %v3483
    %v4038 = vpack.c.b16 %v3486, %v3485
    %v4039 = vpack.c.b16 %v3488, %v3487
    %v4040 = vpack.c.b16 %v3490, %v3489
    %v4041 = vpack.c.b16 %v3492, %v3491
    %v4042 = vpack.c.b16 %v3494, %v3493
    %v4043 = vpack.c.b16 %v3496, %v3495
    %v4044 = vpack.c.b16 %v3498, %v3497
    %v4045 = vpack.c.b16 %v3500, %v3499
    %v4046 = vpack.c.b16 %v3502, %v3501
    %v4047 = vpack.c.b16 %v3504, %v3503
    %v4048 = vpack.c.b16 %v3506, %v3505
    %v4049 = vpack.c.b16 %v3508, %v3507
    %v4050 = vpack.c.b16 %v3510, %v3509
    %v4051 = vpack.c.b16 %v3512, %v3511
    %v4052 = vpack.c.b16 %v3514, %v3513
    %v4053 = vpack.c.b16 %v3516, %v3515
    %v4054 = vpack.c.b16 %v3518, %v3517
    %v4055 = vpack.c.b16 %v3520, %v3519
    %v4056 = vpack.c.b16 %v3522, %v3521
    %v4057 = vpack.c.b16 %v3524, %v3523
    %v4058 = vpack.c.b16 %v3526, %v3525
    %v4059 = vpack.c.b16 %v3528, %v3527
    %v4060 = vpack.c.b16 %v3530, %v3529
    %v4061 = vpack.c.b16 %v3532, %v3531
    %v4062 = vpack.c.b16 %v3534, %v3533
    %v4063 = vpack.c.b16 %v3536, %v3535
    %v4064 = vpack.c.b16 %v3538, %v3537
    %v4065 = vpack.c.b16 %v3540, %v3539
    %v4066 = vpack.c.b16 %v3542, %v3541
    %v4067 = vpack.c.b16 %v3544, %v3543
    %v4068 = vpack.c.b16 %v3546, %v3545
    %v4069 = vpack.c.b16 %v3548, %v3547
    %v4070 = vpack.c.b16 %v3550, %v3549
    %v4071 = vpack.c.b16 %v3552, %v3551
    %v4072 = vpack.c.b16 %v3554, %v3553
    %v4073 = vpack.c.b16 %v3556, %v3555
    %v4074 = vpack.c.b16 %v3558, %v3557
    %v4075 = vpack.c.b16 %v3560, %v3559
    %v4076 = vpack.c.b16 %v3562, %v3561
    %v4077 = vpack.c.b16 %v3564, %v3563
    %v4078 = vpack.c.b16 %v3566, %v3565
    %4591 = vmatprep.subr.bf16.mxu0 0
    %4592 = vmatpush1.bf16.msra.mxu0 %v3567
    %4593 = vmatprep.subr.bf16.mxu0 0
    %4594 = vmatpush1.bf16.msra.mxu0 %v3568
    %4595 = vmatprep.subr.bf16.mxu0 0
    %4596 = vmatpush1.bf16.msra.mxu0 %v3569
    %4597 = vmatprep.subr.bf16.mxu0 0
    %4598 = vmatpush1.bf16.msra.mxu0 %v3570
    %4599 = vmatprep.subr.bf16.mxu0 0
    %4600 = vmatpush1.bf16.msra.mxu0 %v3571
    %4601 = vmatprep.subr.bf16.mxu0 0
    %4602 = vmatpush1.bf16.msra.mxu0 %v3572
    %4603 = vmatprep.subr.bf16.mxu0 0
    %4604 = vmatpush1.bf16.msra.mxu0 %v3573
    %4605 = vmatprep.subr.bf16.mxu0 0
    %4606 = vmatpush1.bf16.msra.mxu0 %v3574
    %4607 = vmatprep.subr.bf16.mxu0 0
    %4608 = vmatpush1.bf16.msra.mxu0 %v3575
    %4609 = vmatprep.subr.bf16.mxu0 0
    %4610 = vmatpush1.bf16.msra.mxu0 %v3576
    %4611 = vmatprep.subr.bf16.mxu0 0
    %4612 = vmatpush1.bf16.msra.mxu0 %v3577
    %4613 = vmatprep.subr.bf16.mxu0 0
    %4614 = vmatpush1.bf16.msra.mxu0 %v3578
    %4615 = vmatprep.subr.bf16.mxu0 0
    %4616 = vmatpush1.bf16.msra.mxu0 %v3579
    %4617 = vmatprep.subr.bf16.mxu0 0
    %4618 = vmatpush1.bf16.msra.mxu0 %v3580
    %4619 = vmatprep.subr.bf16.mxu0 0
    %4620 = vmatpush1.bf16.msra.mxu0 %v3581
    %4621 = vmatprep.subr.bf16.mxu0 0
    %4622 = vmatpush1.bf16.msra.mxu0 %v3582
    %4623 = vmatprep.mubr.bf16.mxu0 %v1100
    %4624 = vmatmul.mubr.bf16.gmra.mrb[0].mxu0 %v1086
    %v4625 = vpop.f32.mrb[0].mxu0
    %v4626 = vadd.f32 %v1053, %v4625
    %v4627 = vpop.f32.mrb[0].mxu0
    %v4628 = vpop.f32.mrb[0].mxu0
    %v4629 = vpop.f32.mrb[0].mxu0
    %4630 = vdwg.mxu0
    %4631 = vmatprep.subr.bf16.mxu0 0
    %4632 = vmatpush1.bf16.msra.mxu0 %v3583
    %4633 = vmatprep.subr.bf16.mxu0 0
    %4634 = vmatpush1.bf16.msra.mxu0 %v3584
    %4635 = vmatprep.subr.bf16.mxu0 0
    %4636 = vmatpush1.bf16.msra.mxu0 %v3585
    %4637 = vmatprep.subr.bf16.mxu0 0
    %4638 = vmatpush1.bf16.msra.mxu0 %v3586
    %4639 = vmatprep.subr.bf16.mxu0 0
    %4640 = vmatpush1.bf16.msra.mxu0 %v3587
    %4641 = vmatprep.subr.bf16.mxu0 0
    %4642 = vmatpush1.bf16.msra.mxu0 %v3588
    %4643 = vmatprep.subr.bf16.mxu0 0
    %4644 = vmatpush1.bf16.msra.mxu0 %v3589
    %4645 = vmatprep.subr.bf16.mxu0 0
    %4646 = vmatpush1.bf16.msra.mxu0 %v3590
    %4647 = vmatprep.subr.bf16.mxu0 0
    %4648 = vmatpush1.bf16.msra.mxu0 %v3591
    %4649 = vmatprep.subr.bf16.mxu0 0
    %4650 = vmatpush1.bf16.msra.mxu0 %v3592
    %4651 = vmatprep.subr.bf16.mxu0 0
    %4652 = vmatpush1.bf16.msra.mxu0 %v3593
    %4653 = vmatprep.subr.bf16.mxu0 0
    %4654 = vmatpush1.bf16.msra.mxu0 %v3594
    %4655 = vmatprep.subr.bf16.mxu0 0
    %4656 = vmatpush1.bf16.msra.mxu0 %v3595
    %4657 = vmatprep.subr.bf16.mxu0 0
    %4658 = vmatpush1.bf16.msra.mxu0 %v3596
    %4659 = vmatprep.subr.bf16.mxu0 0
    %4660 = vmatpush1.bf16.msra.mxu0 %v3597
    %4661 = vmatprep.subr.bf16.mxu0 0
    %4662 = vmatpush1.bf16.msra.mxu0 %v3598
    %4663 = vmatprep.mubr.bf16.mxu0 %v1110
    %4664 = vmatmul.mubr.bf16.gmra.mrb[0].mxu0 %v1108
    %v4665 = vpop.f32.mrb[0].mxu0
    %v4666 = vadd.f32 %v4626, %v4665
    %v4667 = vpop.f32.mrb[0].mxu0
    %v4668 = vpop.f32.mrb[0].mxu0
    %v4669 = vpop.f32.mrb[0].mxu0
    %4670 = vdwg.mxu0
    %4671 = vmatprep.subr.bf16.mxu0 0
    %4672 = vmatpush1.bf16.msra.mxu0 %v3599
    %4673 = vmatprep.subr.bf16.mxu0 0
    %4674 = vmatpush1.bf16.msra.mxu0 %v3600
    %4675 = vmatprep.subr.bf16.mxu0 0
    %4676 = vmatpush1.bf16.msra.mxu0 %v3601
    %4677 = vmatprep.subr.bf16.mxu0 0
    %4678 = vmatpush1.bf16.msra.mxu0 %v3602
    %4679 = vmatprep.subr.bf16.mxu0 0
    %4680 = vmatpush1.bf16.msra.mxu0 %v3603
    %4681 = vmatprep.subr.bf16.mxu0 0
    %4682 = vmatpush1.bf16.msra.mxu0 %v3604
    %4683 = vmatprep.subr.bf16.mxu0 0
    %4684 = vmatpush1.bf16.msra.mxu0 %v3605
    %4685 = vmatprep.subr.bf16.mxu0 0
    %4686 = vmatpush1.bf16.msra.mxu0 %v3606
    %4687 = vmatprep.subr.bf16.mxu0 0
    %4688 = vmatpush1.bf16.msra.mxu0 %v3607
    %4689 = vmatprep.subr.bf16.mxu0 0
    %4690 = vmatpush1.bf16.msra.mxu0 %v3608
    %4691 = vmatprep.subr.bf16.mxu0 0
    %4692 = vmatpush1.bf16.msra.mxu0 %v3609
    %4693 = vmatprep.subr.bf16.mxu0 0
    %4694 = vmatpush1.bf16.msra.mxu0 %v3610
    %4695 = vmatprep.subr.bf16.mxu0 0
    %4696 = vmatpush1.bf16.msra.mxu0 %v3611
    %4697 = vmatprep.subr.bf16.mxu0 0
    %4698 = vmatpush1.bf16.msra.mxu0 %v3612
    %4699 = vmatprep.subr.bf16.mxu0 0
    %4700 = vmatpush1.bf16.msra.mxu0 %v3613
    %4701 = vmatprep.subr.bf16.mxu0 0
    %4702 = vmatpush1.bf16.msra.mxu0 %v3614
    %4703 = vmatprep.mubr.bf16.mxu0 %v1107
    %4704 = vmatmul.mubr.bf16.gmra.mrb[0].mxu0 %v1093
    %v4705 = vpop.f32.mrb[0].mxu0
    %v4706 = vadd.f32 %v4666, %v4705
    %v4707 = vpop.f32.mrb[0].mxu0
    %v4708 = vpop.f32.mrb[0].mxu0
    %v4709 = vpop.f32.mrb[0].mxu0
    %4710 = vdwg.mxu0
    %4711 = vmatprep.subr.bf16.mxu0 0
    %4712 = vmatpush1.bf16.msra.mxu0 %v3615
    %4713 = vmatprep.subr.bf16.mxu0 0
    %4714 = vmatpush1.bf16.msra.mxu0 %v3616
    %4715 = vmatprep.subr.bf16.mxu0 0
    %4716 = vmatpush1.bf16.msra.mxu0 %v3617
    %4717 = vmatprep.subr.bf16.mxu0 0
    %4718 = vmatpush1.bf16.msra.mxu0 %v3618
    %4719 = vmatprep.subr.bf16.mxu0 0
    %4720 = vmatpush1.bf16.msra.mxu0 %v3619
    %4721 = vmatprep.subr.bf16.mxu0 0
    %4722 = vmatpush1.bf16.msra.mxu0 %v3620
    %4723 = vmatprep.subr.bf16.mxu0 0
    %4724 = vmatpush1.bf16.msra.mxu0 %v3621
    %4725 = vmatprep.subr.bf16.mxu0 0
    %4726 = vmatpush1.bf16.msra.mxu0 %v3622
    %4727 = vmatprep.subr.bf16.mxu0 0
    %4728 = vmatpush1.bf16.msra.mxu0 %v3623
    %4729 = vmatprep.subr.bf16.mxu0 0
    %4730 = vmatpush1.bf16.msra.mxu0 %v3624
    %4731 = vmatprep.subr.bf16.mxu0 0
    %4732 = vmatpush1.bf16.msra.mxu0 %v3625
    %4733 = vmatprep.subr.bf16.mxu0 0
    %4734 = vmatpush1.bf16.msra.mxu0 %v3626
    %4735 = vmatprep.subr.bf16.mxu0 0
    %4736 = vmatpush1.bf16.msra.mxu0 %v3627
    %4737 = vmatprep.subr.bf16.mxu0 0
    %4738 = vmatpush1.bf16.msra.mxu0 %v3628
    %4739 = vmatprep.subr.bf16.mxu0 0
    %4740 = vmatpush1.bf16.msra.mxu0 %v3629
    %4741 = vmatprep.subr.bf16.mxu0 0
    %4742 = vmatpush1.bf16.msra.mxu0 %v3630
    %4743 = vmatprep.mubr.bf16.mxu0 %v1111
    %4744 = vmatmul.mubr.bf16.gmra.mrb[0].mxu0 %v1109
    %v4745 = vpop.f32.mrb[0].mxu0
    %v4746 = vadd.f32 %v4706, %v4745
    %v4747 = vpop.f32.mrb[0].mxu0
    %v4748 = vpop.f32.mrb[0].mxu0
    %v4749 = vpop.f32.mrb[0].mxu0
    %4750 = vdwg.mxu0
    %4751 = vmatprep.subr.bf16.mxu0 0
    %4752 = vmatpush1.bf16.msra.mxu0 %v3631
    %4753 = vmatprep.subr.bf16.mxu0 0
    %4754 = vmatpush1.bf16.msra.mxu0 %v3632
    %4755 = vmatprep.subr.bf16.mxu0 0
    %4756 = vmatpush1.bf16.msra.mxu0 %v3633
    %4757 = vmatprep.subr.bf16.mxu0 0
    %4758 = vmatpush1.bf16.msra.mxu0 %v3634
    %4759 = vmatprep.subr.bf16.mxu0 0
    %4760 = vmatpush1.bf16.msra.mxu0 %v3635
    %4761 = vmatprep.subr.bf16.mxu0 0
    %4762 = vmatpush1.bf16.msra.mxu0 %v3636
    %4763 = vmatprep.subr.bf16.mxu0 0
    %4764 = vmatpush1.bf16.msra.mxu0 %v3637
    %4765 = vmatprep.subr.bf16.mxu0 0
    %4766 = vmatpush1.bf16.msra.mxu0 %v3638
    %4767 = vmatprep.subr.bf16.mxu0 0
    %4768 = vmatpush1.bf16.msra.mxu0 %v3639
    %4769 = vmatprep.subr.bf16.mxu0 0
    %4770 = vmatpush1.bf16.msra.mxu0 %v3640
    %4771 = vmatprep.subr.bf16.mxu0 0
    %4772 = vmatpush1.bf16.msra.mxu0 %v3641
    %4773 = vmatprep.subr.bf16.mxu0 0
    %4774 = vmatpush1.bf16.msra.mxu0 %v3642
    %4775 = vmatprep.subr.bf16.mxu0 0
    %4776 = vmatpush1.bf16.msra.mxu0 %v3643
    %4777 = vmatprep.subr.bf16.mxu0 0
    %4778 = vmatpush1.bf16.msra.mxu0 %v3644
    %4779 = vmatprep.subr.bf16.mxu0 0
    %4780 = vmatpush1.bf16.msra.mxu0 %v3645
    %4781 = vmatprep.subr.bf16.mxu0 0
    %4782 = vmatpush1.bf16.msra.mxu0 %v3646
    %4783 = vmatprep.mubr.bf16.mxu0 %v1149
    %4784 = vmatmul.mubr.bf16.gmra.mrb[0].mxu0 %v1135
    %v4785 = vpop.f32.mrb[0].mxu0
    %v4786 = vadd.f32 %v4746, %v4785
    %v4787 = vpop.f32.mrb[0].mxu0
    %v4788 = vpop.f32.mrb[0].mxu0
    %v4789 = vpop.f32.mrb[0].mxu0
    %4790 = vdwg.mxu0
    %4791 = vmatprep.subr.bf16.mxu0 0
    %4792 = vmatpush1.bf16.msra.mxu0 %v3647
    %4793 = vmatprep.subr.bf16.mxu0 0
    %4794 = vmatpush1.bf16.msra.mxu0 %v3648
    %4795 = vmatprep.subr.bf16.mxu0 0
    %4796 = vmatpush1.bf16.msra.mxu0 %v3649
    %4797 = vmatprep.subr.bf16.mxu0 0
    %4798 = vmatpush1.bf16.msra.mxu0 %v3650
    %4799 = vmatprep.subr.bf16.mxu0 0
    %4800 = vmatpush1.bf16.msra.mxu0 %v3651
    %4801 = vmatprep.subr.bf16.mxu0 0
    %4802 = vmatpush1.bf16.msra.mxu0 %v3652
    %4803 = vmatprep.subr.bf16.mxu0 0
    %4804 = vmatpush1.bf16.msra.mxu0 %v3653
    %4805 = vmatprep.subr.bf16.mxu0 0
    %4806 = vmatpush1.bf16.msra.mxu0 %v3654
    %4807 = vmatprep.subr.bf16.mxu0 0
    %4808 = vmatpush1.bf16.msra.mxu0 %v3655
    %4809 = vmatprep.subr.bf16.mxu0 0
    %4810 = vmatpush1.bf16.msra.mxu0 %v3656
    %4811 = vmatprep.subr.bf16.mxu0 0
    %4812 = vmatpush1.bf16.msra.mxu0 %v3657
    %4813 = vmatprep.subr.bf16.mxu0 0
    %4814 = vmatpush1.bf16.msra.mxu0 %v3658
    %4815 = vmatprep.subr.bf16.mxu0 0
    %4816 = vmatpush1.bf16.msra.mxu0 %v3659
    %4817 = vmatprep.subr.bf16.mxu0 0
    %4818 = vmatpush1.bf16.msra.mxu0 %v3660
    %4819 = vmatprep.subr.bf16.mxu0 0
    %4820 = vmatpush1.bf16.msra.mxu0 %v3661
    %4821 = vmatprep.subr.bf16.mxu0 0
    %4822 = vmatpush1.bf16.msra.mxu0 %v3662
    %4823 = vmatprep.mubr.bf16.mxu0 %v1159
    %4824 = vmatmul.mubr.bf16.gmra.mrb[0].mxu0 %v1157
    %v4825 = vpop.f32.mrb[0].mxu0
    %v4826 = vadd.f32 %v4786, %v4825
    %v4827 = vpop.f32.mrb[0].mxu0
    %v4828 = vpop.f32.mrb[0].mxu0
    %v4829 = vpop.f32.mrb[0].mxu0
    %4830 = vdwg.mxu0
    %4831 = vmatprep.subr.bf16.mxu0 0
    %4832 = vmatpush1.bf16.msra.mxu0 %v3663
    %4833 = vmatprep.subr.bf16.mxu0 0
    %4834 = vmatpush1.bf16.msra.mxu0 %v3664
    %4835 = vmatprep.subr.bf16.mxu0 0
    %4836 = vmatpush1.bf16.msra.mxu0 %v3665
    %4837 = vmatprep.subr.bf16.mxu0 0
    %4838 = vmatpush1.bf16.msra.mxu0 %v3666
    %4839 = vmatprep.subr.bf16.mxu0 0
    %4840 = vmatpush1.bf16.msra.mxu0 %v3667
    %4841 = vmatprep.subr.bf16.mxu0 0
    %4842 = vmatpush1.bf16.msra.mxu0 %v3668
    %4843 = vmatprep.subr.bf16.mxu0 0
    %4844 = vmatpush1.bf16.msra.mxu0 %v3669
    %4845 = vmatprep.subr.bf16.mxu0 0
    %4846 = vmatpush1.bf16.msra.mxu0 %v3670
    %4847 = vmatprep.subr.bf16.mxu0 0
    %4848 = vmatpush1.bf16.msra.mxu0 %v3671
    %4849 = vmatprep.subr.bf16.mxu0 0
    %4850 = vmatpush1.bf16.msra.mxu0 %v3672
    %4851 = vmatprep.subr.bf16.mxu0 0
    %4852 = vmatpush1.bf16.msra.mxu0 %v3673
    %4853 = vmatprep.subr.bf16.mxu0 0
    %4854 = vmatpush1.bf16.msra.mxu0 %v3674
    %4855 = vmatprep.subr.bf16.mxu0 0
    %4856 = vmatpush1.bf16.msra.mxu0 %v3675
    %4857 = vmatprep.subr.bf16.mxu0 0
    %4858 = vmatpush1.bf16.msra.mxu0 %v3676
    %4859 = vmatprep.subr.bf16.mxu0 0
    %4860 = vmatpush1.bf16.msra.mxu0 %v3677
    %4861 = vmatprep.subr.bf16.mxu0 0
    %4862 = vmatpush1.bf16.msra.mxu0 %v3678
    %4863 = vmatprep.mubr.bf16.mxu0 %v1156
    %4864 = vmatmul.mubr.bf16.gmra.mrb[0].mxu0 %v1142
    %v4865 = vpop.f32.mrb[0].mxu0
    %v4866 = vadd.f32 %v4826, %v4865
    %v4867 = vpop.f32.mrb[0].mxu0
    %v4868 = vpop.f32.mrb[0].mxu0
    %v4869 = vpop.f32.mrb[0].mxu0
    %4870 = vdwg.mxu0
    %4871 = vmatprep.subr.bf16.mxu0 0
    %4872 = vmatpush1.bf16.msra.mxu0 %v3679
    %4873 = vmatprep.subr.bf16.mxu0 0
    %4874 = vmatpush1.bf16.msra.mxu0 %v3680
    %4875 = vmatprep.subr.bf16.mxu0 0
    %4876 = vmatpush1.bf16.msra.mxu0 %v3681
    %4877 = vmatprep.subr.bf16.mxu0 0
    %4878 = vmatpush1.bf16.msra.mxu0 %v3682
    %4879 = vmatprep.subr.bf16.mxu0 0
    %4880 = vmatpush1.bf16.msra.mxu0 %v3683
    %4881 = vmatprep.subr.bf16.mxu0 0
    %4882 = vmatpush1.bf16.msra.mxu0 %v3684
    %4883 = vmatprep.subr.bf16.mxu0 0
    %4884 = vmatpush1.bf16.msra.mxu0 %v3685
    %4885 = vmatprep.subr.bf16.mxu0 0
    %4886 = vmatpush1.bf16.msra.mxu0 %v3686
    %4887 = vmatprep.subr.bf16.mxu0 0
    %4888 = vmatpush1.bf16.msra.mxu0 %v3687
    %4889 = vmatprep.subr.bf16.mxu0 0
    %4890 = vmatpush1.bf16.msra.mxu0 %v3688
    %4891 = vmatprep.subr.bf16.mxu0 0
    %4892 = vmatpush1.bf16.msra.mxu0 %v3689
    %4893 = vmatprep.subr.bf16.mxu0 0
    %4894 = vmatpush1.bf16.msra.mxu0 %v3690
    %4895 = vmatprep.subr.bf16.mxu0 0
    %4896 = vmatpush1.bf16.msra.mxu0 %v3691
    %4897 = vmatprep.subr.bf16.mxu0 0
    %4898 = vmatpush1.bf16.msra.mxu0 %v3692
    %4899 = vmatprep.subr.bf16.mxu0 0
    %4900 = vmatpush1.bf16.msra.mxu0 %v3693
    %4901 = vmatprep.subr.bf16.mxu0 0
    %4902 = vmatpush1.bf16.msra.mxu0 %v3694
    %4903 = vmatprep.mubr.bf16.mxu0 %v1160
    %4904 = vmatmul.mubr.bf16.gmra.mrb[0].mxu0 %v1158
    %v4905 = vpop.f32.mrb[0].mxu0
    %v4906 = vadd.f32 %v4866, %v4905
    %v4907 = vpop.f32.mrb[0].mxu0
    %v4908 = vpop.f32.mrb[0].mxu0
    %v4909 = vpop.f32.mrb[0].mxu0
    %4910 = vdwg.mxu0
    %4911 = vmatprep.subr.bf16.mxu0 0
    %4912 = vmatpush1.bf16.msra.mxu0 %v3695
    %4913 = vmatprep.subr.bf16.mxu0 0
    %4914 = vmatpush1.bf16.msra.mxu0 %v3696
    %4915 = vmatprep.subr.bf16.mxu0 0
    %4916 = vmatpush1.bf16.msra.mxu0 %v3697
    %4917 = vmatprep.subr.bf16.mxu0 0
    %4918 = vmatpush1.bf16.msra.mxu0 %v3698
    %4919 = vmatprep.subr.bf16.mxu0 0
    %4920 = vmatpush1.bf16.msra.mxu0 %v3699
    %4921 = vmatprep.subr.bf16.mxu0 0
    %4922 = vmatpush1.bf16.msra.mxu0 %v3700
    %4923 = vmatprep.subr.bf16.mxu0 0
    %4924 = vmatpush1.bf16.msra.mxu0 %v3701
    %4925 = vmatprep.subr.bf16.mxu0 0
    %4926 = vmatpush1.bf16.msra.mxu0 %v3702
    %4927 = vmatprep.subr.bf16.mxu0 0
    %4928 = vmatpush1.bf16.msra.mxu0 %v3703
    %4929 = vmatprep.subr.bf16.mxu0 0
    %4930 = vmatpush1.bf16.msra.mxu0 %v3704
    %4931 = vmatprep.subr.bf16.mxu0 0
    %4932 = vmatpush1.bf16.msra.mxu0 %v3705
    %4933 = vmatprep.subr.bf16.mxu0 0
    %4934 = vmatpush1.bf16.msra.mxu0 %v3706
    %4935 = vmatprep.subr.bf16.mxu0 0
    %4936 = vmatpush1.bf16.msra.mxu0 %v3707
    %4937 = vmatprep.subr.bf16.mxu0 0
    %4938 = vmatpush1.bf16.msra.mxu0 %v3708
    %4939 = vmatprep.subr.bf16.mxu0 0
    %4940 = vmatpush1.bf16.msra.mxu0 %v3709
    %4941 = vmatprep.subr.bf16.mxu0 0
    %4942 = vmatpush1.bf16.msra.mxu0 %v3710
    %4943 = vmatprep.mubr.bf16.mxu0 %v1198
    %4944 = vmatmul.mubr.bf16.gmra.mrb[0].mxu0 %v1184
    %v4945 = vpop.f32.mrb[0].mxu0
    %v4946 = vadd.f32 %v4906, %v4945
    %v4947 = vpop.f32.mrb[0].mxu0
    %v4948 = vpop.f32.mrb[0].mxu0
    %v4949 = vpop.f32.mrb[0].mxu0
    %4950 = vdwg.mxu0
    %4951 = vmatprep.subr.bf16.mxu0 0
    %4952 = vmatpush1.bf16.msra.mxu0 %v3711
    %4953 = vmatprep.subr.bf16.mxu0 0
    %4954 = vmatpush1.bf16.msra.mxu0 %v3712
    %4955 = vmatprep.subr.bf16.mxu0 0
    %4956 = vmatpush1.bf16.msra.mxu0 %v3713
    %4957 = vmatprep.subr.bf16.mxu0 0
    %4958 = vmatpush1.bf16.msra.mxu0 %v3714
    %4959 = vmatprep.subr.bf16.mxu0 0
    %4960 = vmatpush1.bf16.msra.mxu0 %v3715
    %4961 = vmatprep.subr.bf16.mxu0 0
    %4962 = vmatpush1.bf16.msra.mxu0 %v3716
    %4963 = vmatprep.subr.bf16.mxu0 0
    %4964 = vmatpush1.bf16.msra.mxu0 %v3717
    %4965 = vmatprep.subr.bf16.mxu0 0
    %4966 = vmatpush1.bf16.msra.mxu0 %v3718
    %4967 = vmatprep.subr.bf16.mxu0 0
    %4968 = vmatpush1.bf16.msra.mxu0 %v3719
    %4969 = vmatprep.subr.bf16.mxu0 0
    %4970 = vmatpush1.bf16.msra.mxu0 %v3720
    %4971 = vmatprep.subr.bf16.mxu0 0
    %4972 = vmatpush1.bf16.msra.mxu0 %v3721
    %4973 = vmatprep.subr.bf16.mxu0 0
    %4974 = vmatpush1.bf16.msra.mxu0 %v3722
    %4975 = vmatprep.subr.bf16.mxu0 0
    %4976 = vmatpush1.bf16.msra.mxu0 %v3723
    %4977 = vmatprep.subr.bf16.mxu0 0
    %4978 = vmatpush1.bf16.msra.mxu0 %v3724
    %4979 = vmatprep.subr.bf16.mxu0 0
    %4980 = vmatpush1.bf16.msra.mxu0 %v3725
    %4981 = vmatprep.subr.bf16.mxu0 0
    %4982 = vmatpush1.bf16.msra.mxu0 %v3726
    %4983 = vmatprep.mubr.bf16.mxu0 %v1208
    %4984 = vmatmul.mubr.bf16.gmra.mrb[0].mxu0 %v1206
    %v4985 = vpop.f32.mrb[0].mxu0
    %v4986 = vadd.f32 %v4946, %v4985
    %v4987 = vpop.f32.mrb[0].mxu0
    %v4988 = vpop.f32.mrb[0].mxu0
    %v4989 = vpop.f32.mrb[0].mxu0
    %4990 = vdwg.mxu0
    %4991 = vmatprep.subr.bf16.mxu0 0
    %4992 = vmatpush1.bf16.msra.mxu0 %v3727
    %4993 = vmatprep.subr.bf16.mxu0 0
    %4994 = vmatpush1.bf16.msra.mxu0 %v3728
    %4995 = vmatprep.subr.bf16.mxu0 0
    %4996 = vmatpush1.bf16.msra.mxu0 %v3729
    %4997 = vmatprep.subr.bf16.mxu0 0
    %4998 = vmatpush1.bf16.msra.mxu0 %v3730
    %4999 = vmatprep.subr.bf16.mxu0 0
    %5000 = vmatpush1.bf16.msra.mxu0 %v3731
    %5001 = vmatprep.subr.bf16.mxu0 0
    %5002 = vmatpush1.bf16.msra.mxu0 %v3732
    %5003 = vmatprep.subr.bf16.mxu0 0
    %5004 = vmatpush1.bf16.msra.mxu0 %v3733
    %5005 = vmatprep.subr.bf16.mxu0 0
    %5006 = vmatpush1.bf16.msra.mxu0 %v3734
    %5007 = vmatprep.subr.bf16.mxu0 0
    %5008 = vmatpush1.bf16.msra.mxu0 %v3735
    %5009 = vmatprep.subr.bf16.mxu0 0
    %5010 = vmatpush1.bf16.msra.mxu0 %v3736
    %5011 = vmatprep.subr.bf16.mxu0 0
    %5012 = vmatpush1.bf16.msra.mxu0 %v3737
    %5013 = vmatprep.subr.bf16.mxu0 0
    %5014 = vmatpush1.bf16.msra.mxu0 %v3738
    %5015 = vmatprep.subr.bf16.mxu0 0
    %5016 = vmatpush1.bf16.msra.mxu0 %v3739
    %5017 = vmatprep.subr.bf16.mxu0 0
    %5018 = vmatpush1.bf16.msra.mxu0 %v3740
    %5019 = vmatprep.subr.bf16.mxu0 0
    %5020 = vmatpush1.bf16.msra.mxu0 %v3741
    %5021 = vmatprep.subr.bf16.mxu0 0
    %5022 = vmatpush1.bf16.msra.mxu0 %v3742
    %5023 = vmatprep.mubr.bf16.mxu0 %v1205
    %5024 = vmatmul.mubr.bf16.gmra.mrb[0].mxu0 %v1191
    %v5025 = vpop.f32.mrb[0].mxu0
    %v5026 = vadd.f32 %v4986, %v5025
    %v5027 = vpop.f32.mrb[0].mxu0
    %v5028 = vpop.f32.mrb[0].mxu0
    %v5029 = vpop.f32.mrb[0].mxu0
    %5030 = vdwg.mxu0
    %5031 = vmatprep.subr.bf16.mxu0 0
    %5032 = vmatpush1.bf16.msra.mxu0 %v3743
    %5033 = vmatprep.subr.bf16.mxu0 0
    %5034 = vmatpush1.bf16.msra.mxu0 %v3744
    %5035 = vmatprep.subr.bf16.mxu0 0
    %5036 = vmatpush1.bf16.msra.mxu0 %v3745
    %5037 = vmatprep.subr.bf16.mxu0 0
    %5038 = vmatpush1.bf16.msra.mxu0 %v3746
    %5039 = vmatprep.subr.bf16.mxu0 0
    %5040 = vmatpush1.bf16.msra.mxu0 %v3747
    %5041 = vmatprep.subr.bf16.mxu0 0
    %5042 = vmatpush1.bf16.msra.mxu0 %v3748
    %5043 = vmatprep.subr.bf16.mxu0 0
    %5044 = vmatpush1.bf16.msra.mxu0 %v3749
    %5045 = vmatprep.subr.bf16.mxu0 0
    %5046 = vmatpush1.bf16.msra.mxu0 %v3750
    %5047 = vmatprep.subr.bf16.mxu0 0
    %5048 = vmatpush1.bf16.msra.mxu0 %v3751
    %5049 = vmatprep.subr.bf16.mxu0 0
    %5050 = vmatpush1.bf16.msra.mxu0 %v3752
    %5051 = vmatprep.subr.bf16.mxu0 0
    %5052 = vmatpush1.bf16.msra.mxu0 %v3753
    %5053 = vmatprep.subr.bf16.mxu0 0
    %5054 = vmatpush1.bf16.msra.mxu0 %v3754
    %5055 = vmatprep.subr.bf16.mxu0 0
    %5056 = vmatpush1.bf16.msra.mxu0 %v3755
    %5057 = vmatprep.subr.bf16.mxu0 0
    %5058 = vmatpush1.bf16.msra.mxu0 %v3756
    %5059 = vmatprep.subr.bf16.mxu0 0
    %5060 = vmatpush1.bf16.msra.mxu0 %v3757
    %5061 = vmatprep.subr.bf16.mxu0 0
    %5062 = vmatpush1.bf16.msra.mxu0 %v3758
    %5063 = vmatprep.mubr.bf16.mxu0 %v1209
    %5064 = vmatmul.mubr.bf16.gmra.mrb[0].mxu0 %v1207
    %v5065 = vpop.f32.mrb[0].mxu0
    %v5066 = vadd.f32 %v5026, %v5065
    %v5067 = vpop.f32.mrb[0].mxu0
    %v5068 = vpop.f32.mrb[0].mxu0
    %v5069 = vpop.f32.mrb[0].mxu0
    %5070 = vdwg.mxu0
    %5071 = vmatprep.subr.bf16.mxu0 0
    %5072 = vmatpush1.bf16.msra.mxu0 %v3759
    %5073 = vmatprep.subr.bf16.mxu0 0
    %5074 = vmatpush1.bf16.msra.mxu0 %v3760
    %5075 = vmatprep.subr.bf16.mxu0 0
    %5076 = vmatpush1.bf16.msra.mxu0 %v3761
    %5077 = vmatprep.subr.bf16.mxu0 0
    %5078 = vmatpush1.bf16.msra.mxu0 %v3762
    %5079 = vmatprep.subr.bf16.mxu0 0
    %5080 = vmatpush1.bf16.msra.mxu0 %v3763
    %5081 = vmatprep.subr.bf16.mxu0 0
    %5082 = vmatpush1.bf16.msra.mxu0 %v3764
    %5083 = vmatprep.subr.bf16.mxu0 0
    %5084 = vmatpush1.bf16.msra.mxu0 %v3765
    %5085 = vmatprep.subr.bf16.mxu0 0
    %5086 = vmatpush1.bf16.msra.mxu0 %v3766
    %5087 = vmatprep.subr.bf16.mxu0 0
    %5088 = vmatpush1.bf16.msra.mxu0 %v3767
    %5089 = vmatprep.subr.bf16.mxu0 0
    %5090 = vmatpush1.bf16.msra.mxu0 %v3768
    %5091 = vmatprep.subr.bf16.mxu0 0
    %5092 = vmatpush1.bf16.msra.mxu0 %v3769
    %5093 = vmatprep.subr.bf16.mxu0 0
    %5094 = vmatpush1.bf16.msra.mxu0 %v3770
    %5095 = vmatprep.subr.bf16.mxu0 0
    %5096 = vmatpush1.bf16.msra.mxu0 %v3771
    %5097 = vmatprep.subr.bf16.mxu0 0
    %5098 = vmatpush1.bf16.msra.mxu0 %v3772
    %5099 = vmatprep.subr.bf16.mxu0 0
    %5100 = vmatpush1.bf16.msra.mxu0 %v3773
    %5101 = vmatprep.subr.bf16.mxu0 0
    %5102 = vmatpush1.bf16.msra.mxu0 %v3774
    %5103 = vmatprep.mubr.bf16.mxu0 %v1247
    %5104 = vmatmul.mubr.bf16.gmra.mrb[0].mxu0 %v1233
    %v5105 = vpop.f32.mrb[0].mxu0
    %v5106 = vadd.f32 %v5066, %v5105
    %v5107 = vpop.f32.mrb[0].mxu0
    %v5108 = vpop.f32.mrb[0].mxu0
    %v5109 = vpop.f32.mrb[0].mxu0
    %5110 = vdwg.mxu0
    %5111 = vmatprep.subr.bf16.mxu0 0
    %5112 = vmatpush1.bf16.msra.mxu0 %v3775
    %5113 = vmatprep.subr.bf16.mxu0 0
    %5114 = vmatpush1.bf16.msra.mxu0 %v3776
    %5115 = vmatprep.subr.bf16.mxu0 0
    %5116 = vmatpush1.bf16.msra.mxu0 %v3777
    %5117 = vmatprep.subr.bf16.mxu0 0
    %5118 = vmatpush1.bf16.msra.mxu0 %v3778
    %5119 = vmatprep.subr.bf16.mxu0 0
    %5120 = vmatpush1.bf16.msra.mxu0 %v3779
    %5121 = vmatprep.subr.bf16.mxu0 0
    %5122 = vmatpush1.bf16.msra.mxu0 %v3780
    %5123 = vmatprep.subr.bf16.mxu0 0
    %5124 = vmatpush1.bf16.msra.mxu0 %v3781
    %5125 = vmatprep.subr.bf16.mxu0 0
    %5126 = vmatpush1.bf16.msra.mxu0 %v3782
    %5127 = vmatprep.subr.bf16.mxu0 0
    %5128 = vmatpush1.bf16.msra.mxu0 %v3783
    %5129 = vmatprep.subr.bf16.mxu0 0
    %5130 = vmatpush1.bf16.msra.mxu0 %v3784
    %5131 = vmatprep.subr.bf16.mxu0 0
    %5132 = vmatpush1.bf16.msra.mxu0 %v3785
    %5133 = vmatprep.subr.bf16.mxu0 0
    %5134 = vmatpush1.bf16.msra.mxu0 %v3786
    %5135 = vmatprep.subr.bf16.mxu0 0
    %5136 = vmatpush1.bf16.msra.mxu0 %v3787
    %5137 = vmatprep.subr.bf16.mxu0 0
    %5138 = vmatpush1.bf16.msra.mxu0 %v3788
    %5139 = vmatprep.subr.bf16.mxu0 0
    %5140 = vmatpush1.bf16.msra.mxu0 %v3789
    %5141 = vmatprep.subr.bf16.mxu0 0
    %5142 = vmatpush1.bf16.msra.mxu0 %v3790
    %5143 = vmatprep.mubr.bf16.mxu0 %v1257
    %5144 = vmatmul.mubr.bf16.gmra.mrb[0].mxu0 %v1255
    %v5145 = vpop.f32.mrb[0].mxu0
    %v5146 = vadd.f32 %v5106, %v5145
    %v5147 = vpop.f32.mrb[0].mxu0
    %v5148 = vpop.f32.mrb[0].mxu0
    %v5149 = vpop.f32.mrb[0].mxu0
    %5150 = vdwg.mxu0
    %5151 = vmatprep.subr.bf16.mxu0 0
    %5152 = vmatpush1.bf16.msra.mxu0 %v3791
    %5153 = vmatprep.subr.bf16.mxu0 0
    %5154 = vmatpush1.bf16.msra.mxu0 %v3792
    %5155 = vmatprep.subr.bf16.mxu0 0
    %5156 = vmatpush1.bf16.msra.mxu0 %v3793
    %5157 = vmatprep.subr.bf16.mxu0 0
    %5158 = vmatpush1.bf16.msra.mxu0 %v3794
    %5159 = vmatprep.subr.bf16.mxu0 0
    %5160 = vmatpush1.bf16.msra.mxu0 %v3795
    %5161 = vmatprep.subr.bf16.mxu0 0
    %5162 = vmatpush1.bf16.msra.mxu0 %v3796
    %5163 = vmatprep.subr.bf16.mxu0 0
    %5164 = vmatpush1.bf16.msra.mxu0 %v3797
    %5165 = vmatprep.subr.bf16.mxu0 0
    %5166 = vmatpush1.bf16.msra.mxu0 %v3798
    %5167 = vmatprep.subr.bf16.mxu0 0
    %5168 = vmatpush1.bf16.msra.mxu0 %v3799
    %5169 = vmatprep.subr.bf16.mxu0 0
    %5170 = vmatpush1.bf16.msra.mxu0 %v3800
    %5171 = vmatprep.subr.bf16.mxu0 0
    %5172 = vmatpush1.bf16.msra.mxu0 %v3801
    %5173 = vmatprep.subr.bf16.mxu0 0
    %5174 = vmatpush1.bf16.msra.mxu0 %v3802
    %5175 = vmatprep.subr.bf16.mxu0 0
    %5176 = vmatpush1.bf16.msra.mxu0 %v3803
    %5177 = vmatprep.subr.bf16.mxu0 0
    %5178 = vmatpush1.bf16.msra.mxu0 %v3804
    %5179 = vmatprep.subr.bf16.mxu0 0
    %5180 = vmatpush1.bf16.msra.mxu0 %v3805
    %5181 = vmatprep.subr.bf16.mxu0 0
    %5182 = vmatpush1.bf16.msra.mxu0 %v3806
    %5183 = vmatprep.mubr.bf16.mxu0 %v1254
    %5184 = vmatmul.mubr.bf16.gmra.mrb[0].mxu0 %v1240
    %v5185 = vpop.f32.mrb[0].mxu0
    %v5186 = vadd.f32 %v5146, %v5185
    %v5187 = vpop.f32.mrb[0].mxu0
    %v5188 = vpop.f32.mrb[0].mxu0
    %v5189 = vpop.f32.mrb[0].mxu0
    %5190 = vdwg.mxu0
    %5191 = vmatprep.subr.bf16.mxu0 0
    %5192 = vmatpush1.bf16.msra.mxu0 %v3807
    %5193 = vmatprep.subr.bf16.mxu0 0
    %5194 = vmatpush1.bf16.msra.mxu0 %v3808
    %5195 = vmatprep.subr.bf16.mxu0 0
    %5196 = vmatpush1.bf16.msra.mxu0 %v3809
    %5197 = vmatprep.subr.bf16.mxu0 0
    %5198 = vmatpush1.bf16.msra.mxu0 %v3810
    %5199 = vmatprep.subr.bf16.mxu0 0
    %5200 = vmatpush1.bf16.msra.mxu0 %v3811
    %5201 = vmatprep.subr.bf16.mxu0 0
    %5202 = vmatpush1.bf16.msra.mxu0 %v3812
    %5203 = vmatprep.subr.bf16.mxu0 0
    %5204 = vmatpush1.bf16.msra.mxu0 %v3813
    %5205 = vmatprep.subr.bf16.mxu0 0
    %5206 = vmatpush1.bf16.msra.mxu0 %v3814
    %5207 = vmatprep.subr.bf16.mxu0 0
    %5208 = vmatpush1.bf16.msra.mxu0 %v3815
    %5209 = vmatprep.subr.bf16.mxu0 0
    %5210 = vmatpush1.bf16.msra.mxu0 %v3816
    %5211 = vmatprep.subr.bf16.mxu0 0
    %5212 = vmatpush1.bf16.msra.mxu0 %v3817
    %5213 = vmatprep.subr.bf16.mxu0 0
    %5214 = vmatpush1.bf16.msra.mxu0 %v3818
    %5215 = vmatprep.subr.bf16.mxu0 0
    %5216 = vmatpush1.bf16.msra.mxu0 %v3819
    %5217 = vmatprep.subr.bf16.mxu0 0
    %5218 = vmatpush1.bf16.msra.mxu0 %v3820
    %5219 = vmatprep.subr.bf16.mxu0 0
    %5220 = vmatpush1.bf16.msra.mxu0 %v3821
    %5221 = vmatprep.subr.bf16.mxu0 0
    %5222 = vmatpush1.bf16.msra.mxu0 %v3822
    %5223 = vmatprep.mubr.bf16.mxu0 %v1258
    %5224 = vmatmul.mubr.bf16.gmra.mrb[0].mxu0 %v1256
    %v5225 = vpop.f32.mrb[0].mxu0
    %v5226 = vadd.f32 %v5186, %v5225
    %v5227 = vpop.f32.mrb[0].mxu0
    %v5228 = vpop.f32.mrb[0].mxu0
    %v5229 = vpop.f32.mrb[0].mxu0
    %5230 = vdwg.mxu0
    %5231 = vmatprep.subr.bf16.mxu0 0
    %5232 = vmatpush1.bf16.msra.mxu0 %v3823
    %5233 = vmatprep.subr.bf16.mxu0 0
    %5234 = vmatpush1.bf16.msra.mxu0 %v3824
    %5235 = vmatprep.subr.bf16.mxu0 0
    %5236 = vmatpush1.bf16.msra.mxu0 %v3825
    %5237 = vmatprep.subr.bf16.mxu0 0
    %5238 = vmatpush1.bf16.msra.mxu0 %v3826
    %5239 = vmatprep.subr.bf16.mxu0 0
    %5240 = vmatpush1.bf16.msra.mxu0 %v3827
    %5241 = vmatprep.subr.bf16.mxu0 0
    %5242 = vmatpush1.bf16.msra.mxu0 %v3828
    %5243 = vmatprep.subr.bf16.mxu0 0
    %5244 = vmatpush1.bf16.msra.mxu0 %v3829
    %5245 = vmatprep.subr.bf16.mxu0 0
    %5246 = vmatpush1.bf16.msra.mxu0 %v3830
    %5247 = vmatprep.subr.bf16.mxu0 0
    %5248 = vmatpush1.bf16.msra.mxu0 %v3831
    %5249 = vmatprep.subr.bf16.mxu0 0
    %5250 = vmatpush1.bf16.msra.mxu0 %v3832
    %5251 = vmatprep.subr.bf16.mxu0 0
    %5252 = vmatpush1.bf16.msra.mxu0 %v3833
    %5253 = vmatprep.subr.bf16.mxu0 0
    %5254 = vmatpush1.bf16.msra.mxu0 %v3834
    %5255 = vmatprep.subr.bf16.mxu0 0
    %5256 = vmatpush1.bf16.msra.mxu0 %v3835
    %5257 = vmatprep.subr.bf16.mxu0 0
    %5258 = vmatpush1.bf16.msra.mxu0 %v3836
    %5259 = vmatprep.subr.bf16.mxu0 0
    %5260 = vmatpush1.bf16.msra.mxu0 %v3837
    %5261 = vmatprep.subr.bf16.mxu0 0
    %5262 = vmatpush1.bf16.msra.mxu0 %v3838
    %5263 = vmatprep.mubr.bf16.mxu0 %v1296
    %5264 = vmatmul.mubr.bf16.gmra.mrb[0].mxu0 %v1282
    %v5265 = vpop.f32.mrb[0].mxu0
    %v5266 = vadd.f32 %v5226, %v5265
    %v5267 = vpop.f32.mrb[0].mxu0
    %v5268 = vpop.f32.mrb[0].mxu0
    %v5269 = vpop.f32.mrb[0].mxu0
    %5270 = vdwg.mxu0
    %5271 = vmatprep.subr.bf16.mxu0 0
    %5272 = vmatpush1.bf16.msra.mxu0 %v3839
    %5273 = vmatprep.subr.bf16.mxu0 0
    %5274 = vmatpush1.bf16.msra.mxu0 %v3840
    %5275 = vmatprep.subr.bf16.mxu0 0
    %5276 = vmatpush1.bf16.msra.mxu0 %v3841
    %5277 = vmatprep.subr.bf16.mxu0 0
    %5278 = vmatpush1.bf16.msra.mxu0 %v3842
    %5279 = vmatprep.subr.bf16.mxu0 0
    %5280 = vmatpush1.bf16.msra.mxu0 %v3843
    %5281 = vmatprep.subr.bf16.mxu0 0
    %5282 = vmatpush1.bf16.msra.mxu0 %v3844
    %5283 = vmatprep.subr.bf16.mxu0 0
    %5284 = vmatpush1.bf16.msra.mxu0 %v3845
    %5285 = vmatprep.subr.bf16.mxu0 0
    %5286 = vmatpush1.bf16.msra.mxu0 %v3846
    %5287 = vmatprep.subr.bf16.mxu0 0
    %5288 = vmatpush1.bf16.msra.mxu0 %v3847
    %5289 = vmatprep.subr.bf16.mxu0 0
    %5290 = vmatpush1.bf16.msra.mxu0 %v3848
    %5291 = vmatprep.subr.bf16.mxu0 0
    %5292 = vmatpush1.bf16.msra.mxu0 %v3849
    %5293 = vmatprep.subr.bf16.mxu0 0
    %5294 = vmatpush1.bf16.msra.mxu0 %v3850
    %5295 = vmatprep.subr.bf16.mxu0 0
    %5296 = vmatpush1.bf16.msra.mxu0 %v3851
    %5297 = vmatprep.subr.bf16.mxu0 0
    %5298 = vmatpush1.bf16.msra.mxu0 %v3852
    %5299 = vmatprep.subr.bf16.mxu0 0
    %5300 = vmatpush1.bf16.msra.mxu0 %v3853
    %5301 = vmatprep.subr.bf16.mxu0 0
    %5302 = vmatpush1.bf16.msra.mxu0 %v3854
    %5303 = vmatprep.mubr.bf16.mxu0 %v1306
    %5304 = vmatmul.mubr.bf16.gmra.mrb[0].mxu0 %v1304
    %v5305 = vpop.f32.mrb[0].mxu0
    %v5306 = vadd.f32 %v5266, %v5305
    %v5307 = vpop.f32.mrb[0].mxu0
    %v5308 = vpop.f32.mrb[0].mxu0
    %v5309 = vpop.f32.mrb[0].mxu0
    %5310 = vdwg.mxu0
    %5311 = vmatprep.subr.bf16.mxu0 0
    %5312 = vmatpush1.bf16.msra.mxu0 %v3855
    %5313 = vmatprep.subr.bf16.mxu0 0
    %5314 = vmatpush1.bf16.msra.mxu0 %v3856
    %5315 = vmatprep.subr.bf16.mxu0 0
    %5316 = vmatpush1.bf16.msra.mxu0 %v3857
    %5317 = vmatprep.subr.bf16.mxu0 0
    %5318 = vmatpush1.bf16.msra.mxu0 %v3858
    %5319 = vmatprep.subr.bf16.mxu0 0
    %5320 = vmatpush1.bf16.msra.mxu0 %v3859
    %5321 = vmatprep.subr.bf16.mxu0 0
    %5322 = vmatpush1.bf16.msra.mxu0 %v3860
    %5323 = vmatprep.subr.bf16.mxu0 0
    %5324 = vmatpush1.bf16.msra.mxu0 %v3861
    %5325 = vmatprep.subr.bf16.mxu0 0
    %5326 = vmatpush1.bf16.msra.mxu0 %v3862
    %5327 = vmatprep.subr.bf16.mxu0 0
    %5328 = vmatpush1.bf16.msra.mxu0 %v3863
    %5329 = vmatprep.subr.bf16.mxu0 0
    %5330 = vmatpush1.bf16.msra.mxu0 %v3864
    %5331 = vmatprep.subr.bf16.mxu0 0
    %5332 = vmatpush1.bf16.msra.mxu0 %v3865
    %5333 = vmatprep.subr.bf16.mxu0 0
    %5334 = vmatpush1.bf16.msra.mxu0 %v3866
    %5335 = vmatprep.subr.bf16.mxu0 0
    %5336 = vmatpush1.bf16.msra.mxu0 %v3867
    %5337 = vmatprep.subr.bf16.mxu0 0
    %5338 = vmatpush1.bf16.msra.mxu0 %v3868
    %5339 = vmatprep.subr.bf16.mxu0 0
    %5340 = vmatpush1.bf16.msra.mxu0 %v3869
    %5341 = vmatprep.subr.bf16.mxu0 0
    %5342 = vmatpush1.bf16.msra.mxu0 %v3870
    %5343 = vmatprep.mubr.bf16.mxu0 %v1303
    %5344 = vmatmul.mubr.bf16.gmra.mrb[0].mxu0 %v1289
    %v5345 = vpop.f32.mrb[0].mxu0
    %v5346 = vadd.f32 %v5306, %v5345
    %v5347 = vpop.f32.mrb[0].mxu0
    %v5348 = vpop.f32.mrb[0].mxu0
    %v5349 = vpop.f32.mrb[0].mxu0
    %5350 = vdwg.mxu0
    %5351 = vmatprep.subr.bf16.mxu0 0
    %5352 = vmatpush1.bf16.msra.mxu0 %v3871
    %5353 = vmatprep.subr.bf16.mxu0 0
    %5354 = vmatpush1.bf16.msra.mxu0 %v3872
    %5355 = vmatprep.subr.bf16.mxu0 0
    %5356 = vmatpush1.bf16.msra.mxu0 %v3873
    %5357 = vmatprep.subr.bf16.mxu0 0
    %5358 = vmatpush1.bf16.msra.mxu0 %v3874
    %5359 = vmatprep.subr.bf16.mxu0 0
    %5360 = vmatpush1.bf16.msra.mxu0 %v3875
    %5361 = vmatprep.subr.bf16.mxu0 0
    %5362 = vmatpush1.bf16.msra.mxu0 %v3876
    %5363 = vmatprep.subr.bf16.mxu0 0
    %5364 = vmatpush1.bf16.msra.mxu0 %v3877
    %5365 = vmatprep.subr.bf16.mxu0 0
    %5366 = vmatpush1.bf16.msra.mxu0 %v3878
    %5367 = vmatprep.subr.bf16.mxu0 0
    %5368 = vmatpush1.bf16.msra.mxu0 %v3879
    %5369 = vmatprep.subr.bf16.mxu0 0
    %5370 = vmatpush1.bf16.msra.mxu0 %v3880
    %5371 = vmatprep.subr.bf16.mxu0 0
    %5372 = vmatpush1.bf16.msra.mxu0 %v3881
    %5373 = vmatprep.subr.bf16.mxu0 0
    %5374 = vmatpush1.bf16.msra.mxu0 %v3882
    %5375 = vmatprep.subr.bf16.mxu0 0
    %5376 = vmatpush1.bf16.msra.mxu0 %v3883
    %5377 = vmatprep.subr.bf16.mxu0 0
    %5378 = vmatpush1.bf16.msra.mxu0 %v3884
    %5379 = vmatprep.subr.bf16.mxu0 0
    %5380 = vmatpush1.bf16.msra.mxu0 %v3885
    %5381 = vmatprep.subr.bf16.mxu0 0
    %5382 = vmatpush1.bf16.msra.mxu0 %v3886
    %5383 = vmatprep.mubr.bf16.mxu0 %v1307
    %5384 = vmatmul.mubr.bf16.gmra.mrb[0].mxu0 %v1305
    %v5385 = vpop.f32.mrb[0].mxu0
    %v5386 = vadd.f32 %v5346, %v5385
    %v5387 = vpop.f32.mrb[0].mxu0
    %v5388 = vpop.f32.mrb[0].mxu0
    %v5389 = vpop.f32.mrb[0].mxu0
    %5390 = vdwg.mxu0
    %5391 = vmatprep.subr.bf16.mxu0 0
    %5392 = vmatpush1.bf16.msra.mxu0 %v3887
    %5393 = vmatprep.subr.bf16.mxu0 0
    %5394 = vmatpush1.bf16.msra.mxu0 %v3888
    %5395 = vmatprep.subr.bf16.mxu0 0
    %5396 = vmatpush1.bf16.msra.mxu0 %v3889
    %5397 = vmatprep.subr.bf16.mxu0 0
    %5398 = vmatpush1.bf16.msra.mxu0 %v3890
    %5399 = vmatprep.subr.bf16.mxu0 0
    %5400 = vmatpush1.bf16.msra.mxu0 %v3891
    %5401 = vmatprep.subr.bf16.mxu0 0
    %5402 = vmatpush1.bf16.msra.mxu0 %v3892
    %5403 = vmatprep.subr.bf16.mxu0 0
    %5404 = vmatpush1.bf16.msra.mxu0 %v3893
    %5405 = vmatprep.subr.bf16.mxu0 0
    %5406 = vmatpush1.bf16.msra.mxu0 %v3894
    %5407 = vmatprep.subr.bf16.mxu0 0
    %5408 = vmatpush1.bf16.msra.mxu0 %v3895
    %5409 = vmatprep.subr.bf16.mxu0 0
    %5410 = vmatpush1.bf16.msra.mxu0 %v3896
    %5411 = vmatprep.subr.bf16.mxu0 0
    %5412 = vmatpush1.bf16.msra.mxu0 %v3897
    %5413 = vmatprep.subr.bf16.mxu0 0
    %5414 = vmatpush1.bf16.msra.mxu0 %v3898
    %5415 = vmatprep.subr.bf16.mxu0 0
    %5416 = vmatpush1.bf16.msra.mxu0 %v3899
    %5417 = vmatprep.subr.bf16.mxu0 0
    %5418 = vmatpush1.bf16.msra.mxu0 %v3900
    %5419 = vmatprep.subr.bf16.mxu0 0
    %5420 = vmatpush1.bf16.msra.mxu0 %v3901
    %5421 = vmatprep.subr.bf16.mxu0 0
    %5422 = vmatpush1.bf16.msra.mxu0 %v3902
    %5423 = vmatprep.mubr.bf16.mxu0 %v1345
    %5424 = vmatmul.mubr.bf16.gmra.mrb[0].mxu0 %v1331
    %v5425 = vpop.f32.mrb[0].mxu0
    %v5426 = vadd.f32 %v5386, %v5425
    %v5427 = vpop.f32.mrb[0].mxu0
    %v5428 = vpop.f32.mrb[0].mxu0
    %v5429 = vpop.f32.mrb[0].mxu0
    %5430 = vdwg.mxu0
    %5431 = vmatprep.subr.bf16.mxu0 0
    %5432 = vmatpush1.bf16.msra.mxu0 %v3903
    %5433 = vmatprep.subr.bf16.mxu0 0
    %5434 = vmatpush1.bf16.msra.mxu0 %v3904
    %5435 = vmatprep.subr.bf16.mxu0 0
    %5436 = vmatpush1.bf16.msra.mxu0 %v3905
    %5437 = vmatprep.subr.bf16.mxu0 0
    %5438 = vmatpush1.bf16.msra.mxu0 %v3906
    %5439 = vmatprep.subr.bf16.mxu0 0
    %5440 = vmatpush1.bf16.msra.mxu0 %v3907
    %5441 = vmatprep.subr.bf16.mxu0 0
    %5442 = vmatpush1.bf16.msra.mxu0 %v3908
    %5443 = vmatprep.subr.bf16.mxu0 0
    %5444 = vmatpush1.bf16.msra.mxu0 %v3909
    %5445 = vmatprep.subr.bf16.mxu0 0
    %5446 = vmatpush1.bf16.msra.mxu0 %v3910
    %5447 = vmatprep.subr.bf16.mxu0 0
    %5448 = vmatpush1.bf16.msra.mxu0 %v3911
    %5449 = vmatprep.subr.bf16.mxu0 0
    %5450 = vmatpush1.bf16.msra.mxu0 %v3912
    %5451 = vmatprep.subr.bf16.mxu0 0
    %5452 = vmatpush1.bf16.msra.mxu0 %v3913
    %5453 = vmatprep.subr.bf16.mxu0 0
    %5454 = vmatpush1.bf16.msra.mxu0 %v3914
    %5455 = vmatprep.subr.bf16.mxu0 0
    %5456 = vmatpush1.bf16.msra.mxu0 %v3915
    %5457 = vmatprep.subr.bf16.mxu0 0
    %5458 = vmatpush1.bf16.msra.mxu0 %v3916
    %5459 = vmatprep.subr.bf16.mxu0 0
    %5460 = vmatpush1.bf16.msra.mxu0 %v3917
    %5461 = vmatprep.subr.bf16.mxu0 0
    %5462 = vmatpush1.bf16.msra.mxu0 %v3918
    %5463 = vmatprep.mubr.bf16.mxu0 %v1355
    %5464 = vmatmul.mubr.bf16.gmra.mrb[0].mxu0 %v1353
    %v5465 = vpop.f32.mrb[0].mxu0
    %v5466 = vadd.f32 %v5426, %v5465
    %v5467 = vpop.f32.mrb[0].mxu0
    %v5468 = vpop.f32.mrb[0].mxu0
    %v5469 = vpop.f32.mrb[0].mxu0
    %5470 = vdwg.mxu0
    %5471 = vmatprep.subr.bf16.mxu0 0
    %5472 = vmatpush1.bf16.msra.mxu0 %v3919
    %5473 = vmatprep.subr.bf16.mxu0 0
    %5474 = vmatpush1.bf16.msra.mxu0 %v3920
    %5475 = vmatprep.subr.bf16.mxu0 0
    %5476 = vmatpush1.bf16.msra.mxu0 %v3921
    %5477 = vmatprep.subr.bf16.mxu0 0
    %5478 = vmatpush1.bf16.msra.mxu0 %v3922
    %5479 = vmatprep.subr.bf16.mxu0 0
    %5480 = vmatpush1.bf16.msra.mxu0 %v3923
    %5481 = vmatprep.subr.bf16.mxu0 0
    %5482 = vmatpush1.bf16.msra.mxu0 %v3924
    %5483 = vmatprep.subr.bf16.mxu0 0
    %5484 = vmatpush1.bf16.msra.mxu0 %v3925
    %5485 = vmatprep.subr.bf16.mxu0 0
    %5486 = vmatpush1.bf16.msra.mxu0 %v3926
    %5487 = vmatprep.subr.bf16.mxu0 0
    %5488 = vmatpush1.bf16.msra.mxu0 %v3927
    %5489 = vmatprep.subr.bf16.mxu0 0
    %5490 = vmatpush1.bf16.msra.mxu0 %v3928
    %5491 = vmatprep.subr.bf16.mxu0 0
    %5492 = vmatpush1.bf16.msra.mxu0 %v3929
    %5493 = vmatprep.subr.bf16.mxu0 0
    %5494 = vmatpush1.bf16.msra.mxu0 %v3930
    %5495 = vmatprep.subr.bf16.mxu0 0
    %5496 = vmatpush1.bf16.msra.mxu0 %v3931
    %5497 = vmatprep.subr.bf16.mxu0 0
    %5498 = vmatpush1.bf16.msra.mxu0 %v3932
    %5499 = vmatprep.subr.bf16.mxu0 0
    %5500 = vmatpush1.bf16.msra.mxu0 %v3933
    %5501 = vmatprep.subr.bf16.mxu0 0
    %5502 = vmatpush1.bf16.msra.mxu0 %v3934
    %5503 = vmatprep.mubr.bf16.mxu0 %v1352
    %5504 = vmatmul.mubr.bf16.gmra.mrb[0].mxu0 %v1338
    %v5505 = vpop.f32.mrb[0].mxu0
    %v5506 = vadd.f32 %v5466, %v5505
    %v5507 = vpop.f32.mrb[0].mxu0
    %v5508 = vpop.f32.mrb[0].mxu0
    %v5509 = vpop.f32.mrb[0].mxu0
    %5510 = vdwg.mxu0
    %5511 = vmatprep.subr.bf16.mxu0 0
    %5512 = vmatpush1.bf16.msra.mxu0 %v3935
    %5513 = vmatprep.subr.bf16.mxu0 0
    %5514 = vmatpush1.bf16.msra.mxu0 %v3936
    %5515 = vmatprep.subr.bf16.mxu0 0
    %5516 = vmatpush1.bf16.msra.mxu0 %v3937
    %5517 = vmatprep.subr.bf16.mxu0 0
    %5518 = vmatpush1.bf16.msra.mxu0 %v3938
    %5519 = vmatprep.subr.bf16.mxu0 0
    %5520 = vmatpush1.bf16.msra.mxu0 %v3939
    %5521 = vmatprep.subr.bf16.mxu0 0
    %5522 = vmatpush1.bf16.msra.mxu0 %v3940
    %5523 = vmatprep.subr.bf16.mxu0 0
    %5524 = vmatpush1.bf16.msra.mxu0 %v3941
    %5525 = vmatprep.subr.bf16.mxu0 0
    %5526 = vmatpush1.bf16.msra.mxu0 %v3942
    %5527 = vmatprep.subr.bf16.mxu0 0
    %5528 = vmatpush1.bf16.msra.mxu0 %v3943
    %5529 = vmatprep.subr.bf16.mxu0 0
    %5530 = vmatpush1.bf16.msra.mxu0 %v3944
    %5531 = vmatprep.subr.bf16.mxu0 0
    %5532 = vmatpush1.bf16.msra.mxu0 %v3945
    %5533 = vmatprep.subr.bf16.mxu0 0
    %5534 = vmatpush1.bf16.msra.mxu0 %v3946
    %5535 = vmatprep.subr.bf16.mxu0 0
    %5536 = vmatpush1.bf16.msra.mxu0 %v3947
    %5537 = vmatprep.subr.bf16.mxu0 0
    %5538 = vmatpush1.bf16.msra.mxu0 %v3948
    %5539 = vmatprep.subr.bf16.mxu0 0
    %5540 = vmatpush1.bf16.msra.mxu0 %v3949
    %5541 = vmatprep.subr.bf16.mxu0 0
    %5542 = vmatpush1.bf16.msra.mxu0 %v3950
    %5543 = vmatprep.mubr.bf16.mxu0 %v1356
    %5544 = vmatmul.mubr.bf16.gmra.mrb[0].mxu0 %v1354
    %v5545 = vpop.f32.mrb[0].mxu0
    %v5546 = vadd.f32 %v5506, %v5545
    %v5547 = vpop.f32.mrb[0].mxu0
    %v5548 = vpop.f32.mrb[0].mxu0
    %v5549 = vpop.f32.mrb[0].mxu0
    %5550 = vdwg.mxu0
    %5551 = vmatprep.subr.bf16.mxu0 0
    %5552 = vmatpush1.bf16.msra.mxu0 %v3951
    %5553 = vmatprep.subr.bf16.mxu0 0
    %5554 = vmatpush1.bf16.msra.mxu0 %v3952
    %5555 = vmatprep.subr.bf16.mxu0 0
    %5556 = vmatpush1.bf16.msra.mxu0 %v3953
    %5557 = vmatprep.subr.bf16.mxu0 0
    %5558 = vmatpush1.bf16.msra.mxu0 %v3954
    %5559 = vmatprep.subr.bf16.mxu0 0
    %5560 = vmatpush1.bf16.msra.mxu0 %v3955
    %5561 = vmatprep.subr.bf16.mxu0 0
    %5562 = vmatpush1.bf16.msra.mxu0 %v3956
    %5563 = vmatprep.subr.bf16.mxu0 0
    %5564 = vmatpush1.bf16.msra.mxu0 %v3957
    %5565 = vmatprep.subr.bf16.mxu0 0
    %5566 = vmatpush1.bf16.msra.mxu0 %v3958
    %5567 = vmatprep.subr.bf16.mxu0 0
    %5568 = vmatpush1.bf16.msra.mxu0 %v3959
    %5569 = vmatprep.subr.bf16.mxu0 0
    %5570 = vmatpush1.bf16.msra.mxu0 %v3960
    %5571 = vmatprep.subr.bf16.mxu0 0
    %5572 = vmatpush1.bf16.msra.mxu0 %v3961
    %5573 = vmatprep.subr.bf16.mxu0 0
    %5574 = vmatpush1.bf16.msra.mxu0 %v3962
    %5575 = vmatprep.subr.bf16.mxu0 0
    %5576 = vmatpush1.bf16.msra.mxu0 %v3963
    %5577 = vmatprep.subr.bf16.mxu0 0
    %5578 = vmatpush1.bf16.msra.mxu0 %v3964
    %5579 = vmatprep.subr.bf16.mxu0 0
    %5580 = vmatpush1.bf16.msra.mxu0 %v3965
    %5581 = vmatprep.subr.bf16.mxu0 0
    %5582 = vmatpush1.bf16.msra.mxu0 %v3966
    %5583 = vmatprep.mubr.bf16.mxu0 %v1394
    %5584 = vmatmul.mubr.bf16.gmra.mrb[0].mxu0 %v1380
    %v5585 = vpop.f32.mrb[0].mxu0
    %v5586 = vadd.f32 %v5546, %v5585
    %v5587 = vpop.f32.mrb[0].mxu0
    %v5588 = vpop.f32.mrb[0].mxu0
    %v5589 = vpop.f32.mrb[0].mxu0
    %5590 = vdwg.mxu0
    %5591 = vmatprep.subr.bf16.mxu0 0
    %5592 = vmatpush1.bf16.msra.mxu0 %v3967
    %5593 = vmatprep.subr.bf16.mxu0 0
    %5594 = vmatpush1.bf16.msra.mxu0 %v3968
    %5595 = vmatprep.subr.bf16.mxu0 0
    %5596 = vmatpush1.bf16.msra.mxu0 %v3969
    %5597 = vmatprep.subr.bf16.mxu0 0
    %5598 = vmatpush1.bf16.msra.mxu0 %v3970
    %5599 = vmatprep.subr.bf16.mxu0 0
    %5600 = vmatpush1.bf16.msra.mxu0 %v3971
    %5601 = vmatprep.subr.bf16.mxu0 0
    %5602 = vmatpush1.bf16.msra.mxu0 %v3972
    %5603 = vmatprep.subr.bf16.mxu0 0
    %5604 = vmatpush1.bf16.msra.mxu0 %v3973
    %5605 = vmatprep.subr.bf16.mxu0 0
    %5606 = vmatpush1.bf16.msra.mxu0 %v3974
    %5607 = vmatprep.subr.bf16.mxu0 0
    %5608 = vmatpush1.bf16.msra.mxu0 %v3975
    %5609 = vmatprep.subr.bf16.mxu0 0
    %5610 = vmatpush1.bf16.msra.mxu0 %v3976
    %5611 = vmatprep.subr.bf16.mxu0 0
    %5612 = vmatpush1.bf16.msra.mxu0 %v3977
    %5613 = vmatprep.subr.bf16.mxu0 0
    %5614 = vmatpush1.bf16.msra.mxu0 %v3978
    %5615 = vmatprep.subr.bf16.mxu0 0
    %5616 = vmatpush1.bf16.msra.mxu0 %v3979
    %5617 = vmatprep.subr.bf16.mxu0 0
    %5618 = vmatpush1.bf16.msra.mxu0 %v3980
    %5619 = vmatprep.subr.bf16.mxu0 0
    %5620 = vmatpush1.bf16.msra.mxu0 %v3981
    %5621 = vmatprep.subr.bf16.mxu0 0
    %5622 = vmatpush1.bf16.msra.mxu0 %v3982
    %5623 = vmatprep.mubr.bf16.mxu0 %v1404
    %5624 = vmatmul.mubr.bf16.gmra.mrb[0].mxu0 %v1402
    %v5625 = vpop.f32.mrb[0].mxu0
    %v5626 = vadd.f32 %v5586, %v5625
    %v5627 = vpop.f32.mrb[0].mxu0
    %v5628 = vpop.f32.mrb[0].mxu0
    %v5629 = vpop.f32.mrb[0].mxu0
    %5630 = vdwg.mxu0
    %5631 = vmatprep.subr.bf16.mxu0 0
    %5632 = vmatpush1.bf16.msra.mxu0 %v3983
    %5633 = vmatprep.subr.bf16.mxu0 0
    %5634 = vmatpush1.bf16.msra.mxu0 %v3984
    %5635 = vmatprep.subr.bf16.mxu0 0
    %5636 = vmatpush1.bf16.msra.mxu0 %v3985
    %5637 = vmatprep.subr.bf16.mxu0 0
    %5638 = vmatpush1.bf16.msra.mxu0 %v3986
    %5639 = vmatprep.subr.bf16.mxu0 0
    %5640 = vmatpush1.bf16.msra.mxu0 %v3987
    %5641 = vmatprep.subr.bf16.mxu0 0
    %5642 = vmatpush1.bf16.msra.mxu0 %v3988
    %5643 = vmatprep.subr.bf16.mxu0 0
    %5644 = vmatpush1.bf16.msra.mxu0 %v3989
    %5645 = vmatprep.subr.bf16.mxu0 0
    %5646 = vmatpush1.bf16.msra.mxu0 %v3990
    %5647 = vmatprep.subr.bf16.mxu0 0
    %5648 = vmatpush1.bf16.msra.mxu0 %v3991
    %5649 = vmatprep.subr.bf16.mxu0 0
    %5650 = vmatpush1.bf16.msra.mxu0 %v3992
    %5651 = vmatprep.subr.bf16.mxu0 0
    %5652 = vmatpush1.bf16.msra.mxu0 %v3993
    %5653 = vmatprep.subr.bf16.mxu0 0
    %5654 = vmatpush1.bf16.msra.mxu0 %v3994
    %5655 = vmatprep.subr.bf16.mxu0 0
    %5656 = vmatpush1.bf16.msra.mxu0 %v3995
    %5657 = vmatprep.subr.bf16.mxu0 0
    %5658 = vmatpush1.bf16.msra.mxu0 %v3996
    %5659 = vmatprep.subr.bf16.mxu0 0
    %5660 = vmatpush1.bf16.msra.mxu0 %v3997
    %5661 = vmatprep.subr.bf16.mxu0 0
    %5662 = vmatpush1.bf16.msra.mxu0 %v3998
    %5663 = vmatprep.mubr.bf16.mxu0 %v1401
    %5664 = vmatmul.mubr.bf16.gmra.mrb[0].mxu0 %v1387
    %v5665 = vpop.f32.mrb[0].mxu0
    %v5666 = vadd.f32 %v5626, %v5665
    %v5667 = vpop.f32.mrb[0].mxu0
    %v5668 = vpop.f32.mrb[0].mxu0
    %v5669 = vpop.f32.mrb[0].mxu0
    %5670 = vdwg.mxu0
    %5671 = vmatprep.subr.bf16.mxu0 0
    %5672 = vmatpush1.bf16.msra.mxu0 %v3999
    %5673 = vmatprep.subr.bf16.mxu0 0
    %5674 = vmatpush1.bf16.msra.mxu0 %v4000
    %5675 = vmatprep.subr.bf16.mxu0 0
    %5676 = vmatpush1.bf16.msra.mxu0 %v4001
    %5677 = vmatprep.subr.bf16.mxu0 0
    %5678 = vmatpush1.bf16.msra.mxu0 %v4002
    %5679 = vmatprep.subr.bf16.mxu0 0
    %5680 = vmatpush1.bf16.msra.mxu0 %v4003
    %5681 = vmatprep.subr.bf16.mxu0 0
    %5682 = vmatpush1.bf16.msra.mxu0 %v4004
    %5683 = vmatprep.subr.bf16.mxu0 0
    %5684 = vmatpush1.bf16.msra.mxu0 %v4005
    %5685 = vmatprep.subr.bf16.mxu0 0
    %5686 = vmatpush1.bf16.msra.mxu0 %v4006
    %5687 = vmatprep.subr.bf16.mxu0 0
    %5688 = vmatpush1.bf16.msra.mxu0 %v4007
    %5689 = vmatprep.subr.bf16.mxu0 0
    %5690 = vmatpush1.bf16.msra.mxu0 %v4008
    %5691 = vmatprep.subr.bf16.mxu0 0
    %5692 = vmatpush1.bf16.msra.mxu0 %v4009
    %5693 = vmatprep.subr.bf16.mxu0 0
    %5694 = vmatpush1.bf16.msra.mxu0 %v4010
    %5695 = vmatprep.subr.bf16.mxu0 0
    %5696 = vmatpush1.bf16.msra.mxu0 %v4011
    %5697 = vmatprep.subr.bf16.mxu0 0
    %5698 = vmatpush1.bf16.msra.mxu0 %v4012
    %5699 = vmatprep.subr.bf16.mxu0 0
    %5700 = vmatpush1.bf16.msra.mxu0 %v4013
    %5701 = vmatprep.subr.bf16.mxu0 0
    %5702 = vmatpush1.bf16.msra.mxu0 %v4014
    %5703 = vmatprep.mubr.bf16.mxu0 %v1405
    %5704 = vmatmul.mubr.bf16.gmra.mrb[0].mxu0 %v1403
    %v5705 = vpop.f32.mrb[0].mxu0
    %v5706 = vadd.f32 %v5666, %v5705
    %v5707 = vpop.f32.mrb[0].mxu0
    %v5708 = vpop.f32.mrb[0].mxu0
    %v5709 = vpop.f32.mrb[0].mxu0
    %5710 = vdwg.mxu0
    %5711 = vmatprep.subr.bf16.mxu0 0
    %5712 = vmatpush1.bf16.msra.mxu0 %v4015
    %5713 = vmatprep.subr.bf16.mxu0 0
    %5714 = vmatpush1.bf16.msra.mxu0 %v4016
    %5715 = vmatprep.subr.bf16.mxu0 0
    %5716 = vmatpush1.bf16.msra.mxu0 %v4017
    %5717 = vmatprep.subr.bf16.mxu0 0
    %5718 = vmatpush1.bf16.msra.mxu0 %v4018
    %5719 = vmatprep.subr.bf16.mxu0 0
    %5720 = vmatpush1.bf16.msra.mxu0 %v4019
    %5721 = vmatprep.subr.bf16.mxu0 0
    %5722 = vmatpush1.bf16.msra.mxu0 %v4020
    %5723 = vmatprep.subr.bf16.mxu0 0
    %5724 = vmatpush1.bf16.msra.mxu0 %v4021
    %5725 = vmatprep.subr.bf16.mxu0 0
    %5726 = vmatpush1.bf16.msra.mxu0 %v4022
    %5727 = vmatprep.subr.bf16.mxu0 0
    %5728 = vmatpush1.bf16.msra.mxu0 %v4023
    %5729 = vmatprep.subr.bf16.mxu0 0
    %5730 = vmatpush1.bf16.msra.mxu0 %v4024
    %5731 = vmatprep.subr.bf16.mxu0 0
    %5732 = vmatpush1.bf16.msra.mxu0 %v4025
    %5733 = vmatprep.subr.bf16.mxu0 0
    %5734 = vmatpush1.bf16.msra.mxu0 %v4026
    %5735 = vmatprep.subr.bf16.mxu0 0
    %5736 = vmatpush1.bf16.msra.mxu0 %v4027
    %5737 = vmatprep.subr.bf16.mxu0 0
    %5738 = vmatpush1.bf16.msra.mxu0 %v4028
    %5739 = vmatprep.subr.bf16.mxu0 0
    %5740 = vmatpush1.bf16.msra.mxu0 %v4029
    %5741 = vmatprep.subr.bf16.mxu0 0
    %5742 = vmatpush1.bf16.msra.mxu0 %v4030
    %5743 = vmatprep.mubr.bf16.mxu0 %v1443
    %5744 = vmatmul.mubr.bf16.gmra.mrb[0].mxu0 %v1429
    %v5745 = vpop.f32.mrb[0].mxu0
    %v5746 = vadd.f32 %v5706, %v5745
    %v5747 = vpop.f32.mrb[0].mxu0
    %v5748 = vpop.f32.mrb[0].mxu0
    %v5749 = vpop.f32.mrb[0].mxu0
    %5750 = vdwg.mxu0
    %5751 = vmatprep.subr.bf16.mxu0 0
    %5752 = vmatpush1.bf16.msra.mxu0 %v4031
    %5753 = vmatprep.subr.bf16.mxu0 0
    %5754 = vmatpush1.bf16.msra.mxu0 %v4032
    %5755 = vmatprep.subr.bf16.mxu0 0
    %5756 = vmatpush1.bf16.msra.mxu0 %v4033
    %5757 = vmatprep.subr.bf16.mxu0 0
    %5758 = vmatpush1.bf16.msra.mxu0 %v4034
    %5759 = vmatprep.subr.bf16.mxu0 0
    %5760 = vmatpush1.bf16.msra.mxu0 %v4035
    %5761 = vmatprep.subr.bf16.mxu0 0
    %5762 = vmatpush1.bf16.msra.mxu0 %v4036
    %5763 = vmatprep.subr.bf16.mxu0 0
    %5764 = vmatpush1.bf16.msra.mxu0 %v4037
    %5765 = vmatprep.subr.bf16.mxu0 0
    %5766 = vmatpush1.bf16.msra.mxu0 %v4038
    %5767 = vmatprep.subr.bf16.mxu0 0
    %5768 = vmatpush1.bf16.msra.mxu0 %v4039
    %5769 = vmatprep.subr.bf16.mxu0 0
    %5770 = vmatpush1.bf16.msra.mxu0 %v4040
    %5771 = vmatprep.subr.bf16.mxu0 0
    %5772 = vmatpush1.bf16.msra.mxu0 %v4041
    %5773 = vmatprep.subr.bf16.mxu0 0
    %5774 = vmatpush1.bf16.msra.mxu0 %v4042
    %5775 = vmatprep.subr.bf16.mxu0 0
    %5776 = vmatpush1.bf16.msra.mxu0 %v4043
    %5777 = vmatprep.subr.bf16.mxu0 0
    %5778 = vmatpush1.bf16.msra.mxu0 %v4044
    %5779 = vmatprep.subr.bf16.mxu0 0
    %5780 = vmatpush1.bf16.msra.mxu0 %v4045
    %5781 = vmatprep.subr.bf16.mxu0 0
    %5782 = vmatpush1.bf16.msra.mxu0 %v4046
    %5783 = vmatprep.mubr.bf16.mxu0 %v1453
    %5784 = vmatmul.mubr.bf16.gmra.mrb[0].mxu0 %v1451
    %v5785 = vpop.f32.mrb[0].mxu0
    %v5786 = vadd.f32 %v5746, %v5785
    %v5787 = vpop.f32.mrb[0].mxu0
    %v5788 = vpop.f32.mrb[0].mxu0
    %v5789 = vpop.f32.mrb[0].mxu0
    %5790 = vdwg.mxu0
    %5791 = vmatprep.subr.bf16.mxu0 0
    %5792 = vmatpush1.bf16.msra.mxu0 %v4047
    %5793 = vmatprep.subr.bf16.mxu0 0
    %5794 = vmatpush1.bf16.msra.mxu0 %v4048
    %5795 = vmatprep.subr.bf16.mxu0 0
    %5796 = vmatpush1.bf16.msra.mxu0 %v4049
    %5797 = vmatprep.subr.bf16.mxu0 0
    %5798 = vmatpush1.bf16.msra.mxu0 %v4050
    %5799 = vmatprep.subr.bf16.mxu0 0
    %5800 = vmatpush1.bf16.msra.mxu0 %v4051
    %5801 = vmatprep.subr.bf16.mxu0 0
    %5802 = vmatpush1.bf16.msra.mxu0 %v4052
    %5803 = vmatprep.subr.bf16.mxu0 0
    %5804 = vmatpush1.bf16.msra.mxu0 %v4053
    %5805 = vmatprep.subr.bf16.mxu0 0
    %5806 = vmatpush1.bf16.msra.mxu0 %v4054
    %5807 = vmatprep.subr.bf16.mxu0 0
    %5808 = vmatpush1.bf16.msra.mxu0 %v4055
    %5809 = vmatprep.subr.bf16.mxu0 0
    %5810 = vmatpush1.bf16.msra.mxu0 %v4056
    %5811 = vmatprep.subr.bf16.mxu0 0
    %5812 = vmatpush1.bf16.msra.mxu0 %v4057
    %5813 = vmatprep.subr.bf16.mxu0 0
    %5814 = vmatpush1.bf16.msra.mxu0 %v4058
    %5815 = vmatprep.subr.bf16.mxu0 0
    %5816 = vmatpush1.bf16.msra.mxu0 %v4059
    %5817 = vmatprep.subr.bf16.mxu0 0
    %5818 = vmatpush1.bf16.msra.mxu0 %v4060
    %5819 = vmatprep.subr.bf16.mxu0 0
    %5820 = vmatpush1.bf16.msra.mxu0 %v4061
    %5821 = vmatprep.subr.bf16.mxu0 0
    %5822 = vmatpush1.bf16.msra.mxu0 %v4062
    %5823 = vmatprep.mubr.bf16.mxu0 %v1450
    %5824 = vmatmul.mubr.bf16.gmra.mrb[0].mxu0 %v1436
    %v5825 = vpop.f32.mrb[0].mxu0
    %v5826 = vadd.f32 %v5786, %v5825
    %v5827 = vpop.f32.mrb[0].mxu0
    %v5828 = vpop.f32.mrb[0].mxu0
    %v5829 = vpop.f32.mrb[0].mxu0
    %5830 = vdwg.mxu0
    %5831 = vmatprep.subr.bf16.mxu0 0
    %5832 = vmatpush1.bf16.msra.mxu0 %v4063
    %5833 = vmatprep.subr.bf16.mxu0 0
    %5834 = vmatpush1.bf16.msra.mxu0 %v4064
    %5835 = vmatprep.subr.bf16.mxu0 0
    %5836 = vmatpush1.bf16.msra.mxu0 %v4065
    %5837 = vmatprep.subr.bf16.mxu0 0
    %5838 = vmatpush1.bf16.msra.mxu0 %v4066
    %5839 = vmatprep.subr.bf16.mxu0 0
    %5840 = vmatpush1.bf16.msra.mxu0 %v4067
    %5841 = vmatprep.subr.bf16.mxu0 0
    %5842 = vmatpush1.bf16.msra.mxu0 %v4068
    %5843 = vmatprep.subr.bf16.mxu0 0
    %5844 = vmatpush1.bf16.msra.mxu0 %v4069
    %5845 = vmatprep.subr.bf16.mxu0 0
    %5846 = vmatpush1.bf16.msra.mxu0 %v4070
    %5847 = vmatprep.subr.bf16.mxu0 0
    %5848 = vmatpush1.bf16.msra.mxu0 %v4071
    %5849 = vmatprep.subr.bf16.mxu0 0
    %5850 = vmatpush1.bf16.msra.mxu0 %v4072
    %5851 = vmatprep.subr.bf16.mxu0 0
    %5852 = vmatpush1.bf16.msra.mxu0 %v4073
    %5853 = vmatprep.subr.bf16.mxu0 0
    %5854 = vmatpush1.bf16.msra.mxu0 %v4074
    %5855 = vmatprep.subr.bf16.mxu0 0
    %5856 = vmatpush1.bf16.msra.mxu0 %v4075
    %5857 = vmatprep.subr.bf16.mxu0 0
    %5858 = vmatpush1.bf16.msra.mxu0 %v4076
    %5859 = vmatprep.subr.bf16.mxu0 0
    %5860 = vmatpush1.bf16.msra.mxu0 %v4077
    %5861 = vmatprep.subr.bf16.mxu0 0
    %5862 = vmatpush1.bf16.msra.mxu0 %v4078
    %5863 = vmatprep.mubr.bf16.mxu0 %v1454
    %5864 = vmatmul.mubr.bf16.gmra.mrb[0].mxu0 %v1452
    %v5865 = vpop.f32.mrb[0].mxu0
    %v5866 = vadd.f32 %v5826, %v5865
    %v5867 = vpop.f32.mrb[0].mxu0
    %v5868 = vpop.f32.mrb[0].mxu0
    %v5869 = vpop.f32.mrb[0].mxu0
    %5870 = vdwg.mxu0
    %5871 = vst [vmem:[#allocation2] sm:$0x3] %v5866
    // Predicated region
    $region14: #{cifar10_forward.3} parent=1 // pred_check
      _
    $region15: #{cifar10_forward.3} parent=1 // pred_check_branch
      %5873 = sbr.rel (0) target = $region17
    $region16: #{cifar10_forward.3} parent=1 // pred_region
      %s5875 = ssub.s32 32, 32
      %5876 = vsyncadd [#allocation3], %s5875
      %s5878 = sshll.u32 [#allocation2], 4
      %s5879 = int_to_ptr.vmem [resolvable:$true] %s5878
      %5881 = dma.vmem_to_hbm [thread:$0]  %s5879, 32, %s3, [#allocation3]
    $region17: #{cifar10_forward.3} parent=1 // pred_fallthru
      _
    // Predicated region
    $region18: #{cifar10_forward.3} parent=1 // pred_check
      _
    $region19: #{cifar10_forward.3} parent=1 // pred_check_branch
      %5883 = sbr.rel (0) target = $region21
    $region20: #{cifar10_forward.3} parent=1 // pred_region
      %5884 = dma.done [#allocation3], 32
    $region21: #{cifar10_forward.3} parent=1 // pred_fallthru
      _
    %5885 = vsyncpa [#allocation3], 1

</llo_original>
